<compile_context>
chip_gen: v6e
topology: v6e:2x2x1
jax: 0.10.0
libtpu: 0.0.40
codegen_flags: <defaults>
</compile_context>

<pallas_src>
import functools

import jax
import jax.numpy as jnp
from jax.experimental import pallas as pl
from jax.experimental.pallas import tpu as pltpu


def _depthwise_scratch_dtype():
    """bf16 depthwise scratch on v6e/v7x (native bf16 VPU); f32 on v5e."""
    try:
        kind = jax.devices()[0].device_kind.lower()
    except Exception:
        kind = ""
    return jnp.float32 if "v5" in kind else jnp.bfloat16


def ge_kernel(H, W, WP, nhwc_out,
              x_ref, w3_ref, b3_ref, wdw_ref, bdw_ref, w1_ref, b1_ref,
              o_ref, xpad_s, ypad_s):
    Cin = x_ref.shape[-1]
    C6 = b3_ref.shape[-1]
    Cout = b1_ref.shape[-1]
    HWJ = H * WP                       # pixel rows incl. (WP - W) junk cols/row
    n_rows = (H + 2) * WP + 8          # flat padded rows (+8 so junk-output
                                       # taps never read out of bounds)

    # ---- stage 0: zero-padded, pixel-major conv3 input (bf16) ----------------
    # Flat layout: row r*WP + c == padded pixel (r, c); image pixel (y, x) is at
    # (y+1)*WP + (x+1).  xpad is the *small* (Cin-lane) scratch, so a full dense
    # zero is cheap and removes all border bookkeeping.
    xpad_s[...] = jnp.zeros((n_rows, Cin), xpad_s.dtype)
    for y in range(H):                 # one re-pitch pass over the input
        xpad_s[pl.ds((y + 1) * WP + 1, W), :] = (
            x_ref[0, y, :, :].astype(xpad_s.dtype))

    # ---- conv3: RepConvN(in, 6*in, 3x3, s=1, p=1) + ReLU ---------------------
    # Nine accumulated MXU matmuls over contiguous sublane windows.
    w3 = w3_ref[...]                                        # (9, Cin, C6) bf16
    acc1 = jnp.dot(xpad_s[pl.ds(0, HWJ), :], w3[0],
                   preferred_element_type=jnp.float32)
    for t in range(1, 9):
        dy, dx = divmod(t, 3)
        a = xpad_s[pl.ds(dy * WP + dx, HWJ), :]             # (HWJ, Cin) window
        acc1 = acc1 + jnp.dot(a, w3[t], preferred_element_type=jnp.float32)
    y1 = jnp.maximum(acc1 + b3_ref[...], 0.0)               # bias + ReLU (f32)

    # Junk columns (x' >= W of every pitched row) hold sliding-window garbage;
    # zero them once so they double as the depthwise padding zeros below.
    col = jax.lax.broadcasted_iota(jnp.int32, (HWJ, 1), 0) % WP
    y1 = jnp.where(col < W, y1, 0.0)

    # ---- conv3dw input: one dense store into the padded depthwise buffer -----
    ypad_s[0:WP + 1, :] = jnp.zeros((WP + 1, C6), ypad_s.dtype)
    ypad_s[pl.ds((H + 1) * WP + 1, WP + 7), :] = jnp.zeros((WP + 7, C6),
                                                           ypad_s.dtype)
    ypad_s[pl.ds(WP + 1, HWJ), :] = y1.astype(ypad_s.dtype)

    # ---- conv3dw: depthwise RepConvN(6*in, 6*in, 3x3, p=1), act=False --------
    # dy taps are 8-aligned (WP % 8 == 0); dx in {1,2} taps need only a sublane
    # shift (XLU) that overlaps the VPU multiply-adds.  f32 accumulation.
    wdw = wdw_ref[...]                                      # (9, C6) f32
    acc2 = ypad_s[pl.ds(0, HWJ), :].astype(jnp.float32) * wdw[0:1, :]
    for t in range(1, 9):
        dy, dx = divmod(t, 3)
        ytap = ypad_s[pl.ds(dy * WP + dx, HWJ), :].astype(jnp.float32)
        acc2 = acc2 + ytap * wdw[t:t + 1, :]
    y2 = acc2 + bdw_ref[...]                                # no activation

    # ---- conv1: ConvNormAct(6*in, out, 1x1) + folded BN + ReLU ---------------
    y3 = jnp.dot(y2.astype(jnp.bfloat16), w1_ref[...],
                 preferred_element_type=jnp.float32)
    y3 = jnp.maximum(y3 + b1_ref[...], 0.0)                 # (HWJ, Cout)

    # ---- drop junk columns (W, WP multiples of 8 -> layout-preserving) -------
    y3 = y3.reshape(H, WP, Cout)[:, :W, :].reshape(H * W, Cout)

    # ---- shortcut (Identity) + StochasticDepth(eval)=Identity + residual ReLU
    x_res = x_ref[0].reshape(H * W, Cin)                    # Cin == Cout, f32
    out = jnp.maximum(y3 + x_res, 0.0)

    if nhwc_out:
        # Cout >= 128: already lane-dense as NHWC; skip the cross-lane transpose.
        o_ref[...] = out.reshape(1, H * W, Cout).astype(o_ref.dtype)
    else:
        # Tiny Cout: channels-major store keeps the last dim = H*W lane-dense.
        o_ref[...] = out.T.reshape(1, Cout, H * W).astype(o_ref.dtype)


def gather_expansion_nhwc(x_nhwc, w3, b3, wdw, bdw, w1, b1, *,
                          vmem_limit_bytes=None):
    N, H, W, Cin = x_nhwc.shape
    C6 = w3.shape[-1]
    Cout = w1.shape[-1]
    assert Cin == Cout, "stride=1 / in==out configuration (ShortCut=Identity)"
    assert W % 8 == 0, "W must be a multiple of 8"
    WP = ((W + 2 + 7) // 8) * 8          # 8-aligned row pitch (W + junk cols)

    nhwc_out = Cout >= 128               # production blocks: store NHWC directly
    if not nhwc_out:
        assert (H * W) % 128 == 0, "H*W must be a multiple of 128"
    dw_dtype = _depthwise_scratch_dtype()

    # one-time weight preprocessing (outside the kernel)
    w3r = w3.reshape(9, Cin, C6).astype(jnp.bfloat16)    # per-tap MXU weights
    b3_ = b3.reshape(1, C6).astype(jnp.float32)
    wdw_ = wdw.reshape(9, C6).astype(jnp.float32)
    bdw_ = bdw.reshape(1, C6).astype(jnp.float32)
    w1b = w1.astype(jnp.bfloat16)
    b1_ = b1.reshape(1, Cout).astype(jnp.float32)

    if nhwc_out:
        out_shape = jax.ShapeDtypeStruct((N, H * W, Cout), x_nhwc.dtype)
        out_spec = pl.BlockSpec((1, H * W, Cout), lambda n: (n, 0, 0))
    else:
        out_shape = jax.ShapeDtypeStruct((N, Cout, H * W), x_nhwc.dtype)
        out_spec = pl.BlockSpec((1, Cout, H * W), lambda n: (n, 0, 0))

    def const_spec(shape):
        # Grid-invariant weights/biases: single-buffered (no point
        # double-buffering a block whose index never changes).
        return pl.BlockSpec(shape, lambda n: (0,) * len(shape),
                            pipeline_mode=pl.Buffered(1))

    cp_kwargs = dict(dimension_semantics=("parallel",))   # batch items indep.
    if vmem_limit_bytes is not None:
        cp_kwargs["vmem_limit_bytes"] = vmem_limit_bytes

    out = pl.pallas_call(
        functools.partial(ge_kernel, H, W, WP, nhwc_out),
        out_shape=out_shape,
        grid_spec=pltpu.PrefetchScalarGridSpec(
            num_scalar_prefetch=0,
            grid=(N,),
            in_specs=[
                pl.BlockSpec((1, H, W, Cin), lambda n: (n, 0, 0, 0)),
                const_spec((9, Cin, C6)),
                const_spec((1, C6)),
                const_spec((9, C6)),
                const_spec((1, C6)),
                const_spec((C6, Cout)),
                const_spec((1, Cout)),
            ],
            out_specs=out_spec,
            scratch_shapes=[
                pltpu.VMEM(((H + 2) * WP + 8, Cin), jnp.bfloat16),
                pltpu.VMEM(((H + 2) * WP + 8, C6), dw_dtype),
            ],
        ),
        compiler_params=pltpu.CompilerParams(**cp_kwargs),
    )(x_nhwc, w3r, b3_, wdw_, bdw_, w1b, b1_)

    if nhwc_out:
        return jnp.transpose(out.reshape(N, H, W, Cout), (0, 3, 1, 2))
    return out.reshape(N, Cout, H, W)


def gather_expansion(x_nchw, params):
    # NCHW (PyTorch) -> NHWC for the kernel; for tiny Cout the kernel emits a
    # channels-major block so the NCHW result is a free reshape (no transpose).
    N, C, H, W = x_nchw.shape
    x_nhwc = jnp.transpose(x_nchw, (0, 2, 3, 1))
    return gather_expansion_nhwc(x_nhwc, *params)          # (N, Cout, H, W)


def ref_forward_nhwc(x, w3, b3, wdw, bdw, w1, b1):
    """Pure-JAX f32 reference of the same forward pass (for verification)."""
    dn = ('NHWC', 'HWIO', 'NHWC')
    y = jax.lax.conv_general_dilated(x, w3, (1, 1), ((1, 1), (1, 1)),
                                     dimension_numbers=dn)
    y = jax.nn.relu(y + b3)
    C6 = wdw.shape[-1]
    y = jax.lax.conv_general_dilated(y, wdw.reshape(3, 3, 1, C6), (1, 1),
                                     ((1, 1), (1, 1)), dimension_numbers=dn,
                                     feature_group_count=C6)
    y = y + bdw
    y = jax.lax.conv_general_dilated(y, w1.reshape(1, 1, *w1.shape), (1, 1),
                                     ((0, 0), (0, 0)), dimension_numbers=dn)
    y = jax.nn.relu(y + b1)
    return jax.nn.relu(y + x)


if __name__ == "__main__":
    N, C, Hh, Ww = 2, 8, 16, 16          # in_channels == out_channels, stride=1
    C6 = 6 * C

    key = jax.random.PRNGKey(0)
    kx, k1, k2, k3, k4, k5, k6 = jax.random.split(key, 7)

    # deterministic synthetic parameters (BN already folded into weight/bias)
    w3 = 0.1 * jax.random.normal(k1, (3, 3, C, C6), jnp.float32)   # conv3 (HWIO)
    b3 = 0.1 * jax.random.normal(k2, (C6,), jnp.float32)
    wdw = 0.1 * jax.random.normal(k3, (3, 3, C6), jnp.float32)     # depthwise
    bdw = 0.1 * jax.random.normal(k4, (C6,), jnp.float32)
    w1 = 0.1 * jax.random.normal(k5, (C6, C), jnp.float32)         # 1x1 conv
    b1 = 0.1 * jax.random.normal(k6, (C,), jnp.float32)
    params = (w3, b3, wdw, bdw, w1, b1)

    x_nchw = jax.random.normal(kx, (N, C, Hh, Ww), jnp.float32)

    out = jax.block_until_ready(gather_expansion(x_nchw, params))

    # verify against pure-JAX f32 reference (kernel uses bf16 MXU operands and a
    # bf16 depthwise scratch on v6e/v7x, hence the relaxed tolerance).
    x_nhwc = jnp.transpose(x_nchw, (0, 2, 3, 1))
    ref = ref_forward_nhwc(x_nhwc, *params)
    ref_nchw = jnp.transpose(ref, (0, 3, 1, 2))
    assert out.shape == (N, C, Hh, Ww)
    assert jnp.allclose(out, ref_nchw, atol=5e-2, rtol=5e-2), "mismatch vs reference"

    print("KERNEL_OK")
</pallas_src>

<mosaic_0001>
module attributes {stable_mosaic.version = 11 : i64} {
  func.func @ge_kernel(%arg0: i32, %arg1: memref<1x16x16x8xf32, #tpu.memory_space<vmem>>, %arg2: memref<9x8x48xbf16, #tpu.memory_space<vmem>>, %arg3: memref<1x48xf32, #tpu.memory_space<vmem>>, %arg4: memref<9x48xf32, #tpu.memory_space<vmem>>, %arg5: memref<1x48xf32, #tpu.memory_space<vmem>>, %arg6: memref<48x8xbf16, #tpu.memory_space<vmem>>, %arg7: memref<1x8xf32, #tpu.memory_space<vmem>>, %arg8: memref<1x8x256xf32, #tpu.memory_space<vmem>>, %arg9: memref<440x8xbf16, #tpu.memory_space<vmem>>, %arg10: memref<440x48xbf16, #tpu.memory_space<vmem>>) attributes {dimension_semantics = [#tpu.dimension_semantics<parallel>], iteration_bounds = array<i64: 2>, scalar_prefetch = 0 : i64, scratch_operands = 2 : i64, tpu.core_type = #tpu.core_type<tc>, window_params = [{transform_indices = @transform_0, window_bounds = array<i64: 1, 16, 16, 8>}, {pipeline_mode = #tpu.pipeline_mode<synchronous>, transform_indices = @transform_1, window_bounds = array<i64: 9, 8, 48>}, {pipeline_mode = #tpu.pipeline_mode<synchronous>, transform_indices = @transform_2, window_bounds = array<i64: 1, 48>}, {pipeline_mode = #tpu.pipeline_mode<synchronous>, transform_indices = @transform_3, window_bounds = array<i64: 9, 48>}, {pipeline_mode = #tpu.pipeline_mode<synchronous>, transform_indices = @transform_4, window_bounds = array<i64: 1, 48>}, {pipeline_mode = #tpu.pipeline_mode<synchronous>, transform_indices = @transform_5, window_bounds = array<i64: 48, 8>}, {pipeline_mode = #tpu.pipeline_mode<synchronous>, transform_indices = @transform_6, window_bounds = array<i64: 1, 8>}, {transform_indices = @transform_7, window_bounds = array<i64: 1, 8, 256>}]} {
    %cst = arith.constant 0.000000e+00 : bf16
    %0 = vector.broadcast %cst : bf16 to vector<440x8xbf16>
    %c0 = arith.constant 0 : index
    %c0_0 = arith.constant 0 : index
    %1 = vector.load %arg9[%c0, %c0_0] : memref<440x8xbf16, #tpu.memory_space<vmem>>, vector<440x8xbf16>
    tpu.vector_store %arg9[%c0, %c0_0], %0 {strides = array<i32>} : memref<440x8xbf16, #tpu.memory_space<vmem>>, vector<440x8xbf16>,
    %c0_1 = arith.constant 0 : index
    %c0_2 = arith.constant 0 : index
    %c0_3 = arith.constant 0 : index
    %c0_4 = arith.constant 0 : index
    %2 = vector.load %arg1[%c0_1, %c0_2, %c0_3, %c0_4] : memref<1x16x16x8xf32, #tpu.memory_space<vmem>>, vector<1x1x16x8xf32>
    %3 = vector.shape_cast %2 : vector<1x1x16x8xf32> to vector<16x8xf32>
    %4 = arith.truncf %3 : vector<16x8xf32> to vector<16x8xbf16>
    %c25 = arith.constant 25 : index
    %c0_5 = arith.constant 0 : index
    %5 = vector.load %arg9[%c25, %c0_5] : memref<440x8xbf16, #tpu.memory_space<vmem>>, vector<16x8xbf16>
    tpu.vector_store %arg9[%c25, %c0_5], %4 {strides = array<i32>} : memref<440x8xbf16, #tpu.memory_space<vmem>>, vector<16x8xbf16>,
    %c0_6 = arith.constant 0 : index
    %c1 = arith.constant 1 : index
    %c0_7 = arith.constant 0 : index
    %c0_8 = arith.constant 0 : index
    %6 = vector.load %arg1[%c0_6, %c1, %c0_7, %c0_8] : memref<1x16x16x8xf32, #tpu.memory_space<vmem>>, vector<1x1x16x8xf32>
    %7 = vector.shape_cast %6 : vector<1x1x16x8xf32> to vector<16x8xf32>
    %8 = arith.truncf %7 : vector<16x8xf32> to vector<16x8xbf16>
    %c49 = arith.constant 49 : index
    %c0_9 = arith.constant 0 : index
    %9 = vector.load %arg9[%c49, %c0_9] : memref<440x8xbf16, #tpu.memory_space<vmem>>, vector<16x8xbf16>
    tpu.vector_store %arg9[%c49, %c0_9], %8 {strides = array<i32>} : memref<440x8xbf16, #tpu.memory_space<vmem>>, vector<16x8xbf16>,
    %c0_10 = arith.constant 0 : index
    %c2 = arith.constant 2 : index
    %c0_11 = arith.constant 0 : index
    %c0_12 = arith.constant 0 : index
    %10 = vector.load %arg1[%c0_10, %c2, %c0_11, %c0_12] : memref<1x16x16x8xf32, #tpu.memory_space<vmem>>, vector<1x1x16x8xf32>
    %11 = vector.shape_cast %10 : vector<1x1x16x8xf32> to vector<16x8xf32>
    %12 = arith.truncf %11 : vector<16x8xf32> to vector<16x8xbf16>
    %c73 = arith.constant 73 : index
    %c0_13 = arith.constant 0 : index
    %13 = vector.load %arg9[%c73, %c0_13] : memref<440x8xbf16, #tpu.memory_space<vmem>>, vector<16x8xbf16>
    tpu.vector_store %arg9[%c73, %c0_13], %12 {strides = array<i32>} : memref<440x8xbf16, #tpu.memory_space<vmem>>, vector<16x8xbf16>,
    %c0_14 = arith.constant 0 : index
    %c3 = arith.constant 3 : index
    %c0_15 = arith.constant 0 : index
    %c0_16 = arith.constant 0 : index
    %14 = vector.load %arg1[%c0_14, %c3, %c0_15, %c0_16] : memref<1x16x16x8xf32, #tpu.memory_space<vmem>>, vector<1x1x16x8xf32>
    %15 = vector.shape_cast %14 : vector<1x1x16x8xf32> to vector<16x8xf32>
    %16 = arith.truncf %15 : vector<16x8xf32> to vector<16x8xbf16>
    %c97 = arith.constant 97 : index
    %c0_17 = arith.constant 0 : index
    %17 = vector.load %arg9[%c97, %c0_17] : memref<440x8xbf16, #tpu.memory_space<vmem>>, vector<16x8xbf16>
    tpu.vector_store %arg9[%c97, %c0_17], %16 {strides = array<i32>} : memref<440x8xbf16, #tpu.memory_space<vmem>>, vector<16x8xbf16>,
    %c0_18 = arith.constant 0 : index
    %c4 = arith.constant 4 : index
    %c0_19 = arith.constant 0 : index
    %c0_20 = arith.constant 0 : index
    %18 = vector.load %arg1[%c0_18, %c4, %c0_19, %c0_20] : memref<1x16x16x8xf32, #tpu.memory_space<vmem>>, vector<1x1x16x8xf32>
    %19 = vector.shape_cast %18 : vector<1x1x16x8xf32> to vector<16x8xf32>
    %20 = arith.truncf %19 : vector<16x8xf32> to vector<16x8xbf16>
    %c121 = arith.constant 121 : index
    %c0_21 = arith.constant 0 : index
    %21 = vector.load %arg9[%c121, %c0_21] : memref<440x8xbf16, #tpu.memory_space<vmem>>, vector<16x8xbf16>
    tpu.vector_store %arg9[%c121, %c0_21], %20 {strides = array<i32>} : memref<440x8xbf16, #tpu.memory_space<vmem>>, vector<16x8xbf16>,
    %c0_22 = arith.constant 0 : index
    %c5 = arith.constant 5 : index
    %c0_23 = arith.constant 0 : index
    %c0_24 = arith.constant 0 : index
    %22 = vector.load %arg1[%c0_22, %c5, %c0_23, %c0_24] : memref<1x16x16x8xf32, #tpu.memory_space<vmem>>, vector<1x1x16x8xf32>
    %23 = vector.shape_cast %22 : vector<1x1x16x8xf32> to vector<16x8xf32>
    %24 = arith.truncf %23 : vector<16x8xf32> to vector<16x8xbf16>
    %c145 = arith.constant 145 : index
    %c0_25 = arith.constant 0 : index
    %25 = vector.load %arg9[%c145, %c0_25] : memref<440x8xbf16, #tpu.memory_space<vmem>>, vector<16x8xbf16>
    tpu.vector_store %arg9[%c145, %c0_25], %24 {strides = array<i32>} : memref<440x8xbf16, #tpu.memory_space<vmem>>, vector<16x8xbf16>,
    %c0_26 = arith.constant 0 : index
    %c6 = arith.constant 6 : index
    %c0_27 = arith.constant 0 : index
    %c0_28 = arith.constant 0 : index
    %26 = vector.load %arg1[%c0_26, %c6, %c0_27, %c0_28] : memref<1x16x16x8xf32, #tpu.memory_space<vmem>>, vector<1x1x16x8xf32>
    %27 = vector.shape_cast %26 : vector<1x1x16x8xf32> to vector<16x8xf32>
    %28 = arith.truncf %27 : vector<16x8xf32> to vector<16x8xbf16>
    %c169 = arith.constant 169 : index
    %c0_29 = arith.constant 0 : index
    %29 = vector.load %arg9[%c169, %c0_29] : memref<440x8xbf16, #tpu.memory_space<vmem>>, vector<16x8xbf16>
    tpu.vector_store %arg9[%c169, %c0_29], %28 {strides = array<i32>} : memref<440x8xbf16, #tpu.memory_space<vmem>>, vector<16x8xbf16>,
    %c0_30 = arith.constant 0 : index
    %c7 = arith.constant 7 : index
    %c0_31 = arith.constant 0 : index
    %c0_32 = arith.constant 0 : index
    %30 = vector.load %arg1[%c0_30, %c7, %c0_31, %c0_32] : memref<1x16x16x8xf32, #tpu.memory_space<vmem>>, vector<1x1x16x8xf32>
    %31 = vector.shape_cast %30 : vector<1x1x16x8xf32> to vector<16x8xf32>
    %32 = arith.truncf %31 : vector<16x8xf32> to vector<16x8xbf16>
    %c193 = arith.constant 193 : index
    %c0_33 = arith.constant 0 : index
    %33 = vector.load %arg9[%c193, %c0_33] : memref<440x8xbf16, #tpu.memory_space<vmem>>, vector<16x8xbf16>
    tpu.vector_store %arg9[%c193, %c0_33], %32 {strides = array<i32>} : memref<440x8xbf16, #tpu.memory_space<vmem>>, vector<16x8xbf16>,
    %c0_34 = arith.constant 0 : index
    %c8 = arith.constant 8 : index
    %c0_35 = arith.constant 0 : index
    %c0_36 = arith.constant 0 : index
    %34 = vector.load %arg1[%c0_34, %c8, %c0_35, %c0_36] : memref<1x16x16x8xf32, #tpu.memory_space<vmem>>, vector<1x1x16x8xf32>
    %35 = vector.shape_cast %34 : vector<1x1x16x8xf32> to vector<16x8xf32>
    %36 = arith.truncf %35 : vector<16x8xf32> to vector<16x8xbf16>
    %c217 = arith.constant 217 : index
    %c0_37 = arith.constant 0 : index
    %37 = vector.load %arg9[%c217, %c0_37] : memref<440x8xbf16, #tpu.memory_space<vmem>>, vector<16x8xbf16>
    tpu.vector_store %arg9[%c217, %c0_37], %36 {strides = array<i32>} : memref<440x8xbf16, #tpu.memory_space<vmem>>, vector<16x8xbf16>,
    %c0_38 = arith.constant 0 : index
    %c9 = arith.constant 9 : index
    %c0_39 = arith.constant 0 : index
    %c0_40 = arith.constant 0 : index
    %38 = vector.load %arg1[%c0_38, %c9, %c0_39, %c0_40] : memref<1x16x16x8xf32, #tpu.memory_space<vmem>>, vector<1x1x16x8xf32>
    %39 = vector.shape_cast %38 : vector<1x1x16x8xf32> to vector<16x8xf32>
    %40 = arith.truncf %39 : vector<16x8xf32> to vector<16x8xbf16>
    %c241 = arith.constant 241 : index
    %c0_41 = arith.constant 0 : index
    %41 = vector.load %arg9[%c241, %c0_41] : memref<440x8xbf16, #tpu.memory_space<vmem>>, vector<16x8xbf16>
    tpu.vector_store %arg9[%c241, %c0_41], %40 {strides = array<i32>} : memref<440x8xbf16, #tpu.memory_space<vmem>>, vector<16x8xbf16>,
    %c0_42 = arith.constant 0 : index
    %c10 = arith.constant 10 : index
    %c0_43 = arith.constant 0 : index
    %c0_44 = arith.constant 0 : index
    %42 = vector.load %arg1[%c0_42, %c10, %c0_43, %c0_44] : memref<1x16x16x8xf32, #tpu.memory_space<vmem>>, vector<1x1x16x8xf32>
    %43 = vector.shape_cast %42 : vector<1x1x16x8xf32> to vector<16x8xf32>
    %44 = arith.truncf %43 : vector<16x8xf32> to vector<16x8xbf16>
    %c265 = arith.constant 265 : index
    %c0_45 = arith.constant 0 : index
    %45 = vector.load %arg9[%c265, %c0_45] : memref<440x8xbf16, #tpu.memory_space<vmem>>, vector<16x8xbf16>
    tpu.vector_store %arg9[%c265, %c0_45], %44 {strides = array<i32>} : memref<440x8xbf16, #tpu.memory_space<vmem>>, vector<16x8xbf16>,
    %c0_46 = arith.constant 0 : index
    %c11 = arith.constant 11 : index
    %c0_47 = arith.constant 0 : index
    %c0_48 = arith.constant 0 : index
    %46 = vector.load %arg1[%c0_46, %c11, %c0_47, %c0_48] : memref<1x16x16x8xf32, #tpu.memory_space<vmem>>, vector<1x1x16x8xf32>
    %47 = vector.shape_cast %46 : vector<1x1x16x8xf32> to vector<16x8xf32>
    %48 = arith.truncf %47 : vector<16x8xf32> to vector<16x8xbf16>
    %c289 = arith.constant 289 : index
    %c0_49 = arith.constant 0 : index
    %49 = vector.load %arg9[%c289, %c0_49] : memref<440x8xbf16, #tpu.memory_space<vmem>>, vector<16x8xbf16>
    tpu.vector_store %arg9[%c289, %c0_49], %48 {strides = array<i32>} : memref<440x8xbf16, #tpu.memory_space<vmem>>, vector<16x8xbf16>,
    %c0_50 = arith.constant 0 : index
    %c12 = arith.constant 12 : index
    %c0_51 = arith.constant 0 : index
    %c0_52 = arith.constant 0 : index
    %50 = vector.load %arg1[%c0_50, %c12, %c0_51, %c0_52] : memref<1x16x16x8xf32, #tpu.memory_space<vmem>>, vector<1x1x16x8xf32>
    %51 = vector.shape_cast %50 : vector<1x1x16x8xf32> to vector<16x8xf32>
    %52 = arith.truncf %51 : vector<16x8xf32> to vector<16x8xbf16>
    %c313 = arith.constant 313 : index
    %c0_53 = arith.constant 0 : index
    %53 = vector.load %arg9[%c313, %c0_53] : memref<440x8xbf16, #tpu.memory_space<vmem>>, vector<16x8xbf16>
    tpu.vector_store %arg9[%c313, %c0_53], %52 {strides = array<i32>} : memref<440x8xbf16, #tpu.memory_space<vmem>>, vector<16x8xbf16>,
    %c0_54 = arith.constant 0 : index
    %c13 = arith.constant 13 : index
    %c0_55 = arith.constant 0 : index
    %c0_56 = arith.constant 0 : index
    %54 = vector.load %arg1[%c0_54, %c13, %c0_55, %c0_56] : memref<1x16x16x8xf32, #tpu.memory_space<vmem>>, vector<1x1x16x8xf32>
    %55 = vector.shape_cast %54 : vector<1x1x16x8xf32> to vector<16x8xf32>
    %56 = arith.truncf %55 : vector<16x8xf32> to vector<16x8xbf16>
    %c337 = arith.constant 337 : index
    %c0_57 = arith.constant 0 : index
    %57 = vector.load %arg9[%c337, %c0_57] : memref<440x8xbf16, #tpu.memory_space<vmem>>, vector<16x8xbf16>
    tpu.vector_store %arg9[%c337, %c0_57], %56 {strides = array<i32>} : memref<440x8xbf16, #tpu.memory_space<vmem>>, vector<16x8xbf16>,
    %c0_58 = arith.constant 0 : index
    %c14 = arith.constant 14 : index
    %c0_59 = arith.constant 0 : index
    %c0_60 = arith.constant 0 : index
    %58 = vector.load %arg1[%c0_58, %c14, %c0_59, %c0_60] : memref<1x16x16x8xf32, #tpu.memory_space<vmem>>, vector<1x1x16x8xf32>
    %59 = vector.shape_cast %58 : vector<1x1x16x8xf32> to vector<16x8xf32>
    %60 = arith.truncf %59 : vector<16x8xf32> to vector<16x8xbf16>
    %c361 = arith.constant 361 : index
    %c0_61 = arith.constant 0 : index
    %61 = vector.load %arg9[%c361, %c0_61] : memref<440x8xbf16, #tpu.memory_space<vmem>>, vector<16x8xbf16>
    tpu.vector_store %arg9[%c361, %c0_61], %60 {strides = array<i32>} : memref<440x8xbf16, #tpu.memory_space<vmem>>, vector<16x8xbf16>,
    %c0_62 = arith.constant 0 : index
    %c15 = arith.constant 15 : index
    %c0_63 = arith.constant 0 : index
    %c0_64 = arith.constant 0 : index
    %62 = vector.load %arg1[%c0_62, %c15, %c0_63, %c0_64] : memref<1x16x16x8xf32, #tpu.memory_space<vmem>>, vector<1x1x16x8xf32>
    %63 = vector.shape_cast %62 : vector<1x1x16x8xf32> to vector<16x8xf32>
    %64 = arith.truncf %63 : vector<16x8xf32> to vector<16x8xbf16>
    %c385 = arith.constant 385 : index
    %c0_65 = arith.constant 0 : index
    %65 = vector.load %arg9[%c385, %c0_65] : memref<440x8xbf16, #tpu.memory_space<vmem>>, vector<16x8xbf16>
    tpu.vector_store %arg9[%c385, %c0_65], %64 {strides = array<i32>} : memref<440x8xbf16, #tpu.memory_space<vmem>>, vector<16x8xbf16>,
    %c0_66 = arith.constant 0 : index
    %c0_67 = arith.constant 0 : index
    %c0_68 = arith.constant 0 : index
    %66 = vector.load %arg2[%c0_66, %c0_67, %c0_68] : memref<9x8x48xbf16, #tpu.memory_space<vmem>>, vector<9x8x48xbf16>
    %c0_69 = arith.constant 0 : index
    %c0_70 = arith.constant 0 : index
    %67 = vector.load %arg9[%c0_69, %c0_70] : memref<440x8xbf16, #tpu.memory_space<vmem>>, vector<384x8xbf16>
    %68 = vector.extract_strided_slice %66 {offsets = [0, 0, 0], sizes = [1, 8, 48], strides = [1, 1, 1]} : vector<9x8x48xbf16> to vector<1x8x48xbf16>
    %69 = vector.shape_cast %68 : vector<1x8x48xbf16> to vector<8x48xbf16>
    %cst_71 = arith.constant dense<0.000000e+00> : vector<384x48xf32>
    %70 = tpu.matmul %67, %69, %cst_71 {dimension_numbers = #tpu.dot_dimension_numbers<[1], [0], [0], [1], [0, 0, 1, 1], [], []>} : vector<384x8xbf16>, vector<8x48xbf16>, vector<384x48xf32> -> vector<384x48xf32>
    %c1_72 = arith.constant 1 : index
    %c0_73 = arith.constant 0 : index
    %71 = vector.load %arg9[%c1_72, %c0_73] : memref<440x8xbf16, #tpu.memory_space<vmem>>, vector<384x8xbf16>
    %72 = vector.extract_strided_slice %66 {offsets = [1, 0, 0], sizes = [1, 8, 48], strides = [1, 1, 1]} : vector<9x8x48xbf16> to vector<1x8x48xbf16>
    %73 = vector.shape_cast %72 : vector<1x8x48xbf16> to vector<8x48xbf16>
    %cst_74 = arith.constant dense<0.000000e+00> : vector<384x48xf32>
    %74 = tpu.matmul %71, %73, %cst_74 {dimension_numbers = #tpu.dot_dimension_numbers<[1], [0], [0], [1], [0, 0, 1, 1], [], []>} : vector<384x8xbf16>, vector<8x48xbf16>, vector<384x48xf32> -> vector<384x48xf32>
    %75 = arith.addf %70, %74 : vector<384x48xf32>
    %c2_75 = arith.constant 2 : index
    %c0_76 = arith.constant 0 : index
    %76 = vector.load %arg9[%c2_75, %c0_76] : memref<440x8xbf16, #tpu.memory_space<vmem>>, vector<384x8xbf16>
    %77 = vector.extract_strided_slice %66 {offsets = [2, 0, 0], sizes = [1, 8, 48], strides = [1, 1, 1]} : vector<9x8x48xbf16> to vector<1x8x48xbf16>
    %78 = vector.shape_cast %77 : vector<1x8x48xbf16> to vector<8x48xbf16>
    %cst_77 = arith.constant dense<0.000000e+00> : vector<384x48xf32>
    %79 = tpu.matmul %76, %78, %cst_77 {dimension_numbers = #tpu.dot_dimension_numbers<[1], [0], [0], [1], [0, 0, 1, 1], [], []>} : vector<384x8xbf16>, vector<8x48xbf16>, vector<384x48xf32> -> vector<384x48xf32>
    %80 = arith.addf %75, %79 : vector<384x48xf32>
    %c24 = arith.constant 24 : index
    %c0_78 = arith.constant 0 : index
    %81 = vector.load %arg9[%c24, %c0_78] : memref<440x8xbf16, #tpu.memory_space<vmem>>, vector<384x8xbf16>
    %82 = vector.extract_strided_slice %66 {offsets = [3, 0, 0], sizes = [1, 8, 48], strides = [1, 1, 1]} : vector<9x8x48xbf16> to vector<1x8x48xbf16>
    %83 = vector.shape_cast %82 : vector<1x8x48xbf16> to vector<8x48xbf16>
    %cst_79 = arith.constant dense<0.000000e+00> : vector<384x48xf32>
    %84 = tpu.matmul %81, %83, %cst_79 {dimension_numbers = #tpu.dot_dimension_numbers<[1], [0], [0], [1], [0, 0, 1, 1], [], []>} : vector<384x8xbf16>, vector<8x48xbf16>, vector<384x48xf32> -> vector<384x48xf32>
    %85 = arith.addf %80, %84 : vector<384x48xf32>
    %c25_80 = arith.constant 25 : index
    %c0_81 = arith.constant 0 : index
    %86 = vector.load %arg9[%c25_80, %c0_81] : memref<440x8xbf16, #tpu.memory_space<vmem>>, vector<384x8xbf16>
    %87 = vector.extract_strided_slice %66 {offsets = [4, 0, 0], sizes = [1, 8, 48], strides = [1, 1, 1]} : vector<9x8x48xbf16> to vector<1x8x48xbf16>
    %88 = vector.shape_cast %87 : vector<1x8x48xbf16> to vector<8x48xbf16>
    %cst_82 = arith.constant dense<0.000000e+00> : vector<384x48xf32>
    %89 = tpu.matmul %86, %88, %cst_82 {dimension_numbers = #tpu.dot_dimension_numbers<[1], [0], [0], [1], [0, 0, 1, 1], [], []>} : vector<384x8xbf16>, vector<8x48xbf16>, vector<384x48xf32> -> vector<384x48xf32>
    %90 = arith.addf %85, %89 : vector<384x48xf32>
    %c26 = arith.constant 26 : index
    %c0_83 = arith.constant 0 : index
    %91 = vector.load %arg9[%c26, %c0_83] : memref<440x8xbf16, #tpu.memory_space<vmem>>, vector<384x8xbf16>
    %92 = vector.extract_strided_slice %66 {offsets = [5, 0, 0], sizes = [1, 8, 48], strides = [1, 1, 1]} : vector<9x8x48xbf16> to vector<1x8x48xbf16>
    %93 = vector.shape_cast %92 : vector<1x8x48xbf16> to vector<8x48xbf16>
    %cst_84 = arith.constant dense<0.000000e+00> : vector<384x48xf32>
    %94 = tpu.matmul %91, %93, %cst_84 {dimension_numbers = #tpu.dot_dimension_numbers<[1], [0], [0], [1], [0, 0, 1, 1], [], []>} : vector<384x8xbf16>, vector<8x48xbf16>, vector<384x48xf32> -> vector<384x48xf32>
    %95 = arith.addf %90, %94 : vector<384x48xf32>
    %c48 = arith.constant 48 : index
    %c0_85 = arith.constant 0 : index
    %96 = vector.load %arg9[%c48, %c0_85] : memref<440x8xbf16, #tpu.memory_space<vmem>>, vector<384x8xbf16>
    %97 = vector.extract_strided_slice %66 {offsets = [6, 0, 0], sizes = [1, 8, 48], strides = [1, 1, 1]} : vector<9x8x48xbf16> to vector<1x8x48xbf16>
    %98 = vector.shape_cast %97 : vector<1x8x48xbf16> to vector<8x48xbf16>
    %cst_86 = arith.constant dense<0.000000e+00> : vector<384x48xf32>
    %99 = tpu.matmul %96, %98, %cst_86 {dimension_numbers = #tpu.dot_dimension_numbers<[1], [0], [0], [1], [0, 0, 1, 1], [], []>} : vector<384x8xbf16>, vector<8x48xbf16>, vector<384x48xf32> -> vector<384x48xf32>
    %100 = arith.addf %95, %99 : vector<384x48xf32>
    %c49_87 = arith.constant 49 : index
    %c0_88 = arith.constant 0 : index
    %101 = vector.load %arg9[%c49_87, %c0_88] : memref<440x8xbf16, #tpu.memory_space<vmem>>, vector<384x8xbf16>
    %102 = vector.extract_strided_slice %66 {offsets = [7, 0, 0], sizes = [1, 8, 48], strides = [1, 1, 1]} : vector<9x8x48xbf16> to vector<1x8x48xbf16>
    %103 = vector.shape_cast %102 : vector<1x8x48xbf16> to vector<8x48xbf16>
    %cst_89 = arith.constant dense<0.000000e+00> : vector<384x48xf32>
    %104 = tpu.matmul %101, %103, %cst_89 {dimension_numbers = #tpu.dot_dimension_numbers<[1], [0], [0], [1], [0, 0, 1, 1], [], []>} : vector<384x8xbf16>, vector<8x48xbf16>, vector<384x48xf32> -> vector<384x48xf32>
    %105 = arith.addf %100, %104 : vector<384x48xf32>
    %c50 = arith.constant 50 : index
    %c0_90 = arith.constant 0 : index
    %106 = vector.load %arg9[%c50, %c0_90] : memref<440x8xbf16, #tpu.memory_space<vmem>>, vector<384x8xbf16>
    %107 = vector.extract_strided_slice %66 {offsets = [8, 0, 0], sizes = [1, 8, 48], strides = [1, 1, 1]} : vector<9x8x48xbf16> to vector<1x8x48xbf16>
    %108 = vector.shape_cast %107 : vector<1x8x48xbf16> to vector<8x48xbf16>
    %cst_91 = arith.constant dense<0.000000e+00> : vector<384x48xf32>
    %109 = tpu.matmul %106, %108, %cst_91 {dimension_numbers = #tpu.dot_dimension_numbers<[1], [0], [0], [1], [0, 0, 1, 1], [], []>} : vector<384x8xbf16>, vector<8x48xbf16>, vector<384x48xf32> -> vector<384x48xf32>
    %110 = arith.addf %105, %109 : vector<384x48xf32>
    %c0_92 = arith.constant 0 : index
    %c0_93 = arith.constant 0 : index
    %111 = vector.load %arg3[%c0_92, %c0_93] : memref<1x48xf32, #tpu.memory_space<vmem>>, vector<1x48xf32>
    %112 = vector.broadcast %111 : vector<1x48xf32> to vector<384x48xf32>
    %113 = arith.addf %110, %112 : vector<384x48xf32>
    %cst_94 = arith.constant 0.000000e+00 : f32
    %114 = vector.broadcast %cst_94 : f32 to vector<384x48xf32>
    %115 = arith.maximumf %113, %114 : vector<384x48xf32>
    %116 = tpu.iota {dimensions = array<i32: 0>} : vector<384x1xi32>
    %c24_i32 = arith.constant 24 : i32
    %c0_i32 = arith.constant 0 : i32
    %117 = arith.cmpi eq, %c24_i32, %c0_i32 : i32
    %c1_i32 = arith.constant 1 : i32
    %118 = arith.select %117, %c1_i32, %c24_i32 : i32
    %119 = vector.broadcast %118 : i32 to vector<384x1xi32>
    %120 = arith.remsi %116, %119 : vector<384x1xi32>
    %c0_i32_95 = arith.constant 0 : i32
    %121 = vector.broadcast %c0_i32_95 : i32 to vector<384x1xi32>
    %122 = arith.cmpi ne, %120, %121 : vector<384x1xi32>
    %c0_i32_96 = arith.constant 0 : i32
    %123 = vector.broadcast %c0_i32_96 : i32 to vector<384x1xi32>
    %124 = arith.cmpi slt, %120, %123 : vector<384x1xi32>
    %c0_i32_97 = arith.constant 0 : i32
    %125 = arith.cmpi slt, %118, %c0_i32_97 : i32
    %126 = vector.broadcast %125 : i1 to vector<384x1xi1>
    %127 = vector.broadcast %126 : vector<384x1xi1> to vector<384x1xi1>
    %128 = arith.xori %124, %127 : vector<384x1xi1>
    %129 = arith.andi %128, %122 : vector<384x1xi1>
    %130 = vector.broadcast %118 : i32 to vector<384x1xi32>
    %131 = arith.addi %120, %130 : vector<384x1xi32>
    %132 = arith.select %129, %131, %120 : vector<384x1xi1>, vector<384x1xi32>
    %c16_i32 = arith.constant 16 : i32
    %133 = vector.broadcast %c16_i32 : i32 to vector<384x1xi32>
    %134 = arith.cmpi slt, %132, %133 : vector<384x1xi32>
    %cst_98 = arith.constant 0.000000e+00 : f32
    %135 = vector.shape_cast %134 : vector<384x1xi1> to vector<384x1xi1>
    %136 = vector.broadcast %135 : vector<384x1xi1> to vector<384x48xi1>
    %137 = vector.broadcast %cst_98 : f32 to vector<384x48xf32>
    %138 = arith.select %136, %115, %137 : vector<384x48xi1>, vector<384x48xf32>
    %cst_99 = arith.constant 0.000000e+00 : bf16
    %139 = vector.broadcast %cst_99 : bf16 to vector<25x48xbf16>
    %c0_100 = arith.constant 0 : index
    %c0_101 = arith.constant 0 : index
    %140 = vector.load %arg10[%c0_100, %c0_101] : memref<440x48xbf16, #tpu.memory_space<vmem>>, vector<25x48xbf16>
    tpu.vector_store %arg10[%c0_100, %c0_101], %139 {strides = array<i32>} : memref<440x48xbf16, #tpu.memory_space<vmem>>, vector<25x48xbf16>,
    %cst_102 = arith.constant 0.000000e+00 : bf16
    %141 = vector.broadcast %cst_102 : bf16 to vector<31x48xbf16>
    %c409 = arith.constant 409 : index
    %c0_103 = arith.constant 0 : index
    %142 = vector.load %arg10[%c409, %c0_103] : memref<440x48xbf16, #tpu.memory_space<vmem>>, vector<31x48xbf16>
    tpu.vector_store %arg10[%c409, %c0_103], %141 {strides = array<i32>} : memref<440x48xbf16, #tpu.memory_space<vmem>>, vector<31x48xbf16>,
    %143 = arith.truncf %138 : vector<384x48xf32> to vector<384x48xbf16>
    %c25_104 = arith.constant 25 : index
    %c0_105 = arith.constant 0 : index
    %144 = vector.load %arg10[%c25_104, %c0_105] : memref<440x48xbf16, #tpu.memory_space<vmem>>, vector<384x48xbf16>
    tpu.vector_store %arg10[%c25_104, %c0_105], %143 {strides = array<i32>} : memref<440x48xbf16, #tpu.memory_space<vmem>>, vector<384x48xbf16>,
    %c0_106 = arith.constant 0 : index
    %c0_107 = arith.constant 0 : index
    %145 = vector.load %arg4[%c0_106, %c0_107] : memref<9x48xf32, #tpu.memory_space<vmem>>, vector<9x48xf32>
    %c0_108 = arith.constant 0 : index
    %c0_109 = arith.constant 0 : index
    %146 = vector.load %arg10[%c0_108, %c0_109] : memref<440x48xbf16, #tpu.memory_space<vmem>>, vector<384x48xbf16>
    %147 = arith.extf %146 : vector<384x48xbf16> to vector<384x48xf32>
    %148 = vector.extract_strided_slice %145 {offsets = [0, 0], sizes = [1, 48], strides = [1, 1]} : vector<9x48xf32> to vector<1x48xf32>
    %149 = vector.broadcast %148 : vector<1x48xf32> to vector<384x48xf32>
    %150 = arith.mulf %147, %149 : vector<384x48xf32>
    %c1_110 = arith.constant 1 : index
    %c0_111 = arith.constant 0 : index
    %151 = vector.load %arg10[%c1_110, %c0_111] : memref<440x48xbf16, #tpu.memory_space<vmem>>, vector<384x48xbf16>
    %152 = arith.extf %151 : vector<384x48xbf16> to vector<384x48xf32>
    %153 = vector.extract_strided_slice %145 {offsets = [1, 0], sizes = [1, 48], strides = [1, 1]} : vector<9x48xf32> to vector<1x48xf32>
    %154 = vector.broadcast %153 : vector<1x48xf32> to vector<384x48xf32>
    %155 = arith.mulf %152, %154 : vector<384x48xf32>
    %156 = arith.addf %150, %155 : vector<384x48xf32>
    %c2_112 = arith.constant 2 : index
    %c0_113 = arith.constant 0 : index
    %157 = vector.load %arg10[%c2_112, %c0_113] : memref<440x48xbf16, #tpu.memory_space<vmem>>, vector<384x48xbf16>
    %158 = arith.extf %157 : vector<384x48xbf16> to vector<384x48xf32>
    %159 = vector.extract_strided_slice %145 {offsets = [2, 0], sizes = [1, 48], strides = [1, 1]} : vector<9x48xf32> to vector<1x48xf32>
    %160 = vector.broadcast %159 : vector<1x48xf32> to vector<384x48xf32>
    %161 = arith.mulf %158, %160 : vector<384x48xf32>
    %162 = arith.addf %156, %161 : vector<384x48xf32>
    %c24_114 = arith.constant 24 : index
    %c0_115 = arith.constant 0 : index
    %163 = vector.load %arg10[%c24_114, %c0_115] : memref<440x48xbf16, #tpu.memory_space<vmem>>, vector<384x48xbf16>
    %164 = arith.extf %163 : vector<384x48xbf16> to vector<384x48xf32>
    %165 = vector.extract_strided_slice %145 {offsets = [3, 0], sizes = [1, 48], strides = [1, 1]} : vector<9x48xf32> to vector<1x48xf32>
    %166 = vector.broadcast %165 : vector<1x48xf32> to vector<384x48xf32>
    %167 = arith.mulf %164, %166 : vector<384x48xf32>
    %168 = arith.addf %162, %167 : vector<384x48xf32>
    %c25_116 = arith.constant 25 : index
    %c0_117 = arith.constant 0 : index
    %169 = vector.load %arg10[%c25_116, %c0_117] : memref<440x48xbf16, #tpu.memory_space<vmem>>, vector<384x48xbf16>
    %170 = arith.extf %169 : vector<384x48xbf16> to vector<384x48xf32>
    %171 = vector.extract_strided_slice %145 {offsets = [4, 0], sizes = [1, 48], strides = [1, 1]} : vector<9x48xf32> to vector<1x48xf32>
    %172 = vector.broadcast %171 : vector<1x48xf32> to vector<384x48xf32>
    %173 = arith.mulf %170, %172 : vector<384x48xf32>
    %174 = arith.addf %168, %173 : vector<384x48xf32>
    %c26_118 = arith.constant 26 : index
    %c0_119 = arith.constant 0 : index
    %175 = vector.load %arg10[%c26_118, %c0_119] : memref<440x48xbf16, #tpu.memory_space<vmem>>, vector<384x48xbf16>
    %176 = arith.extf %175 : vector<384x48xbf16> to vector<384x48xf32>
    %177 = vector.extract_strided_slice %145 {offsets = [5, 0], sizes = [1, 48], strides = [1, 1]} : vector<9x48xf32> to vector<1x48xf32>
    %178 = vector.broadcast %177 : vector<1x48xf32> to vector<384x48xf32>
    %179 = arith.mulf %176, %178 : vector<384x48xf32>
    %180 = arith.addf %174, %179 : vector<384x48xf32>
    %c48_120 = arith.constant 48 : index
    %c0_121 = arith.constant 0 : index
    %181 = vector.load %arg10[%c48_120, %c0_121] : memref<440x48xbf16, #tpu.memory_space<vmem>>, vector<384x48xbf16>
    %182 = arith.extf %181 : vector<384x48xbf16> to vector<384x48xf32>
    %183 = vector.extract_strided_slice %145 {offsets = [6, 0], sizes = [1, 48], strides = [1, 1]} : vector<9x48xf32> to vector<1x48xf32>
    %184 = vector.broadcast %183 : vector<1x48xf32> to vector<384x48xf32>
    %185 = arith.mulf %182, %184 : vector<384x48xf32>
    %186 = arith.addf %180, %185 : vector<384x48xf32>
    %c49_122 = arith.constant 49 : index
    %c0_123 = arith.constant 0 : index
    %187 = vector.load %arg10[%c49_122, %c0_123] : memref<440x48xbf16, #tpu.memory_space<vmem>>, vector<384x48xbf16>
    %188 = arith.extf %187 : vector<384x48xbf16> to vector<384x48xf32>
    %189 = vector.extract_strided_slice %145 {offsets = [7, 0], sizes = [1, 48], strides = [1, 1]} : vector<9x48xf32> to vector<1x48xf32>
    %190 = vector.broadcast %189 : vector<1x48xf32> to vector<384x48xf32>
    %191 = arith.mulf %188, %190 : vector<384x48xf32>
    %192 = arith.addf %186, %191 : vector<384x48xf32>
    %c50_124 = arith.constant 50 : index
    %c0_125 = arith.constant 0 : index
    %193 = vector.load %arg10[%c50_124, %c0_125] : memref<440x48xbf16, #tpu.memory_space<vmem>>, vector<384x48xbf16>
    %194 = arith.extf %193 : vector<384x48xbf16> to vector<384x48xf32>
    %195 = vector.extract_strided_slice %145 {offsets = [8, 0], sizes = [1, 48], strides = [1, 1]} : vector<9x48xf32> to vector<1x48xf32>
    %196 = vector.broadcast %195 : vector<1x48xf32> to vector<384x48xf32>
    %197 = arith.mulf %194, %196 : vector<384x48xf32>
    %198 = arith.addf %192, %197 : vector<384x48xf32>
    %c0_126 = arith.constant 0 : index
    %c0_127 = arith.constant 0 : index
    %199 = vector.load %arg5[%c0_126, %c0_127] : memref<1x48xf32, #tpu.memory_space<vmem>>, vector<1x48xf32>
    %200 = vector.broadcast %199 : vector<1x48xf32> to vector<384x48xf32>
    %201 = arith.addf %198, %200 : vector<384x48xf32>
    %202 = arith.truncf %201 : vector<384x48xf32> to vector<384x48xbf16>
    %c0_128 = arith.constant 0 : index
    %c0_129 = arith.constant 0 : index
    %203 = vector.load %arg6[%c0_128, %c0_129] : memref<48x8xbf16, #tpu.memory_space<vmem>>, vector<48x8xbf16>
    %cst_130 = arith.constant dense<0.000000e+00> : vector<384x8xf32>
    %204 = tpu.matmul %202, %203, %cst_130 {dimension_numbers = #tpu.dot_dimension_numbers<[1], [0], [0], [1], [0, 0, 1, 1], [], []>} : vector<384x48xbf16>, vector<48x8xbf16>, vector<384x8xf32> -> vector<384x8xf32>
    %c0_131 = arith.constant 0 : index
    %c0_132 = arith.constant 0 : index
    %205 = vector.load %arg7[%c0_131, %c0_132] : memref<1x8xf32, #tpu.memory_space<vmem>>, vector<1x8xf32>
    %206 = vector.broadcast %205 : vector<1x8xf32> to vector<384x8xf32>
    %207 = arith.addf %204, %206 : vector<384x8xf32>
    %cst_133 = arith.constant 0.000000e+00 : f32
    %208 = vector.broadcast %cst_133 : f32 to vector<384x8xf32>
    %209 = arith.maximumf %207, %208 : vector<384x8xf32>
    %210 = vector.shape_cast %209 : vector<384x8xf32> to vector<16x24x8xf32>
    %211 = vector.extract_strided_slice %210 {offsets = [0, 0, 0], sizes = [16, 16, 8], strides = [1, 1, 1]} : vector<16x24x8xf32> to vector<16x16x8xf32>
    %212 = vector.shape_cast %211 : vector<16x16x8xf32> to vector<256x8xf32>
    %c0_134 = arith.constant 0 : index
    %c0_135 = arith.constant 0 : index
    %c0_136 = arith.constant 0 : index
    %c0_137 = arith.constant 0 : index
    %213 = vector.load %arg1[%c0_134, %c0_135, %c0_136, %c0_137] : memref<1x16x16x8xf32, #tpu.memory_space<vmem>>, vector<1x16x16x8xf32>
    %214 = vector.shape_cast %213 : vector<1x16x16x8xf32> to vector<16x16x8xf32>
    %215 = vector.shape_cast %214 : vector<16x16x8xf32> to vector<256x8xf32>
    %216 = arith.addf %212, %215 : vector<256x8xf32>
    %cst_138 = arith.constant 0.000000e+00 : f32
    %217 = vector.broadcast %cst_138 : f32 to vector<256x8xf32>
    %218 = arith.maximumf %216, %217 : vector<256x8xf32>
    %219 = tpu.transpose %218, [1, 0] : vector<256x8xf32> -> vector<8x256xf32>
    %220 = vector.shape_cast %219 : vector<8x256xf32> to vector<1x8x256xf32>
    %c0_139 = arith.constant 0 : index
    %c0_140 = arith.constant 0 : index
    %c0_141 = arith.constant 0 : index
    %221 = vector.load %arg8[%c0_139, %c0_140, %c0_141] : memref<1x8x256xf32, #tpu.memory_space<vmem>>, vector<1x8x256xf32>
    tpu.vector_store %arg8[%c0_139, %c0_140, %c0_141], %220 {strides = array<i32>} : memref<1x8x256xf32, #tpu.memory_space<vmem>>, vector<1x8x256xf32>,
    return
  }
  func.func @transform_0(%arg0: i32) -> (i32, i32, i32, i32) {
    %c0_i32 = arith.constant 0 : i32
    %c0_i32_0 = arith.constant 0 : i32
    %c0_i32_1 = arith.constant 0 : i32
    %c0_i32_2 = arith.constant 0 : i32
    return %arg0, %c0_i32, %c0_i32_0, %c0_i32_1 : i32, i32, i32, i32
  }
  func.func @transform_1(%arg0: i32) -> (i32, i32, i32) {
    %c0_i32 = arith.constant 0 : i32
    %c0_i32_0 = arith.constant 0 : i32
    %c0_i32_1 = arith.constant 0 : i32
    %c0_i32_2 = arith.constant 0 : i32
    return %c0_i32, %c0_i32_0, %c0_i32_1 : i32, i32, i32
  }
  func.func @transform_2(%arg0: i32) -> (i32, i32) {
    %c0_i32 = arith.constant 0 : i32
    %c0_i32_0 = arith.constant 0 : i32
    %c0_i32_1 = arith.constant 0 : i32
    return %c0_i32, %c0_i32_0 : i32, i32
  }
  func.func @transform_3(%arg0: i32) -> (i32, i32) {
    %c0_i32 = arith.constant 0 : i32
    %c0_i32_0 = arith.constant 0 : i32
    %c0_i32_1 = arith.constant 0 : i32
    return %c0_i32, %c0_i32_0 : i32, i32
  }
  func.func @transform_4(%arg0: i32) -> (i32, i32) {
    %c0_i32 = arith.constant 0 : i32
    %c0_i32_0 = arith.constant 0 : i32
    %c0_i32_1 = arith.constant 0 : i32
    return %c0_i32, %c0_i32_0 : i32, i32
  }
  func.func @transform_5(%arg0: i32) -> (i32, i32) {
    %c0_i32 = arith.constant 0 : i32
    %c0_i32_0 = arith.constant 0 : i32
    %c0_i32_1 = arith.constant 0 : i32
    return %c0_i32, %c0_i32_0 : i32, i32
  }
  func.func @transform_6(%arg0: i32) -> (i32, i32) {
    %c0_i32 = arith.constant 0 : i32
    %c0_i32_0 = arith.constant 0 : i32
    %c0_i32_1 = arith.constant 0 : i32
    return %c0_i32, %c0_i32_0 : i32, i32
  }
  func.func @transform_7(%arg0: i32) -> (i32, i32, i32) {
    %c0_i32 = arith.constant 0 : i32
    %c0_i32_0 = arith.constant 0 : i32
    %c0_i32_1 = arith.constant 0 : i32
    return %arg0, %c0_i32, %c0_i32_0 : i32, i32, i32
  }
}

</mosaic_0001>

<llo_original>
// kernel: tpu_custom_call.1
$region0: #{tpu_custom_call.1}
  #allocation0 [shape = 'u32[]', space=smem, size = 0x4, offset = 0x4, fixed_abs, tag = 'smem constant byte address 0x4 - core index']
  #allocation1 [shape = 'u32[144,128]{1,0:T(1,128)}', space=vmem, size = 0x12000, scoped, tag = 'internal scratch']
  #allocation2 [shape = 'bf16[440,8]{1,0:T(8,128)(2,1)}', space=vmem, size = 0x1b800, scoped, tag = 'scratch operand']
  #allocation3 [shape = 'bf16[440,48]{1,0:T(8,128)(2,1)}', space=vmem, size = 0x1b800, scoped, tag = 'scratch operand']
  %s0 = inlined_call_operand.vmem [shape: f32[2,16,16,8], index: 0, kind: input, shape index: {}]
  %s1 = inlined_call_operand.vmem [shape: bf16[9,8,48], index: 1, kind: input, shape index: {}]
  %s2 = inlined_call_operand.vmem [shape: f32[1,48], index: 2, kind: input, shape index: {}]
  %s3 = inlined_call_operand.vmem [shape: f32[9,48], index: 3, kind: input, shape index: {}]
  %s4 = inlined_call_operand.vmem [shape: f32[1,48], index: 4, kind: input, shape index: {}]
  %s5 = inlined_call_operand.vmem [shape: bf16[48,8], index: 5, kind: input, shape index: {}]
  %s6 = inlined_call_operand.vmem [shape: f32[1,8], index: 6, kind: input, shape index: {}]
  %s7 = inlined_call_operand.hbm [shape: f32[2,8,256], index: 7, kind: output, shape index: {}]
  %s8 = sld [smem:[#allocation0]]
  $region61: #{tpu_custom_call.1} parent=0
    _
  %s10 = ssub.s32 1, %s8
  %s11 = scalar_select 0, %s10, %s8
  $region1: #{tpu_custom_call.1} parent=0
    #allocation4 [shape = 'u8[16384]{0}', space=vmem, size = 0x4000, scoped, tag = 'output window, operand 0']
    #allocation5 [shape = 's32[2]{0}', space=sflag, size = 0x8, scoped, tag = 'scoped memory for tpu_custom_call.1']
    %12 = vsyncpa [#allocation5], 0
    %s13 = scalar_lea.sflag [#allocation5], 1
    %14 = vsyncpa %s13, 0
    loop: start=0, step=1, limit=4
    $region2: #{tpu_custom_call.1} parent=1 // loop_pre_header
      _
    $region3: #{tpu_custom_call.1} parent=1 // loop_header
      %s16 = sphi 0, %s20
      %p17 = scmp.ge.s32.totalorder %s16, 4
      %s26 = sphi 0, %s28
      %s29 = sphi 0, %s26
      %s30 = sphi 0, %s29
      %s46 = sphi 0, %s30
      %s50 = sphi 0, %s50
      %s52 = sphi 0, %s50
      %s53 = sphi 0, %s52
      %s67 = sphi 0, %s53
      %s71 = sphi 0, %s71
      %s73 = sphi 0, %s71
      %s74 = sphi 0, %s73
      %s88 = sphi 0, %s74
      %s92 = sphi 0, %s92
      %s94 = sphi 0, %s92
      %s95 = sphi 0, %s94
      %s109 = sphi 0, %s95
      %s113 = sphi 0, %s113
      %s115 = sphi 0, %s113
      %s116 = sphi 0, %s115
      %s130 = sphi 0, %s116
      %s134 = sphi 0, %s134
      %s136 = sphi 0, %s134
      %s137 = sphi 0, %s136
      %s151 = sphi 0, %s137
      %s155 = sphi 0, %s155
      %s157 = sphi 0, %s155
      %s158 = sphi 0, %s157
      %s172 = sphi 0, %s158
      %s178 = sphi 0, %s180
      %s181 = sphi 0, %s178
      %s182 = sphi 0, %s181
      %s198 = sphi 0, %s182
    $region4: #{tpu_custom_call.1} parent=1 // loop_header_branch
      %19 = sbr.rel (%p17) target = $region8
    $region5: #{tpu_custom_call.1} parent=1 // loop_body
      %s21 = ssub.s32 %s16, 1
      %s22 = ssub.s32 %s16, 2
      %s23 = sadd.s32 %s16, 1
      %s24 = ssub.s32 %s16, %s23
      %p25 = scmp.eq.s32.totalorder %s24, 0
      %s27 = sadd.s32 %s26, 1
      %s28 = scalar_select %p25, %s26, %s27
      %p31 = pneg %p25
      %p32 = scmp.eq.s32.totalorder %s16, 1
      %p33 = por %p31, %p32
      %p34 = scmp.ne.s32.totalorder %s26, %s29
      %p35 = scmp.eq.s32.totalorder %s16, 0
      %p36 = por %p34, %p35
      %p37 = scmp.ne.s32.totalorder %s26, %s29
      %p38 = scmp.eq.s32.totalorder %s21, 1
      %p39 = por %p37, %p38
      %p40 = scmp.ne.s32.totalorder %s29, %s30
      %p41 = scmp.eq.s32.totalorder %s21, 0
      %p42 = por %p40, %p41
      %p43 = scmp.ne.s32.totalorder %s29, %s30
      %p44 = scmp.eq.s32.totalorder %s22, 1
      %p45 = por %p43, %p44
      %p47 = scmp.ne.s32.totalorder %s30, %s46
      %p48 = scmp.eq.s32.totalorder %s22, 0
      %p49 = por %p47, %p48
      %s51 = sadd.s32 %s50, 1
      %p54 = scmp.eq.s32.totalorder %s16, 1
      %p55 = scmp.ne.s32.totalorder %s50, %s52
      %p56 = scmp.eq.s32.totalorder %s16, 0
      %p57 = por %p55, %p56
      %p58 = scmp.ne.s32.totalorder %s50, %s52
      %p59 = scmp.eq.s32.totalorder %s21, 1
      %p60 = por %p58, %p59
      %p61 = scmp.ne.s32.totalorder %s52, %s53
      %p62 = scmp.eq.s32.totalorder %s21, 0
      %p63 = por %p61, %p62
      %p64 = scmp.ne.s32.totalorder %s52, %s53
      %p65 = scmp.eq.s32.totalorder %s22, 1
      %p66 = por %p64, %p65
      %p68 = scmp.ne.s32.totalorder %s53, %s67
      %p69 = scmp.eq.s32.totalorder %s22, 0
      %p70 = por %p68, %p69
      %s72 = sadd.s32 %s71, 1
      %p75 = scmp.eq.s32.totalorder %s16, 1
      %p76 = scmp.ne.s32.totalorder %s71, %s73
      %p77 = scmp.eq.s32.totalorder %s16, 0
      %p78 = por %p76, %p77
      %p79 = scmp.ne.s32.totalorder %s71, %s73
      %p80 = scmp.eq.s32.totalorder %s21, 1
      %p81 = por %p79, %p80
      %p82 = scmp.ne.s32.totalorder %s73, %s74
      %p83 = scmp.eq.s32.totalorder %s21, 0
      %p84 = por %p82, %p83
      %p85 = scmp.ne.s32.totalorder %s73, %s74
      %p86 = scmp.eq.s32.totalorder %s22, 1
      %p87 = por %p85, %p86
      %p89 = scmp.ne.s32.totalorder %s74, %s88
      %p90 = scmp.eq.s32.totalorder %s22, 0
      %p91 = por %p89, %p90
      %s93 = sadd.s32 %s92, 1
      %p96 = scmp.eq.s32.totalorder %s16, 1
      %p97 = scmp.ne.s32.totalorder %s92, %s94
      %p98 = scmp.eq.s32.totalorder %s16, 0
      %p99 = por %p97, %p98
      %p100 = scmp.ne.s32.totalorder %s92, %s94
      %p101 = scmp.eq.s32.totalorder %s21, 1
      %p102 = por %p100, %p101
      %p103 = scmp.ne.s32.totalorder %s94, %s95
      %p104 = scmp.eq.s32.totalorder %s21, 0
      %p105 = por %p103, %p104
      %p106 = scmp.ne.s32.totalorder %s94, %s95
      %p107 = scmp.eq.s32.totalorder %s22, 1
      %p108 = por %p106, %p107
      %p110 = scmp.ne.s32.totalorder %s95, %s109
      %p111 = scmp.eq.s32.totalorder %s22, 0
      %p112 = por %p110, %p111
      %s114 = sadd.s32 %s113, 1
      %p117 = scmp.eq.s32.totalorder %s16, 1
      %p118 = scmp.ne.s32.totalorder %s113, %s115
      %p119 = scmp.eq.s32.totalorder %s16, 0
      %p120 = por %p118, %p119
      %p121 = scmp.ne.s32.totalorder %s113, %s115
      %p122 = scmp.eq.s32.totalorder %s21, 1
      %p123 = por %p121, %p122
      %p124 = scmp.ne.s32.totalorder %s115, %s116
      %p125 = scmp.eq.s32.totalorder %s21, 0
      %p126 = por %p124, %p125
      %p127 = scmp.ne.s32.totalorder %s115, %s116
      %p128 = scmp.eq.s32.totalorder %s22, 1
      %p129 = por %p127, %p128
      %p131 = scmp.ne.s32.totalorder %s116, %s130
      %p132 = scmp.eq.s32.totalorder %s22, 0
      %p133 = por %p131, %p132
      %s135 = sadd.s32 %s134, 1
      %p138 = scmp.eq.s32.totalorder %s16, 1
      %p139 = scmp.ne.s32.totalorder %s134, %s136
      %p140 = scmp.eq.s32.totalorder %s16, 0
      %p141 = por %p139, %p140
      %p142 = scmp.ne.s32.totalorder %s134, %s136
      %p143 = scmp.eq.s32.totalorder %s21, 1
      %p144 = por %p142, %p143
      %p145 = scmp.ne.s32.totalorder %s136, %s137
      %p146 = scmp.eq.s32.totalorder %s21, 0
      %p147 = por %p145, %p146
      %p148 = scmp.ne.s32.totalorder %s136, %s137
      %p149 = scmp.eq.s32.totalorder %s22, 1
      %p150 = por %p148, %p149
      %p152 = scmp.ne.s32.totalorder %s137, %s151
      %p153 = scmp.eq.s32.totalorder %s22, 0
      %p154 = por %p152, %p153
      %s156 = sadd.s32 %s155, 1
      %p159 = scmp.eq.s32.totalorder %s16, 1
      %p160 = scmp.ne.s32.totalorder %s155, %s157
      %p161 = scmp.eq.s32.totalorder %s16, 0
      %p162 = por %p160, %p161
      %p163 = scmp.ne.s32.totalorder %s155, %s157
      %p164 = scmp.eq.s32.totalorder %s21, 1
      %p165 = por %p163, %p164
      %p166 = scmp.ne.s32.totalorder %s157, %s158
      %p167 = scmp.eq.s32.totalorder %s21, 0
      %p168 = por %p166, %p167
      %p169 = scmp.ne.s32.totalorder %s157, %s158
      %p170 = scmp.eq.s32.totalorder %s22, 1
      %p171 = por %p169, %p170
      %p173 = scmp.ne.s32.totalorder %s158, %s172
      %p174 = scmp.eq.s32.totalorder %s22, 0
      %p175 = por %p173, %p174
      %s176 = ssub.s32 %s16, %s23
      %p177 = scmp.eq.s32.totalorder %s176, 0
      %s179 = sadd.s32 %s178, 1
      %s180 = scalar_select %p177, %s178, %s179
      %p183 = pneg %p177
      %p184 = scmp.eq.s32.totalorder %s16, 1
      %p185 = por %p183, %p184
      %p186 = scmp.ne.s32.totalorder %s178, %s181
      %p187 = scmp.eq.s32.totalorder %s16, 0
      %p188 = por %p186, %p187
      %p189 = scmp.ne.s32.totalorder %s178, %s181
      %p190 = scmp.eq.s32.totalorder %s21, 1
      %p191 = por %p189, %p190
      %p192 = scmp.ne.s32.totalorder %s181, %s182
      %p193 = scmp.eq.s32.totalorder %s21, 0
      %p194 = por %p192, %p193
      %p195 = scmp.ne.s32.totalorder %s181, %s182
      %p196 = scmp.eq.s32.totalorder %s22, 1
      %p197 = por %p195, %p196
      %p199 = scmp.ne.s32.totalorder %s182, %s198
      %p200 = scmp.eq.s32.totalorder %s22, 0
      %p201 = por %p199, %p200
      %p202 = scmp.le.s32.totalorder 1, %s16
      %p203 = scmp.lt.s32.totalorder %s16, 3
      %p204 = pnand %p202, %p203
      %p205 = pneg %p204
      // Predicated region
      $region9: #{tpu_custom_call.1} parent=5 // pred_check
        _
      $region10: #{tpu_custom_call.1} parent=5 // pred_check_branch
        %207 = sbr.rel (%p204) target = $region12
      $region11: #{tpu_custom_call.1} parent=5 // pred_region
        %s208 = ssub.s32 %s16, 1
        // Predicated region
        $region13: #{tpu_custom_call.1} parent=11 // pred_check
          %p209 = pneg %p63
        $region14: #{tpu_custom_call.1} parent=11 // pred_check_branch
          %211 = sbr.rel (%p209) target = $region16
        $region15: #{tpu_custom_call.1} parent=11 // pred_region
          _
        $region16: #{tpu_custom_call.1} parent=11 // pred_fallthru
          _
        // Predicated region
        $region17: #{tpu_custom_call.1} parent=11 // pred_check
          %p212 = pneg %p84
        $region18: #{tpu_custom_call.1} parent=11 // pred_check_branch
          %214 = sbr.rel (%p212) target = $region20
        $region19: #{tpu_custom_call.1} parent=11 // pred_region
          _
        $region20: #{tpu_custom_call.1} parent=11 // pred_fallthru
          _
        // Predicated region
        $region21: #{tpu_custom_call.1} parent=11 // pred_check
          %p215 = pneg %p105
        $region22: #{tpu_custom_call.1} parent=11 // pred_check_branch
          %217 = sbr.rel (%p215) target = $region24
        $region23: #{tpu_custom_call.1} parent=11 // pred_region
          _
        $region24: #{tpu_custom_call.1} parent=11 // pred_fallthru
          _
        // Predicated region
        $region25: #{tpu_custom_call.1} parent=11 // pred_check
          %p218 = pneg %p126
        $region26: #{tpu_custom_call.1} parent=11 // pred_check_branch
          %220 = sbr.rel (%p218) target = $region28
        $region27: #{tpu_custom_call.1} parent=11 // pred_region
          _
        $region28: #{tpu_custom_call.1} parent=11 // pred_fallthru
          _
        // Predicated region
        $region29: #{tpu_custom_call.1} parent=11 // pred_check
          %p221 = pneg %p147
        $region30: #{tpu_custom_call.1} parent=11 // pred_check_branch
          %223 = sbr.rel (%p221) target = $region32
        $region31: #{tpu_custom_call.1} parent=11 // pred_region
          _
        $region32: #{tpu_custom_call.1} parent=11 // pred_fallthru
          _
        // Predicated region
        $region33: #{tpu_custom_call.1} parent=11 // pred_check
          %p224 = pneg %p168
        $region34: #{tpu_custom_call.1} parent=11 // pred_check_branch
          %226 = sbr.rel (%p224) target = $region36
        $region35: #{tpu_custom_call.1} parent=11 // pred_region
          _
        $region36: #{tpu_custom_call.1} parent=11 // pred_fallthru
          _
      $region12: #{tpu_custom_call.1} parent=5 // pred_fallthru
        _
      %p227 = scmp.lt.s32.totalorder %s16, 2
      // Predicated region
      $region37: #{tpu_custom_call.1} parent=5 // pred_check
        %p228 = pneg %p227
      $region38: #{tpu_custom_call.1} parent=5 // pred_check_branch
        %230 = sbr.rel (%p228) target = $region40
      $region39: #{tpu_custom_call.1} parent=5 // pred_region
        // Predicated region
        $region41: #{tpu_custom_call.1} parent=39 // pred_check
          %p231 = pneg %p36
        $region42: #{tpu_custom_call.1} parent=39 // pred_check_branch
          %233 = sbr.rel (%p231) target = $region44
        $region43: #{tpu_custom_call.1} parent=39 // pred_region
          %p234 = scmp.lt.s32.totalorder %s16, 1
          %s235 = scalar_select %p234, %s16, 1
          %s236 = smul.addr %s235, 32
          %s237 = smul.addr %s236, 8
          %s238 = scalar_lea.vmem %s0, %s237
        $region44: #{tpu_custom_call.1} parent=39 // pred_fallthru
          _
      $region40: #{tpu_custom_call.1} parent=5 // pred_fallthru
        _
      %p239 = scmp.le.s32.totalorder 1, %s16
      %p240 = scmp.lt.s32.totalorder %s16, 3
      %p241 = pnand %p239, %p240
      %p242 = pneg %p241
      // Predicated region
      $region45: #{tpu_custom_call.1} parent=5 // pred_check
        _
      $region46: #{tpu_custom_call.1} parent=5 // pred_check_branch
        %244 = sbr.rel (%p241) target = $region48
      $region47: #{tpu_custom_call.1} parent=5 // pred_region
        %s245 = ssub.s32 %s16, 1
        %p246 = scmp.lt.s32.totalorder %s21, 1
        %s247 = scalar_select %p246, %s21, 1
        %s248 = smul.addr %s247, 32
        %s249 = smul.addr %s248, 8
        %s250 = scalar_lea.vmem %s0, %s249
        %p251 = pneg %p42
        %p252 = pneg %p39
        %p253 = pneg %p63
        %p254 = pneg %p60
        %p255 = pneg %p84
        %p256 = pneg %p81
        %p257 = pneg %p105
        %p258 = pneg %p102
        %p259 = pneg %p126
        %p260 = pneg %p123
        %p261 = pneg %p147
        %p262 = pneg %p144
        %p263 = pneg %p168
        %p264 = pneg %p165
        %p265 = pneg %p194
        %p266 = pneg %p191
        %s267 = sand.u32 %s181, 1
        %s268 = scalar_lea.sflag [#allocation5], %s267
        %s269 = sand.u32 %s181, 1
        %s270 = smul.addr %s269, 16
        %s271 = scalar_lea.vmem [#allocation4], %s270
        %p272 = scmp.lt.s32.totalorder %s21, 1
        %s273 = scalar_select %p272, %s21, 1
        %s274 = smul.addr %s273, 32
        %s275 = smul.addr %s274, 8
        %s276 = scalar_lea.vmem %s0, %s275
        %vm278 = vcmask 60416
        %279 = vst.msk [vmem:[#allocation2] sm:$0xf] %vm278, 0
        %280 = vst.msk [vmem:[#allocation2 + $0x4] sm:$0xf] %vm278, 0
        %281 = vst.msk [vmem:[#allocation2 + $0x8] sm:$0xf] %vm278, 0
        %282 = vst.msk [vmem:[#allocation2 + $0xc] sm:$0xf] %vm278, 0
        %283 = vst.msk [vmem:[#allocation2 + $0x10] sm:$0xf] %vm278, 0
        %284 = vst.msk [vmem:[#allocation2 + $0x14] sm:$0xf] %vm278, 0
        %285 = vst.msk [vmem:[#allocation2 + $0x18] sm:$0xf] %vm278, 0
        %286 = vst.msk [vmem:[#allocation2 + $0x1c] sm:$0xf] %vm278, 0
        %287 = vst.msk [vmem:[#allocation2 + $0x20] sm:$0xf] %vm278, 0
        %288 = vst.msk [vmem:[#allocation2 + $0x24] sm:$0xf] %vm278, 0
        %289 = vst.msk [vmem:[#allocation2 + $0x28] sm:$0xf] %vm278, 0
        %290 = vst.msk [vmem:[#allocation2 + $0x2c] sm:$0xf] %vm278, 0
        %291 = vst.msk [vmem:[#allocation2 + $0x30] sm:$0xf] %vm278, 0
        %292 = vst.msk [vmem:[#allocation2 + $0x34] sm:$0xf] %vm278, 0
        %293 = vst.msk [vmem:[#allocation2 + $0x38] sm:$0xf] %vm278, 0
        %294 = vst.msk [vmem:[#allocation2 + $0x3c] sm:$0xf] %vm278, 0
        %295 = vst.msk [vmem:[#allocation2 + $0x40] sm:$0xf] %vm278, 0
        %296 = vst.msk [vmem:[#allocation2 + $0x44] sm:$0xf] %vm278, 0
        %297 = vst.msk [vmem:[#allocation2 + $0x48] sm:$0xf] %vm278, 0
        %298 = vst.msk [vmem:[#allocation2 + $0x4c] sm:$0xf] %vm278, 0
        %299 = vst.msk [vmem:[#allocation2 + $0x50] sm:$0xf] %vm278, 0
        %300 = vst.msk [vmem:[#allocation2 + $0x54] sm:$0xf] %vm278, 0
        %301 = vst.msk [vmem:[#allocation2 + $0x58] sm:$0xf] %vm278, 0
        %302 = vst.msk [vmem:[#allocation2 + $0x5c] sm:$0xf] %vm278, 0
        %303 = vst.msk [vmem:[#allocation2 + $0x60] sm:$0xf] %vm278, 0
        %304 = vst.msk [vmem:[#allocation2 + $0x64] sm:$0xf] %vm278, 0
        %305 = vst.msk [vmem:[#allocation2 + $0x68] sm:$0xf] %vm278, 0
        %306 = vst.msk [vmem:[#allocation2 + $0x6c] sm:$0xf] %vm278, 0
        %307 = vst.msk [vmem:[#allocation2 + $0x70] sm:$0xf] %vm278, 0
        %308 = vst.msk [vmem:[#allocation2 + $0x74] sm:$0xf] %vm278, 0
        %309 = vst.msk [vmem:[#allocation2 + $0x78] sm:$0xf] %vm278, 0
        %310 = vst.msk [vmem:[#allocation2 + $0x7c] sm:$0xf] %vm278, 0
        %311 = vst.msk [vmem:[#allocation2 + $0x80] sm:$0xf] %vm278, 0
        %312 = vst.msk [vmem:[#allocation2 + $0x84] sm:$0xf] %vm278, 0
        %313 = vst.msk [vmem:[#allocation2 + $0x88] sm:$0xf] %vm278, 0
        %314 = vst.msk [vmem:[#allocation2 + $0x8c] sm:$0xf] %vm278, 0
        %315 = vst.msk [vmem:[#allocation2 + $0x90] sm:$0xf] %vm278, 0
        %316 = vst.msk [vmem:[#allocation2 + $0x94] sm:$0xf] %vm278, 0
        %317 = vst.msk [vmem:[#allocation2 + $0x98] sm:$0xf] %vm278, 0
        %318 = vst.msk [vmem:[#allocation2 + $0x9c] sm:$0xf] %vm278, 0
        %319 = vst.msk [vmem:[#allocation2 + $0xa0] sm:$0xf] %vm278, 0
        %320 = vst.msk [vmem:[#allocation2 + $0xa4] sm:$0xf] %vm278, 0
        %321 = vst.msk [vmem:[#allocation2 + $0xa8] sm:$0xf] %vm278, 0
        %322 = vst.msk [vmem:[#allocation2 + $0xac] sm:$0xf] %vm278, 0
        %323 = vst.msk [vmem:[#allocation2 + $0xb0] sm:$0xf] %vm278, 0
        %324 = vst.msk [vmem:[#allocation2 + $0xb4] sm:$0xf] %vm278, 0
        %325 = vst.msk [vmem:[#allocation2 + $0xb8] sm:$0xf] %vm278, 0
        %326 = vst.msk [vmem:[#allocation2 + $0xbc] sm:$0xf] %vm278, 0
        %327 = vst.msk [vmem:[#allocation2 + $0xc0] sm:$0xf] %vm278, 0
        %328 = vst.msk [vmem:[#allocation2 + $0xc4] sm:$0xf] %vm278, 0
        %329 = vst.msk [vmem:[#allocation2 + $0xc8] sm:$0xf] %vm278, 0
        %330 = vst.msk [vmem:[#allocation2 + $0xcc] sm:$0xf] %vm278, 0
        %331 = vst.msk [vmem:[#allocation2 + $0xd0] sm:$0xf] %vm278, 0
        %332 = vst.msk [vmem:[#allocation2 + $0xd4] sm:$0xf] %vm278, 0
        %333 = vst.msk [vmem:[#allocation2 + $0xd8] sm:$0xf] %vm278, 0
        %v334 = vld [vmem:[%s276] sm:$0xff]
        %v335 = vld [vmem:[%s276 + $0x8] sm:$0xff]
        %v336 = vpack.c.bf16 %v335, %v334
        %v338 = vunpack.c.l.b16 %v336
        %v339 = vunpack.c.h.b16 %v336
        %v340 = vpack.c.b16 %v338, %v338
        %v341 = vpack.c.b16 %v339, %v339
        %vm342 = vsmask.f32 256
        %vm343 = vsmask.f32 4368
        %vm344 = vmor %vm342, %vm343
        %v346 = vshrl.u32 %v340, 16
        %v348 = vrot.slane %v346, 7
        %v349 = vshll.u32 %v340, 16
        %v351 = vor.u32 %v348, %v349
        %v352 = vrot.slane %v348, 4
        %v354 = vshrl.u32 %v341, 16
        %v356 = vrot.slane %v354, 7
        %v357 = vshll.u32 %v341, 16
        %v359 = vor.u32 %v356, %v357
        %v360 = vsel %vm344, %v352, %v359
        %v361 = vrot.slane %v356, 4
        %vm365 = vcmask 60416
        %vm366 = vsmask.f32 7938
        %vm367 = vmand %vm365, %vm366
        %v368 = vld [vmem:[#allocation2 + $0xc] sm:$0xf]
        %v369 = vsel %vm367, %v351, %v368
        %370 = vst [vmem:[#allocation2 + $0xc] sm:$0xf] %v369
        %371 = vst.msk [vmem:[#allocation2 + $0x10] sm:$0xf] %vm278, %v360
        %vm372 = vcmask 57344
        %vm373 = vmand %vm372, %vm342
        %v374 = vld [vmem:[#allocation2 + $0x14] sm:$0x1]
        %v375 = vsel %vm373, %v361, %v374
        %376 = vst [vmem:[#allocation2 + $0x14] sm:$0x1] %v375
        %s377 = scalar_lea.vmem %s276, 16
        %v378 = vld [vmem:[%s377] sm:$0xff]
        %v379 = vld [vmem:[%s377 + $0x8] sm:$0xff]
        %v380 = vpack.c.bf16 %v379, %v378
        %v382 = vunpack.c.l.b16 %v380
        %v383 = vunpack.c.h.b16 %v380
        %v384 = vpack.c.b16 %v382, %v382
        %v385 = vpack.c.b16 %v383, %v383
        %v387 = vshrl.u32 %v384, 16
        %v389 = vrot.slane %v387, 7
        %v390 = vshll.u32 %v384, 16
        %v392 = vor.u32 %v389, %v390
        %v393 = vrot.slane %v389, 4
        %v395 = vshrl.u32 %v385, 16
        %v397 = vrot.slane %v395, 7
        %v398 = vshll.u32 %v385, 16
        %v400 = vor.u32 %v397, %v398
        %v401 = vsel %vm344, %v393, %v400
        %v402 = vrot.slane %v397, 4
        %v406 = vld [vmem:[#allocation2 + $0x18] sm:$0xf]
        %v407 = vsel %vm367, %v392, %v406
        %408 = vst [vmem:[#allocation2 + $0x18] sm:$0xf] %v407
        %409 = vst.msk [vmem:[#allocation2 + $0x1c] sm:$0xf] %vm278, %v401
        %v410 = vld [vmem:[#allocation2 + $0x20] sm:$0x1]
        %v411 = vsel %vm373, %v402, %v410
        %412 = vst [vmem:[#allocation2 + $0x20] sm:$0x1] %v411
        %s413 = scalar_lea.vmem %s276, 32
        %v414 = vld [vmem:[%s413] sm:$0xff]
        %v415 = vld [vmem:[%s413 + $0x8] sm:$0xff]
        %v416 = vpack.c.bf16 %v415, %v414
        %v418 = vunpack.c.l.b16 %v416
        %v419 = vunpack.c.h.b16 %v416
        %v420 = vpack.c.b16 %v418, %v418
        %v421 = vpack.c.b16 %v419, %v419
        %v423 = vshrl.u32 %v420, 16
        %v425 = vrot.slane %v423, 7
        %v426 = vshll.u32 %v420, 16
        %v428 = vor.u32 %v425, %v426
        %v429 = vrot.slane %v425, 4
        %v431 = vshrl.u32 %v421, 16
        %v433 = vrot.slane %v431, 7
        %v434 = vshll.u32 %v421, 16
        %v436 = vor.u32 %v433, %v434
        %v437 = vsel %vm344, %v429, %v436
        %v438 = vrot.slane %v433, 4
        %v442 = vld [vmem:[#allocation2 + $0x24] sm:$0xf]
        %v443 = vsel %vm367, %v428, %v442
        %444 = vst [vmem:[#allocation2 + $0x24] sm:$0xf] %v443
        %445 = vst.msk [vmem:[#allocation2 + $0x28] sm:$0xf] %vm278, %v437
        %v446 = vld [vmem:[#allocation2 + $0x2c] sm:$0x1]
        %v447 = vsel %vm373, %v438, %v446
        %448 = vst [vmem:[#allocation2 + $0x2c] sm:$0x1] %v447
        %s449 = scalar_lea.vmem %s276, 48
        %v450 = vld [vmem:[%s449] sm:$0xff]
        %v451 = vld [vmem:[%s449 + $0x8] sm:$0xff]
        %v452 = vpack.c.bf16 %v451, %v450
        %v454 = vunpack.c.l.b16 %v452
        %v455 = vunpack.c.h.b16 %v452
        %v456 = vpack.c.b16 %v454, %v454
        %v457 = vpack.c.b16 %v455, %v455
        %v459 = vshrl.u32 %v456, 16
        %v461 = vrot.slane %v459, 7
        %v462 = vshll.u32 %v456, 16
        %v464 = vor.u32 %v461, %v462
        %v465 = vrot.slane %v461, 4
        %v467 = vshrl.u32 %v457, 16
        %v469 = vrot.slane %v467, 7
        %v470 = vshll.u32 %v457, 16
        %v472 = vor.u32 %v469, %v470
        %v473 = vsel %vm344, %v465, %v472
        %v474 = vrot.slane %v469, 4
        %v478 = vld [vmem:[#allocation2 + $0x30] sm:$0xf]
        %v479 = vsel %vm367, %v464, %v478
        %480 = vst [vmem:[#allocation2 + $0x30] sm:$0xf] %v479
        %481 = vst.msk [vmem:[#allocation2 + $0x34] sm:$0xf] %vm278, %v473
        %v482 = vld [vmem:[#allocation2 + $0x38] sm:$0x1]
        %v483 = vsel %vm373, %v474, %v482
        %484 = vst [vmem:[#allocation2 + $0x38] sm:$0x1] %v483
        %s485 = scalar_lea.vmem %s276, 64
        %v486 = vld [vmem:[%s485] sm:$0xff]
        %v487 = vld [vmem:[%s485 + $0x8] sm:$0xff]
        %v488 = vpack.c.bf16 %v487, %v486
        %v490 = vunpack.c.l.b16 %v488
        %v491 = vunpack.c.h.b16 %v488
        %v492 = vpack.c.b16 %v490, %v490
        %v493 = vpack.c.b16 %v491, %v491
        %v495 = vshrl.u32 %v492, 16
        %v497 = vrot.slane %v495, 7
        %v498 = vshll.u32 %v492, 16
        %v500 = vor.u32 %v497, %v498
        %v501 = vrot.slane %v497, 4
        %v503 = vshrl.u32 %v493, 16
        %v505 = vrot.slane %v503, 7
        %v506 = vshll.u32 %v493, 16
        %v508 = vor.u32 %v505, %v506
        %v509 = vsel %vm344, %v501, %v508
        %v510 = vrot.slane %v505, 4
        %v514 = vld [vmem:[#allocation2 + $0x3c] sm:$0xf]
        %v515 = vsel %vm367, %v500, %v514
        %516 = vst [vmem:[#allocation2 + $0x3c] sm:$0xf] %v515
        %517 = vst.msk [vmem:[#allocation2 + $0x40] sm:$0xf] %vm278, %v509
        %v518 = vld [vmem:[#allocation2 + $0x44] sm:$0x1]
        %v519 = vsel %vm373, %v510, %v518
        %520 = vst [vmem:[#allocation2 + $0x44] sm:$0x1] %v519
        %s521 = scalar_lea.vmem %s276, 80
        %v522 = vld [vmem:[%s521] sm:$0xff]
        %v523 = vld [vmem:[%s521 + $0x8] sm:$0xff]
        %v524 = vpack.c.bf16 %v523, %v522
        %v526 = vunpack.c.l.b16 %v524
        %v527 = vunpack.c.h.b16 %v524
        %v528 = vpack.c.b16 %v526, %v526
        %v529 = vpack.c.b16 %v527, %v527
        %v531 = vshrl.u32 %v528, 16
        %v533 = vrot.slane %v531, 7
        %v534 = vshll.u32 %v528, 16
        %v536 = vor.u32 %v533, %v534
        %v537 = vrot.slane %v533, 4
        %v539 = vshrl.u32 %v529, 16
        %v541 = vrot.slane %v539, 7
        %v542 = vshll.u32 %v529, 16
        %v544 = vor.u32 %v541, %v542
        %v545 = vsel %vm344, %v537, %v544
        %v546 = vrot.slane %v541, 4
        %v550 = vld [vmem:[#allocation2 + $0x48] sm:$0xf]
        %v551 = vsel %vm367, %v536, %v550
        %552 = vst [vmem:[#allocation2 + $0x48] sm:$0xf] %v551
        %553 = vst.msk [vmem:[#allocation2 + $0x4c] sm:$0xf] %vm278, %v545
        %v554 = vld [vmem:[#allocation2 + $0x50] sm:$0x1]
        %v555 = vsel %vm373, %v546, %v554
        %556 = vst [vmem:[#allocation2 + $0x50] sm:$0x1] %v555
        %s557 = scalar_lea.vmem %s276, 96
        %v558 = vld [vmem:[%s557] sm:$0xff]
        %v559 = vld [vmem:[%s557 + $0x8] sm:$0xff]
        %v560 = vpack.c.bf16 %v559, %v558
        %v562 = vunpack.c.l.b16 %v560
        %v563 = vunpack.c.h.b16 %v560
        %v564 = vpack.c.b16 %v562, %v562
        %v565 = vpack.c.b16 %v563, %v563
        %v567 = vshrl.u32 %v564, 16
        %v569 = vrot.slane %v567, 7
        %v570 = vshll.u32 %v564, 16
        %v572 = vor.u32 %v569, %v570
        %v573 = vrot.slane %v569, 4
        %v575 = vshrl.u32 %v565, 16
        %v577 = vrot.slane %v575, 7
        %v578 = vshll.u32 %v565, 16
        %v580 = vor.u32 %v577, %v578
        %v581 = vsel %vm344, %v573, %v580
        %v582 = vrot.slane %v577, 4
        %v586 = vld [vmem:[#allocation2 + $0x54] sm:$0xf]
        %v587 = vsel %vm367, %v572, %v586
        %588 = vst [vmem:[#allocation2 + $0x54] sm:$0xf] %v587
        %589 = vst.msk [vmem:[#allocation2 + $0x58] sm:$0xf] %vm278, %v581
        %v590 = vld [vmem:[#allocation2 + $0x5c] sm:$0x1]
        %v591 = vsel %vm373, %v582, %v590
        %592 = vst [vmem:[#allocation2 + $0x5c] sm:$0x1] %v591
        %s593 = scalar_lea.vmem %s276, 112
        %v594 = vld [vmem:[%s593] sm:$0xff]
        %v595 = vld [vmem:[%s593 + $0x8] sm:$0xff]
        %v596 = vpack.c.bf16 %v595, %v594
        %v598 = vunpack.c.l.b16 %v596
        %v599 = vunpack.c.h.b16 %v596
        %v600 = vpack.c.b16 %v598, %v598
        %v601 = vpack.c.b16 %v599, %v599
        %v603 = vshrl.u32 %v600, 16
        %v605 = vrot.slane %v603, 7
        %v606 = vshll.u32 %v600, 16
        %v608 = vor.u32 %v605, %v606
        %v609 = vrot.slane %v605, 4
        %v611 = vshrl.u32 %v601, 16
        %v613 = vrot.slane %v611, 7
        %v614 = vshll.u32 %v601, 16
        %v616 = vor.u32 %v613, %v614
        %v617 = vsel %vm344, %v609, %v616
        %v618 = vrot.slane %v613, 4
        %v622 = vld [vmem:[#allocation2 + $0x60] sm:$0xf]
        %v623 = vsel %vm367, %v608, %v622
        %624 = vst [vmem:[#allocation2 + $0x60] sm:$0xf] %v623
        %625 = vst.msk [vmem:[#allocation2 + $0x64] sm:$0xf] %vm278, %v617
        %v626 = vld [vmem:[#allocation2 + $0x68] sm:$0x1]
        %v627 = vsel %vm373, %v618, %v626
        %628 = vst [vmem:[#allocation2 + $0x68] sm:$0x1] %v627
        %s629 = scalar_lea.vmem %s276, 128
        %v630 = vld [vmem:[%s629] sm:$0xff]
        %v631 = vld [vmem:[%s629 + $0x8] sm:$0xff]
        %v632 = vpack.c.bf16 %v631, %v630
        %v634 = vunpack.c.l.b16 %v632
        %v635 = vunpack.c.h.b16 %v632
        %v636 = vpack.c.b16 %v634, %v634
        %v637 = vpack.c.b16 %v635, %v635
        %v639 = vshrl.u32 %v636, 16
        %v641 = vrot.slane %v639, 7
        %v642 = vshll.u32 %v636, 16
        %v644 = vor.u32 %v641, %v642
        %v645 = vrot.slane %v641, 4
        %v647 = vshrl.u32 %v637, 16
        %v649 = vrot.slane %v647, 7
        %v650 = vshll.u32 %v637, 16
        %v652 = vor.u32 %v649, %v650
        %v653 = vsel %vm344, %v645, %v652
        %v654 = vrot.slane %v649, 4
        %v658 = vld [vmem:[#allocation2 + $0x6c] sm:$0xf]
        %v659 = vsel %vm367, %v644, %v658
        %660 = vst [vmem:[#allocation2 + $0x6c] sm:$0xf] %v659
        %661 = vst.msk [vmem:[#allocation2 + $0x70] sm:$0xf] %vm278, %v653
        %v662 = vld [vmem:[#allocation2 + $0x74] sm:$0x1]
        %v663 = vsel %vm373, %v654, %v662
        %664 = vst [vmem:[#allocation2 + $0x74] sm:$0x1] %v663
        %s665 = scalar_lea.vmem %s276, 144
        %v666 = vld [vmem:[%s665] sm:$0xff]
        %v667 = vld [vmem:[%s665 + $0x8] sm:$0xff]
        %v668 = vpack.c.bf16 %v667, %v666
        %v670 = vunpack.c.l.b16 %v668
        %v671 = vunpack.c.h.b16 %v668
        %v672 = vpack.c.b16 %v670, %v670
        %v673 = vpack.c.b16 %v671, %v671
        %v675 = vshrl.u32 %v672, 16
        %v677 = vrot.slane %v675, 7
        %v678 = vshll.u32 %v672, 16
        %v680 = vor.u32 %v677, %v678
        %v681 = vrot.slane %v677, 4
        %v683 = vshrl.u32 %v673, 16
        %v685 = vrot.slane %v683, 7
        %v686 = vshll.u32 %v673, 16
        %v688 = vor.u32 %v685, %v686
        %v689 = vsel %vm344, %v681, %v688
        %v690 = vrot.slane %v685, 4
        %v694 = vld [vmem:[#allocation2 + $0x78] sm:$0xf]
        %v695 = vsel %vm367, %v680, %v694
        %696 = vst [vmem:[#allocation2 + $0x78] sm:$0xf] %v695
        %697 = vst.msk [vmem:[#allocation2 + $0x7c] sm:$0xf] %vm278, %v689
        %v698 = vld [vmem:[#allocation2 + $0x80] sm:$0x1]
        %v699 = vsel %vm373, %v690, %v698
        %700 = vst [vmem:[#allocation2 + $0x80] sm:$0x1] %v699
        %s701 = scalar_lea.vmem %s276, 160
        %v702 = vld [vmem:[%s701] sm:$0xff]
        %v703 = vld [vmem:[%s701 + $0x8] sm:$0xff]
        %v704 = vpack.c.bf16 %v703, %v702
        %v706 = vunpack.c.l.b16 %v704
        %v707 = vunpack.c.h.b16 %v704
        %v708 = vpack.c.b16 %v706, %v706
        %v709 = vpack.c.b16 %v707, %v707
        %v711 = vshrl.u32 %v708, 16
        %v713 = vrot.slane %v711, 7
        %v714 = vshll.u32 %v708, 16
        %v716 = vor.u32 %v713, %v714
        %v717 = vrot.slane %v713, 4
        %v719 = vshrl.u32 %v709, 16
        %v721 = vrot.slane %v719, 7
        %v722 = vshll.u32 %v709, 16
        %v724 = vor.u32 %v721, %v722
        %v725 = vsel %vm344, %v717, %v724
        %v726 = vrot.slane %v721, 4
        %v730 = vld [vmem:[#allocation2 + $0x84] sm:$0xf]
        %v731 = vsel %vm367, %v716, %v730
        %732 = vst [vmem:[#allocation2 + $0x84] sm:$0xf] %v731
        %733 = vst.msk [vmem:[#allocation2 + $0x88] sm:$0xf] %vm278, %v725
        %v734 = vld [vmem:[#allocation2 + $0x8c] sm:$0x1]
        %v735 = vsel %vm373, %v726, %v734
        %736 = vst [vmem:[#allocation2 + $0x8c] sm:$0x1] %v735
        %s737 = scalar_lea.vmem %s276, 176
        %v738 = vld [vmem:[%s737] sm:$0xff]
        %v739 = vld [vmem:[%s737 + $0x8] sm:$0xff]
        %v740 = vpack.c.bf16 %v739, %v738
        %v742 = vunpack.c.l.b16 %v740
        %v743 = vunpack.c.h.b16 %v740
        %v744 = vpack.c.b16 %v742, %v742
        %v745 = vpack.c.b16 %v743, %v743
        %v747 = vshrl.u32 %v744, 16
        %v749 = vrot.slane %v747, 7
        %v750 = vshll.u32 %v744, 16
        %v752 = vor.u32 %v749, %v750
        %v753 = vrot.slane %v749, 4
        %v755 = vshrl.u32 %v745, 16
        %v757 = vrot.slane %v755, 7
        %v758 = vshll.u32 %v745, 16
        %v760 = vor.u32 %v757, %v758
        %v761 = vsel %vm344, %v753, %v760
        %v762 = vrot.slane %v757, 4
        %v766 = vld [vmem:[#allocation2 + $0x90] sm:$0xf]
        %v767 = vsel %vm367, %v752, %v766
        %768 = vst [vmem:[#allocation2 + $0x90] sm:$0xf] %v767
        %769 = vst.msk [vmem:[#allocation2 + $0x94] sm:$0xf] %vm278, %v761
        %v770 = vld [vmem:[#allocation2 + $0x98] sm:$0x1]
        %v771 = vsel %vm373, %v762, %v770
        %772 = vst [vmem:[#allocation2 + $0x98] sm:$0x1] %v771
        %s773 = scalar_lea.vmem %s276, 192
        %v774 = vld [vmem:[%s773] sm:$0xff]
        %v775 = vld [vmem:[%s773 + $0x8] sm:$0xff]
        %v776 = vpack.c.bf16 %v775, %v774
        %v778 = vunpack.c.l.b16 %v776
        %v779 = vunpack.c.h.b16 %v776
        %v780 = vpack.c.b16 %v778, %v778
        %v781 = vpack.c.b16 %v779, %v779
        %v783 = vshrl.u32 %v780, 16
        %v785 = vrot.slane %v783, 7
        %v786 = vshll.u32 %v780, 16
        %v788 = vor.u32 %v785, %v786
        %v789 = vrot.slane %v785, 4
        %v791 = vshrl.u32 %v781, 16
        %v793 = vrot.slane %v791, 7
        %v794 = vshll.u32 %v781, 16
        %v796 = vor.u32 %v793, %v794
        %v797 = vsel %vm344, %v789, %v796
        %v798 = vrot.slane %v793, 4
        %v802 = vld [vmem:[#allocation2 + $0x9c] sm:$0xf]
        %v803 = vsel %vm367, %v788, %v802
        %804 = vst [vmem:[#allocation2 + $0x9c] sm:$0xf] %v803
        %805 = vst.msk [vmem:[#allocation2 + $0xa0] sm:$0xf] %vm278, %v797
        %v806 = vld [vmem:[#allocation2 + $0xa4] sm:$0x1]
        %v807 = vsel %vm373, %v798, %v806
        %808 = vst [vmem:[#allocation2 + $0xa4] sm:$0x1] %v807
        %s809 = scalar_lea.vmem %s276, 208
        %v810 = vld [vmem:[%s809] sm:$0xff]
        %v811 = vld [vmem:[%s809 + $0x8] sm:$0xff]
        %v812 = vpack.c.bf16 %v811, %v810
        %v814 = vunpack.c.l.b16 %v812
        %v815 = vunpack.c.h.b16 %v812
        %v816 = vpack.c.b16 %v814, %v814
        %v817 = vpack.c.b16 %v815, %v815
        %v819 = vshrl.u32 %v816, 16
        %v821 = vrot.slane %v819, 7
        %v822 = vshll.u32 %v816, 16
        %v824 = vor.u32 %v821, %v822
        %v825 = vrot.slane %v821, 4
        %v827 = vshrl.u32 %v817, 16
        %v829 = vrot.slane %v827, 7
        %v830 = vshll.u32 %v817, 16
        %v832 = vor.u32 %v829, %v830
        %v833 = vsel %vm344, %v825, %v832
        %v834 = vrot.slane %v829, 4
        %v838 = vld [vmem:[#allocation2 + $0xa8] sm:$0xf]
        %v839 = vsel %vm367, %v824, %v838
        %840 = vst [vmem:[#allocation2 + $0xa8] sm:$0xf] %v839
        %841 = vst.msk [vmem:[#allocation2 + $0xac] sm:$0xf] %vm278, %v833
        %v842 = vld [vmem:[#allocation2 + $0xb0] sm:$0x1]
        %v843 = vsel %vm373, %v834, %v842
        %844 = vst [vmem:[#allocation2 + $0xb0] sm:$0x1] %v843
        %s845 = scalar_lea.vmem %s276, 224
        %v846 = vld [vmem:[%s845] sm:$0xff]
        %v847 = vld [vmem:[%s845 + $0x8] sm:$0xff]
        %v848 = vpack.c.bf16 %v847, %v846
        %v850 = vunpack.c.l.b16 %v848
        %v851 = vunpack.c.h.b16 %v848
        %v852 = vpack.c.b16 %v850, %v850
        %v853 = vpack.c.b16 %v851, %v851
        %v855 = vshrl.u32 %v852, 16
        %v857 = vrot.slane %v855, 7
        %v858 = vshll.u32 %v852, 16
        %v860 = vor.u32 %v857, %v858
        %v861 = vrot.slane %v857, 4
        %v863 = vshrl.u32 %v853, 16
        %v865 = vrot.slane %v863, 7
        %v866 = vshll.u32 %v853, 16
        %v868 = vor.u32 %v865, %v866
        %v869 = vsel %vm344, %v861, %v868
        %v870 = vrot.slane %v865, 4
        %v874 = vld [vmem:[#allocation2 + $0xb4] sm:$0xf]
        %v875 = vsel %vm367, %v860, %v874
        %876 = vst [vmem:[#allocation2 + $0xb4] sm:$0xf] %v875
        %877 = vst.msk [vmem:[#allocation2 + $0xb8] sm:$0xf] %vm278, %v869
        %v878 = vld [vmem:[#allocation2 + $0xbc] sm:$0x1]
        %v879 = vsel %vm373, %v870, %v878
        %880 = vst [vmem:[#allocation2 + $0xbc] sm:$0x1] %v879
        %s881 = scalar_lea.vmem %s276, 240
        %v882 = vld [vmem:[%s881] sm:$0xff]
        %v883 = vld [vmem:[%s881 + $0x8] sm:$0xff]
        %v884 = vpack.c.bf16 %v883, %v882
        %v886 = vunpack.c.l.b16 %v884
        %v887 = vunpack.c.h.b16 %v884
        %v888 = vpack.c.b16 %v886, %v886
        %v889 = vpack.c.b16 %v887, %v887
        %v891 = vshrl.u32 %v888, 16
        %v893 = vrot.slane %v891, 7
        %v894 = vshll.u32 %v888, 16
        %v896 = vor.u32 %v893, %v894
        %v897 = vrot.slane %v893, 4
        %v899 = vshrl.u32 %v889, 16
        %v901 = vrot.slane %v899, 7
        %v902 = vshll.u32 %v889, 16
        %v904 = vor.u32 %v901, %v902
        %v905 = vsel %vm344, %v897, %v904
        %v906 = vrot.slane %v901, 4
        %v910 = vld [vmem:[#allocation2 + $0xc0] sm:$0xf]
        %v911 = vsel %vm367, %v896, %v910
        %912 = vst [vmem:[#allocation2 + $0xc0] sm:$0xf] %v911
        %913 = vst.msk [vmem:[#allocation2 + $0xc4] sm:$0xf] %vm278, %v905
        %v914 = vld [vmem:[#allocation2 + $0xc8] sm:$0x1]
        %v915 = vsel %vm373, %v906, %v914
        %916 = vst [vmem:[#allocation2 + $0xc8] sm:$0x1] %v915
        %v917 = vld [vmem:[%s1] sm:$0xf]
        %v918 = vld [vmem:[%s1 + $0x4] sm:$0xf]
        %v919 = vld [vmem:[%s1 + $0x8] sm:$0xf]
        %v920 = vld [vmem:[%s1 + $0xc] sm:$0xf]
        %v921 = vld [vmem:[%s1 + $0x10] sm:$0xf]
        %v922 = vld [vmem:[%s1 + $0x14] sm:$0xf]
        %v923 = vld [vmem:[%s1 + $0x18] sm:$0xf]
        %v924 = vld [vmem:[%s1 + $0x1c] sm:$0xf]
        %v925 = vld [vmem:[%s1 + $0x20] sm:$0xf]
        %v926 = vld [vmem:[#allocation2] sm:$0xf]
        %v927 = vld [vmem:[#allocation2 + $0x4] sm:$0xf]
        %v928 = vld [vmem:[#allocation2 + $0x8] sm:$0xf]
        %v929 = vld [vmem:[#allocation2 + $0xc] sm:$0xf]
        %v930 = vld [vmem:[#allocation2 + $0x10] sm:$0xf]
        %v931 = vld [vmem:[#allocation2 + $0x14] sm:$0xf]
        %v932 = vld [vmem:[#allocation2 + $0x18] sm:$0xf]
        %v933 = vld [vmem:[#allocation2 + $0x1c] sm:$0xf]
        %v934 = vld [vmem:[#allocation2 + $0x20] sm:$0xf]
        %v935 = vld [vmem:[#allocation2 + $0x24] sm:$0xf]
        %v936 = vld [vmem:[#allocation2 + $0x28] sm:$0xf]
        %v937 = vld [vmem:[#allocation2 + $0x2c] sm:$0xf]
        %v938 = vld [vmem:[#allocation2 + $0x30] sm:$0xf]
        %v939 = vld [vmem:[#allocation2 + $0x34] sm:$0xf]
        %v940 = vld [vmem:[#allocation2 + $0x38] sm:$0xf]
        %v941 = vld [vmem:[#allocation2 + $0x3c] sm:$0xf]
        %v942 = vld [vmem:[#allocation2 + $0x40] sm:$0xf]
        %v943 = vld [vmem:[#allocation2 + $0x44] sm:$0xf]
        %v944 = vld [vmem:[#allocation2 + $0x48] sm:$0xf]
        %v945 = vld [vmem:[#allocation2 + $0x4c] sm:$0xf]
        %v946 = vld [vmem:[#allocation2 + $0x50] sm:$0xf]
        %v947 = vld [vmem:[#allocation2 + $0x54] sm:$0xf]
        %v948 = vld [vmem:[#allocation2 + $0x58] sm:$0xf]
        %v949 = vld [vmem:[#allocation2 + $0x5c] sm:$0xf]
        %v950 = vld [vmem:[#allocation2 + $0x60] sm:$0xf]
        %v951 = vld [vmem:[#allocation2 + $0x64] sm:$0xf]
        %v952 = vld [vmem:[#allocation2 + $0x68] sm:$0xf]
        %v953 = vld [vmem:[#allocation2 + $0x6c] sm:$0xf]
        %v954 = vld [vmem:[#allocation2 + $0x70] sm:$0xf]
        %v955 = vld [vmem:[#allocation2 + $0x74] sm:$0xf]
        %v956 = vld [vmem:[#allocation2 + $0x78] sm:$0xf]
        %v957 = vld [vmem:[#allocation2 + $0x7c] sm:$0xf]
        %v958 = vld [vmem:[#allocation2 + $0x80] sm:$0xf]
        %v959 = vld [vmem:[#allocation2 + $0x84] sm:$0xf]
        %v960 = vld [vmem:[#allocation2 + $0x88] sm:$0xf]
        %v961 = vld [vmem:[#allocation2 + $0x8c] sm:$0xf]
        %v962 = vld [vmem:[#allocation2 + $0x90] sm:$0xf]
        %v963 = vld [vmem:[#allocation2 + $0x94] sm:$0xf]
        %v964 = vld [vmem:[#allocation2 + $0x98] sm:$0xf]
        %v965 = vld [vmem:[#allocation2 + $0x9c] sm:$0xf]
        %v966 = vld [vmem:[#allocation2 + $0xa0] sm:$0xf]
        %v967 = vld [vmem:[#allocation2 + $0xa4] sm:$0xf]
        %v968 = vld [vmem:[#allocation2 + $0xa8] sm:$0xf]
        %v969 = vld [vmem:[#allocation2 + $0xac] sm:$0xf]
        %v970 = vld [vmem:[#allocation2 + $0xb0] sm:$0xf]
        %v971 = vld [vmem:[#allocation2 + $0xb4] sm:$0xf]
        %v972 = vld [vmem:[#allocation2 + $0xb8] sm:$0xf]
        %v973 = vld [vmem:[#allocation2 + $0xbc] sm:$0xf]
        %v974 = vld [vmem:[#allocation2 + $0xc0] sm:$0x1]
        %v1024 = vunpack.c.l.b16 %v926
        %v1025 = vunpack.c.l.b16 %v927
        %v1026 = vunpack.c.l.b16 %v928
        %v1027 = vunpack.c.l.b16 %v929
        %v1028 = vunpack.c.l.b16 %v930
        %v1029 = vunpack.c.l.b16 %v931
        %v1030 = vunpack.c.l.b16 %v932
        %v1031 = vunpack.c.l.b16 %v933
        %v1032 = vunpack.c.l.b16 %v934
        %v1033 = vunpack.c.l.b16 %v935
        %v1034 = vunpack.c.l.b16 %v936
        %v1035 = vunpack.c.l.b16 %v937
        %v1036 = vunpack.c.l.b16 %v938
        %v1037 = vunpack.c.l.b16 %v939
        %v1038 = vunpack.c.l.b16 %v940
        %v1039 = vunpack.c.l.b16 %v941
        %v1040 = vunpack.c.l.b16 %v942
        %v1041 = vunpack.c.l.b16 %v943
        %v1042 = vunpack.c.l.b16 %v944
        %v1043 = vunpack.c.l.b16 %v945
        %v1044 = vunpack.c.l.b16 %v946
        %v1045 = vunpack.c.l.b16 %v947
        %v1046 = vunpack.c.l.b16 %v948
        %v1047 = vunpack.c.l.b16 %v949
        %v1048 = vunpack.c.l.b16 %v950
        %v1049 = vunpack.c.l.b16 %v951
        %v1050 = vunpack.c.l.b16 %v952
        %v1051 = vunpack.c.l.b16 %v953
        %v1052 = vunpack.c.l.b16 %v954
        %v1053 = vunpack.c.l.b16 %v955
        %v1054 = vunpack.c.l.b16 %v956
        %v1055 = vunpack.c.l.b16 %v957
        %v1056 = vunpack.c.l.b16 %v958
        %v1057 = vunpack.c.l.b16 %v959
        %v1058 = vunpack.c.l.b16 %v960
        %v1059 = vunpack.c.l.b16 %v961
        %v1060 = vunpack.c.l.b16 %v962
        %v1061 = vunpack.c.l.b16 %v963
        %v1062 = vunpack.c.l.b16 %v964
        %v1063 = vunpack.c.l.b16 %v965
        %v1064 = vunpack.c.l.b16 %v966
        %v1065 = vunpack.c.l.b16 %v967
        %v1066 = vunpack.c.l.b16 %v968
        %v1067 = vunpack.c.l.b16 %v969
        %v1068 = vunpack.c.l.b16 %v970
        %v1069 = vunpack.c.l.b16 %v971
        %v1070 = vunpack.c.l.b16 %v972
        %v1071 = vunpack.c.l.b16 %v973
        %v1072 = vunpack.c.l.b16 %v974
        %v1073 = vpack.c.b16 %v1025, %v1024
        %v1074 = vpack.c.b16 %v1027, %v1026
        %v1075 = vpack.c.b16 %v1029, %v1028
        %v1076 = vpack.c.b16 %v1031, %v1030
        %v1077 = vpack.c.b16 %v1033, %v1032
        %v1078 = vpack.c.b16 %v1035, %v1034
        %v1079 = vpack.c.b16 %v1037, %v1036
        %v1080 = vpack.c.b16 %v1039, %v1038
        %v1081 = vpack.c.b16 %v1041, %v1040
        %v1082 = vpack.c.b16 %v1043, %v1042
        %v1083 = vpack.c.b16 %v1045, %v1044
        %v1084 = vpack.c.b16 %v1047, %v1046
        %v1085 = vpack.c.b16 %v1049, %v1048
        %v1086 = vpack.c.b16 %v1051, %v1050
        %v1087 = vpack.c.b16 %v1053, %v1052
        %v1088 = vpack.c.b16 %v1055, %v1054
        %v1089 = vpack.c.b16 %v1057, %v1056
        %v1090 = vpack.c.b16 %v1059, %v1058
        %v1091 = vpack.c.b16 %v1061, %v1060
        %v1092 = vpack.c.b16 %v1063, %v1062
        %v1093 = vpack.c.b16 %v1065, %v1064
        %v1094 = vpack.c.b16 %v1067, %v1066
        %v1095 = vpack.c.b16 %v1069, %v1068
        %v1096 = vpack.c.b16 %v1071, %v1070
        %v1097 = vpack.c.b16 %v1072, %v1072
        %vm1098 = vsmask.f32 7424
        %v1100 = vshrl.u32 %v1073, 16
        %v1102 = vshll.u32 %v1073, 16
        %v1104 = vrot.slane %v1102, 1
        %v1105 = vor.u32 %v1100, %v1104
        %v1107 = vshll.u32 %v1074, 16
        %v1109 = vrot.slane %v1107, 1
        %v1110 = vsel %vm1098, %v1105, %v1109
        %v1111 = vshrl.u32 %v1074, 16
        %v1113 = vor.u32 %v1111, %v1109
        %v1115 = vshll.u32 %v1075, 16
        %v1117 = vrot.slane %v1115, 1
        %v1118 = vsel %vm1098, %v1113, %v1117
        %v1119 = vshrl.u32 %v1075, 16
        %v1121 = vor.u32 %v1119, %v1117
        %v1123 = vshll.u32 %v1076, 16
        %v1125 = vrot.slane %v1123, 1
        %v1126 = vsel %vm1098, %v1121, %v1125
        %v1127 = vshrl.u32 %v1076, 16
        %v1129 = vor.u32 %v1127, %v1125
        %v1131 = vshll.u32 %v1077, 16
        %v1133 = vrot.slane %v1131, 1
        %v1134 = vsel %vm1098, %v1129, %v1133
        %v1135 = vshrl.u32 %v1077, 16
        %v1137 = vor.u32 %v1135, %v1133
        %v1139 = vshll.u32 %v1078, 16
        %v1141 = vrot.slane %v1139, 1
        %v1142 = vsel %vm1098, %v1137, %v1141
        %v1143 = vshrl.u32 %v1078, 16
        %v1145 = vor.u32 %v1143, %v1141
        %v1147 = vshll.u32 %v1079, 16
        %v1149 = vrot.slane %v1147, 1
        %v1150 = vsel %vm1098, %v1145, %v1149
        %v1151 = vshrl.u32 %v1079, 16
        %v1153 = vor.u32 %v1151, %v1149
        %v1155 = vshll.u32 %v1080, 16
        %v1157 = vrot.slane %v1155, 1
        %v1158 = vsel %vm1098, %v1153, %v1157
        %v1159 = vshrl.u32 %v1080, 16
        %v1161 = vor.u32 %v1159, %v1157
        %v1163 = vshll.u32 %v1081, 16
        %v1165 = vrot.slane %v1163, 1
        %v1166 = vsel %vm1098, %v1161, %v1165
        %v1167 = vshrl.u32 %v1081, 16
        %v1169 = vor.u32 %v1167, %v1165
        %v1171 = vshll.u32 %v1082, 16
        %v1173 = vrot.slane %v1171, 1
        %v1174 = vsel %vm1098, %v1169, %v1173
        %v1175 = vshrl.u32 %v1082, 16
        %v1177 = vor.u32 %v1175, %v1173
        %v1179 = vshll.u32 %v1083, 16
        %v1181 = vrot.slane %v1179, 1
        %v1182 = vsel %vm1098, %v1177, %v1181
        %v1183 = vshrl.u32 %v1083, 16
        %v1185 = vor.u32 %v1183, %v1181
        %v1187 = vshll.u32 %v1084, 16
        %v1189 = vrot.slane %v1187, 1
        %v1190 = vsel %vm1098, %v1185, %v1189
        %v1191 = vshrl.u32 %v1084, 16
        %v1193 = vor.u32 %v1191, %v1189
        %v1195 = vshll.u32 %v1085, 16
        %v1197 = vrot.slane %v1195, 1
        %v1198 = vsel %vm1098, %v1193, %v1197
        %v1199 = vshrl.u32 %v1085, 16
        %v1201 = vor.u32 %v1199, %v1197
        %v1203 = vshll.u32 %v1086, 16
        %v1205 = vrot.slane %v1203, 1
        %v1206 = vsel %vm1098, %v1201, %v1205
        %v1207 = vshrl.u32 %v1086, 16
        %v1209 = vor.u32 %v1207, %v1205
        %v1211 = vshll.u32 %v1087, 16
        %v1213 = vrot.slane %v1211, 1
        %v1214 = vsel %vm1098, %v1209, %v1213
        %v1215 = vshrl.u32 %v1087, 16
        %v1217 = vor.u32 %v1215, %v1213
        %v1219 = vshll.u32 %v1088, 16
        %v1221 = vrot.slane %v1219, 1
        %v1222 = vsel %vm1098, %v1217, %v1221
        %v1223 = vshrl.u32 %v1088, 16
        %v1225 = vor.u32 %v1223, %v1221
        %v1227 = vshll.u32 %v1089, 16
        %v1229 = vrot.slane %v1227, 1
        %v1230 = vsel %vm1098, %v1225, %v1229
        %v1231 = vshrl.u32 %v1089, 16
        %v1233 = vor.u32 %v1231, %v1229
        %v1235 = vshll.u32 %v1090, 16
        %v1237 = vrot.slane %v1235, 1
        %v1238 = vsel %vm1098, %v1233, %v1237
        %v1239 = vshrl.u32 %v1090, 16
        %v1241 = vor.u32 %v1239, %v1237
        %v1243 = vshll.u32 %v1091, 16
        %v1245 = vrot.slane %v1243, 1
        %v1246 = vsel %vm1098, %v1241, %v1245
        %v1247 = vshrl.u32 %v1091, 16
        %v1249 = vor.u32 %v1247, %v1245
        %v1251 = vshll.u32 %v1092, 16
        %v1253 = vrot.slane %v1251, 1
        %v1254 = vsel %vm1098, %v1249, %v1253
        %v1255 = vshrl.u32 %v1092, 16
        %v1257 = vor.u32 %v1255, %v1253
        %v1259 = vshll.u32 %v1093, 16
        %v1261 = vrot.slane %v1259, 1
        %v1262 = vsel %vm1098, %v1257, %v1261
        %v1263 = vshrl.u32 %v1093, 16
        %v1265 = vor.u32 %v1263, %v1261
        %v1267 = vshll.u32 %v1094, 16
        %v1269 = vrot.slane %v1267, 1
        %v1270 = vsel %vm1098, %v1265, %v1269
        %v1271 = vshrl.u32 %v1094, 16
        %v1273 = vor.u32 %v1271, %v1269
        %v1275 = vshll.u32 %v1095, 16
        %v1277 = vrot.slane %v1275, 1
        %v1278 = vsel %vm1098, %v1273, %v1277
        %v1279 = vshrl.u32 %v1095, 16
        %v1281 = vor.u32 %v1279, %v1277
        %v1283 = vshll.u32 %v1096, 16
        %v1285 = vrot.slane %v1283, 1
        %v1286 = vsel %vm1098, %v1281, %v1285
        %v1287 = vshrl.u32 %v1096, 16
        %v1289 = vor.u32 %v1287, %v1285
        %v1291 = vshll.u32 %v1097, 16
        %v1293 = vrot.slane %v1291, 1
        %v1294 = vsel %vm1098, %v1289, %v1293
        %vm1295 = vcmask 64512
        %v1297 = vsel %vm1295, %v1110, 0
        %v1300 = vsel %vm1295, %v1118, 0
        %v1303 = vsel %vm1295, %v1126, 0
        %v1306 = vsel %vm1295, %v1134, 0
        %v1309 = vsel %vm1295, %v1142, 0
        %v1312 = vsel %vm1295, %v1150, 0
        %v1315 = vsel %vm1295, %v1158, 0
        %v1318 = vsel %vm1295, %v1166, 0
        %v1321 = vsel %vm1295, %v1174, 0
        %v1324 = vsel %vm1295, %v1182, 0
        %v1327 = vsel %vm1295, %v1190, 0
        %v1330 = vsel %vm1295, %v1198, 0
        %v1333 = vsel %vm1295, %v1206, 0
        %v1336 = vsel %vm1295, %v1214, 0
        %v1339 = vsel %vm1295, %v1222, 0
        %v1342 = vsel %vm1295, %v1230, 0
        %v1345 = vsel %vm1295, %v1238, 0
        %v1348 = vsel %vm1295, %v1246, 0
        %v1351 = vsel %vm1295, %v1254, 0
        %v1354 = vsel %vm1295, %v1262, 0
        %v1357 = vsel %vm1295, %v1270, 0
        %v1360 = vsel %vm1295, %v1278, 0
        %v1363 = vsel %vm1295, %v1286, 0
        %v1366 = vsel %vm1295, %v1294, 0
        %vm1368 = vcmask 1043456
        %v1370 = vsel %vm1368, %v918, 0
        %1372 = vmatprep.subr.bf16.mxu0 0
        %1373 = vmatpush1.bf16.msra.mxu0 0
        %1374 = vmatprep.subr.bf16.mxu0 0
        %1375 = vmatpush1.bf16.msra.mxu0 0
        %1376 = vmatprep.subr.bf16.mxu0 0
        %1377 = vmatpush1.bf16.msra.mxu0 0
        %1378 = vmatprep.subr.bf16.mxu0 0
        %1379 = vmatpush1.bf16.msra.mxu0 0
        %1380 = vmatprep.subr.bf16.mxu0 0
        %1381 = vmatpush1.bf16.msra.mxu0 0
        %1382 = vmatprep.subr.bf16.mxu0 0
        %1383 = vmatpush1.bf16.msra.mxu0 0
        %1384 = vmatprep.subr.bf16.mxu0 0
        %1385 = vmatpush1.bf16.msra.mxu0 0
        %1386 = vmatprep.subr.bf16.mxu0 0
        %1387 = vmatpush1.bf16.msra.mxu0 %v1370
        %1388 = vmatprep.subr.bf16.mxu0 0
        %1389 = vmatpush2.bf16.msra.mxu0 0
        %1390 = vmatprep.subr.bf16.mxu0 0
        %1391 = vmatpush2.bf16.msra.mxu0 0
        %1392 = vmatprep.subr.bf16.mxu0 0
        %1393 = vmatpush2.bf16.msra.mxu0 0
        %1394 = vmatprep.subr.bf16.mxu0 0
        %1395 = vmatpush2.bf16.msra.mxu0 0
        %1396 = vmatprep.subr.bf16.mxu0 0
        %1397 = vmatpush2.bf16.msra.mxu0 0
        %1398 = vmatprep.subr.bf16.mxu0 0
        %1399 = vmatpush2.bf16.msra.mxu0 0
        %1400 = vmatprep.subr.bf16.mxu0 0
        %1401 = vmatpush2.bf16.msra.mxu0 0
        %1402 = vmatprep.subr.bf16.mxu0 0
        %1403 = vmatpush2.bf16.msra.mxu0 0
        %1404 = vmatprep.mubr.bf16.mxu0 0
        %1405 = vmatmul.mubr.bf16.gmra.mxu0 %v1297
        %v1406 = vpop.f32.mrf.mxu0
        %v1407 = vadd.f32 0.0, %v1406
        %v1408 = vpop.f32.mrf.mxu0
        %v1409 = vpop.f32.mrf.mxu0
        %v1410 = vadd.f32 0.0, %v1409
        %v1411 = vpop.f32.mrf.mxu0
        %1412 = vmatprep.mubr.bf16.mxu0 0
        %1413 = vmatmul.mubr.bf16.gmra.mxu0 %v1300
        %v1414 = vpop.f32.mrf.mxu0
        %v1415 = vadd.f32 0.0, %v1414
        %v1416 = vpop.f32.mrf.mxu0
        %v1417 = vpop.f32.mrf.mxu0
        %v1418 = vadd.f32 0.0, %v1417
        %v1419 = vpop.f32.mrf.mxu0
        %1420 = vmatprep.mubr.bf16.mxu0 0
        %1421 = vmatmul.mubr.bf16.gmra.mxu0 %v1303
        %v1422 = vpop.f32.mrf.mxu0
        %v1423 = vadd.f32 0.0, %v1422
        %v1424 = vpop.f32.mrf.mxu0
        %v1425 = vpop.f32.mrf.mxu0
        %v1426 = vadd.f32 0.0, %v1425
        %v1427 = vpop.f32.mrf.mxu0
        %1428 = vmatprep.mubr.bf16.mxu0 0
        %1429 = vmatmul.mubr.bf16.gmra.mxu0 %v1306
        %v1430 = vpop.f32.mrf.mxu0
        %v1431 = vadd.f32 0.0, %v1430
        %v1432 = vpop.f32.mrf.mxu0
        %v1433 = vpop.f32.mrf.mxu0
        %v1434 = vadd.f32 0.0, %v1433
        %v1435 = vpop.f32.mrf.mxu0
        %1436 = vmatprep.mubr.bf16.mxu0 0
        %1437 = vmatmul.mubr.bf16.gmra.mxu0 %v1309
        %v1438 = vpop.f32.mrf.mxu0
        %v1439 = vadd.f32 0.0, %v1438
        %v1440 = vpop.f32.mrf.mxu0
        %v1441 = vpop.f32.mrf.mxu0
        %v1442 = vadd.f32 0.0, %v1441
        %v1443 = vpop.f32.mrf.mxu0
        %1444 = vmatprep.mubr.bf16.mxu0 0
        %1445 = vmatmul.mubr.bf16.gmra.mxu0 %v1312
        %v1446 = vpop.f32.mrf.mxu0
        %v1447 = vadd.f32 0.0, %v1446
        %v1448 = vpop.f32.mrf.mxu0
        %v1449 = vpop.f32.mrf.mxu0
        %v1450 = vadd.f32 0.0, %v1449
        %v1451 = vpop.f32.mrf.mxu0
        %1452 = vmatprep.mubr.bf16.mxu0 0
        %1453 = vmatmul.mubr.bf16.gmra.mxu0 %v1315
        %v1454 = vpop.f32.mrf.mxu0
        %v1455 = vadd.f32 0.0, %v1454
        %v1456 = vpop.f32.mrf.mxu0
        %v1457 = vpop.f32.mrf.mxu0
        %v1458 = vadd.f32 0.0, %v1457
        %v1459 = vpop.f32.mrf.mxu0
        %1460 = vmatprep.mubr.bf16.mxu0 0
        %1461 = vmatmul.mubr.bf16.gmra.mxu0 %v1318
        %v1462 = vpop.f32.mrf.mxu0
        %v1463 = vadd.f32 0.0, %v1462
        %v1464 = vpop.f32.mrf.mxu0
        %v1465 = vpop.f32.mrf.mxu0
        %v1466 = vadd.f32 0.0, %v1465
        %v1467 = vpop.f32.mrf.mxu0
        %1468 = vmatprep.mubr.bf16.mxu0 0
        %1469 = vmatmul.mubr.bf16.gmra.mxu0 %v1321
        %v1470 = vpop.f32.mrf.mxu0
        %v1471 = vadd.f32 0.0, %v1470
        %v1472 = vpop.f32.mrf.mxu0
        %v1473 = vpop.f32.mrf.mxu0
        %v1474 = vadd.f32 0.0, %v1473
        %v1475 = vpop.f32.mrf.mxu0
        %1476 = vmatprep.mubr.bf16.mxu0 0
        %1477 = vmatmul.mubr.bf16.gmra.mxu0 %v1324
        %v1478 = vpop.f32.mrf.mxu0
        %v1479 = vadd.f32 0.0, %v1478
        %v1480 = vpop.f32.mrf.mxu0
        %v1481 = vpop.f32.mrf.mxu0
        %v1482 = vadd.f32 0.0, %v1481
        %v1483 = vpop.f32.mrf.mxu0
        %1484 = vmatprep.mubr.bf16.mxu0 0
        %1485 = vmatmul.mubr.bf16.gmra.mxu0 %v1327
        %v1486 = vpop.f32.mrf.mxu0
        %v1487 = vadd.f32 0.0, %v1486
        %v1488 = vpop.f32.mrf.mxu0
        %v1489 = vpop.f32.mrf.mxu0
        %v1490 = vadd.f32 0.0, %v1489
        %v1491 = vpop.f32.mrf.mxu0
        %1492 = vmatprep.mubr.bf16.mxu0 0
        %1493 = vmatmul.mubr.bf16.gmra.mxu0 %v1330
        %v1494 = vpop.f32.mrf.mxu0
        %v1495 = vadd.f32 0.0, %v1494
        %v1496 = vpop.f32.mrf.mxu0
        %v1497 = vpop.f32.mrf.mxu0
        %v1498 = vadd.f32 0.0, %v1497
        %v1499 = vpop.f32.mrf.mxu0
        %1500 = vmatprep.mubr.bf16.mxu0 0
        %1501 = vmatmul.mubr.bf16.gmra.mxu0 %v1333
        %v1502 = vpop.f32.mrf.mxu0
        %v1503 = vadd.f32 0.0, %v1502
        %v1504 = vpop.f32.mrf.mxu0
        %v1505 = vpop.f32.mrf.mxu0
        %v1506 = vadd.f32 0.0, %v1505
        %v1507 = vpop.f32.mrf.mxu0
        %1508 = vmatprep.mubr.bf16.mxu0 0
        %1509 = vmatmul.mubr.bf16.gmra.mxu0 %v1336
        %v1510 = vpop.f32.mrf.mxu0
        %v1511 = vadd.f32 0.0, %v1510
        %v1512 = vpop.f32.mrf.mxu0
        %v1513 = vpop.f32.mrf.mxu0
        %v1514 = vadd.f32 0.0, %v1513
        %v1515 = vpop.f32.mrf.mxu0
        %1516 = vmatprep.mubr.bf16.mxu0 0
        %1517 = vmatmul.mubr.bf16.gmra.mxu0 %v1339
        %v1518 = vpop.f32.mrf.mxu0
        %v1519 = vadd.f32 0.0, %v1518
        %v1520 = vpop.f32.mrf.mxu0
        %v1521 = vpop.f32.mrf.mxu0
        %v1522 = vadd.f32 0.0, %v1521
        %v1523 = vpop.f32.mrf.mxu0
        %1524 = vmatprep.mubr.bf16.mxu0 0
        %1525 = vmatmul.mubr.bf16.gmra.mxu0 %v1342
        %v1526 = vpop.f32.mrf.mxu0
        %v1527 = vadd.f32 0.0, %v1526
        %v1528 = vpop.f32.mrf.mxu0
        %v1529 = vpop.f32.mrf.mxu0
        %v1530 = vadd.f32 0.0, %v1529
        %v1531 = vpop.f32.mrf.mxu0
        %1532 = vmatprep.mubr.bf16.mxu0 0
        %1533 = vmatmul.mubr.bf16.gmra.mxu0 %v1345
        %v1534 = vpop.f32.mrf.mxu0
        %v1535 = vadd.f32 0.0, %v1534
        %v1536 = vpop.f32.mrf.mxu0
        %v1537 = vpop.f32.mrf.mxu0
        %v1538 = vadd.f32 0.0, %v1537
        %v1539 = vpop.f32.mrf.mxu0
        %1540 = vmatprep.mubr.bf16.mxu0 0
        %1541 = vmatmul.mubr.bf16.gmra.mxu0 %v1348
        %v1542 = vpop.f32.mrf.mxu0
        %v1543 = vadd.f32 0.0, %v1542
        %v1544 = vpop.f32.mrf.mxu0
        %v1545 = vpop.f32.mrf.mxu0
        %v1546 = vadd.f32 0.0, %v1545
        %v1547 = vpop.f32.mrf.mxu0
        %1548 = vmatprep.mubr.bf16.mxu0 0
        %1549 = vmatmul.mubr.bf16.gmra.mxu0 %v1351
        %v1550 = vpop.f32.mrf.mxu0
        %v1551 = vadd.f32 0.0, %v1550
        %v1552 = vpop.f32.mrf.mxu0
        %v1553 = vpop.f32.mrf.mxu0
        %v1554 = vadd.f32 0.0, %v1553
        %v1555 = vpop.f32.mrf.mxu0
        %1556 = vmatprep.mubr.bf16.mxu0 0
        %1557 = vmatmul.mubr.bf16.gmra.mxu0 %v1354
        %v1558 = vpop.f32.mrf.mxu0
        %v1559 = vadd.f32 0.0, %v1558
        %v1560 = vpop.f32.mrf.mxu0
        %v1561 = vpop.f32.mrf.mxu0
        %v1562 = vadd.f32 0.0, %v1561
        %v1563 = vpop.f32.mrf.mxu0
        %1564 = vmatprep.mubr.bf16.mxu0 0
        %1565 = vmatmul.mubr.bf16.gmra.mxu0 %v1357
        %v1566 = vpop.f32.mrf.mxu0
        %v1567 = vadd.f32 0.0, %v1566
        %v1568 = vpop.f32.mrf.mxu0
        %v1569 = vpop.f32.mrf.mxu0
        %v1570 = vadd.f32 0.0, %v1569
        %v1571 = vpop.f32.mrf.mxu0
        %1572 = vmatprep.mubr.bf16.mxu0 0
        %1573 = vmatmul.mubr.bf16.gmra.mxu0 %v1360
        %v1574 = vpop.f32.mrf.mxu0
        %v1575 = vadd.f32 0.0, %v1574
        %v1576 = vpop.f32.mrf.mxu0
        %v1577 = vpop.f32.mrf.mxu0
        %v1578 = vadd.f32 0.0, %v1577
        %v1579 = vpop.f32.mrf.mxu0
        %1580 = vmatprep.mubr.bf16.mxu0 0
        %1581 = vmatmul.mubr.bf16.gmra.mxu0 %v1363
        %v1582 = vpop.f32.mrf.mxu0
        %v1583 = vadd.f32 0.0, %v1582
        %v1584 = vpop.f32.mrf.mxu0
        %v1585 = vpop.f32.mrf.mxu0
        %v1586 = vadd.f32 0.0, %v1585
        %v1587 = vpop.f32.mrf.mxu0
        %1588 = vmatprep.mubr.bf16.mxu0 0
        %1589 = vmatmul.mubr.bf16.gmra.mxu0 %v1366
        %v1590 = vpop.f32.mrf.mxu0
        %v1591 = vadd.f32 0.0, %v1590
        %v1592 = vpop.f32.mrf.mxu0
        %v1593 = vpop.f32.mrf.mxu0
        %v1594 = vadd.f32 0.0, %v1593
        %v1595 = vpop.f32.mrf.mxu0
        %1596 = vdwg.mxu0
        %v1597 = vsel %vm1295, %v1073, 0
        %v1599 = vsel %vm1295, %v1074, 0
        %v1601 = vsel %vm1295, %v1075, 0
        %v1603 = vsel %vm1295, %v1076, 0
        %v1605 = vsel %vm1295, %v1077, 0
        %v1607 = vsel %vm1295, %v1078, 0
        %v1609 = vsel %vm1295, %v1079, 0
        %v1611 = vsel %vm1295, %v1080, 0
        %v1613 = vsel %vm1295, %v1081, 0
        %v1615 = vsel %vm1295, %v1082, 0
        %v1617 = vsel %vm1295, %v1083, 0
        %v1619 = vsel %vm1295, %v1084, 0
        %v1621 = vsel %vm1295, %v1085, 0
        %v1623 = vsel %vm1295, %v1086, 0
        %v1625 = vsel %vm1295, %v1087, 0
        %v1627 = vsel %vm1295, %v1088, 0
        %v1629 = vsel %vm1295, %v1089, 0
        %v1631 = vsel %vm1295, %v1090, 0
        %v1633 = vsel %vm1295, %v1091, 0
        %v1635 = vsel %vm1295, %v1092, 0
        %v1637 = vsel %vm1295, %v1093, 0
        %v1639 = vsel %vm1295, %v1094, 0
        %v1641 = vsel %vm1295, %v1095, 0
        %v1643 = vsel %vm1295, %v1096, 0
        %v1646 = vsel %vm1368, %v917, 0
        %1648 = vmatprep.subr.bf16.mxu0 0
        %1649 = vmatpush1.bf16.msra.mxu0 0
        %1650 = vmatprep.subr.bf16.mxu0 0
        %1651 = vmatpush1.bf16.msra.mxu0 0
        %1652 = vmatprep.subr.bf16.mxu0 0
        %1653 = vmatpush1.bf16.msra.mxu0 0
        %1654 = vmatprep.subr.bf16.mxu0 0
        %1655 = vmatpush1.bf16.msra.mxu0 0
        %1656 = vmatprep.subr.bf16.mxu0 0
        %1657 = vmatpush1.bf16.msra.mxu0 0
        %1658 = vmatprep.subr.bf16.mxu0 0
        %1659 = vmatpush1.bf16.msra.mxu0 0
        %1660 = vmatprep.subr.bf16.mxu0 0
        %1661 = vmatpush1.bf16.msra.mxu0 0
        %1662 = vmatprep.subr.bf16.mxu0 0
        %1663 = vmatpush1.bf16.msra.mxu0 %v1646
        %1664 = vmatprep.subr.bf16.mxu0 0
        %1665 = vmatpush2.bf16.msra.mxu0 0
        %1666 = vmatprep.subr.bf16.mxu0 0
        %1667 = vmatpush2.bf16.msra.mxu0 0
        %1668 = vmatprep.subr.bf16.mxu0 0
        %1669 = vmatpush2.bf16.msra.mxu0 0
        %1670 = vmatprep.subr.bf16.mxu0 0
        %1671 = vmatpush2.bf16.msra.mxu0 0
        %1672 = vmatprep.subr.bf16.mxu0 0
        %1673 = vmatpush2.bf16.msra.mxu0 0
        %1674 = vmatprep.subr.bf16.mxu0 0
        %1675 = vmatpush2.bf16.msra.mxu0 0
        %1676 = vmatprep.subr.bf16.mxu0 0
        %1677 = vmatpush2.bf16.msra.mxu0 0
        %1678 = vmatprep.subr.bf16.mxu0 0
        %1679 = vmatpush2.bf16.msra.mxu0 0
        %1680 = vmatprep.mubr.bf16.mxu0 0
        %1681 = vmatmul.mubr.bf16.gmra.mxu0 %v1597
        %v1682 = vpop.f32.mrf.mxu0
        %v1683 = vadd.f32 %v1407, %v1682
        %v1684 = vpop.f32.mrf.mxu0
        %v1685 = vpop.f32.mrf.mxu0
        %v1686 = vadd.f32 %v1410, %v1685
        %v1687 = vpop.f32.mrf.mxu0
        %1688 = vmatprep.mubr.bf16.mxu0 0
        %1689 = vmatmul.mubr.bf16.gmra.mxu0 %v1599
        %v1690 = vpop.f32.mrf.mxu0
        %v1691 = vadd.f32 %v1415, %v1690
        %v1692 = vpop.f32.mrf.mxu0
        %v1693 = vpop.f32.mrf.mxu0
        %v1694 = vadd.f32 %v1418, %v1693
        %v1695 = vpop.f32.mrf.mxu0
        %1696 = vmatprep.mubr.bf16.mxu0 0
        %1697 = vmatmul.mubr.bf16.gmra.mxu0 %v1601
        %v1698 = vpop.f32.mrf.mxu0
        %v1699 = vadd.f32 %v1423, %v1698
        %v1700 = vpop.f32.mrf.mxu0
        %v1701 = vpop.f32.mrf.mxu0
        %v1702 = vadd.f32 %v1426, %v1701
        %v1703 = vpop.f32.mrf.mxu0
        %1704 = vmatprep.mubr.bf16.mxu0 0
        %1705 = vmatmul.mubr.bf16.gmra.mxu0 %v1603
        %v1706 = vpop.f32.mrf.mxu0
        %v1707 = vadd.f32 %v1431, %v1706
        %v1708 = vpop.f32.mrf.mxu0
        %v1709 = vpop.f32.mrf.mxu0
        %v1710 = vadd.f32 %v1434, %v1709
        %v1711 = vpop.f32.mrf.mxu0
        %1712 = vmatprep.mubr.bf16.mxu0 0
        %1713 = vmatmul.mubr.bf16.gmra.mxu0 %v1605
        %v1714 = vpop.f32.mrf.mxu0
        %v1715 = vadd.f32 %v1439, %v1714
        %v1716 = vpop.f32.mrf.mxu0
        %v1717 = vpop.f32.mrf.mxu0
        %v1718 = vadd.f32 %v1442, %v1717
        %v1719 = vpop.f32.mrf.mxu0
        %1720 = vmatprep.mubr.bf16.mxu0 0
        %1721 = vmatmul.mubr.bf16.gmra.mxu0 %v1607
        %v1722 = vpop.f32.mrf.mxu0
        %v1723 = vadd.f32 %v1447, %v1722
        %v1724 = vpop.f32.mrf.mxu0
        %v1725 = vpop.f32.mrf.mxu0
        %v1726 = vadd.f32 %v1450, %v1725
        %v1727 = vpop.f32.mrf.mxu0
        %1728 = vmatprep.mubr.bf16.mxu0 0
        %1729 = vmatmul.mubr.bf16.gmra.mxu0 %v1609
        %v1730 = vpop.f32.mrf.mxu0
        %v1731 = vadd.f32 %v1455, %v1730
        %v1732 = vpop.f32.mrf.mxu0
        %v1733 = vpop.f32.mrf.mxu0
        %v1734 = vadd.f32 %v1458, %v1733
        %v1735 = vpop.f32.mrf.mxu0
        %1736 = vmatprep.mubr.bf16.mxu0 0
        %1737 = vmatmul.mubr.bf16.gmra.mxu0 %v1611
        %v1738 = vpop.f32.mrf.mxu0
        %v1739 = vadd.f32 %v1463, %v1738
        %v1740 = vpop.f32.mrf.mxu0
        %v1741 = vpop.f32.mrf.mxu0
        %v1742 = vadd.f32 %v1466, %v1741
        %v1743 = vpop.f32.mrf.mxu0
        %1744 = vmatprep.mubr.bf16.mxu0 0
        %1745 = vmatmul.mubr.bf16.gmra.mxu0 %v1613
        %v1746 = vpop.f32.mrf.mxu0
        %v1747 = vadd.f32 %v1471, %v1746
        %v1748 = vpop.f32.mrf.mxu0
        %v1749 = vpop.f32.mrf.mxu0
        %v1750 = vadd.f32 %v1474, %v1749
        %v1751 = vpop.f32.mrf.mxu0
        %1752 = vmatprep.mubr.bf16.mxu0 0
        %1753 = vmatmul.mubr.bf16.gmra.mxu0 %v1615
        %v1754 = vpop.f32.mrf.mxu0
        %v1755 = vadd.f32 %v1479, %v1754
        %v1756 = vpop.f32.mrf.mxu0
        %v1757 = vpop.f32.mrf.mxu0
        %v1758 = vadd.f32 %v1482, %v1757
        %v1759 = vpop.f32.mrf.mxu0
        %1760 = vmatprep.mubr.bf16.mxu0 0
        %1761 = vmatmul.mubr.bf16.gmra.mxu0 %v1617
        %v1762 = vpop.f32.mrf.mxu0
        %v1763 = vadd.f32 %v1487, %v1762
        %v1764 = vpop.f32.mrf.mxu0
        %v1765 = vpop.f32.mrf.mxu0
        %v1766 = vadd.f32 %v1490, %v1765
        %v1767 = vpop.f32.mrf.mxu0
        %1768 = vmatprep.mubr.bf16.mxu0 0
        %1769 = vmatmul.mubr.bf16.gmra.mxu0 %v1619
        %v1770 = vpop.f32.mrf.mxu0
        %v1771 = vadd.f32 %v1495, %v1770
        %v1772 = vpop.f32.mrf.mxu0
        %v1773 = vpop.f32.mrf.mxu0
        %v1774 = vadd.f32 %v1498, %v1773
        %v1775 = vpop.f32.mrf.mxu0
        %1776 = vmatprep.mubr.bf16.mxu0 0
        %1777 = vmatmul.mubr.bf16.gmra.mxu0 %v1621
        %v1778 = vpop.f32.mrf.mxu0
        %v1779 = vadd.f32 %v1503, %v1778
        %v1780 = vpop.f32.mrf.mxu0
        %v1781 = vpop.f32.mrf.mxu0
        %v1782 = vadd.f32 %v1506, %v1781
        %v1783 = vpop.f32.mrf.mxu0
        %1784 = vmatprep.mubr.bf16.mxu0 0
        %1785 = vmatmul.mubr.bf16.gmra.mxu0 %v1623
        %v1786 = vpop.f32.mrf.mxu0
        %v1787 = vadd.f32 %v1511, %v1786
        %v1788 = vpop.f32.mrf.mxu0
        %v1789 = vpop.f32.mrf.mxu0
        %v1790 = vadd.f32 %v1514, %v1789
        %v1791 = vpop.f32.mrf.mxu0
        %1792 = vmatprep.mubr.bf16.mxu0 0
        %1793 = vmatmul.mubr.bf16.gmra.mxu0 %v1625
        %v1794 = vpop.f32.mrf.mxu0
        %v1795 = vadd.f32 %v1519, %v1794
        %v1796 = vpop.f32.mrf.mxu0
        %v1797 = vpop.f32.mrf.mxu0
        %v1798 = vadd.f32 %v1522, %v1797
        %v1799 = vpop.f32.mrf.mxu0
        %1800 = vmatprep.mubr.bf16.mxu0 0
        %1801 = vmatmul.mubr.bf16.gmra.mxu0 %v1627
        %v1802 = vpop.f32.mrf.mxu0
        %v1803 = vadd.f32 %v1527, %v1802
        %v1804 = vpop.f32.mrf.mxu0
        %v1805 = vpop.f32.mrf.mxu0
        %v1806 = vadd.f32 %v1530, %v1805
        %v1807 = vpop.f32.mrf.mxu0
        %1808 = vmatprep.mubr.bf16.mxu0 0
        %1809 = vmatmul.mubr.bf16.gmra.mxu0 %v1629
        %v1810 = vpop.f32.mrf.mxu0
        %v1811 = vadd.f32 %v1535, %v1810
        %v1812 = vpop.f32.mrf.mxu0
        %v1813 = vpop.f32.mrf.mxu0
        %v1814 = vadd.f32 %v1538, %v1813
        %v1815 = vpop.f32.mrf.mxu0
        %1816 = vmatprep.mubr.bf16.mxu0 0
        %1817 = vmatmul.mubr.bf16.gmra.mxu0 %v1631
        %v1818 = vpop.f32.mrf.mxu0
        %v1819 = vadd.f32 %v1543, %v1818
        %v1820 = vpop.f32.mrf.mxu0
        %v1821 = vpop.f32.mrf.mxu0
        %v1822 = vadd.f32 %v1546, %v1821
        %v1823 = vpop.f32.mrf.mxu0
        %1824 = vmatprep.mubr.bf16.mxu0 0
        %1825 = vmatmul.mubr.bf16.gmra.mxu0 %v1633
        %v1826 = vpop.f32.mrf.mxu0
        %v1827 = vadd.f32 %v1551, %v1826
        %v1828 = vpop.f32.mrf.mxu0
        %v1829 = vpop.f32.mrf.mxu0
        %v1830 = vadd.f32 %v1554, %v1829
        %v1831 = vpop.f32.mrf.mxu0
        %1832 = vmatprep.mubr.bf16.mxu0 0
        %1833 = vmatmul.mubr.bf16.gmra.mxu0 %v1635
        %v1834 = vpop.f32.mrf.mxu0
        %v1835 = vadd.f32 %v1559, %v1834
        %v1836 = vpop.f32.mrf.mxu0
        %v1837 = vpop.f32.mrf.mxu0
        %v1838 = vadd.f32 %v1562, %v1837
        %v1839 = vpop.f32.mrf.mxu0
        %1840 = vmatprep.mubr.bf16.mxu0 0
        %1841 = vmatmul.mubr.bf16.gmra.mxu0 %v1637
        %v1842 = vpop.f32.mrf.mxu0
        %v1843 = vadd.f32 %v1567, %v1842
        %v1844 = vpop.f32.mrf.mxu0
        %v1845 = vpop.f32.mrf.mxu0
        %v1846 = vadd.f32 %v1570, %v1845
        %v1847 = vpop.f32.mrf.mxu0
        %1848 = vmatprep.mubr.bf16.mxu0 0
        %1849 = vmatmul.mubr.bf16.gmra.mxu0 %v1639
        %v1850 = vpop.f32.mrf.mxu0
        %v1851 = vadd.f32 %v1575, %v1850
        %v1852 = vpop.f32.mrf.mxu0
        %v1853 = vpop.f32.mrf.mxu0
        %v1854 = vadd.f32 %v1578, %v1853
        %v1855 = vpop.f32.mrf.mxu0
        %1856 = vmatprep.mubr.bf16.mxu0 0
        %1857 = vmatmul.mubr.bf16.gmra.mxu0 %v1641
        %v1858 = vpop.f32.mrf.mxu0
        %v1859 = vadd.f32 %v1583, %v1858
        %v1860 = vpop.f32.mrf.mxu0
        %v1861 = vpop.f32.mrf.mxu0
        %v1862 = vadd.f32 %v1586, %v1861
        %v1863 = vpop.f32.mrf.mxu0
        %1864 = vmatprep.mubr.bf16.mxu0 0
        %1865 = vmatmul.mubr.bf16.gmra.mxu0 %v1643
        %v1866 = vpop.f32.mrf.mxu0
        %v1867 = vadd.f32 %v1591, %v1866
        %v1868 = vpop.f32.mrf.mxu0
        %v1869 = vpop.f32.mrf.mxu0
        %v1870 = vadd.f32 %v1594, %v1869
        %v1871 = vpop.f32.mrf.mxu0
        %1872 = vdwg.mxu0
        %v1873 = vld [vmem:[#allocation2] sm:$0xe]
        %v1875 = vunpack.c.l.b16 %v1873
        %v1876 = vpack.c.b16 %v1025, %v1875
        %vm1877 = vcmask 1046528
        %v1878 = vrot.slane %v1876, 1
        %v1879 = vrot.slane %v1074, 1
        %v1880 = vsel %vm1877, %v1878, %v1879
        %v1881 = vrot.slane %v1075, 1
        %v1882 = vsel %vm1877, %v1879, %v1881
        %v1883 = vrot.slane %v1076, 1
        %v1884 = vsel %vm1877, %v1881, %v1883
        %v1885 = vrot.slane %v1077, 1
        %v1886 = vsel %vm1877, %v1883, %v1885
        %v1887 = vrot.slane %v1078, 1
        %v1888 = vsel %vm1877, %v1885, %v1887
        %v1889 = vrot.slane %v1079, 1
        %v1890 = vsel %vm1877, %v1887, %v1889
        %v1891 = vrot.slane %v1080, 1
        %v1892 = vsel %vm1877, %v1889, %v1891
        %v1893 = vrot.slane %v1081, 1
        %v1894 = vsel %vm1877, %v1891, %v1893
        %v1895 = vrot.slane %v1082, 1
        %v1896 = vsel %vm1877, %v1893, %v1895
        %v1897 = vrot.slane %v1083, 1
        %v1898 = vsel %vm1877, %v1895, %v1897
        %v1899 = vrot.slane %v1084, 1
        %v1900 = vsel %vm1877, %v1897, %v1899
        %v1901 = vrot.slane %v1085, 1
        %v1902 = vsel %vm1877, %v1899, %v1901
        %v1903 = vrot.slane %v1086, 1
        %v1904 = vsel %vm1877, %v1901, %v1903
        %v1905 = vrot.slane %v1087, 1
        %v1906 = vsel %vm1877, %v1903, %v1905
        %v1907 = vrot.slane %v1088, 1
        %v1908 = vsel %vm1877, %v1905, %v1907
        %v1909 = vrot.slane %v1089, 1
        %v1910 = vsel %vm1877, %v1907, %v1909
        %v1911 = vrot.slane %v1090, 1
        %v1912 = vsel %vm1877, %v1909, %v1911
        %v1913 = vrot.slane %v1091, 1
        %v1914 = vsel %vm1877, %v1911, %v1913
        %v1915 = vrot.slane %v1092, 1
        %v1916 = vsel %vm1877, %v1913, %v1915
        %v1917 = vrot.slane %v1093, 1
        %v1918 = vsel %vm1877, %v1915, %v1917
        %v1919 = vrot.slane %v1094, 1
        %v1920 = vsel %vm1877, %v1917, %v1919
        %v1921 = vrot.slane %v1095, 1
        %v1922 = vsel %vm1877, %v1919, %v1921
        %v1923 = vrot.slane %v1096, 1
        %v1924 = vsel %vm1877, %v1921, %v1923
        %v1925 = vrot.slane %v1097, 1
        %v1926 = vsel %vm1877, %v1923, %v1925
        %v1928 = vsel %vm1295, %v1880, 0
        %v1931 = vsel %vm1295, %v1882, 0
        %v1934 = vsel %vm1295, %v1884, 0
        %v1937 = vsel %vm1295, %v1886, 0
        %v1940 = vsel %vm1295, %v1888, 0
        %v1943 = vsel %vm1295, %v1890, 0
        %v1946 = vsel %vm1295, %v1892, 0
        %v1949 = vsel %vm1295, %v1894, 0
        %v1952 = vsel %vm1295, %v1896, 0
        %v1955 = vsel %vm1295, %v1898, 0
        %v1958 = vsel %vm1295, %v1900, 0
        %v1961 = vsel %vm1295, %v1902, 0
        %v1964 = vsel %vm1295, %v1904, 0
        %v1967 = vsel %vm1295, %v1906, 0
        %v1970 = vsel %vm1295, %v1908, 0
        %v1973 = vsel %vm1295, %v1910, 0
        %v1976 = vsel %vm1295, %v1912, 0
        %v1979 = vsel %vm1295, %v1914, 0
        %v1982 = vsel %vm1295, %v1916, 0
        %v1985 = vsel %vm1295, %v1918, 0
        %v1988 = vsel %vm1295, %v1920, 0
        %v1991 = vsel %vm1295, %v1922, 0
        %v1994 = vsel %vm1295, %v1924, 0
        %v1997 = vsel %vm1295, %v1926, 0
        %v2000 = vsel %vm1368, %v919, 0
        %2002 = vmatprep.subr.bf16.mxu0 0
        %2003 = vmatpush1.bf16.msra.mxu0 0
        %2004 = vmatprep.subr.bf16.mxu0 0
        %2005 = vmatpush1.bf16.msra.mxu0 0
        %2006 = vmatprep.subr.bf16.mxu0 0
        %2007 = vmatpush1.bf16.msra.mxu0 0
        %2008 = vmatprep.subr.bf16.mxu0 0
        %2009 = vmatpush1.bf16.msra.mxu0 0
        %2010 = vmatprep.subr.bf16.mxu0 0
        %2011 = vmatpush1.bf16.msra.mxu0 0
        %2012 = vmatprep.subr.bf16.mxu0 0
        %2013 = vmatpush1.bf16.msra.mxu0 0
        %2014 = vmatprep.subr.bf16.mxu0 0
        %2015 = vmatpush1.bf16.msra.mxu0 0
        %2016 = vmatprep.subr.bf16.mxu0 0
        %2017 = vmatpush1.bf16.msra.mxu0 %v2000
        %2018 = vmatprep.subr.bf16.mxu0 0
        %2019 = vmatpush2.bf16.msra.mxu0 0
        %2020 = vmatprep.subr.bf16.mxu0 0
        %2021 = vmatpush2.bf16.msra.mxu0 0
        %2022 = vmatprep.subr.bf16.mxu0 0
        %2023 = vmatpush2.bf16.msra.mxu0 0
        %2024 = vmatprep.subr.bf16.mxu0 0
        %2025 = vmatpush2.bf16.msra.mxu0 0
        %2026 = vmatprep.subr.bf16.mxu0 0
        %2027 = vmatpush2.bf16.msra.mxu0 0
        %2028 = vmatprep.subr.bf16.mxu0 0
        %2029 = vmatpush2.bf16.msra.mxu0 0
        %2030 = vmatprep.subr.bf16.mxu0 0
        %2031 = vmatpush2.bf16.msra.mxu0 0
        %2032 = vmatprep.subr.bf16.mxu0 0
        %2033 = vmatpush2.bf16.msra.mxu0 0
        %2034 = vmatprep.mubr.bf16.mxu0 0
        %2035 = vmatmul.mubr.bf16.gmra.mxu0 %v1928
        %v2036 = vpop.f32.mrf.mxu0
        %v2037 = vadd.f32 0.0, %v2036
        %v2038 = vpop.f32.mrf.mxu0
        %v2039 = vpop.f32.mrf.mxu0
        %v2040 = vadd.f32 0.0, %v2039
        %v2041 = vpop.f32.mrf.mxu0
        %2042 = vmatprep.mubr.bf16.mxu0 0
        %2043 = vmatmul.mubr.bf16.gmra.mxu0 %v1931
        %v2044 = vpop.f32.mrf.mxu0
        %v2045 = vadd.f32 0.0, %v2044
        %v2046 = vpop.f32.mrf.mxu0
        %v2047 = vpop.f32.mrf.mxu0
        %v2048 = vadd.f32 0.0, %v2047
        %v2049 = vpop.f32.mrf.mxu0
        %2050 = vmatprep.mubr.bf16.mxu0 0
        %2051 = vmatmul.mubr.bf16.gmra.mxu0 %v1934
        %v2052 = vpop.f32.mrf.mxu0
        %v2053 = vadd.f32 0.0, %v2052
        %v2054 = vpop.f32.mrf.mxu0
        %v2055 = vpop.f32.mrf.mxu0
        %v2056 = vadd.f32 0.0, %v2055
        %v2057 = vpop.f32.mrf.mxu0
        %2058 = vmatprep.mubr.bf16.mxu0 0
        %2059 = vmatmul.mubr.bf16.gmra.mxu0 %v1937
        %v2060 = vpop.f32.mrf.mxu0
        %v2061 = vadd.f32 0.0, %v2060
        %v2062 = vpop.f32.mrf.mxu0
        %v2063 = vpop.f32.mrf.mxu0
        %v2064 = vadd.f32 0.0, %v2063
        %v2065 = vpop.f32.mrf.mxu0
        %2066 = vmatprep.mubr.bf16.mxu0 0
        %2067 = vmatmul.mubr.bf16.gmra.mxu0 %v1940
        %v2068 = vpop.f32.mrf.mxu0
        %v2069 = vadd.f32 0.0, %v2068
        %v2070 = vpop.f32.mrf.mxu0
        %v2071 = vpop.f32.mrf.mxu0
        %v2072 = vadd.f32 0.0, %v2071
        %v2073 = vpop.f32.mrf.mxu0
        %2074 = vmatprep.mubr.bf16.mxu0 0
        %2075 = vmatmul.mubr.bf16.gmra.mxu0 %v1943
        %v2076 = vpop.f32.mrf.mxu0
        %v2077 = vadd.f32 0.0, %v2076
        %v2078 = vpop.f32.mrf.mxu0
        %v2079 = vpop.f32.mrf.mxu0
        %v2080 = vadd.f32 0.0, %v2079
        %v2081 = vpop.f32.mrf.mxu0
        %2082 = vmatprep.mubr.bf16.mxu0 0
        %2083 = vmatmul.mubr.bf16.gmra.mxu0 %v1946
        %v2084 = vpop.f32.mrf.mxu0
        %v2085 = vadd.f32 0.0, %v2084
        %v2086 = vpop.f32.mrf.mxu0
        %v2087 = vpop.f32.mrf.mxu0
        %v2088 = vadd.f32 0.0, %v2087
        %v2089 = vpop.f32.mrf.mxu0
        %2090 = vmatprep.mubr.bf16.mxu0 0
        %2091 = vmatmul.mubr.bf16.gmra.mxu0 %v1949
        %v2092 = vpop.f32.mrf.mxu0
        %v2093 = vadd.f32 0.0, %v2092
        %v2094 = vpop.f32.mrf.mxu0
        %v2095 = vpop.f32.mrf.mxu0
        %v2096 = vadd.f32 0.0, %v2095
        %v2097 = vpop.f32.mrf.mxu0
        %2098 = vmatprep.mubr.bf16.mxu0 0
        %2099 = vmatmul.mubr.bf16.gmra.mxu0 %v1952
        %v2100 = vpop.f32.mrf.mxu0
        %v2101 = vadd.f32 0.0, %v2100
        %v2102 = vpop.f32.mrf.mxu0
        %v2103 = vpop.f32.mrf.mxu0
        %v2104 = vadd.f32 0.0, %v2103
        %v2105 = vpop.f32.mrf.mxu0
        %2106 = vmatprep.mubr.bf16.mxu0 0
        %2107 = vmatmul.mubr.bf16.gmra.mxu0 %v1955
        %v2108 = vpop.f32.mrf.mxu0
        %v2109 = vadd.f32 0.0, %v2108
        %v2110 = vpop.f32.mrf.mxu0
        %v2111 = vpop.f32.mrf.mxu0
        %v2112 = vadd.f32 0.0, %v2111
        %v2113 = vpop.f32.mrf.mxu0
        %2114 = vmatprep.mubr.bf16.mxu0 0
        %2115 = vmatmul.mubr.bf16.gmra.mxu0 %v1958
        %v2116 = vpop.f32.mrf.mxu0
        %v2117 = vadd.f32 0.0, %v2116
        %v2118 = vpop.f32.mrf.mxu0
        %v2119 = vpop.f32.mrf.mxu0
        %v2120 = vadd.f32 0.0, %v2119
        %v2121 = vpop.f32.mrf.mxu0
        %2122 = vmatprep.mubr.bf16.mxu0 0
        %2123 = vmatmul.mubr.bf16.gmra.mxu0 %v1961
        %v2124 = vpop.f32.mrf.mxu0
        %v2125 = vadd.f32 0.0, %v2124
        %v2126 = vpop.f32.mrf.mxu0
        %v2127 = vpop.f32.mrf.mxu0
        %v2128 = vadd.f32 0.0, %v2127
        %v2129 = vpop.f32.mrf.mxu0
        %2130 = vmatprep.mubr.bf16.mxu0 0
        %2131 = vmatmul.mubr.bf16.gmra.mxu0 %v1964
        %v2132 = vpop.f32.mrf.mxu0
        %v2133 = vadd.f32 0.0, %v2132
        %v2134 = vpop.f32.mrf.mxu0
        %v2135 = vpop.f32.mrf.mxu0
        %v2136 = vadd.f32 0.0, %v2135
        %v2137 = vpop.f32.mrf.mxu0
        %2138 = vmatprep.mubr.bf16.mxu0 0
        %2139 = vmatmul.mubr.bf16.gmra.mxu0 %v1967
        %v2140 = vpop.f32.mrf.mxu0
        %v2141 = vadd.f32 0.0, %v2140
        %v2142 = vpop.f32.mrf.mxu0
        %v2143 = vpop.f32.mrf.mxu0
        %v2144 = vadd.f32 0.0, %v2143
        %v2145 = vpop.f32.mrf.mxu0
        %2146 = vmatprep.mubr.bf16.mxu0 0
        %2147 = vmatmul.mubr.bf16.gmra.mxu0 %v1970
        %v2148 = vpop.f32.mrf.mxu0
        %v2149 = vadd.f32 0.0, %v2148
        %v2150 = vpop.f32.mrf.mxu0
        %v2151 = vpop.f32.mrf.mxu0
        %v2152 = vadd.f32 0.0, %v2151
        %v2153 = vpop.f32.mrf.mxu0
        %2154 = vmatprep.mubr.bf16.mxu0 0
        %2155 = vmatmul.mubr.bf16.gmra.mxu0 %v1973
        %v2156 = vpop.f32.mrf.mxu0
        %v2157 = vadd.f32 0.0, %v2156
        %v2158 = vpop.f32.mrf.mxu0
        %v2159 = vpop.f32.mrf.mxu0
        %v2160 = vadd.f32 0.0, %v2159
        %v2161 = vpop.f32.mrf.mxu0
        %2162 = vmatprep.mubr.bf16.mxu0 0
        %2163 = vmatmul.mubr.bf16.gmra.mxu0 %v1976
        %v2164 = vpop.f32.mrf.mxu0
        %v2165 = vadd.f32 0.0, %v2164
        %v2166 = vpop.f32.mrf.mxu0
        %v2167 = vpop.f32.mrf.mxu0
        %v2168 = vadd.f32 0.0, %v2167
        %v2169 = vpop.f32.mrf.mxu0
        %2170 = vmatprep.mubr.bf16.mxu0 0
        %2171 = vmatmul.mubr.bf16.gmra.mxu0 %v1979
        %v2172 = vpop.f32.mrf.mxu0
        %v2173 = vadd.f32 0.0, %v2172
        %v2174 = vpop.f32.mrf.mxu0
        %v2175 = vpop.f32.mrf.mxu0
        %v2176 = vadd.f32 0.0, %v2175
        %v2177 = vpop.f32.mrf.mxu0
        %2178 = vmatprep.mubr.bf16.mxu0 0
        %2179 = vmatmul.mubr.bf16.gmra.mxu0 %v1982
        %v2180 = vpop.f32.mrf.mxu0
        %v2181 = vadd.f32 0.0, %v2180
        %v2182 = vpop.f32.mrf.mxu0
        %v2183 = vpop.f32.mrf.mxu0
        %v2184 = vadd.f32 0.0, %v2183
        %v2185 = vpop.f32.mrf.mxu0
        %2186 = vmatprep.mubr.bf16.mxu0 0
        %2187 = vmatmul.mubr.bf16.gmra.mxu0 %v1985
        %v2188 = vpop.f32.mrf.mxu0
        %v2189 = vadd.f32 0.0, %v2188
        %v2190 = vpop.f32.mrf.mxu0
        %v2191 = vpop.f32.mrf.mxu0
        %v2192 = vadd.f32 0.0, %v2191
        %v2193 = vpop.f32.mrf.mxu0
        %2194 = vmatprep.mubr.bf16.mxu0 0
        %2195 = vmatmul.mubr.bf16.gmra.mxu0 %v1988
        %v2196 = vpop.f32.mrf.mxu0
        %v2197 = vadd.f32 0.0, %v2196
        %v2198 = vpop.f32.mrf.mxu0
        %v2199 = vpop.f32.mrf.mxu0
        %v2200 = vadd.f32 0.0, %v2199
        %v2201 = vpop.f32.mrf.mxu0
        %2202 = vmatprep.mubr.bf16.mxu0 0
        %2203 = vmatmul.mubr.bf16.gmra.mxu0 %v1991
        %v2204 = vpop.f32.mrf.mxu0
        %v2205 = vadd.f32 0.0, %v2204
        %v2206 = vpop.f32.mrf.mxu0
        %v2207 = vpop.f32.mrf.mxu0
        %v2208 = vadd.f32 0.0, %v2207
        %v2209 = vpop.f32.mrf.mxu0
        %2210 = vmatprep.mubr.bf16.mxu0 0
        %2211 = vmatmul.mubr.bf16.gmra.mxu0 %v1994
        %v2212 = vpop.f32.mrf.mxu0
        %v2213 = vadd.f32 0.0, %v2212
        %v2214 = vpop.f32.mrf.mxu0
        %v2215 = vpop.f32.mrf.mxu0
        %v2216 = vadd.f32 0.0, %v2215
        %v2217 = vpop.f32.mrf.mxu0
        %2218 = vmatprep.mubr.bf16.mxu0 0
        %2219 = vmatmul.mubr.bf16.gmra.mxu0 %v1997
        %v2220 = vpop.f32.mrf.mxu0
        %v2221 = vadd.f32 0.0, %v2220
        %v2222 = vpop.f32.mrf.mxu0
        %v2223 = vpop.f32.mrf.mxu0
        %v2224 = vadd.f32 0.0, %v2223
        %v2225 = vpop.f32.mrf.mxu0
        %2226 = vdwg.mxu0
        %v2227 = vadd.f32 %v1683, %v2037
        %v2228 = vadd.f32 %v1686, %v2040
        %v2229 = vadd.f32 %v1691, %v2045
        %v2230 = vadd.f32 %v1694, %v2048
        %v2231 = vadd.f32 %v1699, %v2053
        %v2232 = vadd.f32 %v1702, %v2056
        %v2233 = vadd.f32 %v1707, %v2061
        %v2234 = vadd.f32 %v1710, %v2064
        %v2235 = vadd.f32 %v1715, %v2069
        %v2236 = vadd.f32 %v1718, %v2072
        %v2237 = vadd.f32 %v1723, %v2077
        %v2238 = vadd.f32 %v1726, %v2080
        %v2239 = vadd.f32 %v1731, %v2085
        %v2240 = vadd.f32 %v1734, %v2088
        %v2241 = vadd.f32 %v1739, %v2093
        %v2242 = vadd.f32 %v1742, %v2096
        %v2243 = vadd.f32 %v1747, %v2101
        %v2244 = vadd.f32 %v1750, %v2104
        %v2245 = vadd.f32 %v1755, %v2109
        %v2246 = vadd.f32 %v1758, %v2112
        %v2247 = vadd.f32 %v1763, %v2117
        %v2248 = vadd.f32 %v1766, %v2120
        %v2249 = vadd.f32 %v1771, %v2125
        %v2250 = vadd.f32 %v1774, %v2128
        %v2251 = vadd.f32 %v1779, %v2133
        %v2252 = vadd.f32 %v1782, %v2136
        %v2253 = vadd.f32 %v1787, %v2141
        %v2254 = vadd.f32 %v1790, %v2144
        %v2255 = vadd.f32 %v1795, %v2149
        %v2256 = vadd.f32 %v1798, %v2152
        %v2257 = vadd.f32 %v1803, %v2157
        %v2258 = vadd.f32 %v1806, %v2160
        %v2259 = vadd.f32 %v1811, %v2165
        %v2260 = vadd.f32 %v1814, %v2168
        %v2261 = vadd.f32 %v1819, %v2173
        %v2262 = vadd.f32 %v1822, %v2176
        %v2263 = vadd.f32 %v1827, %v2181
        %v2264 = vadd.f32 %v1830, %v2184
        %v2265 = vadd.f32 %v1835, %v2189
        %v2266 = vadd.f32 %v1838, %v2192
        %v2267 = vadd.f32 %v1843, %v2197
        %v2268 = vadd.f32 %v1846, %v2200
        %v2269 = vadd.f32 %v1851, %v2205
        %v2270 = vadd.f32 %v1854, %v2208
        %v2271 = vadd.f32 %v1859, %v2213
        %v2272 = vadd.f32 %v1862, %v2216
        %v2273 = vadd.f32 %v1867, %v2221
        %v2274 = vadd.f32 %v1870, %v2224
        %v2275 = vld [vmem:[#allocation2 + $0xc] sm:$0xf]
        %v2276 = vld [vmem:[#allocation2 + $0x10] sm:$0xf]
        %v2277 = vld [vmem:[#allocation2 + $0x14] sm:$0xf]
        %v2278 = vld [vmem:[#allocation2 + $0x18] sm:$0xf]
        %v2279 = vld [vmem:[#allocation2 + $0x1c] sm:$0xf]
        %v2280 = vld [vmem:[#allocation2 + $0x20] sm:$0xf]
        %v2281 = vld [vmem:[#allocation2 + $0x24] sm:$0xf]
        %v2282 = vld [vmem:[#allocation2 + $0x28] sm:$0xf]
        %v2283 = vld [vmem:[#allocation2 + $0x2c] sm:$0xf]
        %v2284 = vld [vmem:[#allocation2 + $0x30] sm:$0xf]
        %v2285 = vld [vmem:[#allocation2 + $0x34] sm:$0xf]
        %v2286 = vld [vmem:[#allocation2 + $0x38] sm:$0xf]
        %v2287 = vld [vmem:[#allocation2 + $0x3c] sm:$0xf]
        %v2288 = vld [vmem:[#allocation2 + $0x40] sm:$0xf]
        %v2289 = vld [vmem:[#allocation2 + $0x44] sm:$0xf]
        %v2290 = vld [vmem:[#allocation2 + $0x48] sm:$0xf]
        %v2291 = vld [vmem:[#allocation2 + $0x4c] sm:$0xf]
        %v2292 = vld [vmem:[#allocation2 + $0x50] sm:$0xf]
        %v2293 = vld [vmem:[#allocation2 + $0x54] sm:$0xf]
        %v2294 = vld [vmem:[#allocation2 + $0x58] sm:$0xf]
        %v2295 = vld [vmem:[#allocation2 + $0x5c] sm:$0xf]
        %v2296 = vld [vmem:[#allocation2 + $0x60] sm:$0xf]
        %v2297 = vld [vmem:[#allocation2 + $0x64] sm:$0xf]
        %v2298 = vld [vmem:[#allocation2 + $0x68] sm:$0xf]
        %v2299 = vld [vmem:[#allocation2 + $0x6c] sm:$0xf]
        %v2300 = vld [vmem:[#allocation2 + $0x70] sm:$0xf]
        %v2301 = vld [vmem:[#allocation2 + $0x74] sm:$0xf]
        %v2302 = vld [vmem:[#allocation2 + $0x78] sm:$0xf]
        %v2303 = vld [vmem:[#allocation2 + $0x7c] sm:$0xf]
        %v2304 = vld [vmem:[#allocation2 + $0x80] sm:$0xf]
        %v2305 = vld [vmem:[#allocation2 + $0x84] sm:$0xf]
        %v2306 = vld [vmem:[#allocation2 + $0x88] sm:$0xf]
        %v2307 = vld [vmem:[#allocation2 + $0x8c] sm:$0xf]
        %v2308 = vld [vmem:[#allocation2 + $0x90] sm:$0xf]
        %v2309 = vld [vmem:[#allocation2 + $0x94] sm:$0xf]
        %v2310 = vld [vmem:[#allocation2 + $0x98] sm:$0xf]
        %v2311 = vld [vmem:[#allocation2 + $0x9c] sm:$0xf]
        %v2312 = vld [vmem:[#allocation2 + $0xa0] sm:$0xf]
        %v2313 = vld [vmem:[#allocation2 + $0xa4] sm:$0xf]
        %v2314 = vld [vmem:[#allocation2 + $0xa8] sm:$0xf]
        %v2315 = vld [vmem:[#allocation2 + $0xac] sm:$0xf]
        %v2316 = vld [vmem:[#allocation2 + $0xb0] sm:$0xf]
        %v2317 = vld [vmem:[#allocation2 + $0xb4] sm:$0xf]
        %v2318 = vld [vmem:[#allocation2 + $0xb8] sm:$0xf]
        %v2319 = vld [vmem:[#allocation2 + $0xbc] sm:$0xf]
        %v2320 = vld [vmem:[#allocation2 + $0xc0] sm:$0xf]
        %v2321 = vld [vmem:[#allocation2 + $0xc4] sm:$0xf]
        %v2322 = vld [vmem:[#allocation2 + $0xc8] sm:$0xf]
        %v2371 = vunpack.c.l.b16 %v2275
        %v2372 = vunpack.c.l.b16 %v2276
        %v2373 = vunpack.c.l.b16 %v2277
        %v2374 = vunpack.c.l.b16 %v2278
        %v2375 = vunpack.c.l.b16 %v2279
        %v2376 = vunpack.c.l.b16 %v2280
        %v2377 = vunpack.c.l.b16 %v2281
        %v2378 = vunpack.c.l.b16 %v2282
        %v2379 = vunpack.c.l.b16 %v2283
        %v2380 = vunpack.c.l.b16 %v2284
        %v2381 = vunpack.c.l.b16 %v2285
        %v2382 = vunpack.c.l.b16 %v2286
        %v2383 = vunpack.c.l.b16 %v2287
        %v2384 = vunpack.c.l.b16 %v2288
        %v2385 = vunpack.c.l.b16 %v2289
        %v2386 = vunpack.c.l.b16 %v2290
        %v2387 = vunpack.c.l.b16 %v2291
        %v2388 = vunpack.c.l.b16 %v2292
        %v2389 = vunpack.c.l.b16 %v2293
        %v2390 = vunpack.c.l.b16 %v2294
        %v2391 = vunpack.c.l.b16 %v2295
        %v2392 = vunpack.c.l.b16 %v2296
        %v2393 = vunpack.c.l.b16 %v2297
        %v2394 = vunpack.c.l.b16 %v2298
        %v2395 = vunpack.c.l.b16 %v2299
        %v2396 = vunpack.c.l.b16 %v2300
        %v2397 = vunpack.c.l.b16 %v2301
        %v2398 = vunpack.c.l.b16 %v2302
        %v2399 = vunpack.c.l.b16 %v2303
        %v2400 = vunpack.c.l.b16 %v2304
        %v2401 = vunpack.c.l.b16 %v2305
        %v2402 = vunpack.c.l.b16 %v2306
        %v2403 = vunpack.c.l.b16 %v2307
        %v2404 = vunpack.c.l.b16 %v2308
        %v2405 = vunpack.c.l.b16 %v2309
        %v2406 = vunpack.c.l.b16 %v2310
        %v2407 = vunpack.c.l.b16 %v2311
        %v2408 = vunpack.c.l.b16 %v2312
        %v2409 = vunpack.c.l.b16 %v2313
        %v2410 = vunpack.c.l.b16 %v2314
        %v2411 = vunpack.c.l.b16 %v2315
        %v2412 = vunpack.c.l.b16 %v2316
        %v2413 = vunpack.c.l.b16 %v2317
        %v2414 = vunpack.c.l.b16 %v2318
        %v2415 = vunpack.c.l.b16 %v2319
        %v2416 = vunpack.c.l.b16 %v2320
        %v2417 = vunpack.c.l.b16 %v2321
        %v2418 = vunpack.c.l.b16 %v2322
        %v2419 = vpack.c.b16 %v2372, %v2371
        %v2420 = vpack.c.b16 %v2374, %v2373
        %v2421 = vpack.c.b16 %v2376, %v2375
        %v2422 = vpack.c.b16 %v2378, %v2377
        %v2423 = vpack.c.b16 %v2380, %v2379
        %v2424 = vpack.c.b16 %v2382, %v2381
        %v2425 = vpack.c.b16 %v2384, %v2383
        %v2426 = vpack.c.b16 %v2386, %v2385
        %v2427 = vpack.c.b16 %v2388, %v2387
        %v2428 = vpack.c.b16 %v2390, %v2389
        %v2429 = vpack.c.b16 %v2392, %v2391
        %v2430 = vpack.c.b16 %v2394, %v2393
        %v2431 = vpack.c.b16 %v2396, %v2395
        %v2432 = vpack.c.b16 %v2398, %v2397
        %v2433 = vpack.c.b16 %v2400, %v2399
        %v2434 = vpack.c.b16 %v2402, %v2401
        %v2435 = vpack.c.b16 %v2404, %v2403
        %v2436 = vpack.c.b16 %v2406, %v2405
        %v2437 = vpack.c.b16 %v2408, %v2407
        %v2438 = vpack.c.b16 %v2410, %v2409
        %v2439 = vpack.c.b16 %v2412, %v2411
        %v2440 = vpack.c.b16 %v2414, %v2413
        %v2441 = vpack.c.b16 %v2416, %v2415
        %v2442 = vpack.c.b16 %v2418, %v2417
        %v2444 = vsel %vm1295, %v2419, 0
        %v2447 = vsel %vm1295, %v2420, 0
        %v2450 = vsel %vm1295, %v2421, 0
        %v2453 = vsel %vm1295, %v2422, 0
        %v2456 = vsel %vm1295, %v2423, 0
        %v2459 = vsel %vm1295, %v2424, 0
        %v2462 = vsel %vm1295, %v2425, 0
        %v2465 = vsel %vm1295, %v2426, 0
        %v2468 = vsel %vm1295, %v2427, 0
        %v2471 = vsel %vm1295, %v2428, 0
        %v2474 = vsel %vm1295, %v2429, 0
        %v2477 = vsel %vm1295, %v2430, 0
        %v2480 = vsel %vm1295, %v2431, 0
        %v2483 = vsel %vm1295, %v2432, 0
        %v2486 = vsel %vm1295, %v2433, 0
        %v2489 = vsel %vm1295, %v2434, 0
        %v2492 = vsel %vm1295, %v2435, 0
        %v2495 = vsel %vm1295, %v2436, 0
        %v2498 = vsel %vm1295, %v2437, 0
        %v2501 = vsel %vm1295, %v2438, 0
        %v2504 = vsel %vm1295, %v2439, 0
        %v2507 = vsel %vm1295, %v2440, 0
        %v2510 = vsel %vm1295, %v2441, 0
        %v2513 = vsel %vm1295, %v2442, 0
        %v2516 = vsel %vm1368, %v920, 0
        %2518 = vmatprep.subr.bf16.mxu0 0
        %2519 = vmatpush1.bf16.msra.mxu0 0
        %2520 = vmatprep.subr.bf16.mxu0 0
        %2521 = vmatpush1.bf16.msra.mxu0 0
        %2522 = vmatprep.subr.bf16.mxu0 0
        %2523 = vmatpush1.bf16.msra.mxu0 0
        %2524 = vmatprep.subr.bf16.mxu0 0
        %2525 = vmatpush1.bf16.msra.mxu0 0
        %2526 = vmatprep.subr.bf16.mxu0 0
        %2527 = vmatpush1.bf16.msra.mxu0 0
        %2528 = vmatprep.subr.bf16.mxu0 0
        %2529 = vmatpush1.bf16.msra.mxu0 0
        %2530 = vmatprep.subr.bf16.mxu0 0
        %2531 = vmatpush1.bf16.msra.mxu0 0
        %2532 = vmatprep.subr.bf16.mxu0 0
        %2533 = vmatpush1.bf16.msra.mxu0 %v2516
        %2534 = vmatprep.subr.bf16.mxu0 0
        %2535 = vmatpush2.bf16.msra.mxu0 0
        %2536 = vmatprep.subr.bf16.mxu0 0
        %2537 = vmatpush2.bf16.msra.mxu0 0
        %2538 = vmatprep.subr.bf16.mxu0 0
        %2539 = vmatpush2.bf16.msra.mxu0 0
        %2540 = vmatprep.subr.bf16.mxu0 0
        %2541 = vmatpush2.bf16.msra.mxu0 0
        %2542 = vmatprep.subr.bf16.mxu0 0
        %2543 = vmatpush2.bf16.msra.mxu0 0
        %2544 = vmatprep.subr.bf16.mxu0 0
        %2545 = vmatpush2.bf16.msra.mxu0 0
        %2546 = vmatprep.subr.bf16.mxu0 0
        %2547 = vmatpush2.bf16.msra.mxu0 0
        %2548 = vmatprep.subr.bf16.mxu0 0
        %2549 = vmatpush2.bf16.msra.mxu0 0
        %2550 = vmatprep.mubr.bf16.mxu0 0
        %2551 = vmatmul.mubr.bf16.gmra.mxu0 %v2444
        %v2552 = vpop.f32.mrf.mxu0
        %v2553 = vadd.f32 0.0, %v2552
        %v2554 = vpop.f32.mrf.mxu0
        %v2555 = vpop.f32.mrf.mxu0
        %v2556 = vadd.f32 0.0, %v2555
        %v2557 = vpop.f32.mrf.mxu0
        %2558 = vmatprep.mubr.bf16.mxu0 0
        %2559 = vmatmul.mubr.bf16.gmra.mxu0 %v2447
        %v2560 = vpop.f32.mrf.mxu0
        %v2561 = vadd.f32 0.0, %v2560
        %v2562 = vpop.f32.mrf.mxu0
        %v2563 = vpop.f32.mrf.mxu0
        %v2564 = vadd.f32 0.0, %v2563
        %v2565 = vpop.f32.mrf.mxu0
        %2566 = vmatprep.mubr.bf16.mxu0 0
        %2567 = vmatmul.mubr.bf16.gmra.mxu0 %v2450
        %v2568 = vpop.f32.mrf.mxu0
        %v2569 = vadd.f32 0.0, %v2568
        %v2570 = vpop.f32.mrf.mxu0
        %v2571 = vpop.f32.mrf.mxu0
        %v2572 = vadd.f32 0.0, %v2571
        %v2573 = vpop.f32.mrf.mxu0
        %2574 = vmatprep.mubr.bf16.mxu0 0
        %2575 = vmatmul.mubr.bf16.gmra.mxu0 %v2453
        %v2576 = vpop.f32.mrf.mxu0
        %v2577 = vadd.f32 0.0, %v2576
        %v2578 = vpop.f32.mrf.mxu0
        %v2579 = vpop.f32.mrf.mxu0
        %v2580 = vadd.f32 0.0, %v2579
        %v2581 = vpop.f32.mrf.mxu0
        %2582 = vmatprep.mubr.bf16.mxu0 0
        %2583 = vmatmul.mubr.bf16.gmra.mxu0 %v2456
        %v2584 = vpop.f32.mrf.mxu0
        %v2585 = vadd.f32 0.0, %v2584
        %v2586 = vpop.f32.mrf.mxu0
        %v2587 = vpop.f32.mrf.mxu0
        %v2588 = vadd.f32 0.0, %v2587
        %v2589 = vpop.f32.mrf.mxu0
        %2590 = vmatprep.mubr.bf16.mxu0 0
        %2591 = vmatmul.mubr.bf16.gmra.mxu0 %v2459
        %v2592 = vpop.f32.mrf.mxu0
        %v2593 = vadd.f32 0.0, %v2592
        %v2594 = vpop.f32.mrf.mxu0
        %v2595 = vpop.f32.mrf.mxu0
        %v2596 = vadd.f32 0.0, %v2595
        %v2597 = vpop.f32.mrf.mxu0
        %2598 = vmatprep.mubr.bf16.mxu0 0
        %2599 = vmatmul.mubr.bf16.gmra.mxu0 %v2462
        %v2600 = vpop.f32.mrf.mxu0
        %v2601 = vadd.f32 0.0, %v2600
        %v2602 = vpop.f32.mrf.mxu0
        %v2603 = vpop.f32.mrf.mxu0
        %v2604 = vadd.f32 0.0, %v2603
        %v2605 = vpop.f32.mrf.mxu0
        %2606 = vmatprep.mubr.bf16.mxu0 0
        %2607 = vmatmul.mubr.bf16.gmra.mxu0 %v2465
        %v2608 = vpop.f32.mrf.mxu0
        %v2609 = vadd.f32 0.0, %v2608
        %v2610 = vpop.f32.mrf.mxu0
        %v2611 = vpop.f32.mrf.mxu0
        %v2612 = vadd.f32 0.0, %v2611
        %v2613 = vpop.f32.mrf.mxu0
        %2614 = vmatprep.mubr.bf16.mxu0 0
        %2615 = vmatmul.mubr.bf16.gmra.mxu0 %v2468
        %v2616 = vpop.f32.mrf.mxu0
        %v2617 = vadd.f32 0.0, %v2616
        %v2618 = vpop.f32.mrf.mxu0
        %v2619 = vpop.f32.mrf.mxu0
        %v2620 = vadd.f32 0.0, %v2619
        %v2621 = vpop.f32.mrf.mxu0
        %2622 = vmatprep.mubr.bf16.mxu0 0
        %2623 = vmatmul.mubr.bf16.gmra.mxu0 %v2471
        %v2624 = vpop.f32.mrf.mxu0
        %v2625 = vadd.f32 0.0, %v2624
        %v2626 = vpop.f32.mrf.mxu0
        %v2627 = vpop.f32.mrf.mxu0
        %v2628 = vadd.f32 0.0, %v2627
        %v2629 = vpop.f32.mrf.mxu0
        %2630 = vmatprep.mubr.bf16.mxu0 0
        %2631 = vmatmul.mubr.bf16.gmra.mxu0 %v2474
        %v2632 = vpop.f32.mrf.mxu0
        %v2633 = vadd.f32 0.0, %v2632
        %v2634 = vpop.f32.mrf.mxu0
        %v2635 = vpop.f32.mrf.mxu0
        %v2636 = vadd.f32 0.0, %v2635
        %v2637 = vpop.f32.mrf.mxu0
        %2638 = vmatprep.mubr.bf16.mxu0 0
        %2639 = vmatmul.mubr.bf16.gmra.mxu0 %v2477
        %v2640 = vpop.f32.mrf.mxu0
        %v2641 = vadd.f32 0.0, %v2640
        %v2642 = vpop.f32.mrf.mxu0
        %v2643 = vpop.f32.mrf.mxu0
        %v2644 = vadd.f32 0.0, %v2643
        %v2645 = vpop.f32.mrf.mxu0
        %2646 = vmatprep.mubr.bf16.mxu0 0
        %2647 = vmatmul.mubr.bf16.gmra.mxu0 %v2480
        %v2648 = vpop.f32.mrf.mxu0
        %v2649 = vadd.f32 0.0, %v2648
        %v2650 = vpop.f32.mrf.mxu0
        %v2651 = vpop.f32.mrf.mxu0
        %v2652 = vadd.f32 0.0, %v2651
        %v2653 = vpop.f32.mrf.mxu0
        %2654 = vmatprep.mubr.bf16.mxu0 0
        %2655 = vmatmul.mubr.bf16.gmra.mxu0 %v2483
        %v2656 = vpop.f32.mrf.mxu0
        %v2657 = vadd.f32 0.0, %v2656
        %v2658 = vpop.f32.mrf.mxu0
        %v2659 = vpop.f32.mrf.mxu0
        %v2660 = vadd.f32 0.0, %v2659
        %v2661 = vpop.f32.mrf.mxu0
        %2662 = vmatprep.mubr.bf16.mxu0 0
        %2663 = vmatmul.mubr.bf16.gmra.mxu0 %v2486
        %v2664 = vpop.f32.mrf.mxu0
        %v2665 = vadd.f32 0.0, %v2664
        %v2666 = vpop.f32.mrf.mxu0
        %v2667 = vpop.f32.mrf.mxu0
        %v2668 = vadd.f32 0.0, %v2667
        %v2669 = vpop.f32.mrf.mxu0
        %2670 = vmatprep.mubr.bf16.mxu0 0
        %2671 = vmatmul.mubr.bf16.gmra.mxu0 %v2489
        %v2672 = vpop.f32.mrf.mxu0
        %v2673 = vadd.f32 0.0, %v2672
        %v2674 = vpop.f32.mrf.mxu0
        %v2675 = vpop.f32.mrf.mxu0
        %v2676 = vadd.f32 0.0, %v2675
        %v2677 = vpop.f32.mrf.mxu0
        %2678 = vmatprep.mubr.bf16.mxu0 0
        %2679 = vmatmul.mubr.bf16.gmra.mxu0 %v2492
        %v2680 = vpop.f32.mrf.mxu0
        %v2681 = vadd.f32 0.0, %v2680
        %v2682 = vpop.f32.mrf.mxu0
        %v2683 = vpop.f32.mrf.mxu0
        %v2684 = vadd.f32 0.0, %v2683
        %v2685 = vpop.f32.mrf.mxu0
        %2686 = vmatprep.mubr.bf16.mxu0 0
        %2687 = vmatmul.mubr.bf16.gmra.mxu0 %v2495
        %v2688 = vpop.f32.mrf.mxu0
        %v2689 = vadd.f32 0.0, %v2688
        %v2690 = vpop.f32.mrf.mxu0
        %v2691 = vpop.f32.mrf.mxu0
        %v2692 = vadd.f32 0.0, %v2691
        %v2693 = vpop.f32.mrf.mxu0
        %2694 = vmatprep.mubr.bf16.mxu0 0
        %2695 = vmatmul.mubr.bf16.gmra.mxu0 %v2498
        %v2696 = vpop.f32.mrf.mxu0
        %v2697 = vadd.f32 0.0, %v2696
        %v2698 = vpop.f32.mrf.mxu0
        %v2699 = vpop.f32.mrf.mxu0
        %v2700 = vadd.f32 0.0, %v2699
        %v2701 = vpop.f32.mrf.mxu0
        %2702 = vmatprep.mubr.bf16.mxu0 0
        %2703 = vmatmul.mubr.bf16.gmra.mxu0 %v2501
        %v2704 = vpop.f32.mrf.mxu0
        %v2705 = vadd.f32 0.0, %v2704
        %v2706 = vpop.f32.mrf.mxu0
        %v2707 = vpop.f32.mrf.mxu0
        %v2708 = vadd.f32 0.0, %v2707
        %v2709 = vpop.f32.mrf.mxu0
        %2710 = vmatprep.mubr.bf16.mxu0 0
        %2711 = vmatmul.mubr.bf16.gmra.mxu0 %v2504
        %v2712 = vpop.f32.mrf.mxu0
        %v2713 = vadd.f32 0.0, %v2712
        %v2714 = vpop.f32.mrf.mxu0
        %v2715 = vpop.f32.mrf.mxu0
        %v2716 = vadd.f32 0.0, %v2715
        %v2717 = vpop.f32.mrf.mxu0
        %2718 = vmatprep.mubr.bf16.mxu0 0
        %2719 = vmatmul.mubr.bf16.gmra.mxu0 %v2507
        %v2720 = vpop.f32.mrf.mxu0
        %v2721 = vadd.f32 0.0, %v2720
        %v2722 = vpop.f32.mrf.mxu0
        %v2723 = vpop.f32.mrf.mxu0
        %v2724 = vadd.f32 0.0, %v2723
        %v2725 = vpop.f32.mrf.mxu0
        %2726 = vmatprep.mubr.bf16.mxu0 0
        %2727 = vmatmul.mubr.bf16.gmra.mxu0 %v2510
        %v2728 = vpop.f32.mrf.mxu0
        %v2729 = vadd.f32 0.0, %v2728
        %v2730 = vpop.f32.mrf.mxu0
        %v2731 = vpop.f32.mrf.mxu0
        %v2732 = vadd.f32 0.0, %v2731
        %v2733 = vpop.f32.mrf.mxu0
        %2734 = vmatprep.mubr.bf16.mxu0 0
        %2735 = vmatmul.mubr.bf16.gmra.mxu0 %v2513
        %v2736 = vpop.f32.mrf.mxu0
        %v2737 = vadd.f32 0.0, %v2736
        %v2738 = vpop.f32.mrf.mxu0
        %v2739 = vpop.f32.mrf.mxu0
        %v2740 = vadd.f32 0.0, %v2739
        %v2741 = vpop.f32.mrf.mxu0
        %2742 = vdwg.mxu0
        %v2743 = vadd.f32 %v2227, %v2553
        %v2744 = vadd.f32 %v2228, %v2556
        %v2745 = vadd.f32 %v2229, %v2561
        %v2746 = vadd.f32 %v2230, %v2564
        %v2747 = vadd.f32 %v2231, %v2569
        %v2748 = vadd.f32 %v2232, %v2572
        %v2749 = vadd.f32 %v2233, %v2577
        %v2750 = vadd.f32 %v2234, %v2580
        %v2751 = vadd.f32 %v2235, %v2585
        %v2752 = vadd.f32 %v2236, %v2588
        %v2753 = vadd.f32 %v2237, %v2593
        %v2754 = vadd.f32 %v2238, %v2596
        %v2755 = vadd.f32 %v2239, %v2601
        %v2756 = vadd.f32 %v2240, %v2604
        %v2757 = vadd.f32 %v2241, %v2609
        %v2758 = vadd.f32 %v2242, %v2612
        %v2759 = vadd.f32 %v2243, %v2617
        %v2760 = vadd.f32 %v2244, %v2620
        %v2761 = vadd.f32 %v2245, %v2625
        %v2762 = vadd.f32 %v2246, %v2628
        %v2763 = vadd.f32 %v2247, %v2633
        %v2764 = vadd.f32 %v2248, %v2636
        %v2765 = vadd.f32 %v2249, %v2641
        %v2766 = vadd.f32 %v2250, %v2644
        %v2767 = vadd.f32 %v2251, %v2649
        %v2768 = vadd.f32 %v2252, %v2652
        %v2769 = vadd.f32 %v2253, %v2657
        %v2770 = vadd.f32 %v2254, %v2660
        %v2771 = vadd.f32 %v2255, %v2665
        %v2772 = vadd.f32 %v2256, %v2668
        %v2773 = vadd.f32 %v2257, %v2673
        %v2774 = vadd.f32 %v2258, %v2676
        %v2775 = vadd.f32 %v2259, %v2681
        %v2776 = vadd.f32 %v2260, %v2684
        %v2777 = vadd.f32 %v2261, %v2689
        %v2778 = vadd.f32 %v2262, %v2692
        %v2779 = vadd.f32 %v2263, %v2697
        %v2780 = vadd.f32 %v2264, %v2700
        %v2781 = vadd.f32 %v2265, %v2705
        %v2782 = vadd.f32 %v2266, %v2708
        %v2783 = vadd.f32 %v2267, %v2713
        %v2784 = vadd.f32 %v2268, %v2716
        %v2785 = vadd.f32 %v2269, %v2721
        %v2786 = vadd.f32 %v2270, %v2724
        %v2787 = vadd.f32 %v2271, %v2729
        %v2788 = vadd.f32 %v2272, %v2732
        %v2789 = vadd.f32 %v2273, %v2737
        %v2790 = vadd.f32 %v2274, %v2740
        %v2791 = vld [vmem:[#allocation2 + $0xc] sm:$0xf]
        %v2792 = vld [vmem:[#allocation2 + $0x10] sm:$0xf]
        %v2793 = vld [vmem:[#allocation2 + $0x14] sm:$0xf]
        %v2794 = vld [vmem:[#allocation2 + $0x18] sm:$0xf]
        %v2795 = vld [vmem:[#allocation2 + $0x1c] sm:$0xf]
        %v2796 = vld [vmem:[#allocation2 + $0x20] sm:$0xf]
        %v2797 = vld [vmem:[#allocation2 + $0x24] sm:$0xf]
        %v2798 = vld [vmem:[#allocation2 + $0x28] sm:$0xf]
        %v2799 = vld [vmem:[#allocation2 + $0x2c] sm:$0xf]
        %v2800 = vld [vmem:[#allocation2 + $0x30] sm:$0xf]
        %v2801 = vld [vmem:[#allocation2 + $0x34] sm:$0xf]
        %v2802 = vld [vmem:[#allocation2 + $0x38] sm:$0xf]
        %v2803 = vld [vmem:[#allocation2 + $0x3c] sm:$0xf]
        %v2804 = vld [vmem:[#allocation2 + $0x40] sm:$0xf]
        %v2805 = vld [vmem:[#allocation2 + $0x44] sm:$0xf]
        %v2806 = vld [vmem:[#allocation2 + $0x48] sm:$0xf]
        %v2807 = vld [vmem:[#allocation2 + $0x4c] sm:$0xf]
        %v2808 = vld [vmem:[#allocation2 + $0x50] sm:$0xf]
        %v2809 = vld [vmem:[#allocation2 + $0x54] sm:$0xf]
        %v2810 = vld [vmem:[#allocation2 + $0x58] sm:$0xf]
        %v2811 = vld [vmem:[#allocation2 + $0x5c] sm:$0xf]
        %v2812 = vld [vmem:[#allocation2 + $0x60] sm:$0xf]
        %v2813 = vld [vmem:[#allocation2 + $0x64] sm:$0xf]
        %v2814 = vld [vmem:[#allocation2 + $0x68] sm:$0xf]
        %v2815 = vld [vmem:[#allocation2 + $0x6c] sm:$0xf]
        %v2816 = vld [vmem:[#allocation2 + $0x70] sm:$0xf]
        %v2817 = vld [vmem:[#allocation2 + $0x74] sm:$0xf]
        %v2818 = vld [vmem:[#allocation2 + $0x78] sm:$0xf]
        %v2819 = vld [vmem:[#allocation2 + $0x7c] sm:$0xf]
        %v2820 = vld [vmem:[#allocation2 + $0x80] sm:$0xf]
        %v2821 = vld [vmem:[#allocation2 + $0x84] sm:$0xf]
        %v2822 = vld [vmem:[#allocation2 + $0x88] sm:$0xf]
        %v2823 = vld [vmem:[#allocation2 + $0x8c] sm:$0xf]
        %v2824 = vld [vmem:[#allocation2 + $0x90] sm:$0xf]
        %v2825 = vld [vmem:[#allocation2 + $0x94] sm:$0xf]
        %v2826 = vld [vmem:[#allocation2 + $0x98] sm:$0xf]
        %v2827 = vld [vmem:[#allocation2 + $0x9c] sm:$0xf]
        %v2828 = vld [vmem:[#allocation2 + $0xa0] sm:$0xf]
        %v2829 = vld [vmem:[#allocation2 + $0xa4] sm:$0xf]
        %v2830 = vld [vmem:[#allocation2 + $0xa8] sm:$0xf]
        %v2831 = vld [vmem:[#allocation2 + $0xac] sm:$0xf]
        %v2832 = vld [vmem:[#allocation2 + $0xb0] sm:$0xf]
        %v2833 = vld [vmem:[#allocation2 + $0xb4] sm:$0xf]
        %v2834 = vld [vmem:[#allocation2 + $0xb8] sm:$0xf]
        %v2835 = vld [vmem:[#allocation2 + $0xbc] sm:$0xf]
        %v2836 = vld [vmem:[#allocation2 + $0xc0] sm:$0xf]
        %v2837 = vld [vmem:[#allocation2 + $0xc4] sm:$0xf]
        %v2838 = vld [vmem:[#allocation2 + $0xc8] sm:$0xf]
        %v2839 = vld [vmem:[#allocation2 + $0xcc] sm:$0x1]
        %v2889 = vunpack.c.l.b16 %v2791
        %v2890 = vunpack.c.l.b16 %v2792
        %v2891 = vunpack.c.l.b16 %v2793
        %v2892 = vunpack.c.l.b16 %v2794
        %v2893 = vunpack.c.l.b16 %v2795
        %v2894 = vunpack.c.l.b16 %v2796
        %v2895 = vunpack.c.l.b16 %v2797
        %v2896 = vunpack.c.l.b16 %v2798
        %v2897 = vunpack.c.l.b16 %v2799
        %v2898 = vunpack.c.l.b16 %v2800
        %v2899 = vunpack.c.l.b16 %v2801
        %v2900 = vunpack.c.l.b16 %v2802
        %v2901 = vunpack.c.l.b16 %v2803
        %v2902 = vunpack.c.l.b16 %v2804
        %v2903 = vunpack.c.l.b16 %v2805
        %v2904 = vunpack.c.l.b16 %v2806
        %v2905 = vunpack.c.l.b16 %v2807
        %v2906 = vunpack.c.l.b16 %v2808
        %v2907 = vunpack.c.l.b16 %v2809
        %v2908 = vunpack.c.l.b16 %v2810
        %v2909 = vunpack.c.l.b16 %v2811
        %v2910 = vunpack.c.l.b16 %v2812
        %v2911 = vunpack.c.l.b16 %v2813
        %v2912 = vunpack.c.l.b16 %v2814
        %v2913 = vunpack.c.l.b16 %v2815
        %v2914 = vunpack.c.l.b16 %v2816
        %v2915 = vunpack.c.l.b16 %v2817
        %v2916 = vunpack.c.l.b16 %v2818
        %v2917 = vunpack.c.l.b16 %v2819
        %v2918 = vunpack.c.l.b16 %v2820
        %v2919 = vunpack.c.l.b16 %v2821
        %v2920 = vunpack.c.l.b16 %v2822
        %v2921 = vunpack.c.l.b16 %v2823
        %v2922 = vunpack.c.l.b16 %v2824
        %v2923 = vunpack.c.l.b16 %v2825
        %v2924 = vunpack.c.l.b16 %v2826
        %v2925 = vunpack.c.l.b16 %v2827
        %v2926 = vunpack.c.l.b16 %v2828
        %v2927 = vunpack.c.l.b16 %v2829
        %v2928 = vunpack.c.l.b16 %v2830
        %v2929 = vunpack.c.l.b16 %v2831
        %v2930 = vunpack.c.l.b16 %v2832
        %v2931 = vunpack.c.l.b16 %v2833
        %v2932 = vunpack.c.l.b16 %v2834
        %v2933 = vunpack.c.l.b16 %v2835
        %v2934 = vunpack.c.l.b16 %v2836
        %v2935 = vunpack.c.l.b16 %v2837
        %v2936 = vunpack.c.l.b16 %v2838
        %v2937 = vunpack.c.l.b16 %v2839
        %v2938 = vpack.c.b16 %v2890, %v2889
        %v2939 = vpack.c.b16 %v2892, %v2891
        %v2940 = vpack.c.b16 %v2894, %v2893
        %v2941 = vpack.c.b16 %v2896, %v2895
        %v2942 = vpack.c.b16 %v2898, %v2897
        %v2943 = vpack.c.b16 %v2900, %v2899
        %v2944 = vpack.c.b16 %v2902, %v2901
        %v2945 = vpack.c.b16 %v2904, %v2903
        %v2946 = vpack.c.b16 %v2906, %v2905
        %v2947 = vpack.c.b16 %v2908, %v2907
        %v2948 = vpack.c.b16 %v2910, %v2909
        %v2949 = vpack.c.b16 %v2912, %v2911
        %v2950 = vpack.c.b16 %v2914, %v2913
        %v2951 = vpack.c.b16 %v2916, %v2915
        %v2952 = vpack.c.b16 %v2918, %v2917
        %v2953 = vpack.c.b16 %v2920, %v2919
        %v2954 = vpack.c.b16 %v2922, %v2921
        %v2955 = vpack.c.b16 %v2924, %v2923
        %v2956 = vpack.c.b16 %v2926, %v2925
        %v2957 = vpack.c.b16 %v2928, %v2927
        %v2958 = vpack.c.b16 %v2930, %v2929
        %v2959 = vpack.c.b16 %v2932, %v2931
        %v2960 = vpack.c.b16 %v2934, %v2933
        %v2961 = vpack.c.b16 %v2936, %v2935
        %v2962 = vpack.c.b16 %v2937, %v2937
        %v2964 = vshrl.u32 %v2938, 16
        %v2966 = vshll.u32 %v2938, 16
        %v2968 = vrot.slane %v2966, 1
        %v2969 = vor.u32 %v2964, %v2968
        %v2971 = vshll.u32 %v2939, 16
        %v2973 = vrot.slane %v2971, 1
        %v2974 = vsel %vm1098, %v2969, %v2973
        %v2975 = vshrl.u32 %v2939, 16
        %v2977 = vor.u32 %v2975, %v2973
        %v2979 = vshll.u32 %v2940, 16
        %v2981 = vrot.slane %v2979, 1
        %v2982 = vsel %vm1098, %v2977, %v2981
        %v2983 = vshrl.u32 %v2940, 16
        %v2985 = vor.u32 %v2983, %v2981
        %v2987 = vshll.u32 %v2941, 16
        %v2989 = vrot.slane %v2987, 1
        %v2990 = vsel %vm1098, %v2985, %v2989
        %v2991 = vshrl.u32 %v2941, 16
        %v2993 = vor.u32 %v2991, %v2989
        %v2995 = vshll.u32 %v2942, 16
        %v2997 = vrot.slane %v2995, 1
        %v2998 = vsel %vm1098, %v2993, %v2997
        %v2999 = vshrl.u32 %v2942, 16
        %v3001 = vor.u32 %v2999, %v2997
        %v3003 = vshll.u32 %v2943, 16
        %v3005 = vrot.slane %v3003, 1
        %v3006 = vsel %vm1098, %v3001, %v3005
        %v3007 = vshrl.u32 %v2943, 16
        %v3009 = vor.u32 %v3007, %v3005
        %v3011 = vshll.u32 %v2944, 16
        %v3013 = vrot.slane %v3011, 1
        %v3014 = vsel %vm1098, %v3009, %v3013
        %v3015 = vshrl.u32 %v2944, 16
        %v3017 = vor.u32 %v3015, %v3013
        %v3019 = vshll.u32 %v2945, 16
        %v3021 = vrot.slane %v3019, 1
        %v3022 = vsel %vm1098, %v3017, %v3021
        %v3023 = vshrl.u32 %v2945, 16
        %v3025 = vor.u32 %v3023, %v3021
        %v3027 = vshll.u32 %v2946, 16
        %v3029 = vrot.slane %v3027, 1
        %v3030 = vsel %vm1098, %v3025, %v3029
        %v3031 = vshrl.u32 %v2946, 16
        %v3033 = vor.u32 %v3031, %v3029
        %v3035 = vshll.u32 %v2947, 16
        %v3037 = vrot.slane %v3035, 1
        %v3038 = vsel %vm1098, %v3033, %v3037
        %v3039 = vshrl.u32 %v2947, 16
        %v3041 = vor.u32 %v3039, %v3037
        %v3043 = vshll.u32 %v2948, 16
        %v3045 = vrot.slane %v3043, 1
        %v3046 = vsel %vm1098, %v3041, %v3045
        %v3047 = vshrl.u32 %v2948, 16
        %v3049 = vor.u32 %v3047, %v3045
        %v3051 = vshll.u32 %v2949, 16
        %v3053 = vrot.slane %v3051, 1
        %v3054 = vsel %vm1098, %v3049, %v3053
        %v3055 = vshrl.u32 %v2949, 16
        %v3057 = vor.u32 %v3055, %v3053
        %v3059 = vshll.u32 %v2950, 16
        %v3061 = vrot.slane %v3059, 1
        %v3062 = vsel %vm1098, %v3057, %v3061
        %v3063 = vshrl.u32 %v2950, 16
        %v3065 = vor.u32 %v3063, %v3061
        %v3067 = vshll.u32 %v2951, 16
        %v3069 = vrot.slane %v3067, 1
        %v3070 = vsel %vm1098, %v3065, %v3069
        %v3071 = vshrl.u32 %v2951, 16
        %v3073 = vor.u32 %v3071, %v3069
        %v3075 = vshll.u32 %v2952, 16
        %v3077 = vrot.slane %v3075, 1
        %v3078 = vsel %vm1098, %v3073, %v3077
        %v3079 = vshrl.u32 %v2952, 16
        %v3081 = vor.u32 %v3079, %v3077
        %v3083 = vshll.u32 %v2953, 16
        %v3085 = vrot.slane %v3083, 1
        %v3086 = vsel %vm1098, %v3081, %v3085
        %v3087 = vshrl.u32 %v2953, 16
        %v3089 = vor.u32 %v3087, %v3085
        %v3091 = vshll.u32 %v2954, 16
        %v3093 = vrot.slane %v3091, 1
        %v3094 = vsel %vm1098, %v3089, %v3093
        %v3095 = vshrl.u32 %v2954, 16
        %v3097 = vor.u32 %v3095, %v3093
        %v3099 = vshll.u32 %v2955, 16
        %v3101 = vrot.slane %v3099, 1
        %v3102 = vsel %vm1098, %v3097, %v3101
        %v3103 = vshrl.u32 %v2955, 16
        %v3105 = vor.u32 %v3103, %v3101
        %v3107 = vshll.u32 %v2956, 16
        %v3109 = vrot.slane %v3107, 1
        %v3110 = vsel %vm1098, %v3105, %v3109
        %v3111 = vshrl.u32 %v2956, 16
        %v3113 = vor.u32 %v3111, %v3109
        %v3115 = vshll.u32 %v2957, 16
        %v3117 = vrot.slane %v3115, 1
        %v3118 = vsel %vm1098, %v3113, %v3117
        %v3119 = vshrl.u32 %v2957, 16
        %v3121 = vor.u32 %v3119, %v3117
        %v3123 = vshll.u32 %v2958, 16
        %v3125 = vrot.slane %v3123, 1
        %v3126 = vsel %vm1098, %v3121, %v3125
        %v3127 = vshrl.u32 %v2958, 16
        %v3129 = vor.u32 %v3127, %v3125
        %v3131 = vshll.u32 %v2959, 16
        %v3133 = vrot.slane %v3131, 1
        %v3134 = vsel %vm1098, %v3129, %v3133
        %v3135 = vshrl.u32 %v2959, 16
        %v3137 = vor.u32 %v3135, %v3133
        %v3139 = vshll.u32 %v2960, 16
        %v3141 = vrot.slane %v3139, 1
        %v3142 = vsel %vm1098, %v3137, %v3141
        %v3143 = vshrl.u32 %v2960, 16
        %v3145 = vor.u32 %v3143, %v3141
        %v3147 = vshll.u32 %v2961, 16
        %v3149 = vrot.slane %v3147, 1
        %v3150 = vsel %vm1098, %v3145, %v3149
        %v3151 = vshrl.u32 %v2961, 16
        %v3153 = vor.u32 %v3151, %v3149
        %v3155 = vshll.u32 %v2962, 16
        %v3157 = vrot.slane %v3155, 1
        %v3158 = vsel %vm1098, %v3153, %v3157
        %v3160 = vsel %vm1295, %v2974, 0
        %v3163 = vsel %vm1295, %v2982, 0
        %v3166 = vsel %vm1295, %v2990, 0
        %v3169 = vsel %vm1295, %v2998, 0
        %v3172 = vsel %vm1295, %v3006, 0
        %v3175 = vsel %vm1295, %v3014, 0
        %v3178 = vsel %vm1295, %v3022, 0
        %v3181 = vsel %vm1295, %v3030, 0
        %v3184 = vsel %vm1295, %v3038, 0
        %v3187 = vsel %vm1295, %v3046, 0
        %v3190 = vsel %vm1295, %v3054, 0
        %v3193 = vsel %vm1295, %v3062, 0
        %v3196 = vsel %vm1295, %v3070, 0
        %v3199 = vsel %vm1295, %v3078, 0
        %v3202 = vsel %vm1295, %v3086, 0
        %v3205 = vsel %vm1295, %v3094, 0
        %v3208 = vsel %vm1295, %v3102, 0
        %v3211 = vsel %vm1295, %v3110, 0
        %v3214 = vsel %vm1295, %v3118, 0
        %v3217 = vsel %vm1295, %v3126, 0
        %v3220 = vsel %vm1295, %v3134, 0
        %v3223 = vsel %vm1295, %v3142, 0
        %v3226 = vsel %vm1295, %v3150, 0
        %v3229 = vsel %vm1295, %v3158, 0
        %v3232 = vsel %vm1368, %v921, 0
        %3234 = vmatprep.subr.bf16.mxu0 0
        %3235 = vmatpush1.bf16.msra.mxu0 0
        %3236 = vmatprep.subr.bf16.mxu0 0
        %3237 = vmatpush1.bf16.msra.mxu0 0
        %3238 = vmatprep.subr.bf16.mxu0 0
        %3239 = vmatpush1.bf16.msra.mxu0 0
        %3240 = vmatprep.subr.bf16.mxu0 0
        %3241 = vmatpush1.bf16.msra.mxu0 0
        %3242 = vmatprep.subr.bf16.mxu0 0
        %3243 = vmatpush1.bf16.msra.mxu0 0
        %3244 = vmatprep.subr.bf16.mxu0 0
        %3245 = vmatpush1.bf16.msra.mxu0 0
        %3246 = vmatprep.subr.bf16.mxu0 0
        %3247 = vmatpush1.bf16.msra.mxu0 0
        %3248 = vmatprep.subr.bf16.mxu0 0
        %3249 = vmatpush1.bf16.msra.mxu0 %v3232
        %3250 = vmatprep.subr.bf16.mxu0 0
        %3251 = vmatpush2.bf16.msra.mxu0 0
        %3252 = vmatprep.subr.bf16.mxu0 0
        %3253 = vmatpush2.bf16.msra.mxu0 0
        %3254 = vmatprep.subr.bf16.mxu0 0
        %3255 = vmatpush2.bf16.msra.mxu0 0
        %3256 = vmatprep.subr.bf16.mxu0 0
        %3257 = vmatpush2.bf16.msra.mxu0 0
        %3258 = vmatprep.subr.bf16.mxu0 0
        %3259 = vmatpush2.bf16.msra.mxu0 0
        %3260 = vmatprep.subr.bf16.mxu0 0
        %3261 = vmatpush2.bf16.msra.mxu0 0
        %3262 = vmatprep.subr.bf16.mxu0 0
        %3263 = vmatpush2.bf16.msra.mxu0 0
        %3264 = vmatprep.subr.bf16.mxu0 0
        %3265 = vmatpush2.bf16.msra.mxu0 0
        %3266 = vmatprep.mubr.bf16.mxu0 0
        %3267 = vmatmul.mubr.bf16.gmra.mxu0 %v3160
        %v3268 = vpop.f32.mrf.mxu0
        %v3269 = vadd.f32 0.0, %v3268
        %v3270 = vpop.f32.mrf.mxu0
        %v3271 = vpop.f32.mrf.mxu0
        %v3272 = vadd.f32 0.0, %v3271
        %v3273 = vpop.f32.mrf.mxu0
        %3274 = vmatprep.mubr.bf16.mxu0 0
        %3275 = vmatmul.mubr.bf16.gmra.mxu0 %v3163
        %v3276 = vpop.f32.mrf.mxu0
        %v3277 = vadd.f32 0.0, %v3276
        %v3278 = vpop.f32.mrf.mxu0
        %v3279 = vpop.f32.mrf.mxu0
        %v3280 = vadd.f32 0.0, %v3279
        %v3281 = vpop.f32.mrf.mxu0
        %3282 = vmatprep.mubr.bf16.mxu0 0
        %3283 = vmatmul.mubr.bf16.gmra.mxu0 %v3166
        %v3284 = vpop.f32.mrf.mxu0
        %v3285 = vadd.f32 0.0, %v3284
        %v3286 = vpop.f32.mrf.mxu0
        %v3287 = vpop.f32.mrf.mxu0
        %v3288 = vadd.f32 0.0, %v3287
        %v3289 = vpop.f32.mrf.mxu0
        %3290 = vmatprep.mubr.bf16.mxu0 0
        %3291 = vmatmul.mubr.bf16.gmra.mxu0 %v3169
        %v3292 = vpop.f32.mrf.mxu0
        %v3293 = vadd.f32 0.0, %v3292
        %v3294 = vpop.f32.mrf.mxu0
        %v3295 = vpop.f32.mrf.mxu0
        %v3296 = vadd.f32 0.0, %v3295
        %v3297 = vpop.f32.mrf.mxu0
        %3298 = vmatprep.mubr.bf16.mxu0 0
        %3299 = vmatmul.mubr.bf16.gmra.mxu0 %v3172
        %v3300 = vpop.f32.mrf.mxu0
        %v3301 = vadd.f32 0.0, %v3300
        %v3302 = vpop.f32.mrf.mxu0
        %v3303 = vpop.f32.mrf.mxu0
        %v3304 = vadd.f32 0.0, %v3303
        %v3305 = vpop.f32.mrf.mxu0
        %3306 = vmatprep.mubr.bf16.mxu0 0
        %3307 = vmatmul.mubr.bf16.gmra.mxu0 %v3175
        %v3308 = vpop.f32.mrf.mxu0
        %v3309 = vadd.f32 0.0, %v3308
        %v3310 = vpop.f32.mrf.mxu0
        %v3311 = vpop.f32.mrf.mxu0
        %v3312 = vadd.f32 0.0, %v3311
        %v3313 = vpop.f32.mrf.mxu0
        %3314 = vmatprep.mubr.bf16.mxu0 0
        %3315 = vmatmul.mubr.bf16.gmra.mxu0 %v3178
        %v3316 = vpop.f32.mrf.mxu0
        %v3317 = vadd.f32 0.0, %v3316
        %v3318 = vpop.f32.mrf.mxu0
        %v3319 = vpop.f32.mrf.mxu0
        %v3320 = vadd.f32 0.0, %v3319
        %v3321 = vpop.f32.mrf.mxu0
        %3322 = vmatprep.mubr.bf16.mxu0 0
        %3323 = vmatmul.mubr.bf16.gmra.mxu0 %v3181
        %v3324 = vpop.f32.mrf.mxu0
        %v3325 = vadd.f32 0.0, %v3324
        %v3326 = vpop.f32.mrf.mxu0
        %v3327 = vpop.f32.mrf.mxu0
        %v3328 = vadd.f32 0.0, %v3327
        %v3329 = vpop.f32.mrf.mxu0
        %3330 = vmatprep.mubr.bf16.mxu0 0
        %3331 = vmatmul.mubr.bf16.gmra.mxu0 %v3184
        %v3332 = vpop.f32.mrf.mxu0
        %v3333 = vadd.f32 0.0, %v3332
        %v3334 = vpop.f32.mrf.mxu0
        %v3335 = vpop.f32.mrf.mxu0
        %v3336 = vadd.f32 0.0, %v3335
        %v3337 = vpop.f32.mrf.mxu0
        %3338 = vmatprep.mubr.bf16.mxu0 0
        %3339 = vmatmul.mubr.bf16.gmra.mxu0 %v3187
        %v3340 = vpop.f32.mrf.mxu0
        %v3341 = vadd.f32 0.0, %v3340
        %v3342 = vpop.f32.mrf.mxu0
        %v3343 = vpop.f32.mrf.mxu0
        %v3344 = vadd.f32 0.0, %v3343
        %v3345 = vpop.f32.mrf.mxu0
        %3346 = vmatprep.mubr.bf16.mxu0 0
        %3347 = vmatmul.mubr.bf16.gmra.mxu0 %v3190
        %v3348 = vpop.f32.mrf.mxu0
        %v3349 = vadd.f32 0.0, %v3348
        %v3350 = vpop.f32.mrf.mxu0
        %v3351 = vpop.f32.mrf.mxu0
        %v3352 = vadd.f32 0.0, %v3351
        %v3353 = vpop.f32.mrf.mxu0
        %3354 = vmatprep.mubr.bf16.mxu0 0
        %3355 = vmatmul.mubr.bf16.gmra.mxu0 %v3193
        %v3356 = vpop.f32.mrf.mxu0
        %v3357 = vadd.f32 0.0, %v3356
        %v3358 = vpop.f32.mrf.mxu0
        %v3359 = vpop.f32.mrf.mxu0
        %v3360 = vadd.f32 0.0, %v3359
        %v3361 = vpop.f32.mrf.mxu0
        %3362 = vmatprep.mubr.bf16.mxu0 0
        %3363 = vmatmul.mubr.bf16.gmra.mxu0 %v3196
        %v3364 = vpop.f32.mrf.mxu0
        %v3365 = vadd.f32 0.0, %v3364
        %v3366 = vpop.f32.mrf.mxu0
        %v3367 = vpop.f32.mrf.mxu0
        %v3368 = vadd.f32 0.0, %v3367
        %v3369 = vpop.f32.mrf.mxu0
        %3370 = vmatprep.mubr.bf16.mxu0 0
        %3371 = vmatmul.mubr.bf16.gmra.mxu0 %v3199
        %v3372 = vpop.f32.mrf.mxu0
        %v3373 = vadd.f32 0.0, %v3372
        %v3374 = vpop.f32.mrf.mxu0
        %v3375 = vpop.f32.mrf.mxu0
        %v3376 = vadd.f32 0.0, %v3375
        %v3377 = vpop.f32.mrf.mxu0
        %3378 = vmatprep.mubr.bf16.mxu0 0
        %3379 = vmatmul.mubr.bf16.gmra.mxu0 %v3202
        %v3380 = vpop.f32.mrf.mxu0
        %v3381 = vadd.f32 0.0, %v3380
        %v3382 = vpop.f32.mrf.mxu0
        %v3383 = vpop.f32.mrf.mxu0
        %v3384 = vadd.f32 0.0, %v3383
        %v3385 = vpop.f32.mrf.mxu0
        %3386 = vmatprep.mubr.bf16.mxu0 0
        %3387 = vmatmul.mubr.bf16.gmra.mxu0 %v3205
        %v3388 = vpop.f32.mrf.mxu0
        %v3389 = vadd.f32 0.0, %v3388
        %v3390 = vpop.f32.mrf.mxu0
        %v3391 = vpop.f32.mrf.mxu0
        %v3392 = vadd.f32 0.0, %v3391
        %v3393 = vpop.f32.mrf.mxu0
        %3394 = vmatprep.mubr.bf16.mxu0 0
        %3395 = vmatmul.mubr.bf16.gmra.mxu0 %v3208
        %v3396 = vpop.f32.mrf.mxu0
        %v3397 = vadd.f32 0.0, %v3396
        %v3398 = vpop.f32.mrf.mxu0
        %v3399 = vpop.f32.mrf.mxu0
        %v3400 = vadd.f32 0.0, %v3399
        %v3401 = vpop.f32.mrf.mxu0
        %3402 = vmatprep.mubr.bf16.mxu0 0
        %3403 = vmatmul.mubr.bf16.gmra.mxu0 %v3211
        %v3404 = vpop.f32.mrf.mxu0
        %v3405 = vadd.f32 0.0, %v3404
        %v3406 = vpop.f32.mrf.mxu0
        %v3407 = vpop.f32.mrf.mxu0
        %v3408 = vadd.f32 0.0, %v3407
        %v3409 = vpop.f32.mrf.mxu0
        %3410 = vmatprep.mubr.bf16.mxu0 0
        %3411 = vmatmul.mubr.bf16.gmra.mxu0 %v3214
        %v3412 = vpop.f32.mrf.mxu0
        %v3413 = vadd.f32 0.0, %v3412
        %v3414 = vpop.f32.mrf.mxu0
        %v3415 = vpop.f32.mrf.mxu0
        %v3416 = vadd.f32 0.0, %v3415
        %v3417 = vpop.f32.mrf.mxu0
        %3418 = vmatprep.mubr.bf16.mxu0 0
        %3419 = vmatmul.mubr.bf16.gmra.mxu0 %v3217
        %v3420 = vpop.f32.mrf.mxu0
        %v3421 = vadd.f32 0.0, %v3420
        %v3422 = vpop.f32.mrf.mxu0
        %v3423 = vpop.f32.mrf.mxu0
        %v3424 = vadd.f32 0.0, %v3423
        %v3425 = vpop.f32.mrf.mxu0
        %3426 = vmatprep.mubr.bf16.mxu0 0
        %3427 = vmatmul.mubr.bf16.gmra.mxu0 %v3220
        %v3428 = vpop.f32.mrf.mxu0
        %v3429 = vadd.f32 0.0, %v3428
        %v3430 = vpop.f32.mrf.mxu0
        %v3431 = vpop.f32.mrf.mxu0
        %v3432 = vadd.f32 0.0, %v3431
        %v3433 = vpop.f32.mrf.mxu0
        %3434 = vmatprep.mubr.bf16.mxu0 0
        %3435 = vmatmul.mubr.bf16.gmra.mxu0 %v3223
        %v3436 = vpop.f32.mrf.mxu0
        %v3437 = vadd.f32 0.0, %v3436
        %v3438 = vpop.f32.mrf.mxu0
        %v3439 = vpop.f32.mrf.mxu0
        %v3440 = vadd.f32 0.0, %v3439
        %v3441 = vpop.f32.mrf.mxu0
        %3442 = vmatprep.mubr.bf16.mxu0 0
        %3443 = vmatmul.mubr.bf16.gmra.mxu0 %v3226
        %v3444 = vpop.f32.mrf.mxu0
        %v3445 = vadd.f32 0.0, %v3444
        %v3446 = vpop.f32.mrf.mxu0
        %v3447 = vpop.f32.mrf.mxu0
        %v3448 = vadd.f32 0.0, %v3447
        %v3449 = vpop.f32.mrf.mxu0
        %3450 = vmatprep.mubr.bf16.mxu0 0
        %3451 = vmatmul.mubr.bf16.gmra.mxu0 %v3229
        %v3452 = vpop.f32.mrf.mxu0
        %v3453 = vadd.f32 0.0, %v3452
        %v3454 = vpop.f32.mrf.mxu0
        %v3455 = vpop.f32.mrf.mxu0
        %v3456 = vadd.f32 0.0, %v3455
        %v3457 = vpop.f32.mrf.mxu0
        %3458 = vdwg.mxu0
        %v3459 = vadd.f32 %v2743, %v3269
        %v3460 = vadd.f32 %v2744, %v3272
        %v3461 = vadd.f32 %v2745, %v3277
        %v3462 = vadd.f32 %v2746, %v3280
        %v3463 = vadd.f32 %v2747, %v3285
        %v3464 = vadd.f32 %v2748, %v3288
        %v3465 = vadd.f32 %v2749, %v3293
        %v3466 = vadd.f32 %v2750, %v3296
        %v3467 = vadd.f32 %v2751, %v3301
        %v3468 = vadd.f32 %v2752, %v3304
        %v3469 = vadd.f32 %v2753, %v3309
        %v3470 = vadd.f32 %v2754, %v3312
        %v3471 = vadd.f32 %v2755, %v3317
        %v3472 = vadd.f32 %v2756, %v3320
        %v3473 = vadd.f32 %v2757, %v3325
        %v3474 = vadd.f32 %v2758, %v3328
        %v3475 = vadd.f32 %v2759, %v3333
        %v3476 = vadd.f32 %v2760, %v3336
        %v3477 = vadd.f32 %v2761, %v3341
        %v3478 = vadd.f32 %v2762, %v3344
        %v3479 = vadd.f32 %v2763, %v3349
        %v3480 = vadd.f32 %v2764, %v3352
        %v3481 = vadd.f32 %v2765, %v3357
        %v3482 = vadd.f32 %v2766, %v3360
        %v3483 = vadd.f32 %v2767, %v3365
        %v3484 = vadd.f32 %v2768, %v3368
        %v3485 = vadd.f32 %v2769, %v3373
        %v3486 = vadd.f32 %v2770, %v3376
        %v3487 = vadd.f32 %v2771, %v3381
        %v3488 = vadd.f32 %v2772, %v3384
        %v3489 = vadd.f32 %v2773, %v3389
        %v3490 = vadd.f32 %v2774, %v3392
        %v3491 = vadd.f32 %v2775, %v3397
        %v3492 = vadd.f32 %v2776, %v3400
        %v3493 = vadd.f32 %v2777, %v3405
        %v3494 = vadd.f32 %v2778, %v3408
        %v3495 = vadd.f32 %v2779, %v3413
        %v3496 = vadd.f32 %v2780, %v3416
        %v3497 = vadd.f32 %v2781, %v3421
        %v3498 = vadd.f32 %v2782, %v3424
        %v3499 = vadd.f32 %v2783, %v3429
        %v3500 = vadd.f32 %v2784, %v3432
        %v3501 = vadd.f32 %v2785, %v3437
        %v3502 = vadd.f32 %v2786, %v3440
        %v3503 = vadd.f32 %v2787, %v3445
        %v3504 = vadd.f32 %v2788, %v3448
        %v3505 = vadd.f32 %v2789, %v3453
        %v3506 = vadd.f32 %v2790, %v3456
        %v3507 = vld [vmem:[#allocation2 + $0xc] sm:$0xe]
        %v3509 = vunpack.c.l.b16 %v3507
        %v3510 = vpack.c.b16 %v2890, %v3509
        %v3511 = vrot.slane %v3510, 1
        %v3512 = vrot.slane %v2939, 1
        %v3513 = vsel %vm1877, %v3511, %v3512
        %v3514 = vrot.slane %v2940, 1
        %v3515 = vsel %vm1877, %v3512, %v3514
        %v3516 = vrot.slane %v2941, 1
        %v3517 = vsel %vm1877, %v3514, %v3516
        %v3518 = vrot.slane %v2942, 1
        %v3519 = vsel %vm1877, %v3516, %v3518
        %v3520 = vrot.slane %v2943, 1
        %v3521 = vsel %vm1877, %v3518, %v3520
        %v3522 = vrot.slane %v2944, 1
        %v3523 = vsel %vm1877, %v3520, %v3522
        %v3524 = vrot.slane %v2945, 1
        %v3525 = vsel %vm1877, %v3522, %v3524
        %v3526 = vrot.slane %v2946, 1
        %v3527 = vsel %vm1877, %v3524, %v3526
        %v3528 = vrot.slane %v2947, 1
        %v3529 = vsel %vm1877, %v3526, %v3528
        %v3530 = vrot.slane %v2948, 1
        %v3531 = vsel %vm1877, %v3528, %v3530
        %v3532 = vrot.slane %v2949, 1
        %v3533 = vsel %vm1877, %v3530, %v3532
        %v3534 = vrot.slane %v2950, 1
        %v3535 = vsel %vm1877, %v3532, %v3534
        %v3536 = vrot.slane %v2951, 1
        %v3537 = vsel %vm1877, %v3534, %v3536
        %v3538 = vrot.slane %v2952, 1
        %v3539 = vsel %vm1877, %v3536, %v3538
        %v3540 = vrot.slane %v2953, 1
        %v3541 = vsel %vm1877, %v3538, %v3540
        %v3542 = vrot.slane %v2954, 1
        %v3543 = vsel %vm1877, %v3540, %v3542
        %v3544 = vrot.slane %v2955, 1
        %v3545 = vsel %vm1877, %v3542, %v3544
        %v3546 = vrot.slane %v2956, 1
        %v3547 = vsel %vm1877, %v3544, %v3546
        %v3548 = vrot.slane %v2957, 1
        %v3549 = vsel %vm1877, %v3546, %v3548
        %v3550 = vrot.slane %v2958, 1
        %v3551 = vsel %vm1877, %v3548, %v3550
        %v3552 = vrot.slane %v2959, 1
        %v3553 = vsel %vm1877, %v3550, %v3552
        %v3554 = vrot.slane %v2960, 1
        %v3555 = vsel %vm1877, %v3552, %v3554
        %v3556 = vrot.slane %v2961, 1
        %v3557 = vsel %vm1877, %v3554, %v3556
        %v3558 = vrot.slane %v2962, 1
        %v3559 = vsel %vm1877, %v3556, %v3558
        %v3561 = vsel %vm1295, %v3513, 0
        %v3564 = vsel %vm1295, %v3515, 0
        %v3567 = vsel %vm1295, %v3517, 0
        %v3570 = vsel %vm1295, %v3519, 0
        %v3573 = vsel %vm1295, %v3521, 0
        %v3576 = vsel %vm1295, %v3523, 0
        %v3579 = vsel %vm1295, %v3525, 0
        %v3582 = vsel %vm1295, %v3527, 0
        %v3585 = vsel %vm1295, %v3529, 0
        %v3588 = vsel %vm1295, %v3531, 0
        %v3591 = vsel %vm1295, %v3533, 0
        %v3594 = vsel %vm1295, %v3535, 0
        %v3597 = vsel %vm1295, %v3537, 0
        %v3600 = vsel %vm1295, %v3539, 0
        %v3603 = vsel %vm1295, %v3541, 0
        %v3606 = vsel %vm1295, %v3543, 0
        %v3609 = vsel %vm1295, %v3545, 0
        %v3612 = vsel %vm1295, %v3547, 0
        %v3615 = vsel %vm1295, %v3549, 0
        %v3618 = vsel %vm1295, %v3551, 0
        %v3621 = vsel %vm1295, %v3553, 0
        %v3624 = vsel %vm1295, %v3555, 0
        %v3627 = vsel %vm1295, %v3557, 0
        %v3630 = vsel %vm1295, %v3559, 0
        %v3633 = vsel %vm1368, %v922, 0
        %3635 = vmatprep.subr.bf16.mxu0 0
        %3636 = vmatpush1.bf16.msra.mxu0 0
        %3637 = vmatprep.subr.bf16.mxu0 0
        %3638 = vmatpush1.bf16.msra.mxu0 0
        %3639 = vmatprep.subr.bf16.mxu0 0
        %3640 = vmatpush1.bf16.msra.mxu0 0
        %3641 = vmatprep.subr.bf16.mxu0 0
        %3642 = vmatpush1.bf16.msra.mxu0 0
        %3643 = vmatprep.subr.bf16.mxu0 0
        %3644 = vmatpush1.bf16.msra.mxu0 0
        %3645 = vmatprep.subr.bf16.mxu0 0
        %3646 = vmatpush1.bf16.msra.mxu0 0
        %3647 = vmatprep.subr.bf16.mxu0 0
        %3648 = vmatpush1.bf16.msra.mxu0 0
        %3649 = vmatprep.subr.bf16.mxu0 0
        %3650 = vmatpush1.bf16.msra.mxu0 %v3633
        %3651 = vmatprep.subr.bf16.mxu0 0
        %3652 = vmatpush2.bf16.msra.mxu0 0
        %3653 = vmatprep.subr.bf16.mxu0 0
        %3654 = vmatpush2.bf16.msra.mxu0 0
        %3655 = vmatprep.subr.bf16.mxu0 0
        %3656 = vmatpush2.bf16.msra.mxu0 0
        %3657 = vmatprep.subr.bf16.mxu0 0
        %3658 = vmatpush2.bf16.msra.mxu0 0
        %3659 = vmatprep.subr.bf16.mxu0 0
        %3660 = vmatpush2.bf16.msra.mxu0 0
        %3661 = vmatprep.subr.bf16.mxu0 0
        %3662 = vmatpush2.bf16.msra.mxu0 0
        %3663 = vmatprep.subr.bf16.mxu0 0
        %3664 = vmatpush2.bf16.msra.mxu0 0
        %3665 = vmatprep.subr.bf16.mxu0 0
        %3666 = vmatpush2.bf16.msra.mxu0 0
        %3667 = vmatprep.mubr.bf16.mxu0 0
        %3668 = vmatmul.mubr.bf16.gmra.mxu0 %v3561
        %v3669 = vpop.f32.mrf.mxu0
        %v3670 = vadd.f32 0.0, %v3669
        %v3671 = vpop.f32.mrf.mxu0
        %v3672 = vpop.f32.mrf.mxu0
        %v3673 = vadd.f32 0.0, %v3672
        %v3674 = vpop.f32.mrf.mxu0
        %3675 = vmatprep.mubr.bf16.mxu0 0
        %3676 = vmatmul.mubr.bf16.gmra.mxu0 %v3564
        %v3677 = vpop.f32.mrf.mxu0
        %v3678 = vadd.f32 0.0, %v3677
        %v3679 = vpop.f32.mrf.mxu0
        %v3680 = vpop.f32.mrf.mxu0
        %v3681 = vadd.f32 0.0, %v3680
        %v3682 = vpop.f32.mrf.mxu0
        %3683 = vmatprep.mubr.bf16.mxu0 0
        %3684 = vmatmul.mubr.bf16.gmra.mxu0 %v3567
        %v3685 = vpop.f32.mrf.mxu0
        %v3686 = vadd.f32 0.0, %v3685
        %v3687 = vpop.f32.mrf.mxu0
        %v3688 = vpop.f32.mrf.mxu0
        %v3689 = vadd.f32 0.0, %v3688
        %v3690 = vpop.f32.mrf.mxu0
        %3691 = vmatprep.mubr.bf16.mxu0 0
        %3692 = vmatmul.mubr.bf16.gmra.mxu0 %v3570
        %v3693 = vpop.f32.mrf.mxu0
        %v3694 = vadd.f32 0.0, %v3693
        %v3695 = vpop.f32.mrf.mxu0
        %v3696 = vpop.f32.mrf.mxu0
        %v3697 = vadd.f32 0.0, %v3696
        %v3698 = vpop.f32.mrf.mxu0
        %3699 = vmatprep.mubr.bf16.mxu0 0
        %3700 = vmatmul.mubr.bf16.gmra.mxu0 %v3573
        %v3701 = vpop.f32.mrf.mxu0
        %v3702 = vadd.f32 0.0, %v3701
        %v3703 = vpop.f32.mrf.mxu0
        %v3704 = vpop.f32.mrf.mxu0
        %v3705 = vadd.f32 0.0, %v3704
        %v3706 = vpop.f32.mrf.mxu0
        %3707 = vmatprep.mubr.bf16.mxu0 0
        %3708 = vmatmul.mubr.bf16.gmra.mxu0 %v3576
        %v3709 = vpop.f32.mrf.mxu0
        %v3710 = vadd.f32 0.0, %v3709
        %v3711 = vpop.f32.mrf.mxu0
        %v3712 = vpop.f32.mrf.mxu0
        %v3713 = vadd.f32 0.0, %v3712
        %v3714 = vpop.f32.mrf.mxu0
        %3715 = vmatprep.mubr.bf16.mxu0 0
        %3716 = vmatmul.mubr.bf16.gmra.mxu0 %v3579
        %v3717 = vpop.f32.mrf.mxu0
        %v3718 = vadd.f32 0.0, %v3717
        %v3719 = vpop.f32.mrf.mxu0
        %v3720 = vpop.f32.mrf.mxu0
        %v3721 = vadd.f32 0.0, %v3720
        %v3722 = vpop.f32.mrf.mxu0
        %3723 = vmatprep.mubr.bf16.mxu0 0
        %3724 = vmatmul.mubr.bf16.gmra.mxu0 %v3582
        %v3725 = vpop.f32.mrf.mxu0
        %v3726 = vadd.f32 0.0, %v3725
        %v3727 = vpop.f32.mrf.mxu0
        %v3728 = vpop.f32.mrf.mxu0
        %v3729 = vadd.f32 0.0, %v3728
        %v3730 = vpop.f32.mrf.mxu0
        %3731 = vmatprep.mubr.bf16.mxu0 0
        %3732 = vmatmul.mubr.bf16.gmra.mxu0 %v3585
        %v3733 = vpop.f32.mrf.mxu0
        %v3734 = vadd.f32 0.0, %v3733
        %v3735 = vpop.f32.mrf.mxu0
        %v3736 = vpop.f32.mrf.mxu0
        %v3737 = vadd.f32 0.0, %v3736
        %v3738 = vpop.f32.mrf.mxu0
        %3739 = vmatprep.mubr.bf16.mxu0 0
        %3740 = vmatmul.mubr.bf16.gmra.mxu0 %v3588
        %v3741 = vpop.f32.mrf.mxu0
        %v3742 = vadd.f32 0.0, %v3741
        %v3743 = vpop.f32.mrf.mxu0
        %v3744 = vpop.f32.mrf.mxu0
        %v3745 = vadd.f32 0.0, %v3744
        %v3746 = vpop.f32.mrf.mxu0
        %3747 = vmatprep.mubr.bf16.mxu0 0
        %3748 = vmatmul.mubr.bf16.gmra.mxu0 %v3591
        %v3749 = vpop.f32.mrf.mxu0
        %v3750 = vadd.f32 0.0, %v3749
        %v3751 = vpop.f32.mrf.mxu0
        %v3752 = vpop.f32.mrf.mxu0
        %v3753 = vadd.f32 0.0, %v3752
        %v3754 = vpop.f32.mrf.mxu0
        %3755 = vmatprep.mubr.bf16.mxu0 0
        %3756 = vmatmul.mubr.bf16.gmra.mxu0 %v3594
        %v3757 = vpop.f32.mrf.mxu0
        %v3758 = vadd.f32 0.0, %v3757
        %v3759 = vpop.f32.mrf.mxu0
        %v3760 = vpop.f32.mrf.mxu0
        %v3761 = vadd.f32 0.0, %v3760
        %v3762 = vpop.f32.mrf.mxu0
        %3763 = vmatprep.mubr.bf16.mxu0 0
        %3764 = vmatmul.mubr.bf16.gmra.mxu0 %v3597
        %v3765 = vpop.f32.mrf.mxu0
        %v3766 = vadd.f32 0.0, %v3765
        %v3767 = vpop.f32.mrf.mxu0
        %v3768 = vpop.f32.mrf.mxu0
        %v3769 = vadd.f32 0.0, %v3768
        %v3770 = vpop.f32.mrf.mxu0
        %3771 = vmatprep.mubr.bf16.mxu0 0
        %3772 = vmatmul.mubr.bf16.gmra.mxu0 %v3600
        %v3773 = vpop.f32.mrf.mxu0
        %v3774 = vadd.f32 0.0, %v3773
        %v3775 = vpop.f32.mrf.mxu0
        %v3776 = vpop.f32.mrf.mxu0
        %v3777 = vadd.f32 0.0, %v3776
        %v3778 = vpop.f32.mrf.mxu0
        %3779 = vmatprep.mubr.bf16.mxu0 0
        %3780 = vmatmul.mubr.bf16.gmra.mxu0 %v3603
        %v3781 = vpop.f32.mrf.mxu0
        %v3782 = vadd.f32 0.0, %v3781
        %v3783 = vpop.f32.mrf.mxu0
        %v3784 = vpop.f32.mrf.mxu0
        %v3785 = vadd.f32 0.0, %v3784
        %v3786 = vpop.f32.mrf.mxu0
        %3787 = vmatprep.mubr.bf16.mxu0 0
        %3788 = vmatmul.mubr.bf16.gmra.mxu0 %v3606
        %v3789 = vpop.f32.mrf.mxu0
        %v3790 = vadd.f32 0.0, %v3789
        %v3791 = vpop.f32.mrf.mxu0
        %v3792 = vpop.f32.mrf.mxu0
        %v3793 = vadd.f32 0.0, %v3792
        %v3794 = vpop.f32.mrf.mxu0
        %3795 = vmatprep.mubr.bf16.mxu0 0
        %3796 = vmatmul.mubr.bf16.gmra.mxu0 %v3609
        %v3797 = vpop.f32.mrf.mxu0
        %v3798 = vadd.f32 0.0, %v3797
        %v3799 = vpop.f32.mrf.mxu0
        %v3800 = vpop.f32.mrf.mxu0
        %v3801 = vadd.f32 0.0, %v3800
        %v3802 = vpop.f32.mrf.mxu0
        %3803 = vmatprep.mubr.bf16.mxu0 0
        %3804 = vmatmul.mubr.bf16.gmra.mxu0 %v3612
        %v3805 = vpop.f32.mrf.mxu0
        %v3806 = vadd.f32 0.0, %v3805
        %v3807 = vpop.f32.mrf.mxu0
        %v3808 = vpop.f32.mrf.mxu0
        %v3809 = vadd.f32 0.0, %v3808
        %v3810 = vpop.f32.mrf.mxu0
        %3811 = vmatprep.mubr.bf16.mxu0 0
        %3812 = vmatmul.mubr.bf16.gmra.mxu0 %v3615
        %v3813 = vpop.f32.mrf.mxu0
        %v3814 = vadd.f32 0.0, %v3813
        %v3815 = vpop.f32.mrf.mxu0
        %v3816 = vpop.f32.mrf.mxu0
        %v3817 = vadd.f32 0.0, %v3816
        %v3818 = vpop.f32.mrf.mxu0
        %3819 = vmatprep.mubr.bf16.mxu0 0
        %3820 = vmatmul.mubr.bf16.gmra.mxu0 %v3618
        %v3821 = vpop.f32.mrf.mxu0
        %v3822 = vadd.f32 0.0, %v3821
        %v3823 = vpop.f32.mrf.mxu0
        %v3824 = vpop.f32.mrf.mxu0
        %v3825 = vadd.f32 0.0, %v3824
        %v3826 = vpop.f32.mrf.mxu0
        %3827 = vmatprep.mubr.bf16.mxu0 0
        %3828 = vmatmul.mubr.bf16.gmra.mxu0 %v3621
        %v3829 = vpop.f32.mrf.mxu0
        %v3830 = vadd.f32 0.0, %v3829
        %v3831 = vpop.f32.mrf.mxu0
        %v3832 = vpop.f32.mrf.mxu0
        %v3833 = vadd.f32 0.0, %v3832
        %v3834 = vpop.f32.mrf.mxu0
        %3835 = vmatprep.mubr.bf16.mxu0 0
        %3836 = vmatmul.mubr.bf16.gmra.mxu0 %v3624
        %v3837 = vpop.f32.mrf.mxu0
        %v3838 = vadd.f32 0.0, %v3837
        %v3839 = vpop.f32.mrf.mxu0
        %v3840 = vpop.f32.mrf.mxu0
        %v3841 = vadd.f32 0.0, %v3840
        %v3842 = vpop.f32.mrf.mxu0
        %3843 = vmatprep.mubr.bf16.mxu0 0
        %3844 = vmatmul.mubr.bf16.gmra.mxu0 %v3627
        %v3845 = vpop.f32.mrf.mxu0
        %v3846 = vadd.f32 0.0, %v3845
        %v3847 = vpop.f32.mrf.mxu0
        %v3848 = vpop.f32.mrf.mxu0
        %v3849 = vadd.f32 0.0, %v3848
        %v3850 = vpop.f32.mrf.mxu0
        %3851 = vmatprep.mubr.bf16.mxu0 0
        %3852 = vmatmul.mubr.bf16.gmra.mxu0 %v3630
        %v3853 = vpop.f32.mrf.mxu0
        %v3854 = vadd.f32 0.0, %v3853
        %v3855 = vpop.f32.mrf.mxu0
        %v3856 = vpop.f32.mrf.mxu0
        %v3857 = vadd.f32 0.0, %v3856
        %v3858 = vpop.f32.mrf.mxu0
        %3859 = vdwg.mxu0
        %v3860 = vadd.f32 %v3459, %v3670
        %v3861 = vadd.f32 %v3460, %v3673
        %v3862 = vadd.f32 %v3461, %v3678
        %v3863 = vadd.f32 %v3462, %v3681
        %v3864 = vadd.f32 %v3463, %v3686
        %v3865 = vadd.f32 %v3464, %v3689
        %v3866 = vadd.f32 %v3465, %v3694
        %v3867 = vadd.f32 %v3466, %v3697
        %v3868 = vadd.f32 %v3467, %v3702
        %v3869 = vadd.f32 %v3468, %v3705
        %v3870 = vadd.f32 %v3469, %v3710
        %v3871 = vadd.f32 %v3470, %v3713
        %v3872 = vadd.f32 %v3471, %v3718
        %v3873 = vadd.f32 %v3472, %v3721
        %v3874 = vadd.f32 %v3473, %v3726
        %v3875 = vadd.f32 %v3474, %v3729
        %v3876 = vadd.f32 %v3475, %v3734
        %v3877 = vadd.f32 %v3476, %v3737
        %v3878 = vadd.f32 %v3477, %v3742
        %v3879 = vadd.f32 %v3478, %v3745
        %v3880 = vadd.f32 %v3479, %v3750
        %v3881 = vadd.f32 %v3480, %v3753
        %v3882 = vadd.f32 %v3481, %v3758
        %v3883 = vadd.f32 %v3482, %v3761
        %v3884 = vadd.f32 %v3483, %v3766
        %v3885 = vadd.f32 %v3484, %v3769
        %v3886 = vadd.f32 %v3485, %v3774
        %v3887 = vadd.f32 %v3486, %v3777
        %v3888 = vadd.f32 %v3487, %v3782
        %v3889 = vadd.f32 %v3488, %v3785
        %v3890 = vadd.f32 %v3489, %v3790
        %v3891 = vadd.f32 %v3490, %v3793
        %v3892 = vadd.f32 %v3491, %v3798
        %v3893 = vadd.f32 %v3492, %v3801
        %v3894 = vadd.f32 %v3493, %v3806
        %v3895 = vadd.f32 %v3494, %v3809
        %v3896 = vadd.f32 %v3495, %v3814
        %v3897 = vadd.f32 %v3496, %v3817
        %v3898 = vadd.f32 %v3497, %v3822
        %v3899 = vadd.f32 %v3498, %v3825
        %v3900 = vadd.f32 %v3499, %v3830
        %v3901 = vadd.f32 %v3500, %v3833
        %v3902 = vadd.f32 %v3501, %v3838
        %v3903 = vadd.f32 %v3502, %v3841
        %v3904 = vadd.f32 %v3503, %v3846
        %v3905 = vadd.f32 %v3504, %v3849
        %v3906 = vadd.f32 %v3505, %v3854
        %v3907 = vadd.f32 %v3506, %v3857
        %v3908 = vld [vmem:[#allocation2 + $0x18] sm:$0xf]
        %v3909 = vld [vmem:[#allocation2 + $0x1c] sm:$0xf]
        %v3910 = vld [vmem:[#allocation2 + $0x20] sm:$0xf]
        %v3911 = vld [vmem:[#allocation2 + $0x24] sm:$0xf]
        %v3912 = vld [vmem:[#allocation2 + $0x28] sm:$0xf]
        %v3913 = vld [vmem:[#allocation2 + $0x2c] sm:$0xf]
        %v3914 = vld [vmem:[#allocation2 + $0x30] sm:$0xf]
        %v3915 = vld [vmem:[#allocation2 + $0x34] sm:$0xf]
        %v3916 = vld [vmem:[#allocation2 + $0x38] sm:$0xf]
        %v3917 = vld [vmem:[#allocation2 + $0x3c] sm:$0xf]
        %v3918 = vld [vmem:[#allocation2 + $0x40] sm:$0xf]
        %v3919 = vld [vmem:[#allocation2 + $0x44] sm:$0xf]
        %v3920 = vld [vmem:[#allocation2 + $0x48] sm:$0xf]
        %v3921 = vld [vmem:[#allocation2 + $0x4c] sm:$0xf]
        %v3922 = vld [vmem:[#allocation2 + $0x50] sm:$0xf]
        %v3923 = vld [vmem:[#allocation2 + $0x54] sm:$0xf]
        %v3924 = vld [vmem:[#allocation2 + $0x58] sm:$0xf]
        %v3925 = vld [vmem:[#allocation2 + $0x5c] sm:$0xf]
        %v3926 = vld [vmem:[#allocation2 + $0x60] sm:$0xf]
        %v3927 = vld [vmem:[#allocation2 + $0x64] sm:$0xf]
        %v3928 = vld [vmem:[#allocation2 + $0x68] sm:$0xf]
        %v3929 = vld [vmem:[#allocation2 + $0x6c] sm:$0xf]
        %v3930 = vld [vmem:[#allocation2 + $0x70] sm:$0xf]
        %v3931 = vld [vmem:[#allocation2 + $0x74] sm:$0xf]
        %v3932 = vld [vmem:[#allocation2 + $0x78] sm:$0xf]
        %v3933 = vld [vmem:[#allocation2 + $0x7c] sm:$0xf]
        %v3934 = vld [vmem:[#allocation2 + $0x80] sm:$0xf]
        %v3935 = vld [vmem:[#allocation2 + $0x84] sm:$0xf]
        %v3936 = vld [vmem:[#allocation2 + $0x88] sm:$0xf]
        %v3937 = vld [vmem:[#allocation2 + $0x8c] sm:$0xf]
        %v3938 = vld [vmem:[#allocation2 + $0x90] sm:$0xf]
        %v3939 = vld [vmem:[#allocation2 + $0x94] sm:$0xf]
        %v3940 = vld [vmem:[#allocation2 + $0x98] sm:$0xf]
        %v3941 = vld [vmem:[#allocation2 + $0x9c] sm:$0xf]
        %v3942 = vld [vmem:[#allocation2 + $0xa0] sm:$0xf]
        %v3943 = vld [vmem:[#allocation2 + $0xa4] sm:$0xf]
        %v3944 = vld [vmem:[#allocation2 + $0xa8] sm:$0xf]
        %v3945 = vld [vmem:[#allocation2 + $0xac] sm:$0xf]
        %v3946 = vld [vmem:[#allocation2 + $0xb0] sm:$0xf]
        %v3947 = vld [vmem:[#allocation2 + $0xb4] sm:$0xf]
        %v3948 = vld [vmem:[#allocation2 + $0xb8] sm:$0xf]
        %v3949 = vld [vmem:[#allocation2 + $0xbc] sm:$0xf]
        %v3950 = vld [vmem:[#allocation2 + $0xc0] sm:$0xf]
        %v3951 = vld [vmem:[#allocation2 + $0xc4] sm:$0xf]
        %v3952 = vld [vmem:[#allocation2 + $0xc8] sm:$0xf]
        %v3953 = vld [vmem:[#allocation2 + $0xcc] sm:$0xf]
        %v3954 = vld [vmem:[#allocation2 + $0xd0] sm:$0xf]
        %v3955 = vld [vmem:[#allocation2 + $0xd4] sm:$0xf]
        %v4004 = vunpack.c.l.b16 %v3908
        %v4005 = vunpack.c.l.b16 %v3909
        %v4006 = vunpack.c.l.b16 %v3910
        %v4007 = vunpack.c.l.b16 %v3911
        %v4008 = vunpack.c.l.b16 %v3912
        %v4009 = vunpack.c.l.b16 %v3913
        %v4010 = vunpack.c.l.b16 %v3914
        %v4011 = vunpack.c.l.b16 %v3915
        %v4012 = vunpack.c.l.b16 %v3916
        %v4013 = vunpack.c.l.b16 %v3917
        %v4014 = vunpack.c.l.b16 %v3918
        %v4015 = vunpack.c.l.b16 %v3919
        %v4016 = vunpack.c.l.b16 %v3920
        %v4017 = vunpack.c.l.b16 %v3921
        %v4018 = vunpack.c.l.b16 %v3922
        %v4019 = vunpack.c.l.b16 %v3923
        %v4020 = vunpack.c.l.b16 %v3924
        %v4021 = vunpack.c.l.b16 %v3925
        %v4022 = vunpack.c.l.b16 %v3926
        %v4023 = vunpack.c.l.b16 %v3927
        %v4024 = vunpack.c.l.b16 %v3928
        %v4025 = vunpack.c.l.b16 %v3929
        %v4026 = vunpack.c.l.b16 %v3930
        %v4027 = vunpack.c.l.b16 %v3931
        %v4028 = vunpack.c.l.b16 %v3932
        %v4029 = vunpack.c.l.b16 %v3933
        %v4030 = vunpack.c.l.b16 %v3934
        %v4031 = vunpack.c.l.b16 %v3935
        %v4032 = vunpack.c.l.b16 %v3936
        %v4033 = vunpack.c.l.b16 %v3937
        %v4034 = vunpack.c.l.b16 %v3938
        %v4035 = vunpack.c.l.b16 %v3939
        %v4036 = vunpack.c.l.b16 %v3940
        %v4037 = vunpack.c.l.b16 %v3941
        %v4038 = vunpack.c.l.b16 %v3942
        %v4039 = vunpack.c.l.b16 %v3943
        %v4040 = vunpack.c.l.b16 %v3944
        %v4041 = vunpack.c.l.b16 %v3945
        %v4042 = vunpack.c.l.b16 %v3946
        %v4043 = vunpack.c.l.b16 %v3947
        %v4044 = vunpack.c.l.b16 %v3948
        %v4045 = vunpack.c.l.b16 %v3949
        %v4046 = vunpack.c.l.b16 %v3950
        %v4047 = vunpack.c.l.b16 %v3951
        %v4048 = vunpack.c.l.b16 %v3952
        %v4049 = vunpack.c.l.b16 %v3953
        %v4050 = vunpack.c.l.b16 %v3954
        %v4051 = vunpack.c.l.b16 %v3955
        %v4052 = vpack.c.b16 %v4005, %v4004
        %v4053 = vpack.c.b16 %v4007, %v4006
        %v4054 = vpack.c.b16 %v4009, %v4008
        %v4055 = vpack.c.b16 %v4011, %v4010
        %v4056 = vpack.c.b16 %v4013, %v4012
        %v4057 = vpack.c.b16 %v4015, %v4014
        %v4058 = vpack.c.b16 %v4017, %v4016
        %v4059 = vpack.c.b16 %v4019, %v4018
        %v4060 = vpack.c.b16 %v4021, %v4020
        %v4061 = vpack.c.b16 %v4023, %v4022
        %v4062 = vpack.c.b16 %v4025, %v4024
        %v4063 = vpack.c.b16 %v4027, %v4026
        %v4064 = vpack.c.b16 %v4029, %v4028
        %v4065 = vpack.c.b16 %v4031, %v4030
        %v4066 = vpack.c.b16 %v4033, %v4032
        %v4067 = vpack.c.b16 %v4035, %v4034
        %v4068 = vpack.c.b16 %v4037, %v4036
        %v4069 = vpack.c.b16 %v4039, %v4038
        %v4070 = vpack.c.b16 %v4041, %v4040
        %v4071 = vpack.c.b16 %v4043, %v4042
        %v4072 = vpack.c.b16 %v4045, %v4044
        %v4073 = vpack.c.b16 %v4047, %v4046
        %v4074 = vpack.c.b16 %v4049, %v4048
        %v4075 = vpack.c.b16 %v4051, %v4050
        %v4077 = vsel %vm1295, %v4052, 0
        %v4080 = vsel %vm1295, %v4053, 0
        %v4083 = vsel %vm1295, %v4054, 0
        %v4086 = vsel %vm1295, %v4055, 0
        %v4089 = vsel %vm1295, %v4056, 0
        %v4092 = vsel %vm1295, %v4057, 0
        %v4095 = vsel %vm1295, %v4058, 0
        %v4098 = vsel %vm1295, %v4059, 0
        %v4101 = vsel %vm1295, %v4060, 0
        %v4104 = vsel %vm1295, %v4061, 0
        %v4107 = vsel %vm1295, %v4062, 0
        %v4110 = vsel %vm1295, %v4063, 0
        %v4113 = vsel %vm1295, %v4064, 0
        %v4116 = vsel %vm1295, %v4065, 0
        %v4119 = vsel %vm1295, %v4066, 0
        %v4122 = vsel %vm1295, %v4067, 0
        %v4125 = vsel %vm1295, %v4068, 0
        %v4128 = vsel %vm1295, %v4069, 0
        %v4131 = vsel %vm1295, %v4070, 0
        %v4134 = vsel %vm1295, %v4071, 0
        %v4137 = vsel %vm1295, %v4072, 0
        %v4140 = vsel %vm1295, %v4073, 0
        %v4143 = vsel %vm1295, %v4074, 0
        %v4146 = vsel %vm1295, %v4075, 0
        %v4149 = vsel %vm1368, %v923, 0
        %4151 = vmatprep.subr.bf16.mxu0 0
        %4152 = vmatpush1.bf16.msra.mxu0 0
        %4153 = vmatprep.subr.bf16.mxu0 0
        %4154 = vmatpush1.bf16.msra.mxu0 0
        %4155 = vmatprep.subr.bf16.mxu0 0
        %4156 = vmatpush1.bf16.msra.mxu0 0
        %4157 = vmatprep.subr.bf16.mxu0 0
        %4158 = vmatpush1.bf16.msra.mxu0 0
        %4159 = vmatprep.subr.bf16.mxu0 0
        %4160 = vmatpush1.bf16.msra.mxu0 0
        %4161 = vmatprep.subr.bf16.mxu0 0
        %4162 = vmatpush1.bf16.msra.mxu0 0
        %4163 = vmatprep.subr.bf16.mxu0 0
        %4164 = vmatpush1.bf16.msra.mxu0 0
        %4165 = vmatprep.subr.bf16.mxu0 0
        %4166 = vmatpush1.bf16.msra.mxu0 %v4149
        %4167 = vmatprep.subr.bf16.mxu0 0
        %4168 = vmatpush2.bf16.msra.mxu0 0
        %4169 = vmatprep.subr.bf16.mxu0 0
        %4170 = vmatpush2.bf16.msra.mxu0 0
        %4171 = vmatprep.subr.bf16.mxu0 0
        %4172 = vmatpush2.bf16.msra.mxu0 0
        %4173 = vmatprep.subr.bf16.mxu0 0
        %4174 = vmatpush2.bf16.msra.mxu0 0
        %4175 = vmatprep.subr.bf16.mxu0 0
        %4176 = vmatpush2.bf16.msra.mxu0 0
        %4177 = vmatprep.subr.bf16.mxu0 0
        %4178 = vmatpush2.bf16.msra.mxu0 0
        %4179 = vmatprep.subr.bf16.mxu0 0
        %4180 = vmatpush2.bf16.msra.mxu0 0
        %4181 = vmatprep.subr.bf16.mxu0 0
        %4182 = vmatpush2.bf16.msra.mxu0 0
        %4183 = vmatprep.mubr.bf16.mxu0 0
        %4184 = vmatmul.mubr.bf16.gmra.mxu0 %v4077
        %v4185 = vpop.f32.mrf.mxu0
        %v4186 = vadd.f32 0.0, %v4185
        %v4187 = vpop.f32.mrf.mxu0
        %v4188 = vpop.f32.mrf.mxu0
        %v4189 = vadd.f32 0.0, %v4188
        %v4190 = vpop.f32.mrf.mxu0
        %4191 = vmatprep.mubr.bf16.mxu0 0
        %4192 = vmatmul.mubr.bf16.gmra.mxu0 %v4080
        %v4193 = vpop.f32.mrf.mxu0
        %v4194 = vadd.f32 0.0, %v4193
        %v4195 = vpop.f32.mrf.mxu0
        %v4196 = vpop.f32.mrf.mxu0
        %v4197 = vadd.f32 0.0, %v4196
        %v4198 = vpop.f32.mrf.mxu0
        %4199 = vmatprep.mubr.bf16.mxu0 0
        %4200 = vmatmul.mubr.bf16.gmra.mxu0 %v4083
        %v4201 = vpop.f32.mrf.mxu0
        %v4202 = vadd.f32 0.0, %v4201
        %v4203 = vpop.f32.mrf.mxu0
        %v4204 = vpop.f32.mrf.mxu0
        %v4205 = vadd.f32 0.0, %v4204
        %v4206 = vpop.f32.mrf.mxu0
        %4207 = vmatprep.mubr.bf16.mxu0 0
        %4208 = vmatmul.mubr.bf16.gmra.mxu0 %v4086
        %v4209 = vpop.f32.mrf.mxu0
        %v4210 = vadd.f32 0.0, %v4209
        %v4211 = vpop.f32.mrf.mxu0
        %v4212 = vpop.f32.mrf.mxu0
        %v4213 = vadd.f32 0.0, %v4212
        %v4214 = vpop.f32.mrf.mxu0
        %4215 = vmatprep.mubr.bf16.mxu0 0
        %4216 = vmatmul.mubr.bf16.gmra.mxu0 %v4089
        %v4217 = vpop.f32.mrf.mxu0
        %v4218 = vadd.f32 0.0, %v4217
        %v4219 = vpop.f32.mrf.mxu0
        %v4220 = vpop.f32.mrf.mxu0
        %v4221 = vadd.f32 0.0, %v4220
        %v4222 = vpop.f32.mrf.mxu0
        %4223 = vmatprep.mubr.bf16.mxu0 0
        %4224 = vmatmul.mubr.bf16.gmra.mxu0 %v4092
        %v4225 = vpop.f32.mrf.mxu0
        %v4226 = vadd.f32 0.0, %v4225
        %v4227 = vpop.f32.mrf.mxu0
        %v4228 = vpop.f32.mrf.mxu0
        %v4229 = vadd.f32 0.0, %v4228
        %v4230 = vpop.f32.mrf.mxu0
        %4231 = vmatprep.mubr.bf16.mxu0 0
        %4232 = vmatmul.mubr.bf16.gmra.mxu0 %v4095
        %v4233 = vpop.f32.mrf.mxu0
        %v4234 = vadd.f32 0.0, %v4233
        %v4235 = vpop.f32.mrf.mxu0
        %v4236 = vpop.f32.mrf.mxu0
        %v4237 = vadd.f32 0.0, %v4236
        %v4238 = vpop.f32.mrf.mxu0
        %4239 = vmatprep.mubr.bf16.mxu0 0
        %4240 = vmatmul.mubr.bf16.gmra.mxu0 %v4098
        %v4241 = vpop.f32.mrf.mxu0
        %v4242 = vadd.f32 0.0, %v4241
        %v4243 = vpop.f32.mrf.mxu0
        %v4244 = vpop.f32.mrf.mxu0
        %v4245 = vadd.f32 0.0, %v4244
        %v4246 = vpop.f32.mrf.mxu0
        %4247 = vmatprep.mubr.bf16.mxu0 0
        %4248 = vmatmul.mubr.bf16.gmra.mxu0 %v4101
        %v4249 = vpop.f32.mrf.mxu0
        %v4250 = vadd.f32 0.0, %v4249
        %v4251 = vpop.f32.mrf.mxu0
        %v4252 = vpop.f32.mrf.mxu0
        %v4253 = vadd.f32 0.0, %v4252
        %v4254 = vpop.f32.mrf.mxu0
        %4255 = vmatprep.mubr.bf16.mxu0 0
        %4256 = vmatmul.mubr.bf16.gmra.mxu0 %v4104
        %v4257 = vpop.f32.mrf.mxu0
        %v4258 = vadd.f32 0.0, %v4257
        %v4259 = vpop.f32.mrf.mxu0
        %v4260 = vpop.f32.mrf.mxu0
        %v4261 = vadd.f32 0.0, %v4260
        %v4262 = vpop.f32.mrf.mxu0
        %4263 = vmatprep.mubr.bf16.mxu0 0
        %4264 = vmatmul.mubr.bf16.gmra.mxu0 %v4107
        %v4265 = vpop.f32.mrf.mxu0
        %v4266 = vadd.f32 0.0, %v4265
        %v4267 = vpop.f32.mrf.mxu0
        %v4268 = vpop.f32.mrf.mxu0
        %v4269 = vadd.f32 0.0, %v4268
        %v4270 = vpop.f32.mrf.mxu0
        %4271 = vmatprep.mubr.bf16.mxu0 0
        %4272 = vmatmul.mubr.bf16.gmra.mxu0 %v4110
        %v4273 = vpop.f32.mrf.mxu0
        %v4274 = vadd.f32 0.0, %v4273
        %v4275 = vpop.f32.mrf.mxu0
        %v4276 = vpop.f32.mrf.mxu0
        %v4277 = vadd.f32 0.0, %v4276
        %v4278 = vpop.f32.mrf.mxu0
        %4279 = vmatprep.mubr.bf16.mxu0 0
        %4280 = vmatmul.mubr.bf16.gmra.mxu0 %v4113
        %v4281 = vpop.f32.mrf.mxu0
        %v4282 = vadd.f32 0.0, %v4281
        %v4283 = vpop.f32.mrf.mxu0
        %v4284 = vpop.f32.mrf.mxu0
        %v4285 = vadd.f32 0.0, %v4284
        %v4286 = vpop.f32.mrf.mxu0
        %4287 = vmatprep.mubr.bf16.mxu0 0
        %4288 = vmatmul.mubr.bf16.gmra.mxu0 %v4116
        %v4289 = vpop.f32.mrf.mxu0
        %v4290 = vadd.f32 0.0, %v4289
        %v4291 = vpop.f32.mrf.mxu0
        %v4292 = vpop.f32.mrf.mxu0
        %v4293 = vadd.f32 0.0, %v4292
        %v4294 = vpop.f32.mrf.mxu0
        %4295 = vmatprep.mubr.bf16.mxu0 0
        %4296 = vmatmul.mubr.bf16.gmra.mxu0 %v4119
        %v4297 = vpop.f32.mrf.mxu0
        %v4298 = vadd.f32 0.0, %v4297
        %v4299 = vpop.f32.mrf.mxu0
        %v4300 = vpop.f32.mrf.mxu0
        %v4301 = vadd.f32 0.0, %v4300
        %v4302 = vpop.f32.mrf.mxu0
        %4303 = vmatprep.mubr.bf16.mxu0 0
        %4304 = vmatmul.mubr.bf16.gmra.mxu0 %v4122
        %v4305 = vpop.f32.mrf.mxu0
        %v4306 = vadd.f32 0.0, %v4305
        %v4307 = vpop.f32.mrf.mxu0
        %v4308 = vpop.f32.mrf.mxu0
        %v4309 = vadd.f32 0.0, %v4308
        %v4310 = vpop.f32.mrf.mxu0
        %4311 = vmatprep.mubr.bf16.mxu0 0
        %4312 = vmatmul.mubr.bf16.gmra.mxu0 %v4125
        %v4313 = vpop.f32.mrf.mxu0
        %v4314 = vadd.f32 0.0, %v4313
        %v4315 = vpop.f32.mrf.mxu0
        %v4316 = vpop.f32.mrf.mxu0
        %v4317 = vadd.f32 0.0, %v4316
        %v4318 = vpop.f32.mrf.mxu0
        %4319 = vmatprep.mubr.bf16.mxu0 0
        %4320 = vmatmul.mubr.bf16.gmra.mxu0 %v4128
        %v4321 = vpop.f32.mrf.mxu0
        %v4322 = vadd.f32 0.0, %v4321
        %v4323 = vpop.f32.mrf.mxu0
        %v4324 = vpop.f32.mrf.mxu0
        %v4325 = vadd.f32 0.0, %v4324
        %v4326 = vpop.f32.mrf.mxu0
        %4327 = vmatprep.mubr.bf16.mxu0 0
        %4328 = vmatmul.mubr.bf16.gmra.mxu0 %v4131
        %v4329 = vpop.f32.mrf.mxu0
        %v4330 = vadd.f32 0.0, %v4329
        %v4331 = vpop.f32.mrf.mxu0
        %v4332 = vpop.f32.mrf.mxu0
        %v4333 = vadd.f32 0.0, %v4332
        %v4334 = vpop.f32.mrf.mxu0
        %4335 = vmatprep.mubr.bf16.mxu0 0
        %4336 = vmatmul.mubr.bf16.gmra.mxu0 %v4134
        %v4337 = vpop.f32.mrf.mxu0
        %v4338 = vadd.f32 0.0, %v4337
        %v4339 = vpop.f32.mrf.mxu0
        %v4340 = vpop.f32.mrf.mxu0
        %v4341 = vadd.f32 0.0, %v4340
        %v4342 = vpop.f32.mrf.mxu0
        %4343 = vmatprep.mubr.bf16.mxu0 0
        %4344 = vmatmul.mubr.bf16.gmra.mxu0 %v4137
        %v4345 = vpop.f32.mrf.mxu0
        %v4346 = vadd.f32 0.0, %v4345
        %v4347 = vpop.f32.mrf.mxu0
        %v4348 = vpop.f32.mrf.mxu0
        %v4349 = vadd.f32 0.0, %v4348
        %v4350 = vpop.f32.mrf.mxu0
        %4351 = vmatprep.mubr.bf16.mxu0 0
        %4352 = vmatmul.mubr.bf16.gmra.mxu0 %v4140
        %v4353 = vpop.f32.mrf.mxu0
        %v4354 = vadd.f32 0.0, %v4353
        %v4355 = vpop.f32.mrf.mxu0
        %v4356 = vpop.f32.mrf.mxu0
        %v4357 = vadd.f32 0.0, %v4356
        %v4358 = vpop.f32.mrf.mxu0
        %4359 = vmatprep.mubr.bf16.mxu0 0
        %4360 = vmatmul.mubr.bf16.gmra.mxu0 %v4143
        %v4361 = vpop.f32.mrf.mxu0
        %v4362 = vadd.f32 0.0, %v4361
        %v4363 = vpop.f32.mrf.mxu0
        %v4364 = vpop.f32.mrf.mxu0
        %v4365 = vadd.f32 0.0, %v4364
        %v4366 = vpop.f32.mrf.mxu0
        %4367 = vmatprep.mubr.bf16.mxu0 0
        %4368 = vmatmul.mubr.bf16.gmra.mxu0 %v4146
        %v4369 = vpop.f32.mrf.mxu0
        %v4370 = vadd.f32 0.0, %v4369
        %v4371 = vpop.f32.mrf.mxu0
        %v4372 = vpop.f32.mrf.mxu0
        %v4373 = vadd.f32 0.0, %v4372
        %v4374 = vpop.f32.mrf.mxu0
        %4375 = vdwg.mxu0
        %v4376 = vadd.f32 %v3860, %v4186
        %v4377 = vadd.f32 %v3861, %v4189
        %v4378 = vadd.f32 %v3862, %v4194
        %v4379 = vadd.f32 %v3863, %v4197
        %v4380 = vadd.f32 %v3864, %v4202
        %v4381 = vadd.f32 %v3865, %v4205
        %v4382 = vadd.f32 %v3866, %v4210
        %v4383 = vadd.f32 %v3867, %v4213
        %v4384 = vadd.f32 %v3868, %v4218
        %v4385 = vadd.f32 %v3869, %v4221
        %v4386 = vadd.f32 %v3870, %v4226
        %v4387 = vadd.f32 %v3871, %v4229
        %v4388 = vadd.f32 %v3872, %v4234
        %v4389 = vadd.f32 %v3873, %v4237
        %v4390 = vadd.f32 %v3874, %v4242
        %v4391 = vadd.f32 %v3875, %v4245
        %v4392 = vadd.f32 %v3876, %v4250
        %v4393 = vadd.f32 %v3877, %v4253
        %v4394 = vadd.f32 %v3878, %v4258
        %v4395 = vadd.f32 %v3879, %v4261
        %v4396 = vadd.f32 %v3880, %v4266
        %v4397 = vadd.f32 %v3881, %v4269
        %v4398 = vadd.f32 %v3882, %v4274
        %v4399 = vadd.f32 %v3883, %v4277
        %v4400 = vadd.f32 %v3884, %v4282
        %v4401 = vadd.f32 %v3885, %v4285
        %v4402 = vadd.f32 %v3886, %v4290
        %v4403 = vadd.f32 %v3887, %v4293
        %v4404 = vadd.f32 %v3888, %v4298
        %v4405 = vadd.f32 %v3889, %v4301
        %v4406 = vadd.f32 %v3890, %v4306
        %v4407 = vadd.f32 %v3891, %v4309
        %v4408 = vadd.f32 %v3892, %v4314
        %v4409 = vadd.f32 %v3893, %v4317
        %v4410 = vadd.f32 %v3894, %v4322
        %v4411 = vadd.f32 %v3895, %v4325
        %v4412 = vadd.f32 %v3896, %v4330
        %v4413 = vadd.f32 %v3897, %v4333
        %v4414 = vadd.f32 %v3898, %v4338
        %v4415 = vadd.f32 %v3899, %v4341
        %v4416 = vadd.f32 %v3900, %v4346
        %v4417 = vadd.f32 %v3901, %v4349
        %v4418 = vadd.f32 %v3902, %v4354
        %v4419 = vadd.f32 %v3903, %v4357
        %v4420 = vadd.f32 %v3904, %v4362
        %v4421 = vadd.f32 %v3905, %v4365
        %v4422 = vadd.f32 %v3906, %v4370
        %v4423 = vadd.f32 %v3907, %v4373
        %v4424 = vld [vmem:[#allocation2 + $0x18] sm:$0xf]
        %v4425 = vld [vmem:[#allocation2 + $0x1c] sm:$0xf]
        %v4426 = vld [vmem:[#allocation2 + $0x20] sm:$0xf]
        %v4427 = vld [vmem:[#allocation2 + $0x24] sm:$0xf]
        %v4428 = vld [vmem:[#allocation2 + $0x28] sm:$0xf]
        %v4429 = vld [vmem:[#allocation2 + $0x2c] sm:$0xf]
        %v4430 = vld [vmem:[#allocation2 + $0x30] sm:$0xf]
        %v4431 = vld [vmem:[#allocation2 + $0x34] sm:$0xf]
        %v4432 = vld [vmem:[#allocation2 + $0x38] sm:$0xf]
        %v4433 = vld [vmem:[#allocation2 + $0x3c] sm:$0xf]
        %v4434 = vld [vmem:[#allocation2 + $0x40] sm:$0xf]
        %v4435 = vld [vmem:[#allocation2 + $0x44] sm:$0xf]
        %v4436 = vld [vmem:[#allocation2 + $0x48] sm:$0xf]
        %v4437 = vld [vmem:[#allocation2 + $0x4c] sm:$0xf]
        %v4438 = vld [vmem:[#allocation2 + $0x50] sm:$0xf]
        %v4439 = vld [vmem:[#allocation2 + $0x54] sm:$0xf]
        %v4440 = vld [vmem:[#allocation2 + $0x58] sm:$0xf]
        %v4441 = vld [vmem:[#allocation2 + $0x5c] sm:$0xf]
        %v4442 = vld [vmem:[#allocation2 + $0x60] sm:$0xf]
        %v4443 = vld [vmem:[#allocation2 + $0x64] sm:$0xf]
        %v4444 = vld [vmem:[#allocation2 + $0x68] sm:$0xf]
        %v4445 = vld [vmem:[#allocation2 + $0x6c] sm:$0xf]
        %v4446 = vld [vmem:[#allocation2 + $0x70] sm:$0xf]
        %v4447 = vld [vmem:[#allocation2 + $0x74] sm:$0xf]
        %v4448 = vld [vmem:[#allocation2 + $0x78] sm:$0xf]
        %v4449 = vld [vmem:[#allocation2 + $0x7c] sm:$0xf]
        %v4450 = vld [vmem:[#allocation2 + $0x80] sm:$0xf]
        %v4451 = vld [vmem:[#allocation2 + $0x84] sm:$0xf]
        %v4452 = vld [vmem:[#allocation2 + $0x88] sm:$0xf]
        %v4453 = vld [vmem:[#allocation2 + $0x8c] sm:$0xf]
        %v4454 = vld [vmem:[#allocation2 + $0x90] sm:$0xf]
        %v4455 = vld [vmem:[#allocation2 + $0x94] sm:$0xf]
        %v4456 = vld [vmem:[#allocation2 + $0x98] sm:$0xf]
        %v4457 = vld [vmem:[#allocation2 + $0x9c] sm:$0xf]
        %v4458 = vld [vmem:[#allocation2 + $0xa0] sm:$0xf]
        %v4459 = vld [vmem:[#allocation2 + $0xa4] sm:$0xf]
        %v4460 = vld [vmem:[#allocation2 + $0xa8] sm:$0xf]
        %v4461 = vld [vmem:[#allocation2 + $0xac] sm:$0xf]
        %v4462 = vld [vmem:[#allocation2 + $0xb0] sm:$0xf]
        %v4463 = vld [vmem:[#allocation2 + $0xb4] sm:$0xf]
        %v4464 = vld [vmem:[#allocation2 + $0xb8] sm:$0xf]
        %v4465 = vld [vmem:[#allocation2 + $0xbc] sm:$0xf]
        %v4466 = vld [vmem:[#allocation2 + $0xc0] sm:$0xf]
        %v4467 = vld [vmem:[#allocation2 + $0xc4] sm:$0xf]
        %v4468 = vld [vmem:[#allocation2 + $0xc8] sm:$0xf]
        %v4469 = vld [vmem:[#allocation2 + $0xcc] sm:$0xf]
        %v4470 = vld [vmem:[#allocation2 + $0xd0] sm:$0xf]
        %v4471 = vld [vmem:[#allocation2 + $0xd4] sm:$0xf]
        %v4472 = vld [vmem:[#allocation2 + $0xd8] sm:$0x1]
        %v4522 = vunpack.c.l.b16 %v4424
        %v4523 = vunpack.c.l.b16 %v4425
        %v4524 = vunpack.c.l.b16 %v4426
        %v4525 = vunpack.c.l.b16 %v4427
        %v4526 = vunpack.c.l.b16 %v4428
        %v4527 = vunpack.c.l.b16 %v4429
        %v4528 = vunpack.c.l.b16 %v4430
        %v4529 = vunpack.c.l.b16 %v4431
        %v4530 = vunpack.c.l.b16 %v4432
        %v4531 = vunpack.c.l.b16 %v4433
        %v4532 = vunpack.c.l.b16 %v4434
        %v4533 = vunpack.c.l.b16 %v4435
        %v4534 = vunpack.c.l.b16 %v4436
        %v4535 = vunpack.c.l.b16 %v4437
        %v4536 = vunpack.c.l.b16 %v4438
        %v4537 = vunpack.c.l.b16 %v4439
        %v4538 = vunpack.c.l.b16 %v4440
        %v4539 = vunpack.c.l.b16 %v4441
        %v4540 = vunpack.c.l.b16 %v4442
        %v4541 = vunpack.c.l.b16 %v4443
        %v4542 = vunpack.c.l.b16 %v4444
        %v4543 = vunpack.c.l.b16 %v4445
        %v4544 = vunpack.c.l.b16 %v4446
        %v4545 = vunpack.c.l.b16 %v4447
        %v4546 = vunpack.c.l.b16 %v4448
        %v4547 = vunpack.c.l.b16 %v4449
        %v4548 = vunpack.c.l.b16 %v4450
        %v4549 = vunpack.c.l.b16 %v4451
        %v4550 = vunpack.c.l.b16 %v4452
        %v4551 = vunpack.c.l.b16 %v4453
        %v4552 = vunpack.c.l.b16 %v4454
        %v4553 = vunpack.c.l.b16 %v4455
        %v4554 = vunpack.c.l.b16 %v4456
        %v4555 = vunpack.c.l.b16 %v4457
        %v4556 = vunpack.c.l.b16 %v4458
        %v4557 = vunpack.c.l.b16 %v4459
        %v4558 = vunpack.c.l.b16 %v4460
        %v4559 = vunpack.c.l.b16 %v4461
        %v4560 = vunpack.c.l.b16 %v4462
        %v4561 = vunpack.c.l.b16 %v4463
        %v4562 = vunpack.c.l.b16 %v4464
        %v4563 = vunpack.c.l.b16 %v4465
        %v4564 = vunpack.c.l.b16 %v4466
        %v4565 = vunpack.c.l.b16 %v4467
        %v4566 = vunpack.c.l.b16 %v4468
        %v4567 = vunpack.c.l.b16 %v4469
        %v4568 = vunpack.c.l.b16 %v4470
        %v4569 = vunpack.c.l.b16 %v4471
        %v4570 = vunpack.c.l.b16 %v4472
        %v4571 = vpack.c.b16 %v4523, %v4522
        %v4572 = vpack.c.b16 %v4525, %v4524
        %v4573 = vpack.c.b16 %v4527, %v4526
        %v4574 = vpack.c.b16 %v4529, %v4528
        %v4575 = vpack.c.b16 %v4531, %v4530
        %v4576 = vpack.c.b16 %v4533, %v4532
        %v4577 = vpack.c.b16 %v4535, %v4534
        %v4578 = vpack.c.b16 %v4537, %v4536
        %v4579 = vpack.c.b16 %v4539, %v4538
        %v4580 = vpack.c.b16 %v4541, %v4540
        %v4581 = vpack.c.b16 %v4543, %v4542
        %v4582 = vpack.c.b16 %v4545, %v4544
        %v4583 = vpack.c.b16 %v4547, %v4546
        %v4584 = vpack.c.b16 %v4549, %v4548
        %v4585 = vpack.c.b16 %v4551, %v4550
        %v4586 = vpack.c.b16 %v4553, %v4552
        %v4587 = vpack.c.b16 %v4555, %v4554
        %v4588 = vpack.c.b16 %v4557, %v4556
        %v4589 = vpack.c.b16 %v4559, %v4558
        %v4590 = vpack.c.b16 %v4561, %v4560
        %v4591 = vpack.c.b16 %v4563, %v4562
        %v4592 = vpack.c.b16 %v4565, %v4564
        %v4593 = vpack.c.b16 %v4567, %v4566
        %v4594 = vpack.c.b16 %v4569, %v4568
        %v4595 = vpack.c.b16 %v4570, %v4570
        %v4597 = vshrl.u32 %v4571, 16
        %v4599 = vshll.u32 %v4571, 16
        %v4601 = vrot.slane %v4599, 1
        %v4602 = vor.u32 %v4597, %v4601
        %v4604 = vshll.u32 %v4572, 16
        %v4606 = vrot.slane %v4604, 1
        %v4607 = vsel %vm1098, %v4602, %v4606
        %v4608 = vshrl.u32 %v4572, 16
        %v4610 = vor.u32 %v4608, %v4606
        %v4612 = vshll.u32 %v4573, 16
        %v4614 = vrot.slane %v4612, 1
        %v4615 = vsel %vm1098, %v4610, %v4614
        %v4616 = vshrl.u32 %v4573, 16
        %v4618 = vor.u32 %v4616, %v4614
        %v4620 = vshll.u32 %v4574, 16
        %v4622 = vrot.slane %v4620, 1
        %v4623 = vsel %vm1098, %v4618, %v4622
        %v4624 = vshrl.u32 %v4574, 16
        %v4626 = vor.u32 %v4624, %v4622
        %v4628 = vshll.u32 %v4575, 16
        %v4630 = vrot.slane %v4628, 1
        %v4631 = vsel %vm1098, %v4626, %v4630
        %v4632 = vshrl.u32 %v4575, 16
        %v4634 = vor.u32 %v4632, %v4630
        %v4636 = vshll.u32 %v4576, 16
        %v4638 = vrot.slane %v4636, 1
        %v4639 = vsel %vm1098, %v4634, %v4638
        %v4640 = vshrl.u32 %v4576, 16
        %v4642 = vor.u32 %v4640, %v4638
        %v4644 = vshll.u32 %v4577, 16
        %v4646 = vrot.slane %v4644, 1
        %v4647 = vsel %vm1098, %v4642, %v4646
        %v4648 = vshrl.u32 %v4577, 16
        %v4650 = vor.u32 %v4648, %v4646
        %v4652 = vshll.u32 %v4578, 16
        %v4654 = vrot.slane %v4652, 1
        %v4655 = vsel %vm1098, %v4650, %v4654
        %v4656 = vshrl.u32 %v4578, 16
        %v4658 = vor.u32 %v4656, %v4654
        %v4660 = vshll.u32 %v4579, 16
        %v4662 = vrot.slane %v4660, 1
        %v4663 = vsel %vm1098, %v4658, %v4662
        %v4664 = vshrl.u32 %v4579, 16
        %v4666 = vor.u32 %v4664, %v4662
        %v4668 = vshll.u32 %v4580, 16
        %v4670 = vrot.slane %v4668, 1
        %v4671 = vsel %vm1098, %v4666, %v4670
        %v4672 = vshrl.u32 %v4580, 16
        %v4674 = vor.u32 %v4672, %v4670
        %v4676 = vshll.u32 %v4581, 16
        %v4678 = vrot.slane %v4676, 1
        %v4679 = vsel %vm1098, %v4674, %v4678
        %v4680 = vshrl.u32 %v4581, 16
        %v4682 = vor.u32 %v4680, %v4678
        %v4684 = vshll.u32 %v4582, 16
        %v4686 = vrot.slane %v4684, 1
        %v4687 = vsel %vm1098, %v4682, %v4686
        %v4688 = vshrl.u32 %v4582, 16
        %v4690 = vor.u32 %v4688, %v4686
        %v4692 = vshll.u32 %v4583, 16
        %v4694 = vrot.slane %v4692, 1
        %v4695 = vsel %vm1098, %v4690, %v4694
        %v4696 = vshrl.u32 %v4583, 16
        %v4698 = vor.u32 %v4696, %v4694
        %v4700 = vshll.u32 %v4584, 16
        %v4702 = vrot.slane %v4700, 1
        %v4703 = vsel %vm1098, %v4698, %v4702
        %v4704 = vshrl.u32 %v4584, 16
        %v4706 = vor.u32 %v4704, %v4702
        %v4708 = vshll.u32 %v4585, 16
        %v4710 = vrot.slane %v4708, 1
        %v4711 = vsel %vm1098, %v4706, %v4710
        %v4712 = vshrl.u32 %v4585, 16
        %v4714 = vor.u32 %v4712, %v4710
        %v4716 = vshll.u32 %v4586, 16
        %v4718 = vrot.slane %v4716, 1
        %v4719 = vsel %vm1098, %v4714, %v4718
        %v4720 = vshrl.u32 %v4586, 16
        %v4722 = vor.u32 %v4720, %v4718
        %v4724 = vshll.u32 %v4587, 16
        %v4726 = vrot.slane %v4724, 1
        %v4727 = vsel %vm1098, %v4722, %v4726
        %v4728 = vshrl.u32 %v4587, 16
        %v4730 = vor.u32 %v4728, %v4726
        %v4732 = vshll.u32 %v4588, 16
        %v4734 = vrot.slane %v4732, 1
        %v4735 = vsel %vm1098, %v4730, %v4734
        %v4736 = vshrl.u32 %v4588, 16
        %v4738 = vor.u32 %v4736, %v4734
        %v4740 = vshll.u32 %v4589, 16
        %v4742 = vrot.slane %v4740, 1
        %v4743 = vsel %vm1098, %v4738, %v4742
        %v4744 = vshrl.u32 %v4589, 16
        %v4746 = vor.u32 %v4744, %v4742
        %v4748 = vshll.u32 %v4590, 16
        %v4750 = vrot.slane %v4748, 1
        %v4751 = vsel %vm1098, %v4746, %v4750
        %v4752 = vshrl.u32 %v4590, 16
        %v4754 = vor.u32 %v4752, %v4750
        %v4756 = vshll.u32 %v4591, 16
        %v4758 = vrot.slane %v4756, 1
        %v4759 = vsel %vm1098, %v4754, %v4758
        %v4760 = vshrl.u32 %v4591, 16
        %v4762 = vor.u32 %v4760, %v4758
        %v4764 = vshll.u32 %v4592, 16
        %v4766 = vrot.slane %v4764, 1
        %v4767 = vsel %vm1098, %v4762, %v4766
        %v4768 = vshrl.u32 %v4592, 16
        %v4770 = vor.u32 %v4768, %v4766
        %v4772 = vshll.u32 %v4593, 16
        %v4774 = vrot.slane %v4772, 1
        %v4775 = vsel %vm1098, %v4770, %v4774
        %v4776 = vshrl.u32 %v4593, 16
        %v4778 = vor.u32 %v4776, %v4774
        %v4780 = vshll.u32 %v4594, 16
        %v4782 = vrot.slane %v4780, 1
        %v4783 = vsel %vm1098, %v4778, %v4782
        %v4784 = vshrl.u32 %v4594, 16
        %v4786 = vor.u32 %v4784, %v4782
        %v4788 = vshll.u32 %v4595, 16
        %v4790 = vrot.slane %v4788, 1
        %v4791 = vsel %vm1098, %v4786, %v4790
        %v4793 = vsel %vm1295, %v4607, 0
        %v4796 = vsel %vm1295, %v4615, 0
        %v4799 = vsel %vm1295, %v4623, 0
        %v4802 = vsel %vm1295, %v4631, 0
        %v4805 = vsel %vm1295, %v4639, 0
        %v4808 = vsel %vm1295, %v4647, 0
        %v4811 = vsel %vm1295, %v4655, 0
        %v4814 = vsel %vm1295, %v4663, 0
        %v4817 = vsel %vm1295, %v4671, 0
        %v4820 = vsel %vm1295, %v4679, 0
        %v4823 = vsel %vm1295, %v4687, 0
        %v4826 = vsel %vm1295, %v4695, 0
        %v4829 = vsel %vm1295, %v4703, 0
        %v4832 = vsel %vm1295, %v4711, 0
        %v4835 = vsel %vm1295, %v4719, 0
        %v4838 = vsel %vm1295, %v4727, 0
        %v4841 = vsel %vm1295, %v4735, 0
        %v4844 = vsel %vm1295, %v4743, 0
        %v4847 = vsel %vm1295, %v4751, 0
        %v4850 = vsel %vm1295, %v4759, 0
        %v4853 = vsel %vm1295, %v4767, 0
        %v4856 = vsel %vm1295, %v4775, 0
        %v4859 = vsel %vm1295, %v4783, 0
        %v4862 = vsel %vm1295, %v4791, 0
        %v4865 = vsel %vm1368, %v924, 0
        %4867 = vmatprep.subr.bf16.mxu0 0
        %4868 = vmatpush1.bf16.msra.mxu0 0
        %4869 = vmatprep.subr.bf16.mxu0 0
        %4870 = vmatpush1.bf16.msra.mxu0 0
        %4871 = vmatprep.subr.bf16.mxu0 0
        %4872 = vmatpush1.bf16.msra.mxu0 0
        %4873 = vmatprep.subr.bf16.mxu0 0
        %4874 = vmatpush1.bf16.msra.mxu0 0
        %4875 = vmatprep.subr.bf16.mxu0 0
        %4876 = vmatpush1.bf16.msra.mxu0 0
        %4877 = vmatprep.subr.bf16.mxu0 0
        %4878 = vmatpush1.bf16.msra.mxu0 0
        %4879 = vmatprep.subr.bf16.mxu0 0
        %4880 = vmatpush1.bf16.msra.mxu0 0
        %4881 = vmatprep.subr.bf16.mxu0 0
        %4882 = vmatpush1.bf16.msra.mxu0 %v4865
        %4883 = vmatprep.subr.bf16.mxu0 0
        %4884 = vmatpush2.bf16.msra.mxu0 0
        %4885 = vmatprep.subr.bf16.mxu0 0
        %4886 = vmatpush2.bf16.msra.mxu0 0
        %4887 = vmatprep.subr.bf16.mxu0 0
        %4888 = vmatpush2.bf16.msra.mxu0 0
        %4889 = vmatprep.subr.bf16.mxu0 0
        %4890 = vmatpush2.bf16.msra.mxu0 0
        %4891 = vmatprep.subr.bf16.mxu0 0
        %4892 = vmatpush2.bf16.msra.mxu0 0
        %4893 = vmatprep.subr.bf16.mxu0 0
        %4894 = vmatpush2.bf16.msra.mxu0 0
        %4895 = vmatprep.subr.bf16.mxu0 0
        %4896 = vmatpush2.bf16.msra.mxu0 0
        %4897 = vmatprep.subr.bf16.mxu0 0
        %4898 = vmatpush2.bf16.msra.mxu0 0
        %4899 = vmatprep.mubr.bf16.mxu0 0
        %4900 = vmatmul.mubr.bf16.gmra.mxu0 %v4793
        %v4901 = vpop.f32.mrf.mxu0
        %v4902 = vadd.f32 0.0, %v4901
        %v4903 = vpop.f32.mrf.mxu0
        %v4904 = vpop.f32.mrf.mxu0
        %v4905 = vadd.f32 0.0, %v4904
        %v4906 = vpop.f32.mrf.mxu0
        %4907 = vmatprep.mubr.bf16.mxu0 0
        %4908 = vmatmul.mubr.bf16.gmra.mxu0 %v4796
        %v4909 = vpop.f32.mrf.mxu0
        %v4910 = vadd.f32 0.0, %v4909
        %v4911 = vpop.f32.mrf.mxu0
        %v4912 = vpop.f32.mrf.mxu0
        %v4913 = vadd.f32 0.0, %v4912
        %v4914 = vpop.f32.mrf.mxu0
        %4915 = vmatprep.mubr.bf16.mxu0 0
        %4916 = vmatmul.mubr.bf16.gmra.mxu0 %v4799
        %v4917 = vpop.f32.mrf.mxu0
        %v4918 = vadd.f32 0.0, %v4917
        %v4919 = vpop.f32.mrf.mxu0
        %v4920 = vpop.f32.mrf.mxu0
        %v4921 = vadd.f32 0.0, %v4920
        %v4922 = vpop.f32.mrf.mxu0
        %4923 = vmatprep.mubr.bf16.mxu0 0
        %4924 = vmatmul.mubr.bf16.gmra.mxu0 %v4802
        %v4925 = vpop.f32.mrf.mxu0
        %v4926 = vadd.f32 0.0, %v4925
        %v4927 = vpop.f32.mrf.mxu0
        %v4928 = vpop.f32.mrf.mxu0
        %v4929 = vadd.f32 0.0, %v4928
        %v4930 = vpop.f32.mrf.mxu0
        %4931 = vmatprep.mubr.bf16.mxu0 0
        %4932 = vmatmul.mubr.bf16.gmra.mxu0 %v4805
        %v4933 = vpop.f32.mrf.mxu0
        %v4934 = vadd.f32 0.0, %v4933
        %v4935 = vpop.f32.mrf.mxu0
        %v4936 = vpop.f32.mrf.mxu0
        %v4937 = vadd.f32 0.0, %v4936
        %v4938 = vpop.f32.mrf.mxu0
        %4939 = vmatprep.mubr.bf16.mxu0 0
        %4940 = vmatmul.mubr.bf16.gmra.mxu0 %v4808
        %v4941 = vpop.f32.mrf.mxu0
        %v4942 = vadd.f32 0.0, %v4941
        %v4943 = vpop.f32.mrf.mxu0
        %v4944 = vpop.f32.mrf.mxu0
        %v4945 = vadd.f32 0.0, %v4944
        %v4946 = vpop.f32.mrf.mxu0
        %4947 = vmatprep.mubr.bf16.mxu0 0
        %4948 = vmatmul.mubr.bf16.gmra.mxu0 %v4811
        %v4949 = vpop.f32.mrf.mxu0
        %v4950 = vadd.f32 0.0, %v4949
        %v4951 = vpop.f32.mrf.mxu0
        %v4952 = vpop.f32.mrf.mxu0
        %v4953 = vadd.f32 0.0, %v4952
        %v4954 = vpop.f32.mrf.mxu0
        %4955 = vmatprep.mubr.bf16.mxu0 0
        %4956 = vmatmul.mubr.bf16.gmra.mxu0 %v4814
        %v4957 = vpop.f32.mrf.mxu0
        %v4958 = vadd.f32 0.0, %v4957
        %v4959 = vpop.f32.mrf.mxu0
        %v4960 = vpop.f32.mrf.mxu0
        %v4961 = vadd.f32 0.0, %v4960
        %v4962 = vpop.f32.mrf.mxu0
        %4963 = vmatprep.mubr.bf16.mxu0 0
        %4964 = vmatmul.mubr.bf16.gmra.mxu0 %v4817
        %v4965 = vpop.f32.mrf.mxu0
        %v4966 = vadd.f32 0.0, %v4965
        %v4967 = vpop.f32.mrf.mxu0
        %v4968 = vpop.f32.mrf.mxu0
        %v4969 = vadd.f32 0.0, %v4968
        %v4970 = vpop.f32.mrf.mxu0
        %4971 = vmatprep.mubr.bf16.mxu0 0
        %4972 = vmatmul.mubr.bf16.gmra.mxu0 %v4820
        %v4973 = vpop.f32.mrf.mxu0
        %v4974 = vadd.f32 0.0, %v4973
        %v4975 = vpop.f32.mrf.mxu0
        %v4976 = vpop.f32.mrf.mxu0
        %v4977 = vadd.f32 0.0, %v4976
        %v4978 = vpop.f32.mrf.mxu0
        %4979 = vmatprep.mubr.bf16.mxu0 0
        %4980 = vmatmul.mubr.bf16.gmra.mxu0 %v4823
        %v4981 = vpop.f32.mrf.mxu0
        %v4982 = vadd.f32 0.0, %v4981
        %v4983 = vpop.f32.mrf.mxu0
        %v4984 = vpop.f32.mrf.mxu0
        %v4985 = vadd.f32 0.0, %v4984
        %v4986 = vpop.f32.mrf.mxu0
        %4987 = vmatprep.mubr.bf16.mxu0 0
        %4988 = vmatmul.mubr.bf16.gmra.mxu0 %v4826
        %v4989 = vpop.f32.mrf.mxu0
        %v4990 = vadd.f32 0.0, %v4989
        %v4991 = vpop.f32.mrf.mxu0
        %v4992 = vpop.f32.mrf.mxu0
        %v4993 = vadd.f32 0.0, %v4992
        %v4994 = vpop.f32.mrf.mxu0
        %4995 = vmatprep.mubr.bf16.mxu0 0
        %4996 = vmatmul.mubr.bf16.gmra.mxu0 %v4829
        %v4997 = vpop.f32.mrf.mxu0
        %v4998 = vadd.f32 0.0, %v4997
        %v4999 = vpop.f32.mrf.mxu0
        %v5000 = vpop.f32.mrf.mxu0
        %v5001 = vadd.f32 0.0, %v5000
        %v5002 = vpop.f32.mrf.mxu0
        %5003 = vmatprep.mubr.bf16.mxu0 0
        %5004 = vmatmul.mubr.bf16.gmra.mxu0 %v4832
        %v5005 = vpop.f32.mrf.mxu0
        %v5006 = vadd.f32 0.0, %v5005
        %v5007 = vpop.f32.mrf.mxu0
        %v5008 = vpop.f32.mrf.mxu0
        %v5009 = vadd.f32 0.0, %v5008
        %v5010 = vpop.f32.mrf.mxu0
        %5011 = vmatprep.mubr.bf16.mxu0 0
        %5012 = vmatmul.mubr.bf16.gmra.mxu0 %v4835
        %v5013 = vpop.f32.mrf.mxu0
        %v5014 = vadd.f32 0.0, %v5013
        %v5015 = vpop.f32.mrf.mxu0
        %v5016 = vpop.f32.mrf.mxu0
        %v5017 = vadd.f32 0.0, %v5016
        %v5018 = vpop.f32.mrf.mxu0
        %5019 = vmatprep.mubr.bf16.mxu0 0
        %5020 = vmatmul.mubr.bf16.gmra.mxu0 %v4838
        %v5021 = vpop.f32.mrf.mxu0
        %v5022 = vadd.f32 0.0, %v5021
        %v5023 = vpop.f32.mrf.mxu0
        %v5024 = vpop.f32.mrf.mxu0
        %v5025 = vadd.f32 0.0, %v5024
        %v5026 = vpop.f32.mrf.mxu0
        %5027 = vmatprep.mubr.bf16.mxu0 0
        %5028 = vmatmul.mubr.bf16.gmra.mxu0 %v4841
        %v5029 = vpop.f32.mrf.mxu0
        %v5030 = vadd.f32 0.0, %v5029
        %v5031 = vpop.f32.mrf.mxu0
        %v5032 = vpop.f32.mrf.mxu0
        %v5033 = vadd.f32 0.0, %v5032
        %v5034 = vpop.f32.mrf.mxu0
        %5035 = vmatprep.mubr.bf16.mxu0 0
        %5036 = vmatmul.mubr.bf16.gmra.mxu0 %v4844
        %v5037 = vpop.f32.mrf.mxu0
        %v5038 = vadd.f32 0.0, %v5037
        %v5039 = vpop.f32.mrf.mxu0
        %v5040 = vpop.f32.mrf.mxu0
        %v5041 = vadd.f32 0.0, %v5040
        %v5042 = vpop.f32.mrf.mxu0
        %5043 = vmatprep.mubr.bf16.mxu0 0
        %5044 = vmatmul.mubr.bf16.gmra.mxu0 %v4847
        %v5045 = vpop.f32.mrf.mxu0
        %v5046 = vadd.f32 0.0, %v5045
        %v5047 = vpop.f32.mrf.mxu0
        %v5048 = vpop.f32.mrf.mxu0
        %v5049 = vadd.f32 0.0, %v5048
        %v5050 = vpop.f32.mrf.mxu0
        %5051 = vmatprep.mubr.bf16.mxu0 0
        %5052 = vmatmul.mubr.bf16.gmra.mxu0 %v4850
        %v5053 = vpop.f32.mrf.mxu0
        %v5054 = vadd.f32 0.0, %v5053
        %v5055 = vpop.f32.mrf.mxu0
        %v5056 = vpop.f32.mrf.mxu0
        %v5057 = vadd.f32 0.0, %v5056
        %v5058 = vpop.f32.mrf.mxu0
        %5059 = vmatprep.mubr.bf16.mxu0 0
        %5060 = vmatmul.mubr.bf16.gmra.mxu0 %v4853
        %v5061 = vpop.f32.mrf.mxu0
        %v5062 = vadd.f32 0.0, %v5061
        %v5063 = vpop.f32.mrf.mxu0
        %v5064 = vpop.f32.mrf.mxu0
        %v5065 = vadd.f32 0.0, %v5064
        %v5066 = vpop.f32.mrf.mxu0
        %5067 = vmatprep.mubr.bf16.mxu0 0
        %5068 = vmatmul.mubr.bf16.gmra.mxu0 %v4856
        %v5069 = vpop.f32.mrf.mxu0
        %v5070 = vadd.f32 0.0, %v5069
        %v5071 = vpop.f32.mrf.mxu0
        %v5072 = vpop.f32.mrf.mxu0
        %v5073 = vadd.f32 0.0, %v5072
        %v5074 = vpop.f32.mrf.mxu0
        %5075 = vmatprep.mubr.bf16.mxu0 0
        %5076 = vmatmul.mubr.bf16.gmra.mxu0 %v4859
        %v5077 = vpop.f32.mrf.mxu0
        %v5078 = vadd.f32 0.0, %v5077
        %v5079 = vpop.f32.mrf.mxu0
        %v5080 = vpop.f32.mrf.mxu0
        %v5081 = vadd.f32 0.0, %v5080
        %v5082 = vpop.f32.mrf.mxu0
        %5083 = vmatprep.mubr.bf16.mxu0 0
        %5084 = vmatmul.mubr.bf16.gmra.mxu0 %v4862
        %v5085 = vpop.f32.mrf.mxu0
        %v5086 = vadd.f32 0.0, %v5085
        %v5087 = vpop.f32.mrf.mxu0
        %v5088 = vpop.f32.mrf.mxu0
        %v5089 = vadd.f32 0.0, %v5088
        %v5090 = vpop.f32.mrf.mxu0
        %5091 = vdwg.mxu0
        %v5092 = vadd.f32 %v4376, %v4902
        %v5093 = vadd.f32 %v4377, %v4905
        %v5094 = vadd.f32 %v4378, %v4910
        %v5095 = vadd.f32 %v4379, %v4913
        %v5096 = vadd.f32 %v4380, %v4918
        %v5097 = vadd.f32 %v4381, %v4921
        %v5098 = vadd.f32 %v4382, %v4926
        %v5099 = vadd.f32 %v4383, %v4929
        %v5100 = vadd.f32 %v4384, %v4934
        %v5101 = vadd.f32 %v4385, %v4937
        %v5102 = vadd.f32 %v4386, %v4942
        %v5103 = vadd.f32 %v4387, %v4945
        %v5104 = vadd.f32 %v4388, %v4950
        %v5105 = vadd.f32 %v4389, %v4953
        %v5106 = vadd.f32 %v4390, %v4958
        %v5107 = vadd.f32 %v4391, %v4961
        %v5108 = vadd.f32 %v4392, %v4966
        %v5109 = vadd.f32 %v4393, %v4969
        %v5110 = vadd.f32 %v4394, %v4974
        %v5111 = vadd.f32 %v4395, %v4977
        %v5112 = vadd.f32 %v4396, %v4982
        %v5113 = vadd.f32 %v4397, %v4985
        %v5114 = vadd.f32 %v4398, %v4990
        %v5115 = vadd.f32 %v4399, %v4993
        %v5116 = vadd.f32 %v4400, %v4998
        %v5117 = vadd.f32 %v4401, %v5001
        %v5118 = vadd.f32 %v4402, %v5006
        %v5119 = vadd.f32 %v4403, %v5009
        %v5120 = vadd.f32 %v4404, %v5014
        %v5121 = vadd.f32 %v4405, %v5017
        %v5122 = vadd.f32 %v4406, %v5022
        %v5123 = vadd.f32 %v4407, %v5025
        %v5124 = vadd.f32 %v4408, %v5030
        %v5125 = vadd.f32 %v4409, %v5033
        %v5126 = vadd.f32 %v4410, %v5038
        %v5127 = vadd.f32 %v4411, %v5041
        %v5128 = vadd.f32 %v4412, %v5046
        %v5129 = vadd.f32 %v4413, %v5049
        %v5130 = vadd.f32 %v4414, %v5054
        %v5131 = vadd.f32 %v4415, %v5057
        %v5132 = vadd.f32 %v4416, %v5062
        %v5133 = vadd.f32 %v4417, %v5065
        %v5134 = vadd.f32 %v4418, %v5070
        %v5135 = vadd.f32 %v4419, %v5073
        %v5136 = vadd.f32 %v4420, %v5078
        %v5137 = vadd.f32 %v4421, %v5081
        %v5138 = vadd.f32 %v4422, %v5086
        %v5139 = vadd.f32 %v4423, %v5089
        %v5140 = vld [vmem:[#allocation2 + $0x18] sm:$0xe]
        %v5142 = vunpack.c.l.b16 %v5140
        %v5143 = vpack.c.b16 %v4523, %v5142
        %v5144 = vrot.slane %v5143, 1
        %v5145 = vrot.slane %v4572, 1
        %v5146 = vsel %vm1877, %v5144, %v5145
        %v5147 = vrot.slane %v4573, 1
        %v5148 = vsel %vm1877, %v5145, %v5147
        %v5149 = vrot.slane %v4574, 1
        %v5150 = vsel %vm1877, %v5147, %v5149
        %v5151 = vrot.slane %v4575, 1
        %v5152 = vsel %vm1877, %v5149, %v5151
        %v5153 = vrot.slane %v4576, 1
        %v5154 = vsel %vm1877, %v5151, %v5153
        %v5155 = vrot.slane %v4577, 1
        %v5156 = vsel %vm1877, %v5153, %v5155
        %v5157 = vrot.slane %v4578, 1
        %v5158 = vsel %vm1877, %v5155, %v5157
        %v5159 = vrot.slane %v4579, 1
        %v5160 = vsel %vm1877, %v5157, %v5159
        %v5161 = vrot.slane %v4580, 1
        %v5162 = vsel %vm1877, %v5159, %v5161
        %v5163 = vrot.slane %v4581, 1
        %v5164 = vsel %vm1877, %v5161, %v5163
        %v5165 = vrot.slane %v4582, 1
        %v5166 = vsel %vm1877, %v5163, %v5165
        %v5167 = vrot.slane %v4583, 1
        %v5168 = vsel %vm1877, %v5165, %v5167
        %v5169 = vrot.slane %v4584, 1
        %v5170 = vsel %vm1877, %v5167, %v5169
        %v5171 = vrot.slane %v4585, 1
        %v5172 = vsel %vm1877, %v5169, %v5171
        %v5173 = vrot.slane %v4586, 1
        %v5174 = vsel %vm1877, %v5171, %v5173
        %v5175 = vrot.slane %v4587, 1
        %v5176 = vsel %vm1877, %v5173, %v5175
        %v5177 = vrot.slane %v4588, 1
        %v5178 = vsel %vm1877, %v5175, %v5177
        %v5179 = vrot.slane %v4589, 1
        %v5180 = vsel %vm1877, %v5177, %v5179
        %v5181 = vrot.slane %v4590, 1
        %v5182 = vsel %vm1877, %v5179, %v5181
        %v5183 = vrot.slane %v4591, 1
        %v5184 = vsel %vm1877, %v5181, %v5183
        %v5185 = vrot.slane %v4592, 1
        %v5186 = vsel %vm1877, %v5183, %v5185
        %v5187 = vrot.slane %v4593, 1
        %v5188 = vsel %vm1877, %v5185, %v5187
        %v5189 = vrot.slane %v4594, 1
        %v5190 = vsel %vm1877, %v5187, %v5189
        %v5191 = vrot.slane %v4595, 1
        %v5192 = vsel %vm1877, %v5189, %v5191
        %v5194 = vsel %vm1295, %v5146, 0
        %v5197 = vsel %vm1295, %v5148, 0
        %v5200 = vsel %vm1295, %v5150, 0
        %v5203 = vsel %vm1295, %v5152, 0
        %v5206 = vsel %vm1295, %v5154, 0
        %v5209 = vsel %vm1295, %v5156, 0
        %v5212 = vsel %vm1295, %v5158, 0
        %v5215 = vsel %vm1295, %v5160, 0
        %v5218 = vsel %vm1295, %v5162, 0
        %v5221 = vsel %vm1295, %v5164, 0
        %v5224 = vsel %vm1295, %v5166, 0
        %v5227 = vsel %vm1295, %v5168, 0
        %v5230 = vsel %vm1295, %v5170, 0
        %v5233 = vsel %vm1295, %v5172, 0
        %v5236 = vsel %vm1295, %v5174, 0
        %v5239 = vsel %vm1295, %v5176, 0
        %v5242 = vsel %vm1295, %v5178, 0
        %v5245 = vsel %vm1295, %v5180, 0
        %v5248 = vsel %vm1295, %v5182, 0
        %v5251 = vsel %vm1295, %v5184, 0
        %v5254 = vsel %vm1295, %v5186, 0
        %v5257 = vsel %vm1295, %v5188, 0
        %v5260 = vsel %vm1295, %v5190, 0
        %v5263 = vsel %vm1295, %v5192, 0
        %v5266 = vsel %vm1368, %v925, 0
        %5268 = vmatprep.subr.bf16.mxu0 0
        %5269 = vmatpush1.bf16.msra.mxu0 0
        %5270 = vmatprep.subr.bf16.mxu0 0
        %5271 = vmatpush1.bf16.msra.mxu0 0
        %5272 = vmatprep.subr.bf16.mxu0 0
        %5273 = vmatpush1.bf16.msra.mxu0 0
        %5274 = vmatprep.subr.bf16.mxu0 0
        %5275 = vmatpush1.bf16.msra.mxu0 0
        %5276 = vmatprep.subr.bf16.mxu0 0
        %5277 = vmatpush1.bf16.msra.mxu0 0
        %5278 = vmatprep.subr.bf16.mxu0 0
        %5279 = vmatpush1.bf16.msra.mxu0 0
        %5280 = vmatprep.subr.bf16.mxu0 0
        %5281 = vmatpush1.bf16.msra.mxu0 0
        %5282 = vmatprep.subr.bf16.mxu0 0
        %5283 = vmatpush1.bf16.msra.mxu0 %v5266
        %5284 = vmatprep.subr.bf16.mxu0 0
        %5285 = vmatpush2.bf16.msra.mxu0 0
        %5286 = vmatprep.subr.bf16.mxu0 0
        %5287 = vmatpush2.bf16.msra.mxu0 0
        %5288 = vmatprep.subr.bf16.mxu0 0
        %5289 = vmatpush2.bf16.msra.mxu0 0
        %5290 = vmatprep.subr.bf16.mxu0 0
        %5291 = vmatpush2.bf16.msra.mxu0 0
        %5292 = vmatprep.subr.bf16.mxu0 0
        %5293 = vmatpush2.bf16.msra.mxu0 0
        %5294 = vmatprep.subr.bf16.mxu0 0
        %5295 = vmatpush2.bf16.msra.mxu0 0
        %5296 = vmatprep.subr.bf16.mxu0 0
        %5297 = vmatpush2.bf16.msra.mxu0 0
        %5298 = vmatprep.subr.bf16.mxu0 0
        %5299 = vmatpush2.bf16.msra.mxu0 0
        %5300 = vmatprep.mubr.bf16.mxu0 0
        %5301 = vmatmul.mubr.bf16.gmra.mxu0 %v5194
        %v5302 = vpop.f32.mrf.mxu0
        %v5303 = vadd.f32 0.0, %v5302
        %v5304 = vpop.f32.mrf.mxu0
        %v5305 = vpop.f32.mrf.mxu0
        %v5306 = vadd.f32 0.0, %v5305
        %v5307 = vpop.f32.mrf.mxu0
        %5308 = vmatprep.mubr.bf16.mxu0 0
        %5309 = vmatmul.mubr.bf16.gmra.mxu0 %v5197
        %v5310 = vpop.f32.mrf.mxu0
        %v5311 = vadd.f32 0.0, %v5310
        %v5312 = vpop.f32.mrf.mxu0
        %v5313 = vpop.f32.mrf.mxu0
        %v5314 = vadd.f32 0.0, %v5313
        %v5315 = vpop.f32.mrf.mxu0
        %5316 = vmatprep.mubr.bf16.mxu0 0
        %5317 = vmatmul.mubr.bf16.gmra.mxu0 %v5200
        %v5318 = vpop.f32.mrf.mxu0
        %v5319 = vadd.f32 0.0, %v5318
        %v5320 = vpop.f32.mrf.mxu0
        %v5321 = vpop.f32.mrf.mxu0
        %v5322 = vadd.f32 0.0, %v5321
        %v5323 = vpop.f32.mrf.mxu0
        %5324 = vmatprep.mubr.bf16.mxu0 0
        %5325 = vmatmul.mubr.bf16.gmra.mxu0 %v5203
        %v5326 = vpop.f32.mrf.mxu0
        %v5327 = vadd.f32 0.0, %v5326
        %v5328 = vpop.f32.mrf.mxu0
        %v5329 = vpop.f32.mrf.mxu0
        %v5330 = vadd.f32 0.0, %v5329
        %v5331 = vpop.f32.mrf.mxu0
        %5332 = vmatprep.mubr.bf16.mxu0 0
        %5333 = vmatmul.mubr.bf16.gmra.mxu0 %v5206
        %v5334 = vpop.f32.mrf.mxu0
        %v5335 = vadd.f32 0.0, %v5334
        %v5336 = vpop.f32.mrf.mxu0
        %v5337 = vpop.f32.mrf.mxu0
        %v5338 = vadd.f32 0.0, %v5337
        %v5339 = vpop.f32.mrf.mxu0
        %5340 = vmatprep.mubr.bf16.mxu0 0
        %5341 = vmatmul.mubr.bf16.gmra.mxu0 %v5209
        %v5342 = vpop.f32.mrf.mxu0
        %v5343 = vadd.f32 0.0, %v5342
        %v5344 = vpop.f32.mrf.mxu0
        %v5345 = vpop.f32.mrf.mxu0
        %v5346 = vadd.f32 0.0, %v5345
        %v5347 = vpop.f32.mrf.mxu0
        %5348 = vmatprep.mubr.bf16.mxu0 0
        %5349 = vmatmul.mubr.bf16.gmra.mxu0 %v5212
        %v5350 = vpop.f32.mrf.mxu0
        %v5351 = vadd.f32 0.0, %v5350
        %v5352 = vpop.f32.mrf.mxu0
        %v5353 = vpop.f32.mrf.mxu0
        %v5354 = vadd.f32 0.0, %v5353
        %v5355 = vpop.f32.mrf.mxu0
        %5356 = vmatprep.mubr.bf16.mxu0 0
        %5357 = vmatmul.mubr.bf16.gmra.mxu0 %v5215
        %v5358 = vpop.f32.mrf.mxu0
        %v5359 = vadd.f32 0.0, %v5358
        %v5360 = vpop.f32.mrf.mxu0
        %v5361 = vpop.f32.mrf.mxu0
        %v5362 = vadd.f32 0.0, %v5361
        %v5363 = vpop.f32.mrf.mxu0
        %5364 = vmatprep.mubr.bf16.mxu0 0
        %5365 = vmatmul.mubr.bf16.gmra.mxu0 %v5218
        %v5366 = vpop.f32.mrf.mxu0
        %v5367 = vadd.f32 0.0, %v5366
        %v5368 = vpop.f32.mrf.mxu0
        %v5369 = vpop.f32.mrf.mxu0
        %v5370 = vadd.f32 0.0, %v5369
        %v5371 = vpop.f32.mrf.mxu0
        %5372 = vmatprep.mubr.bf16.mxu0 0
        %5373 = vmatmul.mubr.bf16.gmra.mxu0 %v5221
        %v5374 = vpop.f32.mrf.mxu0
        %v5375 = vadd.f32 0.0, %v5374
        %v5376 = vpop.f32.mrf.mxu0
        %v5377 = vpop.f32.mrf.mxu0
        %v5378 = vadd.f32 0.0, %v5377
        %v5379 = vpop.f32.mrf.mxu0
        %5380 = vmatprep.mubr.bf16.mxu0 0
        %5381 = vmatmul.mubr.bf16.gmra.mxu0 %v5224
        %v5382 = vpop.f32.mrf.mxu0
        %v5383 = vadd.f32 0.0, %v5382
        %v5384 = vpop.f32.mrf.mxu0
        %v5385 = vpop.f32.mrf.mxu0
        %v5386 = vadd.f32 0.0, %v5385
        %v5387 = vpop.f32.mrf.mxu0
        %5388 = vmatprep.mubr.bf16.mxu0 0
        %5389 = vmatmul.mubr.bf16.gmra.mxu0 %v5227
        %v5390 = vpop.f32.mrf.mxu0
        %v5391 = vadd.f32 0.0, %v5390
        %v5392 = vpop.f32.mrf.mxu0
        %v5393 = vpop.f32.mrf.mxu0
        %v5394 = vadd.f32 0.0, %v5393
        %v5395 = vpop.f32.mrf.mxu0
        %5396 = vmatprep.mubr.bf16.mxu0 0
        %5397 = vmatmul.mubr.bf16.gmra.mxu0 %v5230
        %v5398 = vpop.f32.mrf.mxu0
        %v5399 = vadd.f32 0.0, %v5398
        %v5400 = vpop.f32.mrf.mxu0
        %v5401 = vpop.f32.mrf.mxu0
        %v5402 = vadd.f32 0.0, %v5401
        %v5403 = vpop.f32.mrf.mxu0
        %5404 = vmatprep.mubr.bf16.mxu0 0
        %5405 = vmatmul.mubr.bf16.gmra.mxu0 %v5233
        %v5406 = vpop.f32.mrf.mxu0
        %v5407 = vadd.f32 0.0, %v5406
        %v5408 = vpop.f32.mrf.mxu0
        %v5409 = vpop.f32.mrf.mxu0
        %v5410 = vadd.f32 0.0, %v5409
        %v5411 = vpop.f32.mrf.mxu0
        %5412 = vmatprep.mubr.bf16.mxu0 0
        %5413 = vmatmul.mubr.bf16.gmra.mxu0 %v5236
        %v5414 = vpop.f32.mrf.mxu0
        %v5415 = vadd.f32 0.0, %v5414
        %v5416 = vpop.f32.mrf.mxu0
        %v5417 = vpop.f32.mrf.mxu0
        %v5418 = vadd.f32 0.0, %v5417
        %v5419 = vpop.f32.mrf.mxu0
        %5420 = vmatprep.mubr.bf16.mxu0 0
        %5421 = vmatmul.mubr.bf16.gmra.mxu0 %v5239
        %v5422 = vpop.f32.mrf.mxu0
        %v5423 = vadd.f32 0.0, %v5422
        %v5424 = vpop.f32.mrf.mxu0
        %v5425 = vpop.f32.mrf.mxu0
        %v5426 = vadd.f32 0.0, %v5425
        %v5427 = vpop.f32.mrf.mxu0
        %5428 = vmatprep.mubr.bf16.mxu0 0
        %5429 = vmatmul.mubr.bf16.gmra.mxu0 %v5242
        %v5430 = vpop.f32.mrf.mxu0
        %v5431 = vadd.f32 0.0, %v5430
        %v5432 = vpop.f32.mrf.mxu0
        %v5433 = vpop.f32.mrf.mxu0
        %v5434 = vadd.f32 0.0, %v5433
        %v5435 = vpop.f32.mrf.mxu0
        %5436 = vmatprep.mubr.bf16.mxu0 0
        %5437 = vmatmul.mubr.bf16.gmra.mxu0 %v5245
        %v5438 = vpop.f32.mrf.mxu0
        %v5439 = vadd.f32 0.0, %v5438
        %v5440 = vpop.f32.mrf.mxu0
        %v5441 = vpop.f32.mrf.mxu0
        %v5442 = vadd.f32 0.0, %v5441
        %v5443 = vpop.f32.mrf.mxu0
        %5444 = vmatprep.mubr.bf16.mxu0 0
        %5445 = vmatmul.mubr.bf16.gmra.mxu0 %v5248
        %v5446 = vpop.f32.mrf.mxu0
        %v5447 = vadd.f32 0.0, %v5446
        %v5448 = vpop.f32.mrf.mxu0
        %v5449 = vpop.f32.mrf.mxu0
        %v5450 = vadd.f32 0.0, %v5449
        %v5451 = vpop.f32.mrf.mxu0
        %5452 = vmatprep.mubr.bf16.mxu0 0
        %5453 = vmatmul.mubr.bf16.gmra.mxu0 %v5251
        %v5454 = vpop.f32.mrf.mxu0
        %v5455 = vadd.f32 0.0, %v5454
        %v5456 = vpop.f32.mrf.mxu0
        %v5457 = vpop.f32.mrf.mxu0
        %v5458 = vadd.f32 0.0, %v5457
        %v5459 = vpop.f32.mrf.mxu0
        %5460 = vmatprep.mubr.bf16.mxu0 0
        %5461 = vmatmul.mubr.bf16.gmra.mxu0 %v5254
        %v5462 = vpop.f32.mrf.mxu0
        %v5463 = vadd.f32 0.0, %v5462
        %v5464 = vpop.f32.mrf.mxu0
        %v5465 = vpop.f32.mrf.mxu0
        %v5466 = vadd.f32 0.0, %v5465
        %v5467 = vpop.f32.mrf.mxu0
        %5468 = vmatprep.mubr.bf16.mxu0 0
        %5469 = vmatmul.mubr.bf16.gmra.mxu0 %v5257
        %v5470 = vpop.f32.mrf.mxu0
        %v5471 = vadd.f32 0.0, %v5470
        %v5472 = vpop.f32.mrf.mxu0
        %v5473 = vpop.f32.mrf.mxu0
        %v5474 = vadd.f32 0.0, %v5473
        %v5475 = vpop.f32.mrf.mxu0
        %5476 = vmatprep.mubr.bf16.mxu0 0
        %5477 = vmatmul.mubr.bf16.gmra.mxu0 %v5260
        %v5478 = vpop.f32.mrf.mxu0
        %v5479 = vadd.f32 0.0, %v5478
        %v5480 = vpop.f32.mrf.mxu0
        %v5481 = vpop.f32.mrf.mxu0
        %v5482 = vadd.f32 0.0, %v5481
        %v5483 = vpop.f32.mrf.mxu0
        %5484 = vmatprep.mubr.bf16.mxu0 0
        %5485 = vmatmul.mubr.bf16.gmra.mxu0 %v5263
        %v5486 = vpop.f32.mrf.mxu0
        %v5487 = vadd.f32 0.0, %v5486
        %v5488 = vpop.f32.mrf.mxu0
        %v5489 = vpop.f32.mrf.mxu0
        %v5490 = vadd.f32 0.0, %v5489
        %v5491 = vpop.f32.mrf.mxu0
        %5492 = vdwg.mxu0
        %v5493 = vadd.f32 %v5092, %v5303
        %v5494 = vadd.f32 %v5093, %v5306
        %v5495 = vadd.f32 %v5094, %v5311
        %v5496 = vadd.f32 %v5095, %v5314
        %v5497 = vadd.f32 %v5096, %v5319
        %v5498 = vadd.f32 %v5097, %v5322
        %v5499 = vadd.f32 %v5098, %v5327
        %v5500 = vadd.f32 %v5099, %v5330
        %v5501 = vadd.f32 %v5100, %v5335
        %v5502 = vadd.f32 %v5101, %v5338
        %v5503 = vadd.f32 %v5102, %v5343
        %v5504 = vadd.f32 %v5103, %v5346
        %v5505 = vadd.f32 %v5104, %v5351
        %v5506 = vadd.f32 %v5105, %v5354
        %v5507 = vadd.f32 %v5106, %v5359
        %v5508 = vadd.f32 %v5107, %v5362
        %v5509 = vadd.f32 %v5108, %v5367
        %v5510 = vadd.f32 %v5109, %v5370
        %v5511 = vadd.f32 %v5110, %v5375
        %v5512 = vadd.f32 %v5111, %v5378
        %v5513 = vadd.f32 %v5112, %v5383
        %v5514 = vadd.f32 %v5113, %v5386
        %v5515 = vadd.f32 %v5114, %v5391
        %v5516 = vadd.f32 %v5115, %v5394
        %v5517 = vadd.f32 %v5116, %v5399
        %v5518 = vadd.f32 %v5117, %v5402
        %v5519 = vadd.f32 %v5118, %v5407
        %v5520 = vadd.f32 %v5119, %v5410
        %v5521 = vadd.f32 %v5120, %v5415
        %v5522 = vadd.f32 %v5121, %v5418
        %v5523 = vadd.f32 %v5122, %v5423
        %v5524 = vadd.f32 %v5123, %v5426
        %v5525 = vadd.f32 %v5124, %v5431
        %v5526 = vadd.f32 %v5125, %v5434
        %v5527 = vadd.f32 %v5126, %v5439
        %v5528 = vadd.f32 %v5127, %v5442
        %v5529 = vadd.f32 %v5128, %v5447
        %v5530 = vadd.f32 %v5129, %v5450
        %v5531 = vadd.f32 %v5130, %v5455
        %v5532 = vadd.f32 %v5131, %v5458
        %v5533 = vadd.f32 %v5132, %v5463
        %v5534 = vadd.f32 %v5133, %v5466
        %v5535 = vadd.f32 %v5134, %v5471
        %v5536 = vadd.f32 %v5135, %v5474
        %v5537 = vadd.f32 %v5136, %v5479
        %v5538 = vadd.f32 %v5137, %v5482
        %v5539 = vadd.f32 %v5138, %v5487
        %v5540 = vadd.f32 %v5139, %v5490
        %v5541 = vld [vmem:[%s2] sm:$0x1]
        %v5543 = vlaneseq
        %v5544 = vshrl.u32 %v5543, 7
        %v5545 = vsub.s32 0, %v5544
        %v5546 = vrot.slane %v5541, %v5545
        %v5548 = vadd.f32 %v5493, %v5546
        %v5549 = vadd.f32 %v5494, %v5546
        %v5550 = vadd.f32 %v5495, %v5546
        %v5551 = vadd.f32 %v5496, %v5546
        %v5552 = vadd.f32 %v5497, %v5546
        %v5553 = vadd.f32 %v5498, %v5546
        %v5554 = vadd.f32 %v5499, %v5546
        %v5555 = vadd.f32 %v5500, %v5546
        %v5556 = vadd.f32 %v5501, %v5546
        %v5557 = vadd.f32 %v5502, %v5546
        %v5558 = vadd.f32 %v5503, %v5546
        %v5559 = vadd.f32 %v5504, %v5546
        %v5560 = vadd.f32 %v5505, %v5546
        %v5561 = vadd.f32 %v5506, %v5546
        %v5562 = vadd.f32 %v5507, %v5546
        %v5563 = vadd.f32 %v5508, %v5546
        %v5564 = vadd.f32 %v5509, %v5546
        %v5565 = vadd.f32 %v5510, %v5546
        %v5566 = vadd.f32 %v5511, %v5546
        %v5567 = vadd.f32 %v5512, %v5546
        %v5568 = vadd.f32 %v5513, %v5546
        %v5569 = vadd.f32 %v5514, %v5546
        %v5570 = vadd.f32 %v5515, %v5546
        %v5571 = vadd.f32 %v5516, %v5546
        %v5572 = vadd.f32 %v5517, %v5546
        %v5573 = vadd.f32 %v5518, %v5546
        %v5574 = vadd.f32 %v5519, %v5546
        %v5575 = vadd.f32 %v5520, %v5546
        %v5576 = vadd.f32 %v5521, %v5546
        %v5577 = vadd.f32 %v5522, %v5546
        %v5578 = vadd.f32 %v5523, %v5546
        %v5579 = vadd.f32 %v5524, %v5546
        %v5580 = vadd.f32 %v5525, %v5546
        %v5581 = vadd.f32 %v5526, %v5546
        %v5582 = vadd.f32 %v5527, %v5546
        %v5583 = vadd.f32 %v5528, %v5546
        %v5584 = vadd.f32 %v5529, %v5546
        %v5585 = vadd.f32 %v5530, %v5546
        %v5586 = vadd.f32 %v5531, %v5546
        %v5587 = vadd.f32 %v5532, %v5546
        %v5588 = vadd.f32 %v5533, %v5546
        %v5589 = vadd.f32 %v5534, %v5546
        %v5590 = vadd.f32 %v5535, %v5546
        %v5591 = vadd.f32 %v5536, %v5546
        %v5592 = vadd.f32 %v5537, %v5546
        %v5593 = vadd.f32 %v5538, %v5546
        %v5594 = vadd.f32 %v5539, %v5546
        %v5595 = vadd.f32 %v5540, %v5546
        %v5596 = vmax.f32 %v5548, 0.0
        %v5597 = vmax.f32 %v5549, 0.0
        %v5598 = vmax.f32 %v5550, 0.0
        %v5599 = vmax.f32 %v5551, 0.0
        %v5600 = vmax.f32 %v5552, 0.0
        %v5601 = vmax.f32 %v5553, 0.0
        %v5602 = vmax.f32 %v5554, 0.0
        %v5603 = vmax.f32 %v5555, 0.0
        %v5604 = vmax.f32 %v5556, 0.0
        %v5605 = vmax.f32 %v5557, 0.0
        %v5606 = vmax.f32 %v5558, 0.0
        %v5607 = vmax.f32 %v5559, 0.0
        %v5608 = vmax.f32 %v5560, 0.0
        %v5609 = vmax.f32 %v5561, 0.0
        %v5610 = vmax.f32 %v5562, 0.0
        %v5611 = vmax.f32 %v5563, 0.0
        %v5612 = vmax.f32 %v5564, 0.0
        %v5613 = vmax.f32 %v5565, 0.0
        %v5614 = vmax.f32 %v5566, 0.0
        %v5615 = vmax.f32 %v5567, 0.0
        %v5616 = vmax.f32 %v5568, 0.0
        %v5617 = vmax.f32 %v5569, 0.0
        %v5618 = vmax.f32 %v5570, 0.0
        %v5619 = vmax.f32 %v5571, 0.0
        %v5620 = vmax.f32 %v5572, 0.0
        %v5621 = vmax.f32 %v5573, 0.0
        %v5622 = vmax.f32 %v5574, 0.0
        %v5623 = vmax.f32 %v5575, 0.0
        %v5624 = vmax.f32 %v5576, 0.0
        %v5625 = vmax.f32 %v5577, 0.0
        %v5626 = vmax.f32 %v5578, 0.0
        %v5627 = vmax.f32 %v5579, 0.0
        %v5628 = vmax.f32 %v5580, 0.0
        %v5629 = vmax.f32 %v5581, 0.0
        %v5630 = vmax.f32 %v5582, 0.0
        %v5631 = vmax.f32 %v5583, 0.0
        %v5632 = vmax.f32 %v5584, 0.0
        %v5633 = vmax.f32 %v5585, 0.0
        %v5634 = vmax.f32 %v5586, 0.0
        %v5635 = vmax.f32 %v5587, 0.0
        %v5636 = vmax.f32 %v5588, 0.0
        %v5637 = vmax.f32 %v5589, 0.0
        %v5638 = vmax.f32 %v5590, 0.0
        %v5639 = vmax.f32 %v5591, 0.0
        %v5640 = vmax.f32 %v5592, 0.0
        %v5641 = vmax.f32 %v5593, 0.0
        %v5642 = vmax.f32 %v5594, 0.0
        %v5643 = vmax.f32 %v5595, 0.0
        %v5644 = vlaneseq
        %v5645 = vshrl.u32 %v5644, 7
        %v5646 = vadd.s32 %v5645, 8
        %v5647 = vadd.s32 %v5645, 16
        %v5648 = vadd.s32 %v5645, 24
        %v5649 = vadd.s32 %v5645, 32
        %v5650 = vadd.s32 %v5645, 40
        %v5651 = vadd.s32 %v5645, 48
        %v5652 = vadd.s32 %v5645, 56
        %v5653 = vadd.s32 %v5645, 64
        %v5654 = vadd.s32 %v5645, 72
        %v5655 = vadd.s32 %v5645, 80
        %v5656 = vadd.s32 %v5645, 88
        %v5657 = vadd.s32 %v5645, 96
        %v5658 = vadd.s32 %v5645, 104
        %v5659 = vadd.s32 %v5645, 112
        %v5660 = vadd.s32 %v5645, 120
        %v5661 = vadd.s32 %v5645, 128
        %v5662 = vadd.s32 %v5645, 136
        %v5663 = vadd.s32 %v5645, 144
        %v5664 = vadd.s32 %v5645, 152
        %v5665 = vadd.s32 %v5645, 160
        %v5666 = vadd.s32 %v5645, 168
        %v5667 = vadd.s32 %v5645, 176
        %v5668 = vadd.s32 %v5645, 184
        %v5669 = vadd.s32 %v5645, 192
        %v5670 = vadd.s32 %v5645, 200
        %v5671 = vadd.s32 %v5645, 208
        %v5672 = vadd.s32 %v5645, 216
        %v5673 = vadd.s32 %v5645, 224
        %v5674 = vadd.s32 %v5645, 232
        %v5675 = vadd.s32 %v5645, 240
        %v5676 = vadd.s32 %v5645, 248
        %v5677 = vadd.s32 %v5645, 256
        %v5678 = vadd.s32 %v5645, 264
        %v5679 = vadd.s32 %v5645, 272
        %v5680 = vadd.s32 %v5645, 280
        %v5681 = vadd.s32 %v5645, 288
        %v5682 = vadd.s32 %v5645, 296
        %v5683 = vadd.s32 %v5645, 304
        %v5684 = vadd.s32 %v5645, 312
        %v5685 = vadd.s32 %v5645, 320
        %v5686 = vadd.s32 %v5645, 328
        %v5687 = vadd.s32 %v5645, 336
        %v5688 = vadd.s32 %v5645, 344
        %v5689 = vadd.s32 %v5645, 352
        %v5690 = vadd.s32 %v5645, 360
        %v5691 = vadd.s32 %v5645, 368
        %v5692 = vadd.s32 %v5645, 376
        %vm5693 = vcmp.lt.s32.totalorder %v5645, 0
        %v5694 = vsub.s32 0, %v5645
        %v5695 = vsel %vm5693, %v5694, %v5645
        %v5696 = vmul.u32.u64.compose %v5695, 2863311531
        %v5697 = vextract.low.u32 %v5696
        %v5698 = vextract.high.u32 %v5696
        %v5699 = vshrl.u32 %v5698, 4
        %v5700 = vmul.u32 %v5699, 24
        %v5701 = vsub.s32 %v5695, %v5700
        %v5702 = vsub.s32 0, %v5701
        %v5703 = vsel %vm5693, %v5702, %v5701
        %vm5704 = vcmp.lt.s32.totalorder %v5646, 0
        %v5705 = vsub.s32 0, %v5646
        %v5706 = vsel %vm5704, %v5705, %v5646
        %v5707 = vmul.u32.u64.compose %v5706, 2863311531
        %v5708 = vextract.low.u32 %v5707
        %v5709 = vextract.high.u32 %v5707
        %v5710 = vshrl.u32 %v5709, 4
        %v5711 = vmul.u32 %v5710, 24
        %v5712 = vsub.s32 %v5706, %v5711
        %v5713 = vsub.s32 0, %v5712
        %v5714 = vsel %vm5704, %v5713, %v5712
        %vm5715 = vcmp.lt.s32.totalorder %v5647, 0
        %v5716 = vsub.s32 0, %v5647
        %v5717 = vsel %vm5715, %v5716, %v5647
        %v5718 = vmul.u32.u64.compose %v5717, 2863311531
        %v5719 = vextract.low.u32 %v5718
        %v5720 = vextract.high.u32 %v5718
        %v5721 = vshrl.u32 %v5720, 4
        %v5722 = vmul.u32 %v5721, 24
        %v5723 = vsub.s32 %v5717, %v5722
        %v5724 = vsub.s32 0, %v5723
        %v5725 = vsel %vm5715, %v5724, %v5723
        %vm5726 = vcmp.lt.s32.totalorder %v5648, 0
        %v5727 = vsub.s32 0, %v5648
        %v5728 = vsel %vm5726, %v5727, %v5648
        %v5729 = vmul.u32.u64.compose %v5728, 2863311531
        %v5730 = vextract.low.u32 %v5729
        %v5731 = vextract.high.u32 %v5729
        %v5732 = vshrl.u32 %v5731, 4
        %v5733 = vmul.u32 %v5732, 24
        %v5734 = vsub.s32 %v5728, %v5733
        %v5735 = vsub.s32 0, %v5734
        %v5736 = vsel %vm5726, %v5735, %v5734
        %vm5737 = vcmp.lt.s32.totalorder %v5649, 0
        %v5738 = vsub.s32 0, %v5649
        %v5739 = vsel %vm5737, %v5738, %v5649
        %v5740 = vmul.u32.u64.compose %v5739, 2863311531
        %v5741 = vextract.low.u32 %v5740
        %v5742 = vextract.high.u32 %v5740
        %v5743 = vshrl.u32 %v5742, 4
        %v5744 = vmul.u32 %v5743, 24
        %v5745 = vsub.s32 %v5739, %v5744
        %v5746 = vsub.s32 0, %v5745
        %v5747 = vsel %vm5737, %v5746, %v5745
        %vm5748 = vcmp.lt.s32.totalorder %v5650, 0
        %v5749 = vsub.s32 0, %v5650
        %v5750 = vsel %vm5748, %v5749, %v5650
        %v5751 = vmul.u32.u64.compose %v5750, 2863311531
        %v5752 = vextract.low.u32 %v5751
        %v5753 = vextract.high.u32 %v5751
        %v5754 = vshrl.u32 %v5753, 4
        %v5755 = vmul.u32 %v5754, 24
        %v5756 = vsub.s32 %v5750, %v5755
        %v5757 = vsub.s32 0, %v5756
        %v5758 = vsel %vm5748, %v5757, %v5756
        %vm5759 = vcmp.lt.s32.totalorder %v5651, 0
        %v5760 = vsub.s32 0, %v5651
        %v5761 = vsel %vm5759, %v5760, %v5651
        %v5762 = vmul.u32.u64.compose %v5761, 2863311531
        %v5763 = vextract.low.u32 %v5762
        %v5764 = vextract.high.u32 %v5762
        %v5765 = vshrl.u32 %v5764, 4
        %v5766 = vmul.u32 %v5765, 24
        %v5767 = vsub.s32 %v5761, %v5766
        %v5768 = vsub.s32 0, %v5767
        %v5769 = vsel %vm5759, %v5768, %v5767
        %vm5770 = vcmp.lt.s32.totalorder %v5652, 0
        %v5771 = vsub.s32 0, %v5652
        %v5772 = vsel %vm5770, %v5771, %v5652
        %v5773 = vmul.u32.u64.compose %v5772, 2863311531
        %v5774 = vextract.low.u32 %v5773
        %v5775 = vextract.high.u32 %v5773
        %v5776 = vshrl.u32 %v5775, 4
        %v5777 = vmul.u32 %v5776, 24
        %v5778 = vsub.s32 %v5772, %v5777
        %v5779 = vsub.s32 0, %v5778
        %v5780 = vsel %vm5770, %v5779, %v5778
        %vm5781 = vcmp.lt.s32.totalorder %v5653, 0
        %v5782 = vsub.s32 0, %v5653
        %v5783 = vsel %vm5781, %v5782, %v5653
        %v5784 = vmul.u32.u64.compose %v5783, 2863311531
        %v5785 = vextract.low.u32 %v5784
        %v5786 = vextract.high.u32 %v5784
        %v5787 = vshrl.u32 %v5786, 4
        %v5788 = vmul.u32 %v5787, 24
        %v5789 = vsub.s32 %v5783, %v5788
        %v5790 = vsub.s32 0, %v5789
        %v5791 = vsel %vm5781, %v5790, %v5789
        %vm5792 = vcmp.lt.s32.totalorder %v5654, 0
        %v5793 = vsub.s32 0, %v5654
        %v5794 = vsel %vm5792, %v5793, %v5654
        %v5795 = vmul.u32.u64.compose %v5794, 2863311531
        %v5796 = vextract.low.u32 %v5795
        %v5797 = vextract.high.u32 %v5795
        %v5798 = vshrl.u32 %v5797, 4
        %v5799 = vmul.u32 %v5798, 24
        %v5800 = vsub.s32 %v5794, %v5799
        %v5801 = vsub.s32 0, %v5800
        %v5802 = vsel %vm5792, %v5801, %v5800
        %vm5803 = vcmp.lt.s32.totalorder %v5655, 0
        %v5804 = vsub.s32 0, %v5655
        %v5805 = vsel %vm5803, %v5804, %v5655
        %v5806 = vmul.u32.u64.compose %v5805, 2863311531
        %v5807 = vextract.low.u32 %v5806
        %v5808 = vextract.high.u32 %v5806
        %v5809 = vshrl.u32 %v5808, 4
        %v5810 = vmul.u32 %v5809, 24
        %v5811 = vsub.s32 %v5805, %v5810
        %v5812 = vsub.s32 0, %v5811
        %v5813 = vsel %vm5803, %v5812, %v5811
        %vm5814 = vcmp.lt.s32.totalorder %v5656, 0
        %v5815 = vsub.s32 0, %v5656
        %v5816 = vsel %vm5814, %v5815, %v5656
        %v5817 = vmul.u32.u64.compose %v5816, 2863311531
        %v5818 = vextract.low.u32 %v5817
        %v5819 = vextract.high.u32 %v5817
        %v5820 = vshrl.u32 %v5819, 4
        %v5821 = vmul.u32 %v5820, 24
        %v5822 = vsub.s32 %v5816, %v5821
        %v5823 = vsub.s32 0, %v5822
        %v5824 = vsel %vm5814, %v5823, %v5822
        %vm5825 = vcmp.lt.s32.totalorder %v5657, 0
        %v5826 = vsub.s32 0, %v5657
        %v5827 = vsel %vm5825, %v5826, %v5657
        %v5828 = vmul.u32.u64.compose %v5827, 2863311531
        %v5829 = vextract.low.u32 %v5828
        %v5830 = vextract.high.u32 %v5828
        %v5831 = vshrl.u32 %v5830, 4
        %v5832 = vmul.u32 %v5831, 24
        %v5833 = vsub.s32 %v5827, %v5832
        %v5834 = vsub.s32 0, %v5833
        %v5835 = vsel %vm5825, %v5834, %v5833
        %vm5836 = vcmp.lt.s32.totalorder %v5658, 0
        %v5837 = vsub.s32 0, %v5658
        %v5838 = vsel %vm5836, %v5837, %v5658
        %v5839 = vmul.u32.u64.compose %v5838, 2863311531
        %v5840 = vextract.low.u32 %v5839
        %v5841 = vextract.high.u32 %v5839
        %v5842 = vshrl.u32 %v5841, 4
        %v5843 = vmul.u32 %v5842, 24
        %v5844 = vsub.s32 %v5838, %v5843
        %v5845 = vsub.s32 0, %v5844
        %v5846 = vsel %vm5836, %v5845, %v5844
        %vm5847 = vcmp.lt.s32.totalorder %v5659, 0
        %v5848 = vsub.s32 0, %v5659
        %v5849 = vsel %vm5847, %v5848, %v5659
        %v5850 = vmul.u32.u64.compose %v5849, 2863311531
        %v5851 = vextract.low.u32 %v5850
        %v5852 = vextract.high.u32 %v5850
        %v5853 = vshrl.u32 %v5852, 4
        %v5854 = vmul.u32 %v5853, 24
        %v5855 = vsub.s32 %v5849, %v5854
        %v5856 = vsub.s32 0, %v5855
        %v5857 = vsel %vm5847, %v5856, %v5855
        %vm5858 = vcmp.lt.s32.totalorder %v5660, 0
        %v5859 = vsub.s32 0, %v5660
        %v5860 = vsel %vm5858, %v5859, %v5660
        %v5861 = vmul.u32.u64.compose %v5860, 2863311531
        %v5862 = vextract.low.u32 %v5861
        %v5863 = vextract.high.u32 %v5861
        %v5864 = vshrl.u32 %v5863, 4
        %v5865 = vmul.u32 %v5864, 24
        %v5866 = vsub.s32 %v5860, %v5865
        %v5867 = vsub.s32 0, %v5866
        %v5868 = vsel %vm5858, %v5867, %v5866
        %vm5869 = vcmp.lt.s32.totalorder %v5661, 0
        %v5870 = vsub.s32 0, %v5661
        %v5871 = vsel %vm5869, %v5870, %v5661
        %v5872 = vmul.u32.u64.compose %v5871, 2863311531
        %v5873 = vextract.low.u32 %v5872
        %v5874 = vextract.high.u32 %v5872
        %v5875 = vshrl.u32 %v5874, 4
        %v5876 = vmul.u32 %v5875, 24
        %v5877 = vsub.s32 %v5871, %v5876
        %v5878 = vsub.s32 0, %v5877
        %v5879 = vsel %vm5869, %v5878, %v5877
        %vm5880 = vcmp.lt.s32.totalorder %v5662, 0
        %v5881 = vsub.s32 0, %v5662
        %v5882 = vsel %vm5880, %v5881, %v5662
        %v5883 = vmul.u32.u64.compose %v5882, 2863311531
        %v5884 = vextract.low.u32 %v5883
        %v5885 = vextract.high.u32 %v5883
        %v5886 = vshrl.u32 %v5885, 4
        %v5887 = vmul.u32 %v5886, 24
        %v5888 = vsub.s32 %v5882, %v5887
        %v5889 = vsub.s32 0, %v5888
        %v5890 = vsel %vm5880, %v5889, %v5888
        %vm5891 = vcmp.lt.s32.totalorder %v5663, 0
        %v5892 = vsub.s32 0, %v5663
        %v5893 = vsel %vm5891, %v5892, %v5663
        %v5894 = vmul.u32.u64.compose %v5893, 2863311531
        %v5895 = vextract.low.u32 %v5894
        %v5896 = vextract.high.u32 %v5894
        %v5897 = vshrl.u32 %v5896, 4
        %v5898 = vmul.u32 %v5897, 24
        %v5899 = vsub.s32 %v5893, %v5898
        %v5900 = vsub.s32 0, %v5899
        %v5901 = vsel %vm5891, %v5900, %v5899
        %vm5902 = vcmp.lt.s32.totalorder %v5664, 0
        %v5903 = vsub.s32 0, %v5664
        %v5904 = vsel %vm5902, %v5903, %v5664
        %v5905 = vmul.u32.u64.compose %v5904, 2863311531
        %v5906 = vextract.low.u32 %v5905
        %v5907 = vextract.high.u32 %v5905
        %v5908 = vshrl.u32 %v5907, 4
        %v5909 = vmul.u32 %v5908, 24
        %v5910 = vsub.s32 %v5904, %v5909
        %v5911 = vsub.s32 0, %v5910
        %v5912 = vsel %vm5902, %v5911, %v5910
        %vm5913 = vcmp.lt.s32.totalorder %v5665, 0
        %v5914 = vsub.s32 0, %v5665
        %v5915 = vsel %vm5913, %v5914, %v5665
        %v5916 = vmul.u32.u64.compose %v5915, 2863311531
        %v5917 = vextract.low.u32 %v5916
        %v5918 = vextract.high.u32 %v5916
        %v5919 = vshrl.u32 %v5918, 4
        %v5920 = vmul.u32 %v5919, 24
        %v5921 = vsub.s32 %v5915, %v5920
        %v5922 = vsub.s32 0, %v5921
        %v5923 = vsel %vm5913, %v5922, %v5921
        %vm5924 = vcmp.lt.s32.totalorder %v5666, 0
        %v5925 = vsub.s32 0, %v5666
        %v5926 = vsel %vm5924, %v5925, %v5666
        %v5927 = vmul.u32.u64.compose %v5926, 2863311531
        %v5928 = vextract.low.u32 %v5927
        %v5929 = vextract.high.u32 %v5927
        %v5930 = vshrl.u32 %v5929, 4
        %v5931 = vmul.u32 %v5930, 24
        %v5932 = vsub.s32 %v5926, %v5931
        %v5933 = vsub.s32 0, %v5932
        %v5934 = vsel %vm5924, %v5933, %v5932
        %vm5935 = vcmp.lt.s32.totalorder %v5667, 0
        %v5936 = vsub.s32 0, %v5667
        %v5937 = vsel %vm5935, %v5936, %v5667
        %v5938 = vmul.u32.u64.compose %v5937, 2863311531
        %v5939 = vextract.low.u32 %v5938
        %v5940 = vextract.high.u32 %v5938
        %v5941 = vshrl.u32 %v5940, 4
        %v5942 = vmul.u32 %v5941, 24
        %v5943 = vsub.s32 %v5937, %v5942
        %v5944 = vsub.s32 0, %v5943
        %v5945 = vsel %vm5935, %v5944, %v5943
        %vm5946 = vcmp.lt.s32.totalorder %v5668, 0
        %v5947 = vsub.s32 0, %v5668
        %v5948 = vsel %vm5946, %v5947, %v5668
        %v5949 = vmul.u32.u64.compose %v5948, 2863311531
        %v5950 = vextract.low.u32 %v5949
        %v5951 = vextract.high.u32 %v5949
        %v5952 = vshrl.u32 %v5951, 4
        %v5953 = vmul.u32 %v5952, 24
        %v5954 = vsub.s32 %v5948, %v5953
        %v5955 = vsub.s32 0, %v5954
        %v5956 = vsel %vm5946, %v5955, %v5954
        %vm5957 = vcmp.lt.s32.totalorder %v5669, 0
        %v5958 = vsub.s32 0, %v5669
        %v5959 = vsel %vm5957, %v5958, %v5669
        %v5960 = vmul.u32.u64.compose %v5959, 2863311531
        %v5961 = vextract.low.u32 %v5960
        %v5962 = vextract.high.u32 %v5960
        %v5963 = vshrl.u32 %v5962, 4
        %v5964 = vmul.u32 %v5963, 24
        %v5965 = vsub.s32 %v5959, %v5964
        %v5966 = vsub.s32 0, %v5965
        %v5967 = vsel %vm5957, %v5966, %v5965
        %vm5968 = vcmp.lt.s32.totalorder %v5670, 0
        %v5969 = vsub.s32 0, %v5670
        %v5970 = vsel %vm5968, %v5969, %v5670
        %v5971 = vmul.u32.u64.compose %v5970, 2863311531
        %v5972 = vextract.low.u32 %v5971
        %v5973 = vextract.high.u32 %v5971
        %v5974 = vshrl.u32 %v5973, 4
        %v5975 = vmul.u32 %v5974, 24
        %v5976 = vsub.s32 %v5970, %v5975
        %v5977 = vsub.s32 0, %v5976
        %v5978 = vsel %vm5968, %v5977, %v5976
        %vm5979 = vcmp.lt.s32.totalorder %v5671, 0
        %v5980 = vsub.s32 0, %v5671
        %v5981 = vsel %vm5979, %v5980, %v5671
        %v5982 = vmul.u32.u64.compose %v5981, 2863311531
        %v5983 = vextract.low.u32 %v5982
        %v5984 = vextract.high.u32 %v5982
        %v5985 = vshrl.u32 %v5984, 4
        %v5986 = vmul.u32 %v5985, 24
        %v5987 = vsub.s32 %v5981, %v5986
        %v5988 = vsub.s32 0, %v5987
        %v5989 = vsel %vm5979, %v5988, %v5987
        %vm5990 = vcmp.lt.s32.totalorder %v5672, 0
        %v5991 = vsub.s32 0, %v5672
        %v5992 = vsel %vm5990, %v5991, %v5672
        %v5993 = vmul.u32.u64.compose %v5992, 2863311531
        %v5994 = vextract.low.u32 %v5993
        %v5995 = vextract.high.u32 %v5993
        %v5996 = vshrl.u32 %v5995, 4
        %v5997 = vmul.u32 %v5996, 24
        %v5998 = vsub.s32 %v5992, %v5997
        %v5999 = vsub.s32 0, %v5998
        %v6000 = vsel %vm5990, %v5999, %v5998
        %vm6001 = vcmp.lt.s32.totalorder %v5673, 0
        %v6002 = vsub.s32 0, %v5673
        %v6003 = vsel %vm6001, %v6002, %v5673
        %v6004 = vmul.u32.u64.compose %v6003, 2863311531
        %v6005 = vextract.low.u32 %v6004
        %v6006 = vextract.high.u32 %v6004
        %v6007 = vshrl.u32 %v6006, 4
        %v6008 = vmul.u32 %v6007, 24
        %v6009 = vsub.s32 %v6003, %v6008
        %v6010 = vsub.s32 0, %v6009
        %v6011 = vsel %vm6001, %v6010, %v6009
        %vm6012 = vcmp.lt.s32.totalorder %v5674, 0
        %v6013 = vsub.s32 0, %v5674
        %v6014 = vsel %vm6012, %v6013, %v5674
        %v6015 = vmul.u32.u64.compose %v6014, 2863311531
        %v6016 = vextract.low.u32 %v6015
        %v6017 = vextract.high.u32 %v6015
        %v6018 = vshrl.u32 %v6017, 4
        %v6019 = vmul.u32 %v6018, 24
        %v6020 = vsub.s32 %v6014, %v6019
        %v6021 = vsub.s32 0, %v6020
        %v6022 = vsel %vm6012, %v6021, %v6020
        %vm6023 = vcmp.lt.s32.totalorder %v5675, 0
        %v6024 = vsub.s32 0, %v5675
        %v6025 = vsel %vm6023, %v6024, %v5675
        %v6026 = vmul.u32.u64.compose %v6025, 2863311531
        %v6027 = vextract.low.u32 %v6026
        %v6028 = vextract.high.u32 %v6026
        %v6029 = vshrl.u32 %v6028, 4
        %v6030 = vmul.u32 %v6029, 24
        %v6031 = vsub.s32 %v6025, %v6030
        %v6032 = vsub.s32 0, %v6031
        %v6033 = vsel %vm6023, %v6032, %v6031
        %vm6034 = vcmp.lt.s32.totalorder %v5676, 0
        %v6035 = vsub.s32 0, %v5676
        %v6036 = vsel %vm6034, %v6035, %v5676
        %v6037 = vmul.u32.u64.compose %v6036, 2863311531
        %v6038 = vextract.low.u32 %v6037
        %v6039 = vextract.high.u32 %v6037
        %v6040 = vshrl.u32 %v6039, 4
        %v6041 = vmul.u32 %v6040, 24
        %v6042 = vsub.s32 %v6036, %v6041
        %v6043 = vsub.s32 0, %v6042
        %v6044 = vsel %vm6034, %v6043, %v6042
        %vm6045 = vcmp.lt.s32.totalorder %v5677, 0
        %v6046 = vsub.s32 0, %v5677
        %v6047 = vsel %vm6045, %v6046, %v5677
        %v6048 = vmul.u32.u64.compose %v6047, 2863311531
        %v6049 = vextract.low.u32 %v6048
        %v6050 = vextract.high.u32 %v6048
        %v6051 = vshrl.u32 %v6050, 4
        %v6052 = vmul.u32 %v6051, 24
        %v6053 = vsub.s32 %v6047, %v6052
        %v6054 = vsub.s32 0, %v6053
        %v6055 = vsel %vm6045, %v6054, %v6053
        %vm6056 = vcmp.lt.s32.totalorder %v5678, 0
        %v6057 = vsub.s32 0, %v5678
        %v6058 = vsel %vm6056, %v6057, %v5678
        %v6059 = vmul.u32.u64.compose %v6058, 2863311531
        %v6060 = vextract.low.u32 %v6059
        %v6061 = vextract.high.u32 %v6059
        %v6062 = vshrl.u32 %v6061, 4
        %v6063 = vmul.u32 %v6062, 24
        %v6064 = vsub.s32 %v6058, %v6063
        %v6065 = vsub.s32 0, %v6064
        %v6066 = vsel %vm6056, %v6065, %v6064
        %vm6067 = vcmp.lt.s32.totalorder %v5679, 0
        %v6068 = vsub.s32 0, %v5679
        %v6069 = vsel %vm6067, %v6068, %v5679
        %v6070 = vmul.u32.u64.compose %v6069, 2863311531
        %v6071 = vextract.low.u32 %v6070
        %v6072 = vextract.high.u32 %v6070
        %v6073 = vshrl.u32 %v6072, 4
        %v6074 = vmul.u32 %v6073, 24
        %v6075 = vsub.s32 %v6069, %v6074
        %v6076 = vsub.s32 0, %v6075
        %v6077 = vsel %vm6067, %v6076, %v6075
        %vm6078 = vcmp.lt.s32.totalorder %v5680, 0
        %v6079 = vsub.s32 0, %v5680
        %v6080 = vsel %vm6078, %v6079, %v5680
        %v6081 = vmul.u32.u64.compose %v6080, 2863311531
        %v6082 = vextract.low.u32 %v6081
        %v6083 = vextract.high.u32 %v6081
        %v6084 = vshrl.u32 %v6083, 4
        %v6085 = vmul.u32 %v6084, 24
        %v6086 = vsub.s32 %v6080, %v6085
        %v6087 = vsub.s32 0, %v6086
        %v6088 = vsel %vm6078, %v6087, %v6086
        %vm6089 = vcmp.lt.s32.totalorder %v5681, 0
        %v6090 = vsub.s32 0, %v5681
        %v6091 = vsel %vm6089, %v6090, %v5681
        %v6092 = vmul.u32.u64.compose %v6091, 2863311531
        %v6093 = vextract.low.u32 %v6092
        %v6094 = vextract.high.u32 %v6092
        %v6095 = vshrl.u32 %v6094, 4
        %v6096 = vmul.u32 %v6095, 24
        %v6097 = vsub.s32 %v6091, %v6096
        %v6098 = vsub.s32 0, %v6097
        %v6099 = vsel %vm6089, %v6098, %v6097
        %vm6100 = vcmp.lt.s32.totalorder %v5682, 0
        %v6101 = vsub.s32 0, %v5682
        %v6102 = vsel %vm6100, %v6101, %v5682
        %v6103 = vmul.u32.u64.compose %v6102, 2863311531
        %v6104 = vextract.low.u32 %v6103
        %v6105 = vextract.high.u32 %v6103
        %v6106 = vshrl.u32 %v6105, 4
        %v6107 = vmul.u32 %v6106, 24
        %v6108 = vsub.s32 %v6102, %v6107
        %v6109 = vsub.s32 0, %v6108
        %v6110 = vsel %vm6100, %v6109, %v6108
        %vm6111 = vcmp.lt.s32.totalorder %v5683, 0
        %v6112 = vsub.s32 0, %v5683
        %v6113 = vsel %vm6111, %v6112, %v5683
        %v6114 = vmul.u32.u64.compose %v6113, 2863311531
        %v6115 = vextract.low.u32 %v6114
        %v6116 = vextract.high.u32 %v6114
        %v6117 = vshrl.u32 %v6116, 4
        %v6118 = vmul.u32 %v6117, 24
        %v6119 = vsub.s32 %v6113, %v6118
        %v6120 = vsub.s32 0, %v6119
        %v6121 = vsel %vm6111, %v6120, %v6119
        %vm6122 = vcmp.lt.s32.totalorder %v5684, 0
        %v6123 = vsub.s32 0, %v5684
        %v6124 = vsel %vm6122, %v6123, %v5684
        %v6125 = vmul.u32.u64.compose %v6124, 2863311531
        %v6126 = vextract.low.u32 %v6125
        %v6127 = vextract.high.u32 %v6125
        %v6128 = vshrl.u32 %v6127, 4
        %v6129 = vmul.u32 %v6128, 24
        %v6130 = vsub.s32 %v6124, %v6129
        %v6131 = vsub.s32 0, %v6130
        %v6132 = vsel %vm6122, %v6131, %v6130
        %vm6133 = vcmp.lt.s32.totalorder %v5685, 0
        %v6134 = vsub.s32 0, %v5685
        %v6135 = vsel %vm6133, %v6134, %v5685
        %v6136 = vmul.u32.u64.compose %v6135, 2863311531
        %v6137 = vextract.low.u32 %v6136
        %v6138 = vextract.high.u32 %v6136
        %v6139 = vshrl.u32 %v6138, 4
        %v6140 = vmul.u32 %v6139, 24
        %v6141 = vsub.s32 %v6135, %v6140
        %v6142 = vsub.s32 0, %v6141
        %v6143 = vsel %vm6133, %v6142, %v6141
        %vm6144 = vcmp.lt.s32.totalorder %v5686, 0
        %v6145 = vsub.s32 0, %v5686
        %v6146 = vsel %vm6144, %v6145, %v5686
        %v6147 = vmul.u32.u64.compose %v6146, 2863311531
        %v6148 = vextract.low.u32 %v6147
        %v6149 = vextract.high.u32 %v6147
        %v6150 = vshrl.u32 %v6149, 4
        %v6151 = vmul.u32 %v6150, 24
        %v6152 = vsub.s32 %v6146, %v6151
        %v6153 = vsub.s32 0, %v6152
        %v6154 = vsel %vm6144, %v6153, %v6152
        %vm6155 = vcmp.lt.s32.totalorder %v5687, 0
        %v6156 = vsub.s32 0, %v5687
        %v6157 = vsel %vm6155, %v6156, %v5687
        %v6158 = vmul.u32.u64.compose %v6157, 2863311531
        %v6159 = vextract.low.u32 %v6158
        %v6160 = vextract.high.u32 %v6158
        %v6161 = vshrl.u32 %v6160, 4
        %v6162 = vmul.u32 %v6161, 24
        %v6163 = vsub.s32 %v6157, %v6162
        %v6164 = vsub.s32 0, %v6163
        %v6165 = vsel %vm6155, %v6164, %v6163
        %vm6166 = vcmp.lt.s32.totalorder %v5688, 0
        %v6167 = vsub.s32 0, %v5688
        %v6168 = vsel %vm6166, %v6167, %v5688
        %v6169 = vmul.u32.u64.compose %v6168, 2863311531
        %v6170 = vextract.low.u32 %v6169
        %v6171 = vextract.high.u32 %v6169
        %v6172 = vshrl.u32 %v6171, 4
        %v6173 = vmul.u32 %v6172, 24
        %v6174 = vsub.s32 %v6168, %v6173
        %v6175 = vsub.s32 0, %v6174
        %v6176 = vsel %vm6166, %v6175, %v6174
        %vm6177 = vcmp.lt.s32.totalorder %v5689, 0
        %v6178 = vsub.s32 0, %v5689
        %v6179 = vsel %vm6177, %v6178, %v5689
        %v6180 = vmul.u32.u64.compose %v6179, 2863311531
        %v6181 = vextract.low.u32 %v6180
        %v6182 = vextract.high.u32 %v6180
        %v6183 = vshrl.u32 %v6182, 4
        %v6184 = vmul.u32 %v6183, 24
        %v6185 = vsub.s32 %v6179, %v6184
        %v6186 = vsub.s32 0, %v6185
        %v6187 = vsel %vm6177, %v6186, %v6185
        %vm6188 = vcmp.lt.s32.totalorder %v5690, 0
        %v6189 = vsub.s32 0, %v5690
        %v6190 = vsel %vm6188, %v6189, %v5690
        %v6191 = vmul.u32.u64.compose %v6190, 2863311531
        %v6192 = vextract.low.u32 %v6191
        %v6193 = vextract.high.u32 %v6191
        %v6194 = vshrl.u32 %v6193, 4
        %v6195 = vmul.u32 %v6194, 24
        %v6196 = vsub.s32 %v6190, %v6195
        %v6197 = vsub.s32 0, %v6196
        %v6198 = vsel %vm6188, %v6197, %v6196
        %vm6199 = vcmp.lt.s32.totalorder %v5691, 0
        %v6200 = vsub.s32 0, %v5691
        %v6201 = vsel %vm6199, %v6200, %v5691
        %v6202 = vmul.u32.u64.compose %v6201, 2863311531
        %v6203 = vextract.low.u32 %v6202
        %v6204 = vextract.high.u32 %v6202
        %v6205 = vshrl.u32 %v6204, 4
        %v6206 = vmul.u32 %v6205, 24
        %v6207 = vsub.s32 %v6201, %v6206
        %v6208 = vsub.s32 0, %v6207
        %v6209 = vsel %vm6199, %v6208, %v6207
        %vm6210 = vcmp.lt.s32.totalorder %v5692, 0
        %v6211 = vsub.s32 0, %v5692
        %v6212 = vsel %vm6210, %v6211, %v5692
        %v6213 = vmul.u32.u64.compose %v6212, 2863311531
        %v6214 = vextract.low.u32 %v6213
        %v6215 = vextract.high.u32 %v6213
        %v6216 = vshrl.u32 %v6215, 4
        %v6217 = vmul.u32 %v6216, 24
        %v6218 = vsub.s32 %v6212, %v6217
        %v6219 = vsub.s32 0, %v6218
        %v6220 = vsel %vm6210, %v6219, %v6218
        %vm6221 = vcmp.ne.s32.totalorder %v5703, 0
        %vm6222 = vcmp.ne.s32.totalorder %v5714, 0
        %vm6223 = vcmp.ne.s32.totalorder %v5725, 0
        %vm6224 = vcmp.ne.s32.totalorder %v5736, 0
        %vm6225 = vcmp.ne.s32.totalorder %v5747, 0
        %vm6226 = vcmp.ne.s32.totalorder %v5758, 0
        %vm6227 = vcmp.ne.s32.totalorder %v5769, 0
        %vm6228 = vcmp.ne.s32.totalorder %v5780, 0
        %vm6229 = vcmp.ne.s32.totalorder %v5791, 0
        %vm6230 = vcmp.ne.s32.totalorder %v5802, 0
        %vm6231 = vcmp.ne.s32.totalorder %v5813, 0
        %vm6232 = vcmp.ne.s32.totalorder %v5824, 0
        %vm6233 = vcmp.ne.s32.totalorder %v5835, 0
        %vm6234 = vcmp.ne.s32.totalorder %v5846, 0
        %vm6235 = vcmp.ne.s32.totalorder %v5857, 0
        %vm6236 = vcmp.ne.s32.totalorder %v5868, 0
        %vm6237 = vcmp.ne.s32.totalorder %v5879, 0
        %vm6238 = vcmp.ne.s32.totalorder %v5890, 0
        %vm6239 = vcmp.ne.s32.totalorder %v5901, 0
        %vm6240 = vcmp.ne.s32.totalorder %v5912, 0
        %vm6241 = vcmp.ne.s32.totalorder %v5923, 0
        %vm6242 = vcmp.ne.s32.totalorder %v5934, 0
        %vm6243 = vcmp.ne.s32.totalorder %v5945, 0
        %vm6244 = vcmp.ne.s32.totalorder %v5956, 0
        %vm6245 = vcmp.ne.s32.totalorder %v5967, 0
        %vm6246 = vcmp.ne.s32.totalorder %v5978, 0
        %vm6247 = vcmp.ne.s32.totalorder %v5989, 0
        %vm6248 = vcmp.ne.s32.totalorder %v6000, 0
        %vm6249 = vcmp.ne.s32.totalorder %v6011, 0
        %vm6250 = vcmp.ne.s32.totalorder %v6022, 0
        %vm6251 = vcmp.ne.s32.totalorder %v6033, 0
        %vm6252 = vcmp.ne.s32.totalorder %v6044, 0
        %vm6253 = vcmp.ne.s32.totalorder %v6055, 0
        %vm6254 = vcmp.ne.s32.totalorder %v6066, 0
        %vm6255 = vcmp.ne.s32.totalorder %v6077, 0
        %vm6256 = vcmp.ne.s32.totalorder %v6088, 0
        %vm6257 = vcmp.ne.s32.totalorder %v6099, 0
        %vm6258 = vcmp.ne.s32.totalorder %v6110, 0
        %vm6259 = vcmp.ne.s32.totalorder %v6121, 0
        %vm6260 = vcmp.ne.s32.totalorder %v6132, 0
        %vm6261 = vcmp.ne.s32.totalorder %v6143, 0
        %vm6262 = vcmp.ne.s32.totalorder %v6154, 0
        %vm6263 = vcmp.ne.s32.totalorder %v6165, 0
        %vm6264 = vcmp.ne.s32.totalorder %v6176, 0
        %vm6265 = vcmp.ne.s32.totalorder %v6187, 0
        %vm6266 = vcmp.ne.s32.totalorder %v6198, 0
        %vm6267 = vcmp.ne.s32.totalorder %v6209, 0
        %vm6268 = vcmp.ne.s32.totalorder %v6220, 0
        %vm6269 = vcmp.lt.s32.totalorder %v5703, 0
        %vm6270 = vcmp.lt.s32.totalorder %v5714, 0
        %vm6271 = vcmp.lt.s32.totalorder %v5725, 0
        %vm6272 = vcmp.lt.s32.totalorder %v5736, 0
        %vm6273 = vcmp.lt.s32.totalorder %v5747, 0
        %vm6274 = vcmp.lt.s32.totalorder %v5758, 0
        %vm6275 = vcmp.lt.s32.totalorder %v5769, 0
        %vm6276 = vcmp.lt.s32.totalorder %v5780, 0
        %vm6277 = vcmp.lt.s32.totalorder %v5791, 0
        %vm6278 = vcmp.lt.s32.totalorder %v5802, 0
        %vm6279 = vcmp.lt.s32.totalorder %v5813, 0
        %vm6280 = vcmp.lt.s32.totalorder %v5824, 0
        %vm6281 = vcmp.lt.s32.totalorder %v5835, 0
        %vm6282 = vcmp.lt.s32.totalorder %v5846, 0
        %vm6283 = vcmp.lt.s32.totalorder %v5857, 0
        %vm6284 = vcmp.lt.s32.totalorder %v5868, 0
        %vm6285 = vcmp.lt.s32.totalorder %v5879, 0
        %vm6286 = vcmp.lt.s32.totalorder %v5890, 0
        %vm6287 = vcmp.lt.s32.totalorder %v5901, 0
        %vm6288 = vcmp.lt.s32.totalorder %v5912, 0
        %vm6289 = vcmp.lt.s32.totalorder %v5923, 0
        %vm6290 = vcmp.lt.s32.totalorder %v5934, 0
        %vm6291 = vcmp.lt.s32.totalorder %v5945, 0
        %vm6292 = vcmp.lt.s32.totalorder %v5956, 0
        %vm6293 = vcmp.lt.s32.totalorder %v5967, 0
        %vm6294 = vcmp.lt.s32.totalorder %v5978, 0
        %vm6295 = vcmp.lt.s32.totalorder %v5989, 0
        %vm6296 = vcmp.lt.s32.totalorder %v6000, 0
        %vm6297 = vcmp.lt.s32.totalorder %v6011, 0
        %vm6298 = vcmp.lt.s32.totalorder %v6022, 0
        %vm6299 = vcmp.lt.s32.totalorder %v6033, 0
        %vm6300 = vcmp.lt.s32.totalorder %v6044, 0
        %vm6301 = vcmp.lt.s32.totalorder %v6055, 0
        %vm6302 = vcmp.lt.s32.totalorder %v6066, 0
        %vm6303 = vcmp.lt.s32.totalorder %v6077, 0
        %vm6304 = vcmp.lt.s32.totalorder %v6088, 0
        %vm6305 = vcmp.lt.s32.totalorder %v6099, 0
        %vm6306 = vcmp.lt.s32.totalorder %v6110, 0
        %vm6307 = vcmp.lt.s32.totalorder %v6121, 0
        %vm6308 = vcmp.lt.s32.totalorder %v6132, 0
        %vm6309 = vcmp.lt.s32.totalorder %v6143, 0
        %vm6310 = vcmp.lt.s32.totalorder %v6154, 0
        %vm6311 = vcmp.lt.s32.totalorder %v6165, 0
        %vm6312 = vcmp.lt.s32.totalorder %v6176, 0
        %vm6313 = vcmp.lt.s32.totalorder %v6187, 0
        %vm6314 = vcmp.lt.s32.totalorder %v6198, 0
        %vm6315 = vcmp.lt.s32.totalorder %v6209, 0
        %vm6316 = vcmp.lt.s32.totalorder %v6220, 0
        %vm6317 = vmand %vm6269, %vm6221
        %vm6318 = vmand %vm6270, %vm6222
        %vm6319 = vmand %vm6271, %vm6223
        %vm6320 = vmand %vm6272, %vm6224
        %vm6321 = vmand %vm6273, %vm6225
        %vm6322 = vmand %vm6274, %vm6226
        %vm6323 = vmand %vm6275, %vm6227
        %vm6324 = vmand %vm6276, %vm6228
        %vm6325 = vmand %vm6277, %vm6229
        %vm6326 = vmand %vm6278, %vm6230
        %vm6327 = vmand %vm6279, %vm6231
        %vm6328 = vmand %vm6280, %vm6232
        %vm6329 = vmand %vm6281, %vm6233
        %vm6330 = vmand %vm6282, %vm6234
        %vm6331 = vmand %vm6283, %vm6235
        %vm6332 = vmand %vm6284, %vm6236
        %vm6333 = vmand %vm6285, %vm6237
        %vm6334 = vmand %vm6286, %vm6238
        %vm6335 = vmand %vm6287, %vm6239
        %vm6336 = vmand %vm6288, %vm6240
        %vm6337 = vmand %vm6289, %vm6241
        %vm6338 = vmand %vm6290, %vm6242
        %vm6339 = vmand %vm6291, %vm6243
        %vm6340 = vmand %vm6292, %vm6244
        %vm6341 = vmand %vm6293, %vm6245
        %vm6342 = vmand %vm6294, %vm6246
        %vm6343 = vmand %vm6295, %vm6247
        %vm6344 = vmand %vm6296, %vm6248
        %vm6345 = vmand %vm6297, %vm6249
        %vm6346 = vmand %vm6298, %vm6250
        %vm6347 = vmand %vm6299, %vm6251
        %vm6348 = vmand %vm6300, %vm6252
        %vm6349 = vmand %vm6301, %vm6253
        %vm6350 = vmand %vm6302, %vm6254
        %vm6351 = vmand %vm6303, %vm6255
        %vm6352 = vmand %vm6304, %vm6256
        %vm6353 = vmand %vm6305, %vm6257
        %vm6354 = vmand %vm6306, %vm6258
        %vm6355 = vmand %vm6307, %vm6259
        %vm6356 = vmand %vm6308, %vm6260
        %vm6357 = vmand %vm6309, %vm6261
        %vm6358 = vmand %vm6310, %vm6262
        %vm6359 = vmand %vm6311, %vm6263
        %vm6360 = vmand %vm6312, %vm6264
        %vm6361 = vmand %vm6313, %vm6265
        %vm6362 = vmand %vm6314, %vm6266
        %vm6363 = vmand %vm6315, %vm6267
        %vm6364 = vmand %vm6316, %vm6268
        %v6365 = vadd.s32 %v5703, 24
        %v6366 = vadd.s32 %v5714, 24
        %v6367 = vadd.s32 %v5725, 24
        %v6368 = vadd.s32 %v5736, 24
        %v6369 = vadd.s32 %v5747, 24
        %v6370 = vadd.s32 %v5758, 24
        %v6371 = vadd.s32 %v5769, 24
        %v6372 = vadd.s32 %v5780, 24
        %v6373 = vadd.s32 %v5791, 24
        %v6374 = vadd.s32 %v5802, 24
        %v6375 = vadd.s32 %v5813, 24
        %v6376 = vadd.s32 %v5824, 24
        %v6377 = vadd.s32 %v5835, 24
        %v6378 = vadd.s32 %v5846, 24
        %v6379 = vadd.s32 %v5857, 24
        %v6380 = vadd.s32 %v5868, 24
        %v6381 = vadd.s32 %v5879, 24
        %v6382 = vadd.s32 %v5890, 24
        %v6383 = vadd.s32 %v5901, 24
        %v6384 = vadd.s32 %v5912, 24
        %v6385 = vadd.s32 %v5923, 24
        %v6386 = vadd.s32 %v5934, 24
        %v6387 = vadd.s32 %v5945, 24
        %v6388 = vadd.s32 %v5956, 24
        %v6389 = vadd.s32 %v5967, 24
        %v6390 = vadd.s32 %v5978, 24
        %v6391 = vadd.s32 %v5989, 24
        %v6392 = vadd.s32 %v6000, 24
        %v6393 = vadd.s32 %v6011, 24
        %v6394 = vadd.s32 %v6022, 24
        %v6395 = vadd.s32 %v6033, 24
        %v6396 = vadd.s32 %v6044, 24
        %v6397 = vadd.s32 %v6055, 24
        %v6398 = vadd.s32 %v6066, 24
        %v6399 = vadd.s32 %v6077, 24
        %v6400 = vadd.s32 %v6088, 24
        %v6401 = vadd.s32 %v6099, 24
        %v6402 = vadd.s32 %v6110, 24
        %v6403 = vadd.s32 %v6121, 24
        %v6404 = vadd.s32 %v6132, 24
        %v6405 = vadd.s32 %v6143, 24
        %v6406 = vadd.s32 %v6154, 24
        %v6407 = vadd.s32 %v6165, 24
        %v6408 = vadd.s32 %v6176, 24
        %v6409 = vadd.s32 %v6187, 24
        %v6410 = vadd.s32 %v6198, 24
        %v6411 = vadd.s32 %v6209, 24
        %v6412 = vadd.s32 %v6220, 24
        %v6413 = vsel %vm6317, %v6365, %v5703
        %v6414 = vsel %vm6318, %v6366, %v5714
        %v6415 = vsel %vm6319, %v6367, %v5725
        %v6416 = vsel %vm6320, %v6368, %v5736
        %v6417 = vsel %vm6321, %v6369, %v5747
        %v6418 = vsel %vm6322, %v6370, %v5758
        %v6419 = vsel %vm6323, %v6371, %v5769
        %v6420 = vsel %vm6324, %v6372, %v5780
        %v6421 = vsel %vm6325, %v6373, %v5791
        %v6422 = vsel %vm6326, %v6374, %v5802
        %v6423 = vsel %vm6327, %v6375, %v5813
        %v6424 = vsel %vm6328, %v6376, %v5824
        %v6425 = vsel %vm6329, %v6377, %v5835
        %v6426 = vsel %vm6330, %v6378, %v5846
        %v6427 = vsel %vm6331, %v6379, %v5857
        %v6428 = vsel %vm6332, %v6380, %v5868
        %v6429 = vsel %vm6333, %v6381, %v5879
        %v6430 = vsel %vm6334, %v6382, %v5890
        %v6431 = vsel %vm6335, %v6383, %v5901
        %v6432 = vsel %vm6336, %v6384, %v5912
        %v6433 = vsel %vm6337, %v6385, %v5923
        %v6434 = vsel %vm6338, %v6386, %v5934
        %v6435 = vsel %vm6339, %v6387, %v5945
        %v6436 = vsel %vm6340, %v6388, %v5956
        %v6437 = vsel %vm6341, %v6389, %v5967
        %v6438 = vsel %vm6342, %v6390, %v5978
        %v6439 = vsel %vm6343, %v6391, %v5989
        %v6440 = vsel %vm6344, %v6392, %v6000
        %v6441 = vsel %vm6345, %v6393, %v6011
        %v6442 = vsel %vm6346, %v6394, %v6022
        %v6443 = vsel %vm6347, %v6395, %v6033
        %v6444 = vsel %vm6348, %v6396, %v6044
        %v6445 = vsel %vm6349, %v6397, %v6055
        %v6446 = vsel %vm6350, %v6398, %v6066
        %v6447 = vsel %vm6351, %v6399, %v6077
        %v6448 = vsel %vm6352, %v6400, %v6088
        %v6449 = vsel %vm6353, %v6401, %v6099
        %v6450 = vsel %vm6354, %v6402, %v6110
        %v6451 = vsel %vm6355, %v6403, %v6121
        %v6452 = vsel %vm6356, %v6404, %v6132
        %v6453 = vsel %vm6357, %v6405, %v6143
        %v6454 = vsel %vm6358, %v6406, %v6154
        %v6455 = vsel %vm6359, %v6407, %v6165
        %v6456 = vsel %vm6360, %v6408, %v6176
        %v6457 = vsel %vm6361, %v6409, %v6187
        %v6458 = vsel %vm6362, %v6410, %v6198
        %v6459 = vsel %vm6363, %v6411, %v6209
        %v6460 = vsel %vm6364, %v6412, %v6220
        %vm6461 = vcmp.lt.s32.totalorder %v6413, 16
        %vm6462 = vcmp.lt.s32.totalorder %v6414, 16
        %vm6463 = vcmp.lt.s32.totalorder %v6415, 16
        %vm6464 = vcmp.lt.s32.totalorder %v6416, 16
        %vm6465 = vcmp.lt.s32.totalorder %v6417, 16
        %vm6466 = vcmp.lt.s32.totalorder %v6418, 16
        %vm6467 = vcmp.lt.s32.totalorder %v6419, 16
        %vm6468 = vcmp.lt.s32.totalorder %v6420, 16
        %vm6469 = vcmp.lt.s32.totalorder %v6421, 16
        %vm6470 = vcmp.lt.s32.totalorder %v6422, 16
        %vm6471 = vcmp.lt.s32.totalorder %v6423, 16
        %vm6472 = vcmp.lt.s32.totalorder %v6424, 16
        %vm6473 = vcmp.lt.s32.totalorder %v6425, 16
        %vm6474 = vcmp.lt.s32.totalorder %v6426, 16
        %vm6475 = vcmp.lt.s32.totalorder %v6427, 16
        %vm6476 = vcmp.lt.s32.totalorder %v6428, 16
        %vm6477 = vcmp.lt.s32.totalorder %v6429, 16
        %vm6478 = vcmp.lt.s32.totalorder %v6430, 16
        %vm6479 = vcmp.lt.s32.totalorder %v6431, 16
        %vm6480 = vcmp.lt.s32.totalorder %v6432, 16
        %vm6481 = vcmp.lt.s32.totalorder %v6433, 16
        %vm6482 = vcmp.lt.s32.totalorder %v6434, 16
        %vm6483 = vcmp.lt.s32.totalorder %v6435, 16
        %vm6484 = vcmp.lt.s32.totalorder %v6436, 16
        %vm6485 = vcmp.lt.s32.totalorder %v6437, 16
        %vm6486 = vcmp.lt.s32.totalorder %v6438, 16
        %vm6487 = vcmp.lt.s32.totalorder %v6439, 16
        %vm6488 = vcmp.lt.s32.totalorder %v6440, 16
        %vm6489 = vcmp.lt.s32.totalorder %v6441, 16
        %vm6490 = vcmp.lt.s32.totalorder %v6442, 16
        %vm6491 = vcmp.lt.s32.totalorder %v6443, 16
        %vm6492 = vcmp.lt.s32.totalorder %v6444, 16
        %vm6493 = vcmp.lt.s32.totalorder %v6445, 16
        %vm6494 = vcmp.lt.s32.totalorder %v6446, 16
        %vm6495 = vcmp.lt.s32.totalorder %v6447, 16
        %vm6496 = vcmp.lt.s32.totalorder %v6448, 16
        %vm6497 = vcmp.lt.s32.totalorder %v6449, 16
        %vm6498 = vcmp.lt.s32.totalorder %v6450, 16
        %vm6499 = vcmp.lt.s32.totalorder %v6451, 16
        %vm6500 = vcmp.lt.s32.totalorder %v6452, 16
        %vm6501 = vcmp.lt.s32.totalorder %v6453, 16
        %vm6502 = vcmp.lt.s32.totalorder %v6454, 16
        %vm6503 = vcmp.lt.s32.totalorder %v6455, 16
        %vm6504 = vcmp.lt.s32.totalorder %v6456, 16
        %vm6505 = vcmp.lt.s32.totalorder %v6457, 16
        %vm6506 = vcmp.lt.s32.totalorder %v6458, 16
        %vm6507 = vcmp.lt.s32.totalorder %v6459, 16
        %vm6508 = vcmp.lt.s32.totalorder %v6460, 16
        %v6509 = vsel %vm6461, 1, 0
        %v6510 = vsel %vm6462, 1, 0
        %v6511 = vsel %vm6463, 1, 0
        %v6512 = vsel %vm6464, 1, 0
        %v6513 = vsel %vm6465, 1, 0
        %v6514 = vsel %vm6466, 1, 0
        %v6515 = vsel %vm6467, 1, 0
        %v6516 = vsel %vm6468, 1, 0
        %v6517 = vsel %vm6469, 1, 0
        %v6518 = vsel %vm6470, 1, 0
        %v6519 = vsel %vm6471, 1, 0
        %v6520 = vsel %vm6472, 1, 0
        %v6521 = vsel %vm6473, 1, 0
        %v6522 = vsel %vm6474, 1, 0
        %v6523 = vsel %vm6475, 1, 0
        %v6524 = vsel %vm6476, 1, 0
        %v6525 = vsel %vm6477, 1, 0
        %v6526 = vsel %vm6478, 1, 0
        %v6527 = vsel %vm6479, 1, 0
        %v6528 = vsel %vm6480, 1, 0
        %v6529 = vsel %vm6481, 1, 0
        %v6530 = vsel %vm6482, 1, 0
        %v6531 = vsel %vm6483, 1, 0
        %v6532 = vsel %vm6484, 1, 0
        %v6533 = vsel %vm6485, 1, 0
        %v6534 = vsel %vm6486, 1, 0
        %v6535 = vsel %vm6487, 1, 0
        %v6536 = vsel %vm6488, 1, 0
        %v6537 = vsel %vm6489, 1, 0
        %v6538 = vsel %vm6490, 1, 0
        %v6539 = vsel %vm6491, 1, 0
        %v6540 = vsel %vm6492, 1, 0
        %v6541 = vsel %vm6493, 1, 0
        %v6542 = vsel %vm6494, 1, 0
        %v6543 = vsel %vm6495, 1, 0
        %v6544 = vsel %vm6496, 1, 0
        %v6545 = vsel %vm6497, 1, 0
        %v6546 = vsel %vm6498, 1, 0
        %v6547 = vsel %vm6499, 1, 0
        %v6548 = vsel %vm6500, 1, 0
        %v6549 = vsel %vm6501, 1, 0
        %v6550 = vsel %vm6502, 1, 0
        %v6551 = vsel %vm6503, 1, 0
        %v6552 = vsel %vm6504, 1, 0
        %v6553 = vsel %vm6505, 1, 0
        %v6554 = vsel %vm6506, 1, 0
        %v6555 = vsel %vm6507, 1, 0
        %v6556 = vsel %vm6508, 1, 0
        %vm6557 = vcmp.eq.s32.totalorder %v6509, 1
        %vm6558 = vcmp.eq.s32.totalorder %v6510, 1
        %vm6559 = vcmp.eq.s32.totalorder %v6511, 1
        %vm6560 = vcmp.eq.s32.totalorder %v6512, 1
        %vm6561 = vcmp.eq.s32.totalorder %v6513, 1
        %vm6562 = vcmp.eq.s32.totalorder %v6514, 1
        %vm6563 = vcmp.eq.s32.totalorder %v6515, 1
        %vm6564 = vcmp.eq.s32.totalorder %v6516, 1
        %vm6565 = vcmp.eq.s32.totalorder %v6517, 1
        %vm6566 = vcmp.eq.s32.totalorder %v6518, 1
        %vm6567 = vcmp.eq.s32.totalorder %v6519, 1
        %vm6568 = vcmp.eq.s32.totalorder %v6520, 1
        %vm6569 = vcmp.eq.s32.totalorder %v6521, 1
        %vm6570 = vcmp.eq.s32.totalorder %v6522, 1
        %vm6571 = vcmp.eq.s32.totalorder %v6523, 1
        %vm6572 = vcmp.eq.s32.totalorder %v6524, 1
        %vm6573 = vcmp.eq.s32.totalorder %v6525, 1
        %vm6574 = vcmp.eq.s32.totalorder %v6526, 1
        %vm6575 = vcmp.eq.s32.totalorder %v6527, 1
        %vm6576 = vcmp.eq.s32.totalorder %v6528, 1
        %vm6577 = vcmp.eq.s32.totalorder %v6529, 1
        %vm6578 = vcmp.eq.s32.totalorder %v6530, 1
        %vm6579 = vcmp.eq.s32.totalorder %v6531, 1
        %vm6580 = vcmp.eq.s32.totalorder %v6532, 1
        %vm6581 = vcmp.eq.s32.totalorder %v6533, 1
        %vm6582 = vcmp.eq.s32.totalorder %v6534, 1
        %vm6583 = vcmp.eq.s32.totalorder %v6535, 1
        %vm6584 = vcmp.eq.s32.totalorder %v6536, 1
        %vm6585 = vcmp.eq.s32.totalorder %v6537, 1
        %vm6586 = vcmp.eq.s32.totalorder %v6538, 1
        %vm6587 = vcmp.eq.s32.totalorder %v6539, 1
        %vm6588 = vcmp.eq.s32.totalorder %v6540, 1
        %vm6589 = vcmp.eq.s32.totalorder %v6541, 1
        %vm6590 = vcmp.eq.s32.totalorder %v6542, 1
        %vm6591 = vcmp.eq.s32.totalorder %v6543, 1
        %vm6592 = vcmp.eq.s32.totalorder %v6544, 1
        %vm6593 = vcmp.eq.s32.totalorder %v6545, 1
        %vm6594 = vcmp.eq.s32.totalorder %v6546, 1
        %vm6595 = vcmp.eq.s32.totalorder %v6547, 1
        %vm6596 = vcmp.eq.s32.totalorder %v6548, 1
        %vm6597 = vcmp.eq.s32.totalorder %v6549, 1
        %vm6598 = vcmp.eq.s32.totalorder %v6550, 1
        %vm6599 = vcmp.eq.s32.totalorder %v6551, 1
        %vm6600 = vcmp.eq.s32.totalorder %v6552, 1
        %vm6601 = vcmp.eq.s32.totalorder %v6553, 1
        %vm6602 = vcmp.eq.s32.totalorder %v6554, 1
        %vm6603 = vcmp.eq.s32.totalorder %v6555, 1
        %vm6604 = vcmp.eq.s32.totalorder %v6556, 1
        %v6605 = vsel %vm6557, %v5596, 0.0
        %v6606 = vsel %vm6558, %v5597, 0.0
        %v6607 = vsel %vm6559, %v5598, 0.0
        %v6608 = vsel %vm6560, %v5599, 0.0
        %v6609 = vsel %vm6561, %v5600, 0.0
        %v6610 = vsel %vm6562, %v5601, 0.0
        %v6611 = vsel %vm6563, %v5602, 0.0
        %v6612 = vsel %vm6564, %v5603, 0.0
        %v6613 = vsel %vm6565, %v5604, 0.0
        %v6614 = vsel %vm6566, %v5605, 0.0
        %v6615 = vsel %vm6567, %v5606, 0.0
        %v6616 = vsel %vm6568, %v5607, 0.0
        %v6617 = vsel %vm6569, %v5608, 0.0
        %v6618 = vsel %vm6570, %v5609, 0.0
        %v6619 = vsel %vm6571, %v5610, 0.0
        %v6620 = vsel %vm6572, %v5611, 0.0
        %v6621 = vsel %vm6573, %v5612, 0.0
        %v6622 = vsel %vm6574, %v5613, 0.0
        %v6623 = vsel %vm6575, %v5614, 0.0
        %v6624 = vsel %vm6576, %v5615, 0.0
        %v6625 = vsel %vm6577, %v5616, 0.0
        %v6626 = vsel %vm6578, %v5617, 0.0
        %v6627 = vsel %vm6579, %v5618, 0.0
        %v6628 = vsel %vm6580, %v5619, 0.0
        %v6629 = vsel %vm6581, %v5620, 0.0
        %v6630 = vsel %vm6582, %v5621, 0.0
        %v6631 = vsel %vm6583, %v5622, 0.0
        %v6632 = vsel %vm6584, %v5623, 0.0
        %v6633 = vsel %vm6585, %v5624, 0.0
        %v6634 = vsel %vm6586, %v5625, 0.0
        %v6635 = vsel %vm6587, %v5626, 0.0
        %v6636 = vsel %vm6588, %v5627, 0.0
        %v6637 = vsel %vm6589, %v5628, 0.0
        %v6638 = vsel %vm6590, %v5629, 0.0
        %v6639 = vsel %vm6591, %v5630, 0.0
        %v6640 = vsel %vm6592, %v5631, 0.0
        %v6641 = vsel %vm6593, %v5632, 0.0
        %v6642 = vsel %vm6594, %v5633, 0.0
        %v6643 = vsel %vm6595, %v5634, 0.0
        %v6644 = vsel %vm6596, %v5635, 0.0
        %v6645 = vsel %vm6597, %v5636, 0.0
        %v6646 = vsel %vm6598, %v5637, 0.0
        %v6647 = vsel %vm6599, %v5638, 0.0
        %v6648 = vsel %vm6600, %v5639, 0.0
        %v6649 = vsel %vm6601, %v5640, 0.0
        %v6650 = vsel %vm6602, %v5641, 0.0
        %v6651 = vsel %vm6603, %v5642, 0.0
        %v6652 = vsel %vm6604, %v5643, 0.0
        %vm6653 = vcmask 388096
        %6654 = vst.msk [vmem:[#allocation3] sm:$0xf] %vm6653, 0
        %6655 = vst.msk [vmem:[#allocation3 + $0x4] sm:$0xf] %vm6653, 0
        %6656 = vst.msk [vmem:[#allocation3 + $0x8] sm:$0xf] %vm6653, 0
        %vm6657 = vcmask 385024
        %vm6658 = vmand %vm6657, %vm342
        %v6659 = vld [vmem:[#allocation3 + $0xc] sm:$0x1]
        %v6660 = vsel %vm6658, 0, %v6659
        %6661 = vst [vmem:[#allocation3 + $0xc] sm:$0x1] %v6660
        %vm6662 = vcmask 388096
        %vm6663 = vmand %vm6662, %vm366
        %v6664 = vld [vmem:[#allocation3 + $0xcc] sm:$0xf]
        %v6665 = vsel %vm6663, 0, %v6664
        %6666 = vst [vmem:[#allocation3 + $0xcc] sm:$0xf] %v6665
        %6667 = vst.msk [vmem:[#allocation3 + $0xd0] sm:$0xf] %vm6653, 0
        %6668 = vst.msk [vmem:[#allocation3 + $0xd4] sm:$0xf] %vm6653, 0
        %6669 = vst.msk [vmem:[#allocation3 + $0xd8] sm:$0xf] %vm6653, 0
        %v6670 = vpack.c.bf16 %v6606, %v6605
        %v6671 = vpack.c.bf16 %v6608, %v6607
        %v6672 = vpack.c.bf16 %v6610, %v6609
        %v6673 = vpack.c.bf16 %v6612, %v6611
        %v6674 = vpack.c.bf16 %v6614, %v6613
        %v6675 = vpack.c.bf16 %v6616, %v6615
        %v6676 = vpack.c.bf16 %v6618, %v6617
        %v6677 = vpack.c.bf16 %v6620, %v6619
        %v6678 = vpack.c.bf16 %v6622, %v6621
        %v6679 = vpack.c.bf16 %v6624, %v6623
        %v6680 = vpack.c.bf16 %v6626, %v6625
        %v6681 = vpack.c.bf16 %v6628, %v6627
        %v6682 = vpack.c.bf16 %v6630, %v6629
        %v6683 = vpack.c.bf16 %v6632, %v6631
        %v6684 = vpack.c.bf16 %v6634, %v6633
        %v6685 = vpack.c.bf16 %v6636, %v6635
        %v6686 = vpack.c.bf16 %v6638, %v6637
        %v6687 = vpack.c.bf16 %v6640, %v6639
        %v6688 = vpack.c.bf16 %v6642, %v6641
        %v6689 = vpack.c.bf16 %v6644, %v6643
        %v6690 = vpack.c.bf16 %v6646, %v6645
        %v6691 = vpack.c.bf16 %v6648, %v6647
        %v6692 = vpack.c.bf16 %v6650, %v6649
        %v6693 = vpack.c.bf16 %v6652, %v6651
        %v6718 = vunpack.c.l.b16 %v6670
        %v6719 = vunpack.c.h.b16 %v6670
        %v6720 = vunpack.c.l.b16 %v6671
        %v6721 = vunpack.c.h.b16 %v6671
        %v6722 = vunpack.c.l.b16 %v6672
        %v6723 = vunpack.c.h.b16 %v6672
        %v6724 = vunpack.c.l.b16 %v6673
        %v6725 = vunpack.c.h.b16 %v6673
        %v6726 = vunpack.c.l.b16 %v6674
        %v6727 = vunpack.c.h.b16 %v6674
        %v6728 = vunpack.c.l.b16 %v6675
        %v6729 = vunpack.c.h.b16 %v6675
        %v6730 = vunpack.c.l.b16 %v6676
        %v6731 = vunpack.c.h.b16 %v6676
        %v6732 = vunpack.c.l.b16 %v6677
        %v6733 = vunpack.c.h.b16 %v6677
        %v6734 = vunpack.c.l.b16 %v6678
        %v6735 = vunpack.c.h.b16 %v6678
        %v6736 = vunpack.c.l.b16 %v6679
        %v6737 = vunpack.c.h.b16 %v6679
        %v6738 = vunpack.c.l.b16 %v6680
        %v6739 = vunpack.c.h.b16 %v6680
        %v6740 = vunpack.c.l.b16 %v6681
        %v6741 = vunpack.c.h.b16 %v6681
        %v6742 = vunpack.c.l.b16 %v6682
        %v6743 = vunpack.c.h.b16 %v6682
        %v6744 = vunpack.c.l.b16 %v6683
        %v6745 = vunpack.c.h.b16 %v6683
        %v6746 = vunpack.c.l.b16 %v6684
        %v6747 = vunpack.c.h.b16 %v6684
        %v6748 = vunpack.c.l.b16 %v6685
        %v6749 = vunpack.c.h.b16 %v6685
        %v6750 = vunpack.c.l.b16 %v6686
        %v6751 = vunpack.c.h.b16 %v6686
        %v6752 = vunpack.c.l.b16 %v6687
        %v6753 = vunpack.c.h.b16 %v6687
        %v6754 = vunpack.c.l.b16 %v6688
        %v6755 = vunpack.c.h.b16 %v6688
        %v6756 = vunpack.c.l.b16 %v6689
        %v6757 = vunpack.c.h.b16 %v6689
        %v6758 = vunpack.c.l.b16 %v6690
        %v6759 = vunpack.c.h.b16 %v6690
        %v6760 = vunpack.c.l.b16 %v6691
        %v6761 = vunpack.c.h.b16 %v6691
        %v6762 = vunpack.c.l.b16 %v6692
        %v6763 = vunpack.c.h.b16 %v6692
        %v6764 = vunpack.c.l.b16 %v6693
        %v6765 = vunpack.c.h.b16 %v6693
        %v6766 = vpack.c.b16 %v6718, %v6718
        %v6767 = vpack.c.b16 %v6719, %v6719
        %v6768 = vpack.c.b16 %v6720, %v6720
        %v6769 = vpack.c.b16 %v6721, %v6721
        %v6770 = vpack.c.b16 %v6722, %v6722
        %v6771 = vpack.c.b16 %v6723, %v6723
        %v6772 = vpack.c.b16 %v6724, %v6724
        %v6773 = vpack.c.b16 %v6725, %v6725
        %v6774 = vpack.c.b16 %v6726, %v6726
        %v6775 = vpack.c.b16 %v6727, %v6727
        %v6776 = vpack.c.b16 %v6728, %v6728
        %v6777 = vpack.c.b16 %v6729, %v6729
        %v6778 = vpack.c.b16 %v6730, %v6730
        %v6779 = vpack.c.b16 %v6731, %v6731
        %v6780 = vpack.c.b16 %v6732, %v6732
        %v6781 = vpack.c.b16 %v6733, %v6733
        %v6782 = vpack.c.b16 %v6734, %v6734
        %v6783 = vpack.c.b16 %v6735, %v6735
        %v6784 = vpack.c.b16 %v6736, %v6736
        %v6785 = vpack.c.b16 %v6737, %v6737
        %v6786 = vpack.c.b16 %v6738, %v6738
        %v6787 = vpack.c.b16 %v6739, %v6739
        %v6788 = vpack.c.b16 %v6740, %v6740
        %v6789 = vpack.c.b16 %v6741, %v6741
        %v6790 = vpack.c.b16 %v6742, %v6742
        %v6791 = vpack.c.b16 %v6743, %v6743
        %v6792 = vpack.c.b16 %v6744, %v6744
        %v6793 = vpack.c.b16 %v6745, %v6745
        %v6794 = vpack.c.b16 %v6746, %v6746
        %v6795 = vpack.c.b16 %v6747, %v6747
        %v6796 = vpack.c.b16 %v6748, %v6748
        %v6797 = vpack.c.b16 %v6749, %v6749
        %v6798 = vpack.c.b16 %v6750, %v6750
        %v6799 = vpack.c.b16 %v6751, %v6751
        %v6800 = vpack.c.b16 %v6752, %v6752
        %v6801 = vpack.c.b16 %v6753, %v6753
        %v6802 = vpack.c.b16 %v6754, %v6754
        %v6803 = vpack.c.b16 %v6755, %v6755
        %v6804 = vpack.c.b16 %v6756, %v6756
        %v6805 = vpack.c.b16 %v6757, %v6757
        %v6806 = vpack.c.b16 %v6758, %v6758
        %v6807 = vpack.c.b16 %v6759, %v6759
        %v6808 = vpack.c.b16 %v6760, %v6760
        %v6809 = vpack.c.b16 %v6761, %v6761
        %v6810 = vpack.c.b16 %v6762, %v6762
        %v6811 = vpack.c.b16 %v6763, %v6763
        %v6812 = vpack.c.b16 %v6764, %v6764
        %v6813 = vpack.c.b16 %v6765, %v6765
        %v6815 = vshrl.u32 %v6766, 16
        %v6817 = vrot.slane %v6815, 7
        %v6818 = vshll.u32 %v6766, 16
        %v6820 = vor.u32 %v6817, %v6818
        %v6821 = vrot.slane %v6817, 4
        %v6823 = vshrl.u32 %v6767, 16
        %v6825 = vrot.slane %v6823, 7
        %v6826 = vshll.u32 %v6767, 16
        %v6828 = vor.u32 %v6825, %v6826
        %v6829 = vsel %vm344, %v6821, %v6828
        %v6830 = vrot.slane %v6825, 4
        %v6832 = vshrl.u32 %v6768, 16
        %v6834 = vrot.slane %v6832, 7
        %v6835 = vshll.u32 %v6768, 16
        %v6837 = vor.u32 %v6834, %v6835
        %v6838 = vsel %vm344, %v6830, %v6837
        %v6839 = vrot.slane %v6834, 4
        %v6841 = vshrl.u32 %v6769, 16
        %v6843 = vrot.slane %v6841, 7
        %v6844 = vshll.u32 %v6769, 16
        %v6846 = vor.u32 %v6843, %v6844
        %v6847 = vsel %vm344, %v6839, %v6846
        %v6848 = vrot.slane %v6843, 4
        %v6850 = vshrl.u32 %v6770, 16
        %v6852 = vrot.slane %v6850, 7
        %v6853 = vshll.u32 %v6770, 16
        %v6855 = vor.u32 %v6852, %v6853
        %v6856 = vsel %vm344, %v6848, %v6855
        %v6857 = vrot.slane %v6852, 4
        %v6859 = vshrl.u32 %v6771, 16
        %v6861 = vrot.slane %v6859, 7
        %v6862 = vshll.u32 %v6771, 16
        %v6864 = vor.u32 %v6861, %v6862
        %v6865 = vsel %vm344, %v6857, %v6864
        %v6866 = vrot.slane %v6861, 4
        %v6868 = vshrl.u32 %v6772, 16
        %v6870 = vrot.slane %v6868, 7
        %v6871 = vshll.u32 %v6772, 16
        %v6873 = vor.u32 %v6870, %v6871
        %v6874 = vsel %vm344, %v6866, %v6873
        %v6875 = vrot.slane %v6870, 4
        %v6877 = vshrl.u32 %v6773, 16
        %v6879 = vrot.slane %v6877, 7
        %v6880 = vshll.u32 %v6773, 16
        %v6882 = vor.u32 %v6879, %v6880
        %v6883 = vsel %vm344, %v6875, %v6882
        %v6884 = vrot.slane %v6879, 4
        %v6886 = vshrl.u32 %v6774, 16
        %v6888 = vrot.slane %v6886, 7
        %v6889 = vshll.u32 %v6774, 16
        %v6891 = vor.u32 %v6888, %v6889
        %v6892 = vsel %vm344, %v6884, %v6891
        %v6893 = vrot.slane %v6888, 4
        %v6895 = vshrl.u32 %v6775, 16
        %v6897 = vrot.slane %v6895, 7
        %v6898 = vshll.u32 %v6775, 16
        %v6900 = vor.u32 %v6897, %v6898
        %v6901 = vsel %vm344, %v6893, %v6900
        %v6902 = vrot.slane %v6897, 4
        %v6904 = vshrl.u32 %v6776, 16
        %v6906 = vrot.slane %v6904, 7
        %v6907 = vshll.u32 %v6776, 16
        %v6909 = vor.u32 %v6906, %v6907
        %v6910 = vsel %vm344, %v6902, %v6909
        %v6911 = vrot.slane %v6906, 4
        %v6913 = vshrl.u32 %v6777, 16
        %v6915 = vrot.slane %v6913, 7
        %v6916 = vshll.u32 %v6777, 16
        %v6918 = vor.u32 %v6915, %v6916
        %v6919 = vsel %vm344, %v6911, %v6918
        %v6920 = vrot.slane %v6915, 4
        %v6922 = vshrl.u32 %v6778, 16
        %v6924 = vrot.slane %v6922, 7
        %v6925 = vshll.u32 %v6778, 16
        %v6927 = vor.u32 %v6924, %v6925
        %v6928 = vsel %vm344, %v6920, %v6927
        %v6929 = vrot.slane %v6924, 4
        %v6931 = vshrl.u32 %v6779, 16
        %v6933 = vrot.slane %v6931, 7
        %v6934 = vshll.u32 %v6779, 16
        %v6936 = vor.u32 %v6933, %v6934
        %v6937 = vsel %vm344, %v6929, %v6936
        %v6938 = vrot.slane %v6933, 4
        %v6940 = vshrl.u32 %v6780, 16
        %v6942 = vrot.slane %v6940, 7
        %v6943 = vshll.u32 %v6780, 16
        %v6945 = vor.u32 %v6942, %v6943
        %v6946 = vsel %vm344, %v6938, %v6945
        %v6947 = vrot.slane %v6942, 4
        %v6949 = vshrl.u32 %v6781, 16
        %v6951 = vrot.slane %v6949, 7
        %v6952 = vshll.u32 %v6781, 16
        %v6954 = vor.u32 %v6951, %v6952
        %v6955 = vsel %vm344, %v6947, %v6954
        %v6956 = vrot.slane %v6951, 4
        %v6958 = vshrl.u32 %v6782, 16
        %v6960 = vrot.slane %v6958, 7
        %v6961 = vshll.u32 %v6782, 16
        %v6963 = vor.u32 %v6960, %v6961
        %v6964 = vsel %vm344, %v6956, %v6963
        %v6965 = vrot.slane %v6960, 4
        %v6967 = vshrl.u32 %v6783, 16
        %v6969 = vrot.slane %v6967, 7
        %v6970 = vshll.u32 %v6783, 16
        %v6972 = vor.u32 %v6969, %v6970
        %v6973 = vsel %vm344, %v6965, %v6972
        %v6974 = vrot.slane %v6969, 4
        %v6976 = vshrl.u32 %v6784, 16
        %v6978 = vrot.slane %v6976, 7
        %v6979 = vshll.u32 %v6784, 16
        %v6981 = vor.u32 %v6978, %v6979
        %v6982 = vsel %vm344, %v6974, %v6981
        %v6983 = vrot.slane %v6978, 4
        %v6985 = vshrl.u32 %v6785, 16
        %v6987 = vrot.slane %v6985, 7
        %v6988 = vshll.u32 %v6785, 16
        %v6990 = vor.u32 %v6987, %v6988
        %v6991 = vsel %vm344, %v6983, %v6990
        %v6992 = vrot.slane %v6987, 4
        %v6994 = vshrl.u32 %v6786, 16
        %v6996 = vrot.slane %v6994, 7
        %v6997 = vshll.u32 %v6786, 16
        %v6999 = vor.u32 %v6996, %v6997
        %v7000 = vsel %vm344, %v6992, %v6999
        %v7001 = vrot.slane %v6996, 4
        %v7003 = vshrl.u32 %v6787, 16
        %v7005 = vrot.slane %v7003, 7
        %v7006 = vshll.u32 %v6787, 16
        %v7008 = vor.u32 %v7005, %v7006
        %v7009 = vsel %vm344, %v7001, %v7008
        %v7010 = vrot.slane %v7005, 4
        %v7012 = vshrl.u32 %v6788, 16
        %v7014 = vrot.slane %v7012, 7
        %v7015 = vshll.u32 %v6788, 16
        %v7017 = vor.u32 %v7014, %v7015
        %v7018 = vsel %vm344, %v7010, %v7017
        %v7019 = vrot.slane %v7014, 4
        %v7021 = vshrl.u32 %v6789, 16
        %v7023 = vrot.slane %v7021, 7
        %v7024 = vshll.u32 %v6789, 16
        %v7026 = vor.u32 %v7023, %v7024
        %v7027 = vsel %vm344, %v7019, %v7026
        %v7028 = vrot.slane %v7023, 4
        %v7030 = vshrl.u32 %v6790, 16
        %v7032 = vrot.slane %v7030, 7
        %v7033 = vshll.u32 %v6790, 16
        %v7035 = vor.u32 %v7032, %v7033
        %v7036 = vsel %vm344, %v7028, %v7035
        %v7037 = vrot.slane %v7032, 4
        %v7039 = vshrl.u32 %v6791, 16
        %v7041 = vrot.slane %v7039, 7
        %v7042 = vshll.u32 %v6791, 16
        %v7044 = vor.u32 %v7041, %v7042
        %v7045 = vsel %vm344, %v7037, %v7044
        %v7046 = vrot.slane %v7041, 4
        %v7048 = vshrl.u32 %v6792, 16
        %v7050 = vrot.slane %v7048, 7
        %v7051 = vshll.u32 %v6792, 16
        %v7053 = vor.u32 %v7050, %v7051
        %v7054 = vsel %vm344, %v7046, %v7053
        %v7055 = vrot.slane %v7050, 4
        %v7057 = vshrl.u32 %v6793, 16
        %v7059 = vrot.slane %v7057, 7
        %v7060 = vshll.u32 %v6793, 16
        %v7062 = vor.u32 %v7059, %v7060
        %v7063 = vsel %vm344, %v7055, %v7062
        %v7064 = vrot.slane %v7059, 4
        %v7066 = vshrl.u32 %v6794, 16
        %v7068 = vrot.slane %v7066, 7
        %v7069 = vshll.u32 %v6794, 16
        %v7071 = vor.u32 %v7068, %v7069
        %v7072 = vsel %vm344, %v7064, %v7071
        %v7073 = vrot.slane %v7068, 4
        %v7075 = vshrl.u32 %v6795, 16
        %v7077 = vrot.slane %v7075, 7
        %v7078 = vshll.u32 %v6795, 16
        %v7080 = vor.u32 %v7077, %v7078
        %v7081 = vsel %vm344, %v7073, %v7080
        %v7082 = vrot.slane %v7077, 4
        %v7084 = vshrl.u32 %v6796, 16
        %v7086 = vrot.slane %v7084, 7
        %v7087 = vshll.u32 %v6796, 16
        %v7089 = vor.u32 %v7086, %v7087
        %v7090 = vsel %vm344, %v7082, %v7089
        %v7091 = vrot.slane %v7086, 4
        %v7093 = vshrl.u32 %v6797, 16
        %v7095 = vrot.slane %v7093, 7
        %v7096 = vshll.u32 %v6797, 16
        %v7098 = vor.u32 %v7095, %v7096
        %v7099 = vsel %vm344, %v7091, %v7098
        %v7100 = vrot.slane %v7095, 4
        %v7102 = vshrl.u32 %v6798, 16
        %v7104 = vrot.slane %v7102, 7
        %v7105 = vshll.u32 %v6798, 16
        %v7107 = vor.u32 %v7104, %v7105
        %v7108 = vsel %vm344, %v7100, %v7107
        %v7109 = vrot.slane %v7104, 4
        %v7111 = vshrl.u32 %v6799, 16
        %v7113 = vrot.slane %v7111, 7
        %v7114 = vshll.u32 %v6799, 16
        %v7116 = vor.u32 %v7113, %v7114
        %v7117 = vsel %vm344, %v7109, %v7116
        %v7118 = vrot.slane %v7113, 4
        %v7120 = vshrl.u32 %v6800, 16
        %v7122 = vrot.slane %v7120, 7
        %v7123 = vshll.u32 %v6800, 16
        %v7125 = vor.u32 %v7122, %v7123
        %v7126 = vsel %vm344, %v7118, %v7125
        %v7127 = vrot.slane %v7122, 4
        %v7129 = vshrl.u32 %v6801, 16
        %v7131 = vrot.slane %v7129, 7
        %v7132 = vshll.u32 %v6801, 16
        %v7134 = vor.u32 %v7131, %v7132
        %v7135 = vsel %vm344, %v7127, %v7134
        %v7136 = vrot.slane %v7131, 4
        %v7138 = vshrl.u32 %v6802, 16
        %v7140 = vrot.slane %v7138, 7
        %v7141 = vshll.u32 %v6802, 16
        %v7143 = vor.u32 %v7140, %v7141
        %v7144 = vsel %vm344, %v7136, %v7143
        %v7145 = vrot.slane %v7140, 4
        %v7147 = vshrl.u32 %v6803, 16
        %v7149 = vrot.slane %v7147, 7
        %v7150 = vshll.u32 %v6803, 16
        %v7152 = vor.u32 %v7149, %v7150
        %v7153 = vsel %vm344, %v7145, %v7152
        %v7154 = vrot.slane %v7149, 4
        %v7156 = vshrl.u32 %v6804, 16
        %v7158 = vrot.slane %v7156, 7
        %v7159 = vshll.u32 %v6804, 16
        %v7161 = vor.u32 %v7158, %v7159
        %v7162 = vsel %vm344, %v7154, %v7161
        %v7163 = vrot.slane %v7158, 4
        %v7165 = vshrl.u32 %v6805, 16
        %v7167 = vrot.slane %v7165, 7
        %v7168 = vshll.u32 %v6805, 16
        %v7170 = vor.u32 %v7167, %v7168
        %v7171 = vsel %vm344, %v7163, %v7170
        %v7172 = vrot.slane %v7167, 4
        %v7174 = vshrl.u32 %v6806, 16
        %v7176 = vrot.slane %v7174, 7
        %v7177 = vshll.u32 %v6806, 16
        %v7179 = vor.u32 %v7176, %v7177
        %v7180 = vsel %vm344, %v7172, %v7179
        %v7181 = vrot.slane %v7176, 4
        %v7183 = vshrl.u32 %v6807, 16
        %v7185 = vrot.slane %v7183, 7
        %v7186 = vshll.u32 %v6807, 16
        %v7188 = vor.u32 %v7185, %v7186
        %v7189 = vsel %vm344, %v7181, %v7188
        %v7190 = vrot.slane %v7185, 4
        %v7192 = vshrl.u32 %v6808, 16
        %v7194 = vrot.slane %v7192, 7
        %v7195 = vshll.u32 %v6808, 16
        %v7197 = vor.u32 %v7194, %v7195
        %v7198 = vsel %vm344, %v7190, %v7197
        %v7199 = vrot.slane %v7194, 4
        %v7201 = vshrl.u32 %v6809, 16
        %v7203 = vrot.slane %v7201, 7
        %v7204 = vshll.u32 %v6809, 16
        %v7206 = vor.u32 %v7203, %v7204
        %v7207 = vsel %vm344, %v7199, %v7206
        %v7208 = vrot.slane %v7203, 4
        %v7210 = vshrl.u32 %v6810, 16
        %v7212 = vrot.slane %v7210, 7
        %v7213 = vshll.u32 %v6810, 16
        %v7215 = vor.u32 %v7212, %v7213
        %v7216 = vsel %vm344, %v7208, %v7215
        %v7217 = vrot.slane %v7212, 4
        %v7219 = vshrl.u32 %v6811, 16
        %v7221 = vrot.slane %v7219, 7
        %v7222 = vshll.u32 %v6811, 16
        %v7224 = vor.u32 %v7221, %v7222
        %v7225 = vsel %vm344, %v7217, %v7224
        %v7226 = vrot.slane %v7221, 4
        %v7228 = vshrl.u32 %v6812, 16
        %v7230 = vrot.slane %v7228, 7
        %v7231 = vshll.u32 %v6812, 16
        %v7233 = vor.u32 %v7230, %v7231
        %v7234 = vsel %vm344, %v7226, %v7233
        %v7235 = vrot.slane %v7230, 4
        %v7237 = vshrl.u32 %v6813, 16
        %v7239 = vrot.slane %v7237, 7
        %v7240 = vshll.u32 %v6813, 16
        %v7242 = vor.u32 %v7239, %v7240
        %v7243 = vsel %vm344, %v7235, %v7242
        %v7244 = vrot.slane %v7239, 4
        %v7294 = vld [vmem:[#allocation3 + $0xc] sm:$0xf]
        %v7295 = vsel %vm6663, %v6820, %v7294
        %7296 = vst [vmem:[#allocation3 + $0xc] sm:$0xf] %v7295
        %7297 = vst.msk [vmem:[#allocation3 + $0x10] sm:$0xf] %vm6653, %v6829
        %7298 = vst.msk [vmem:[#allocation3 + $0x14] sm:$0xf] %vm6653, %v6838
        %7299 = vst.msk [vmem:[#allocation3 + $0x18] sm:$0xf] %vm6653, %v6847
        %7300 = vst.msk [vmem:[#allocation3 + $0x1c] sm:$0xf] %vm6653, %v6856
        %7301 = vst.msk [vmem:[#allocation3 + $0x20] sm:$0xf] %vm6653, %v6865
        %7302 = vst.msk [vmem:[#allocation3 + $0x24] sm:$0xf] %vm6653, %v6874
        %7303 = vst.msk [vmem:[#allocation3 + $0x28] sm:$0xf] %vm6653, %v6883
        %7304 = vst.msk [vmem:[#allocation3 + $0x2c] sm:$0xf] %vm6653, %v6892
        %7305 = vst.msk [vmem:[#allocation3 + $0x30] sm:$0xf] %vm6653, %v6901
        %7306 = vst.msk [vmem:[#allocation3 + $0x34] sm:$0xf] %vm6653, %v6910
        %7307 = vst.msk [vmem:[#allocation3 + $0x38] sm:$0xf] %vm6653, %v6919
        %7308 = vst.msk [vmem:[#allocation3 + $0x3c] sm:$0xf] %vm6653, %v6928
        %7309 = vst.msk [vmem:[#allocation3 + $0x40] sm:$0xf] %vm6653, %v6937
        %7310 = vst.msk [vmem:[#allocation3 + $0x44] sm:$0xf] %vm6653, %v6946
        %7311 = vst.msk [vmem:[#allocation3 + $0x48] sm:$0xf] %vm6653, %v6955
        %7312 = vst.msk [vmem:[#allocation3 + $0x4c] sm:$0xf] %vm6653, %v6964
        %7313 = vst.msk [vmem:[#allocation3 + $0x50] sm:$0xf] %vm6653, %v6973
        %7314 = vst.msk [vmem:[#allocation3 + $0x54] sm:$0xf] %vm6653, %v6982
        %7315 = vst.msk [vmem:[#allocation3 + $0x58] sm:$0xf] %vm6653, %v6991
        %7316 = vst.msk [vmem:[#allocation3 + $0x5c] sm:$0xf] %vm6653, %v7000
        %7317 = vst.msk [vmem:[#allocation3 + $0x60] sm:$0xf] %vm6653, %v7009
        %7318 = vst.msk [vmem:[#allocation3 + $0x64] sm:$0xf] %vm6653, %v7018
        %7319 = vst.msk [vmem:[#allocation3 + $0x68] sm:$0xf] %vm6653, %v7027
        %7320 = vst.msk [vmem:[#allocation3 + $0x6c] sm:$0xf] %vm6653, %v7036
        %7321 = vst.msk [vmem:[#allocation3 + $0x70] sm:$0xf] %vm6653, %v7045
        %7322 = vst.msk [vmem:[#allocation3 + $0x74] sm:$0xf] %vm6653, %v7054
        %7323 = vst.msk [vmem:[#allocation3 + $0x78] sm:$0xf] %vm6653, %v7063
        %7324 = vst.msk [vmem:[#allocation3 + $0x7c] sm:$0xf] %vm6653, %v7072
        %7325 = vst.msk [vmem:[#allocation3 + $0x80] sm:$0xf] %vm6653, %v7081
        %7326 = vst.msk [vmem:[#allocation3 + $0x84] sm:$0xf] %vm6653, %v7090
        %7327 = vst.msk [vmem:[#allocation3 + $0x88] sm:$0xf] %vm6653, %v7099
        %7328 = vst.msk [vmem:[#allocation3 + $0x8c] sm:$0xf] %vm6653, %v7108
        %7329 = vst.msk [vmem:[#allocation3 + $0x90] sm:$0xf] %vm6653, %v7117
        %7330 = vst.msk [vmem:[#allocation3 + $0x94] sm:$0xf] %vm6653, %v7126
        %7331 = vst.msk [vmem:[#allocation3 + $0x98] sm:$0xf] %vm6653, %v7135
        %7332 = vst.msk [vmem:[#allocation3 + $0x9c] sm:$0xf] %vm6653, %v7144
        %7333 = vst.msk [vmem:[#allocation3 + $0xa0] sm:$0xf] %vm6653, %v7153
        %7334 = vst.msk [vmem:[#allocation3 + $0xa4] sm:$0xf] %vm6653, %v7162
        %7335 = vst.msk [vmem:[#allocation3 + $0xa8] sm:$0xf] %vm6653, %v7171
        %7336 = vst.msk [vmem:[#allocation3 + $0xac] sm:$0xf] %vm6653, %v7180
        %7337 = vst.msk [vmem:[#allocation3 + $0xb0] sm:$0xf] %vm6653, %v7189
        %7338 = vst.msk [vmem:[#allocation3 + $0xb4] sm:$0xf] %vm6653, %v7198
        %7339 = vst.msk [vmem:[#allocation3 + $0xb8] sm:$0xf] %vm6653, %v7207
        %7340 = vst.msk [vmem:[#allocation3 + $0xbc] sm:$0xf] %vm6653, %v7216
        %7341 = vst.msk [vmem:[#allocation3 + $0xc0] sm:$0xf] %vm6653, %v7225
        %7342 = vst.msk [vmem:[#allocation3 + $0xc4] sm:$0xf] %vm6653, %v7234
        %7343 = vst.msk [vmem:[#allocation3 + $0xc8] sm:$0xf] %vm6653, %v7243
        %v7344 = vld [vmem:[#allocation3 + $0xcc] sm:$0x1]
        %v7345 = vsel %vm6658, %v7244, %v7344
        %7346 = vst [vmem:[#allocation3 + $0xcc] sm:$0x1] %v7345
        %v7347 = vld [vmem:[%s3] sm:$0xff]
        %v7348 = vld [vmem:[%s3 + $0x8] sm:$0x1]
        %v7349 = vld [vmem:[#allocation3] sm:$0xf]
        %v7350 = vld [vmem:[#allocation3 + $0x4] sm:$0xf]
        %v7351 = vld [vmem:[#allocation3 + $0x8] sm:$0xf]
        %v7352 = vld [vmem:[#allocation3 + $0xc] sm:$0xf]
        %v7353 = vld [vmem:[#allocation3 + $0x10] sm:$0xf]
        %v7354 = vld [vmem:[#allocation3 + $0x14] sm:$0xf]
        %v7355 = vld [vmem:[#allocation3 + $0x18] sm:$0xf]
        %v7356 = vld [vmem:[#allocation3 + $0x1c] sm:$0xf]
        %v7357 = vld [vmem:[#allocation3 + $0x20] sm:$0xf]
        %v7358 = vld [vmem:[#allocation3 + $0x24] sm:$0xf]
        %v7359 = vld [vmem:[#allocation3 + $0x28] sm:$0xf]
        %v7360 = vld [vmem:[#allocation3 + $0x2c] sm:$0xf]
        %v7361 = vld [vmem:[#allocation3 + $0x30] sm:$0xf]
        %v7362 = vld [vmem:[#allocation3 + $0x34] sm:$0xf]
        %v7363 = vld [vmem:[#allocation3 + $0x38] sm:$0xf]
        %v7364 = vld [vmem:[#allocation3 + $0x3c] sm:$0xf]
        %v7365 = vld [vmem:[#allocation3 + $0x40] sm:$0xf]
        %v7366 = vld [vmem:[#allocation3 + $0x44] sm:$0xf]
        %v7367 = vld [vmem:[#allocation3 + $0x48] sm:$0xf]
        %v7368 = vld [vmem:[#allocation3 + $0x4c] sm:$0xf]
        %v7369 = vld [vmem:[#allocation3 + $0x50] sm:$0xf]
        %v7370 = vld [vmem:[#allocation3 + $0x54] sm:$0xf]
        %v7371 = vld [vmem:[#allocation3 + $0x58] sm:$0xf]
        %v7372 = vld [vmem:[#allocation3 + $0x5c] sm:$0xf]
        %v7373 = vld [vmem:[#allocation3 + $0x60] sm:$0xf]
        %v7374 = vld [vmem:[#allocation3 + $0x64] sm:$0xf]
        %v7375 = vld [vmem:[#allocation3 + $0x68] sm:$0xf]
        %v7376 = vld [vmem:[#allocation3 + $0x6c] sm:$0xf]
        %v7377 = vld [vmem:[#allocation3 + $0x70] sm:$0xf]
        %v7378 = vld [vmem:[#allocation3 + $0x74] sm:$0xf]
        %v7379 = vld [vmem:[#allocation3 + $0x78] sm:$0xf]
        %v7380 = vld [vmem:[#allocation3 + $0x7c] sm:$0xf]
        %v7381 = vld [vmem:[#allocation3 + $0x80] sm:$0xf]
        %v7382 = vld [vmem:[#allocation3 + $0x84] sm:$0xf]
        %v7383 = vld [vmem:[#allocation3 + $0x88] sm:$0xf]
        %v7384 = vld [vmem:[#allocation3 + $0x8c] sm:$0xf]
        %v7385 = vld [vmem:[#allocation3 + $0x90] sm:$0xf]
        %v7386 = vld [vmem:[#allocation3 + $0x94] sm:$0xf]
        %v7387 = vld [vmem:[#allocation3 + $0x98] sm:$0xf]
        %v7388 = vld [vmem:[#allocation3 + $0x9c] sm:$0xf]
        %v7389 = vld [vmem:[#allocation3 + $0xa0] sm:$0xf]
        %v7390 = vld [vmem:[#allocation3 + $0xa4] sm:$0xf]
        %v7391 = vld [vmem:[#allocation3 + $0xa8] sm:$0xf]
        %v7392 = vld [vmem:[#allocation3 + $0xac] sm:$0xf]
        %v7393 = vld [vmem:[#allocation3 + $0xb0] sm:$0xf]
        %v7394 = vld [vmem:[#allocation3 + $0xb4] sm:$0xf]
        %v7395 = vld [vmem:[#allocation3 + $0xb8] sm:$0xf]
        %v7396 = vld [vmem:[#allocation3 + $0xbc] sm:$0xf]
        %v7397 = vunpack.c.l.bf16 %v7349
        %v7398 = vunpack.c.l.bf16 %v7350
        %v7399 = vunpack.c.l.bf16 %v7351
        %v7400 = vunpack.c.l.bf16 %v7352
        %v7401 = vunpack.c.l.bf16 %v7353
        %v7402 = vunpack.c.l.bf16 %v7354
        %v7403 = vunpack.c.l.bf16 %v7355
        %v7404 = vunpack.c.l.bf16 %v7356
        %v7405 = vunpack.c.l.bf16 %v7357
        %v7406 = vunpack.c.l.bf16 %v7358
        %v7407 = vunpack.c.l.bf16 %v7359
        %v7408 = vunpack.c.l.bf16 %v7360
        %v7409 = vunpack.c.l.bf16 %v7361
        %v7410 = vunpack.c.l.bf16 %v7362
        %v7411 = vunpack.c.l.bf16 %v7363
        %v7412 = vunpack.c.l.bf16 %v7364
        %v7413 = vunpack.c.l.bf16 %v7365
        %v7414 = vunpack.c.l.bf16 %v7366
        %v7415 = vunpack.c.l.bf16 %v7367
        %v7416 = vunpack.c.l.bf16 %v7368
        %v7417 = vunpack.c.l.bf16 %v7369
        %v7418 = vunpack.c.l.bf16 %v7370
        %v7419 = vunpack.c.l.bf16 %v7371
        %v7420 = vunpack.c.l.bf16 %v7372
        %v7421 = vunpack.c.l.bf16 %v7373
        %v7422 = vunpack.c.l.bf16 %v7374
        %v7423 = vunpack.c.l.bf16 %v7375
        %v7424 = vunpack.c.l.bf16 %v7376
        %v7425 = vunpack.c.l.bf16 %v7377
        %v7426 = vunpack.c.l.bf16 %v7378
        %v7427 = vunpack.c.l.bf16 %v7379
        %v7428 = vunpack.c.l.bf16 %v7380
        %v7429 = vunpack.c.l.bf16 %v7381
        %v7430 = vunpack.c.l.bf16 %v7382
        %v7431 = vunpack.c.l.bf16 %v7383
        %v7432 = vunpack.c.l.bf16 %v7384
        %v7433 = vunpack.c.l.bf16 %v7385
        %v7434 = vunpack.c.l.bf16 %v7386
        %v7435 = vunpack.c.l.bf16 %v7387
        %v7436 = vunpack.c.l.bf16 %v7388
        %v7437 = vunpack.c.l.bf16 %v7389
        %v7438 = vunpack.c.l.bf16 %v7390
        %v7439 = vunpack.c.l.bf16 %v7391
        %v7440 = vunpack.c.l.bf16 %v7392
        %v7441 = vunpack.c.l.bf16 %v7393
        %v7442 = vunpack.c.l.bf16 %v7394
        %v7443 = vunpack.c.l.bf16 %v7395
        %v7444 = vunpack.c.l.bf16 %v7396
        %v7445 = vlaneseq
        %v7446 = vshrl.u32 %v7445, 7
        %v7447 = vsub.s32 0, %v7446
        %v7448 = vrot.slane %v7347, %v7447
        %v7449 = vmul.f32 %v7397, %v7448
        %v7450 = vmul.f32 %v7398, %v7448
        %v7451 = vmul.f32 %v7399, %v7448
        %v7452 = vmul.f32 %v7400, %v7448
        %v7453 = vmul.f32 %v7401, %v7448
        %v7454 = vmul.f32 %v7402, %v7448
        %v7455 = vmul.f32 %v7403, %v7448
        %v7456 = vmul.f32 %v7404, %v7448
        %v7457 = vmul.f32 %v7405, %v7448
        %v7458 = vmul.f32 %v7406, %v7448
        %v7459 = vmul.f32 %v7407, %v7448
        %v7460 = vmul.f32 %v7408, %v7448
        %v7461 = vmul.f32 %v7409, %v7448
        %v7462 = vmul.f32 %v7410, %v7448
        %v7463 = vmul.f32 %v7411, %v7448
        %v7464 = vmul.f32 %v7412, %v7448
        %v7465 = vmul.f32 %v7413, %v7448
        %v7466 = vmul.f32 %v7414, %v7448
        %v7467 = vmul.f32 %v7415, %v7448
        %v7468 = vmul.f32 %v7416, %v7448
        %v7469 = vmul.f32 %v7417, %v7448
        %v7470 = vmul.f32 %v7418, %v7448
        %v7471 = vmul.f32 %v7419, %v7448
        %v7472 = vmul.f32 %v7420, %v7448
        %v7473 = vmul.f32 %v7421, %v7448
        %v7474 = vmul.f32 %v7422, %v7448
        %v7475 = vmul.f32 %v7423, %v7448
        %v7476 = vmul.f32 %v7424, %v7448
        %v7477 = vmul.f32 %v7425, %v7448
        %v7478 = vmul.f32 %v7426, %v7448
        %v7479 = vmul.f32 %v7427, %v7448
        %v7480 = vmul.f32 %v7428, %v7448
        %v7481 = vmul.f32 %v7429, %v7448
        %v7482 = vmul.f32 %v7430, %v7448
        %v7483 = vmul.f32 %v7431, %v7448
        %v7484 = vmul.f32 %v7432, %v7448
        %v7485 = vmul.f32 %v7433, %v7448
        %v7486 = vmul.f32 %v7434, %v7448
        %v7487 = vmul.f32 %v7435, %v7448
        %v7488 = vmul.f32 %v7436, %v7448
        %v7489 = vmul.f32 %v7437, %v7448
        %v7490 = vmul.f32 %v7438, %v7448
        %v7491 = vmul.f32 %v7439, %v7448
        %v7492 = vmul.f32 %v7440, %v7448
        %v7493 = vmul.f32 %v7441, %v7448
        %v7494 = vmul.f32 %v7442, %v7448
        %v7495 = vmul.f32 %v7443, %v7448
        %v7496 = vmul.f32 %v7444, %v7448
        %v7497 = vld [vmem:[#allocation3 + $0xc0] sm:$0x1]
        %v7498 = vunpack.c.l.bf16 %v7497
        %v7499 = vlaneseq
        %v7500 = vshrl.u32 %v7499, 7
        %v7501 = vsub.s32 1, %v7500
        %v7502 = vrot.slane %v7347, %v7501
        %v7503 = vmul.f32 %v7397, %v7502
        %v7504 = vmul.f32 %v7398, %v7502
        %v7505 = vmul.f32 %v7399, %v7502
        %v7506 = vmul.f32 %v7400, %v7502
        %v7507 = vmul.f32 %v7401, %v7502
        %v7508 = vmul.f32 %v7402, %v7502
        %v7509 = vmul.f32 %v7403, %v7502
        %v7510 = vmul.f32 %v7404, %v7502
        %v7511 = vmul.f32 %v7405, %v7502
        %v7512 = vmul.f32 %v7406, %v7502
        %v7513 = vmul.f32 %v7407, %v7502
        %v7514 = vmul.f32 %v7408, %v7502
        %v7515 = vmul.f32 %v7409, %v7502
        %v7516 = vmul.f32 %v7410, %v7502
        %v7517 = vmul.f32 %v7411, %v7502
        %v7518 = vmul.f32 %v7412, %v7502
        %v7519 = vmul.f32 %v7413, %v7502
        %v7520 = vmul.f32 %v7414, %v7502
        %v7521 = vmul.f32 %v7415, %v7502
        %v7522 = vmul.f32 %v7416, %v7502
        %v7523 = vmul.f32 %v7417, %v7502
        %v7524 = vmul.f32 %v7418, %v7502
        %v7525 = vmul.f32 %v7419, %v7502
        %v7526 = vmul.f32 %v7420, %v7502
        %v7527 = vmul.f32 %v7421, %v7502
        %v7528 = vmul.f32 %v7422, %v7502
        %v7529 = vmul.f32 %v7423, %v7502
        %v7530 = vmul.f32 %v7424, %v7502
        %v7531 = vmul.f32 %v7425, %v7502
        %v7532 = vmul.f32 %v7426, %v7502
        %v7533 = vmul.f32 %v7427, %v7502
        %v7534 = vmul.f32 %v7428, %v7502
        %v7535 = vmul.f32 %v7429, %v7502
        %v7536 = vmul.f32 %v7430, %v7502
        %v7537 = vmul.f32 %v7431, %v7502
        %v7538 = vmul.f32 %v7432, %v7502
        %v7539 = vmul.f32 %v7433, %v7502
        %v7540 = vmul.f32 %v7434, %v7502
        %v7541 = vmul.f32 %v7435, %v7502
        %v7542 = vmul.f32 %v7436, %v7502
        %v7543 = vmul.f32 %v7437, %v7502
        %v7544 = vmul.f32 %v7438, %v7502
        %v7545 = vmul.f32 %v7439, %v7502
        %v7546 = vmul.f32 %v7440, %v7502
        %v7547 = vmul.f32 %v7441, %v7502
        %v7548 = vmul.f32 %v7442, %v7502
        %v7549 = vmul.f32 %v7443, %v7502
        %v7550 = vmul.f32 %v7444, %v7502
        %v7551 = vmul.f32 %v7498, %v7502
        %vm7601 = vcmask 1046528
        %v7602 = vrot.slane %v7503, 1
        %v7603 = vrot.slane %v7504, 1
        %v7604 = vsel %vm7601, %v7602, %v7603
        %v7605 = vrot.slane %v7505, 1
        %v7606 = vsel %vm7601, %v7603, %v7605
        %v7607 = vrot.slane %v7506, 1
        %v7608 = vsel %vm7601, %v7605, %v7607
        %v7609 = vrot.slane %v7507, 1
        %v7610 = vsel %vm7601, %v7607, %v7609
        %v7611 = vrot.slane %v7508, 1
        %v7612 = vsel %vm7601, %v7609, %v7611
        %v7613 = vrot.slane %v7509, 1
        %v7614 = vsel %vm7601, %v7611, %v7613
        %v7615 = vrot.slane %v7510, 1
        %v7616 = vsel %vm7601, %v7613, %v7615
        %v7617 = vrot.slane %v7511, 1
        %v7618 = vsel %vm7601, %v7615, %v7617
        %v7619 = vrot.slane %v7512, 1
        %v7620 = vsel %vm7601, %v7617, %v7619
        %v7621 = vrot.slane %v7513, 1
        %v7622 = vsel %vm7601, %v7619, %v7621
        %v7623 = vrot.slane %v7514, 1
        %v7624 = vsel %vm7601, %v7621, %v7623
        %v7625 = vrot.slane %v7515, 1
        %v7626 = vsel %vm7601, %v7623, %v7625
        %v7627 = vrot.slane %v7516, 1
        %v7628 = vsel %vm7601, %v7625, %v7627
        %v7629 = vrot.slane %v7517, 1
        %v7630 = vsel %vm7601, %v7627, %v7629
        %v7631 = vrot.slane %v7518, 1
        %v7632 = vsel %vm7601, %v7629, %v7631
        %v7633 = vrot.slane %v7519, 1
        %v7634 = vsel %vm7601, %v7631, %v7633
        %v7635 = vrot.slane %v7520, 1
        %v7636 = vsel %vm7601, %v7633, %v7635
        %v7637 = vrot.slane %v7521, 1
        %v7638 = vsel %vm7601, %v7635, %v7637
        %v7639 = vrot.slane %v7522, 1
        %v7640 = vsel %vm7601, %v7637, %v7639
        %v7641 = vrot.slane %v7523, 1
        %v7642 = vsel %vm7601, %v7639, %v7641
        %v7643 = vrot.slane %v7524, 1
        %v7644 = vsel %vm7601, %v7641, %v7643
        %v7645 = vrot.slane %v7525, 1
        %v7646 = vsel %vm7601, %v7643, %v7645
        %v7647 = vrot.slane %v7526, 1
        %v7648 = vsel %vm7601, %v7645, %v7647
        %v7649 = vrot.slane %v7527, 1
        %v7650 = vsel %vm7601, %v7647, %v7649
        %v7651 = vrot.slane %v7528, 1
        %v7652 = vsel %vm7601, %v7649, %v7651
        %v7653 = vrot.slane %v7529, 1
        %v7654 = vsel %vm7601, %v7651, %v7653
        %v7655 = vrot.slane %v7530, 1
        %v7656 = vsel %vm7601, %v7653, %v7655
        %v7657 = vrot.slane %v7531, 1
        %v7658 = vsel %vm7601, %v7655, %v7657
        %v7659 = vrot.slane %v7532, 1
        %v7660 = vsel %vm7601, %v7657, %v7659
        %v7661 = vrot.slane %v7533, 1
        %v7662 = vsel %vm7601, %v7659, %v7661
        %v7663 = vrot.slane %v7534, 1
        %v7664 = vsel %vm7601, %v7661, %v7663
        %v7665 = vrot.slane %v7535, 1
        %v7666 = vsel %vm7601, %v7663, %v7665
        %v7667 = vrot.slane %v7536, 1
        %v7668 = vsel %vm7601, %v7665, %v7667
        %v7669 = vrot.slane %v7537, 1
        %v7670 = vsel %vm7601, %v7667, %v7669
        %v7671 = vrot.slane %v7538, 1
        %v7672 = vsel %vm7601, %v7669, %v7671
        %v7673 = vrot.slane %v7539, 1
        %v7674 = vsel %vm7601, %v7671, %v7673
        %v7675 = vrot.slane %v7540, 1
        %v7676 = vsel %vm7601, %v7673, %v7675
        %v7677 = vrot.slane %v7541, 1
        %v7678 = vsel %vm7601, %v7675, %v7677
        %v7679 = vrot.slane %v7542, 1
        %v7680 = vsel %vm7601, %v7677, %v7679
        %v7681 = vrot.slane %v7543, 1
        %v7682 = vsel %vm7601, %v7679, %v7681
        %v7683 = vrot.slane %v7544, 1
        %v7684 = vsel %vm7601, %v7681, %v7683
        %v7685 = vrot.slane %v7545, 1
        %v7686 = vsel %vm7601, %v7683, %v7685
        %v7687 = vrot.slane %v7546, 1
        %v7688 = vsel %vm7601, %v7685, %v7687
        %v7689 = vrot.slane %v7547, 1
        %v7690 = vsel %vm7601, %v7687, %v7689
        %v7691 = vrot.slane %v7548, 1
        %v7692 = vsel %vm7601, %v7689, %v7691
        %v7693 = vrot.slane %v7549, 1
        %v7694 = vsel %vm7601, %v7691, %v7693
        %v7695 = vrot.slane %v7550, 1
        %v7696 = vsel %vm7601, %v7693, %v7695
        %v7697 = vrot.slane %v7551, 1
        %v7698 = vsel %vm7601, %v7695, %v7697
        %v7747 = vadd.f32 %v7449, %v7604
        %v7748 = vadd.f32 %v7450, %v7606
        %v7749 = vadd.f32 %v7451, %v7608
        %v7750 = vadd.f32 %v7452, %v7610
        %v7751 = vadd.f32 %v7453, %v7612
        %v7752 = vadd.f32 %v7454, %v7614
        %v7753 = vadd.f32 %v7455, %v7616
        %v7754 = vadd.f32 %v7456, %v7618
        %v7755 = vadd.f32 %v7457, %v7620
        %v7756 = vadd.f32 %v7458, %v7622
        %v7757 = vadd.f32 %v7459, %v7624
        %v7758 = vadd.f32 %v7460, %v7626
        %v7759 = vadd.f32 %v7461, %v7628
        %v7760 = vadd.f32 %v7462, %v7630
        %v7761 = vadd.f32 %v7463, %v7632
        %v7762 = vadd.f32 %v7464, %v7634
        %v7763 = vadd.f32 %v7465, %v7636
        %v7764 = vadd.f32 %v7466, %v7638
        %v7765 = vadd.f32 %v7467, %v7640
        %v7766 = vadd.f32 %v7468, %v7642
        %v7767 = vadd.f32 %v7469, %v7644
        %v7768 = vadd.f32 %v7470, %v7646
        %v7769 = vadd.f32 %v7471, %v7648
        %v7770 = vadd.f32 %v7472, %v7650
        %v7771 = vadd.f32 %v7473, %v7652
        %v7772 = vadd.f32 %v7474, %v7654
        %v7773 = vadd.f32 %v7475, %v7656
        %v7774 = vadd.f32 %v7476, %v7658
        %v7775 = vadd.f32 %v7477, %v7660
        %v7776 = vadd.f32 %v7478, %v7662
        %v7777 = vadd.f32 %v7479, %v7664
        %v7778 = vadd.f32 %v7480, %v7666
        %v7779 = vadd.f32 %v7481, %v7668
        %v7780 = vadd.f32 %v7482, %v7670
        %v7781 = vadd.f32 %v7483, %v7672
        %v7782 = vadd.f32 %v7484, %v7674
        %v7783 = vadd.f32 %v7485, %v7676
        %v7784 = vadd.f32 %v7486, %v7678
        %v7785 = vadd.f32 %v7487, %v7680
        %v7786 = vadd.f32 %v7488, %v7682
        %v7787 = vadd.f32 %v7489, %v7684
        %v7788 = vadd.f32 %v7490, %v7686
        %v7789 = vadd.f32 %v7491, %v7688
        %v7790 = vadd.f32 %v7492, %v7690
        %v7791 = vadd.f32 %v7493, %v7692
        %v7792 = vadd.f32 %v7494, %v7694
        %v7793 = vadd.f32 %v7495, %v7696
        %v7794 = vadd.f32 %v7496, %v7698
        %v7795 = vld [vmem:[#allocation3] sm:$0xe]
        %v7796 = vunpack.c.l.bf16 %v7795
        %v7797 = vlaneseq
        %v7798 = vshrl.u32 %v7797, 7
        %v7799 = vsub.s32 2, %v7798
        %v7800 = vrot.slane %v7347, %v7799
        %v7801 = vmul.f32 %v7796, %v7800
        %v7802 = vmul.f32 %v7398, %v7800
        %v7803 = vmul.f32 %v7399, %v7800
        %v7804 = vmul.f32 %v7400, %v7800
        %v7805 = vmul.f32 %v7401, %v7800
        %v7806 = vmul.f32 %v7402, %v7800
        %v7807 = vmul.f32 %v7403, %v7800
        %v7808 = vmul.f32 %v7404, %v7800
        %v7809 = vmul.f32 %v7405, %v7800
        %v7810 = vmul.f32 %v7406, %v7800
        %v7811 = vmul.f32 %v7407, %v7800
        %v7812 = vmul.f32 %v7408, %v7800
        %v7813 = vmul.f32 %v7409, %v7800
        %v7814 = vmul.f32 %v7410, %v7800
        %v7815 = vmul.f32 %v7411, %v7800
        %v7816 = vmul.f32 %v7412, %v7800
        %v7817 = vmul.f32 %v7413, %v7800
        %v7818 = vmul.f32 %v7414, %v7800
        %v7819 = vmul.f32 %v7415, %v7800
        %v7820 = vmul.f32 %v7416, %v7800
        %v7821 = vmul.f32 %v7417, %v7800
        %v7822 = vmul.f32 %v7418, %v7800
        %v7823 = vmul.f32 %v7419, %v7800
        %v7824 = vmul.f32 %v7420, %v7800
        %v7825 = vmul.f32 %v7421, %v7800
        %v7826 = vmul.f32 %v7422, %v7800
        %v7827 = vmul.f32 %v7423, %v7800
        %v7828 = vmul.f32 %v7424, %v7800
        %v7829 = vmul.f32 %v7425, %v7800
        %v7830 = vmul.f32 %v7426, %v7800
        %v7831 = vmul.f32 %v7427, %v7800
        %v7832 = vmul.f32 %v7428, %v7800
        %v7833 = vmul.f32 %v7429, %v7800
        %v7834 = vmul.f32 %v7430, %v7800
        %v7835 = vmul.f32 %v7431, %v7800
        %v7836 = vmul.f32 %v7432, %v7800
        %v7837 = vmul.f32 %v7433, %v7800
        %v7838 = vmul.f32 %v7434, %v7800
        %v7839 = vmul.f32 %v7435, %v7800
        %v7840 = vmul.f32 %v7436, %v7800
        %v7841 = vmul.f32 %v7437, %v7800
        %v7842 = vmul.f32 %v7438, %v7800
        %v7843 = vmul.f32 %v7439, %v7800
        %v7844 = vmul.f32 %v7440, %v7800
        %v7845 = vmul.f32 %v7441, %v7800
        %v7846 = vmul.f32 %v7442, %v7800
        %v7847 = vmul.f32 %v7443, %v7800
        %v7848 = vmul.f32 %v7444, %v7800
        %v7849 = vmul.f32 %v7498, %v7800
        %vm7899 = vcmask 1045504
        %v7900 = vrot.slane %v7801, 2
        %v7901 = vrot.slane %v7802, 2
        %v7902 = vsel %vm7899, %v7900, %v7901
        %v7903 = vrot.slane %v7803, 2
        %v7904 = vsel %vm7899, %v7901, %v7903
        %v7905 = vrot.slane %v7804, 2
        %v7906 = vsel %vm7899, %v7903, %v7905
        %v7907 = vrot.slane %v7805, 2
        %v7908 = vsel %vm7899, %v7905, %v7907
        %v7909 = vrot.slane %v7806, 2
        %v7910 = vsel %vm7899, %v7907, %v7909
        %v7911 = vrot.slane %v7807, 2
        %v7912 = vsel %vm7899, %v7909, %v7911
        %v7913 = vrot.slane %v7808, 2
        %v7914 = vsel %vm7899, %v7911, %v7913
        %v7915 = vrot.slane %v7809, 2
        %v7916 = vsel %vm7899, %v7913, %v7915
        %v7917 = vrot.slane %v7810, 2
        %v7918 = vsel %vm7899, %v7915, %v7917
        %v7919 = vrot.slane %v7811, 2
        %v7920 = vsel %vm7899, %v7917, %v7919
        %v7921 = vrot.slane %v7812, 2
        %v7922 = vsel %vm7899, %v7919, %v7921
        %v7923 = vrot.slane %v7813, 2
        %v7924 = vsel %vm7899, %v7921, %v7923
        %v7925 = vrot.slane %v7814, 2
        %v7926 = vsel %vm7899, %v7923, %v7925
        %v7927 = vrot.slane %v7815, 2
        %v7928 = vsel %vm7899, %v7925, %v7927
        %v7929 = vrot.slane %v7816, 2
        %v7930 = vsel %vm7899, %v7927, %v7929
        %v7931 = vrot.slane %v7817, 2
        %v7932 = vsel %vm7899, %v7929, %v7931
        %v7933 = vrot.slane %v7818, 2
        %v7934 = vsel %vm7899, %v7931, %v7933
        %v7935 = vrot.slane %v7819, 2
        %v7936 = vsel %vm7899, %v7933, %v7935
        %v7937 = vrot.slane %v7820, 2
        %v7938 = vsel %vm7899, %v7935, %v7937
        %v7939 = vrot.slane %v7821, 2
        %v7940 = vsel %vm7899, %v7937, %v7939
        %v7941 = vrot.slane %v7822, 2
        %v7942 = vsel %vm7899, %v7939, %v7941
        %v7943 = vrot.slane %v7823, 2
        %v7944 = vsel %vm7899, %v7941, %v7943
        %v7945 = vrot.slane %v7824, 2
        %v7946 = vsel %vm7899, %v7943, %v7945
        %v7947 = vrot.slane %v7825, 2
        %v7948 = vsel %vm7899, %v7945, %v7947
        %v7949 = vrot.slane %v7826, 2
        %v7950 = vsel %vm7899, %v7947, %v7949
        %v7951 = vrot.slane %v7827, 2
        %v7952 = vsel %vm7899, %v7949, %v7951
        %v7953 = vrot.slane %v7828, 2
        %v7954 = vsel %vm7899, %v7951, %v7953
        %v7955 = vrot.slane %v7829, 2
        %v7956 = vsel %vm7899, %v7953, %v7955
        %v7957 = vrot.slane %v7830, 2
        %v7958 = vsel %vm7899, %v7955, %v7957
        %v7959 = vrot.slane %v7831, 2
        %v7960 = vsel %vm7899, %v7957, %v7959
        %v7961 = vrot.slane %v7832, 2
        %v7962 = vsel %vm7899, %v7959, %v7961
        %v7963 = vrot.slane %v7833, 2
        %v7964 = vsel %vm7899, %v7961, %v7963
        %v7965 = vrot.slane %v7834, 2
        %v7966 = vsel %vm7899, %v7963, %v7965
        %v7967 = vrot.slane %v7835, 2
        %v7968 = vsel %vm7899, %v7965, %v7967
        %v7969 = vrot.slane %v7836, 2
        %v7970 = vsel %vm7899, %v7967, %v7969
        %v7971 = vrot.slane %v7837, 2
        %v7972 = vsel %vm7899, %v7969, %v7971
        %v7973 = vrot.slane %v7838, 2
        %v7974 = vsel %vm7899, %v7971, %v7973
        %v7975 = vrot.slane %v7839, 2
        %v7976 = vsel %vm7899, %v7973, %v7975
        %v7977 = vrot.slane %v7840, 2
        %v7978 = vsel %vm7899, %v7975, %v7977
        %v7979 = vrot.slane %v7841, 2
        %v7980 = vsel %vm7899, %v7977, %v7979
        %v7981 = vrot.slane %v7842, 2
        %v7982 = vsel %vm7899, %v7979, %v7981
        %v7983 = vrot.slane %v7843, 2
        %v7984 = vsel %vm7899, %v7981, %v7983
        %v7985 = vrot.slane %v7844, 2
        %v7986 = vsel %vm7899, %v7983, %v7985
        %v7987 = vrot.slane %v7845, 2
        %v7988 = vsel %vm7899, %v7985, %v7987
        %v7989 = vrot.slane %v7846, 2
        %v7990 = vsel %vm7899, %v7987, %v7989
        %v7991 = vrot.slane %v7847, 2
        %v7992 = vsel %vm7899, %v7989, %v7991
        %v7993 = vrot.slane %v7848, 2
        %v7994 = vsel %vm7899, %v7991, %v7993
        %v7995 = vrot.slane %v7849, 2
        %v7996 = vsel %vm7899, %v7993, %v7995
        %v8045 = vadd.f32 %v7747, %v7902
        %v8046 = vadd.f32 %v7748, %v7904
        %v8047 = vadd.f32 %v7749, %v7906
        %v8048 = vadd.f32 %v7750, %v7908
        %v8049 = vadd.f32 %v7751, %v7910
        %v8050 = vadd.f32 %v7752, %v7912
        %v8051 = vadd.f32 %v7753, %v7914
        %v8052 = vadd.f32 %v7754, %v7916
        %v8053 = vadd.f32 %v7755, %v7918
        %v8054 = vadd.f32 %v7756, %v7920
        %v8055 = vadd.f32 %v7757, %v7922
        %v8056 = vadd.f32 %v7758, %v7924
        %v8057 = vadd.f32 %v7759, %v7926
        %v8058 = vadd.f32 %v7760, %v7928
        %v8059 = vadd.f32 %v7761, %v7930
        %v8060 = vadd.f32 %v7762, %v7932
        %v8061 = vadd.f32 %v7763, %v7934
        %v8062 = vadd.f32 %v7764, %v7936
        %v8063 = vadd.f32 %v7765, %v7938
        %v8064 = vadd.f32 %v7766, %v7940
        %v8065 = vadd.f32 %v7767, %v7942
        %v8066 = vadd.f32 %v7768, %v7944
        %v8067 = vadd.f32 %v7769, %v7946
        %v8068 = vadd.f32 %v7770, %v7948
        %v8069 = vadd.f32 %v7771, %v7950
        %v8070 = vadd.f32 %v7772, %v7952
        %v8071 = vadd.f32 %v7773, %v7954
        %v8072 = vadd.f32 %v7774, %v7956
        %v8073 = vadd.f32 %v7775, %v7958
        %v8074 = vadd.f32 %v7776, %v7960
        %v8075 = vadd.f32 %v7777, %v7962
        %v8076 = vadd.f32 %v7778, %v7964
        %v8077 = vadd.f32 %v7779, %v7966
        %v8078 = vadd.f32 %v7780, %v7968
        %v8079 = vadd.f32 %v7781, %v7970
        %v8080 = vadd.f32 %v7782, %v7972
        %v8081 = vadd.f32 %v7783, %v7974
        %v8082 = vadd.f32 %v7784, %v7976
        %v8083 = vadd.f32 %v7785, %v7978
        %v8084 = vadd.f32 %v7786, %v7980
        %v8085 = vadd.f32 %v7787, %v7982
        %v8086 = vadd.f32 %v7788, %v7984
        %v8087 = vadd.f32 %v7789, %v7986
        %v8088 = vadd.f32 %v7790, %v7988
        %v8089 = vadd.f32 %v7791, %v7990
        %v8090 = vadd.f32 %v7792, %v7992
        %v8091 = vadd.f32 %v7793, %v7994
        %v8092 = vadd.f32 %v7794, %v7996
        %v8093 = vld [vmem:[#allocation3 + $0xc0] sm:$0xf]
        %v8094 = vld [vmem:[#allocation3 + $0xc4] sm:$0xf]
        %v8095 = vld [vmem:[#allocation3 + $0xc8] sm:$0xf]
        %v8096 = vunpack.c.l.bf16 %v8093
        %v8097 = vunpack.c.l.bf16 %v8094
        %v8098 = vunpack.c.l.bf16 %v8095
        %v8099 = vlaneseq
        %v8100 = vshrl.u32 %v8099, 7
        %v8101 = vsub.s32 3, %v8100
        %v8102 = vrot.slane %v7347, %v8101
        %v8103 = vmul.f32 %v7400, %v8102
        %v8104 = vmul.f32 %v7401, %v8102
        %v8105 = vmul.f32 %v7402, %v8102
        %v8106 = vmul.f32 %v7403, %v8102
        %v8107 = vmul.f32 %v7404, %v8102
        %v8108 = vmul.f32 %v7405, %v8102
        %v8109 = vmul.f32 %v7406, %v8102
        %v8110 = vmul.f32 %v7407, %v8102
        %v8111 = vmul.f32 %v7408, %v8102
        %v8112 = vmul.f32 %v7409, %v8102
        %v8113 = vmul.f32 %v7410, %v8102
        %v8114 = vmul.f32 %v7411, %v8102
        %v8115 = vmul.f32 %v7412, %v8102
        %v8116 = vmul.f32 %v7413, %v8102
        %v8117 = vmul.f32 %v7414, %v8102
        %v8118 = vmul.f32 %v7415, %v8102
        %v8119 = vmul.f32 %v7416, %v8102
        %v8120 = vmul.f32 %v7417, %v8102
        %v8121 = vmul.f32 %v7418, %v8102
        %v8122 = vmul.f32 %v7419, %v8102
        %v8123 = vmul.f32 %v7420, %v8102
        %v8124 = vmul.f32 %v7421, %v8102
        %v8125 = vmul.f32 %v7422, %v8102
        %v8126 = vmul.f32 %v7423, %v8102
        %v8127 = vmul.f32 %v7424, %v8102
        %v8128 = vmul.f32 %v7425, %v8102
        %v8129 = vmul.f32 %v7426, %v8102
        %v8130 = vmul.f32 %v7427, %v8102
        %v8131 = vmul.f32 %v7428, %v8102
        %v8132 = vmul.f32 %v7429, %v8102
        %v8133 = vmul.f32 %v7430, %v8102
        %v8134 = vmul.f32 %v7431, %v8102
        %v8135 = vmul.f32 %v7432, %v8102
        %v8136 = vmul.f32 %v7433, %v8102
        %v8137 = vmul.f32 %v7434, %v8102
        %v8138 = vmul.f32 %v7435, %v8102
        %v8139 = vmul.f32 %v7436, %v8102
        %v8140 = vmul.f32 %v7437, %v8102
        %v8141 = vmul.f32 %v7438, %v8102
        %v8142 = vmul.f32 %v7439, %v8102
        %v8143 = vmul.f32 %v7440, %v8102
        %v8144 = vmul.f32 %v7441, %v8102
        %v8145 = vmul.f32 %v7442, %v8102
        %v8146 = vmul.f32 %v7443, %v8102
        %v8147 = vmul.f32 %v7444, %v8102
        %v8148 = vmul.f32 %v8096, %v8102
        %v8149 = vmul.f32 %v8097, %v8102
        %v8150 = vmul.f32 %v8098, %v8102
        %v8151 = vadd.f32 %v8045, %v8103
        %v8152 = vadd.f32 %v8046, %v8104
        %v8153 = vadd.f32 %v8047, %v8105
        %v8154 = vadd.f32 %v8048, %v8106
        %v8155 = vadd.f32 %v8049, %v8107
        %v8156 = vadd.f32 %v8050, %v8108
        %v8157 = vadd.f32 %v8051, %v8109
        %v8158 = vadd.f32 %v8052, %v8110
        %v8159 = vadd.f32 %v8053, %v8111
        %v8160 = vadd.f32 %v8054, %v8112
        %v8161 = vadd.f32 %v8055, %v8113
        %v8162 = vadd.f32 %v8056, %v8114
        %v8163 = vadd.f32 %v8057, %v8115
        %v8164 = vadd.f32 %v8058, %v8116
        %v8165 = vadd.f32 %v8059, %v8117
        %v8166 = vadd.f32 %v8060, %v8118
        %v8167 = vadd.f32 %v8061, %v8119
        %v8168 = vadd.f32 %v8062, %v8120
        %v8169 = vadd.f32 %v8063, %v8121
        %v8170 = vadd.f32 %v8064, %v8122
        %v8171 = vadd.f32 %v8065, %v8123
        %v8172 = vadd.f32 %v8066, %v8124
        %v8173 = vadd.f32 %v8067, %v8125
        %v8174 = vadd.f32 %v8068, %v8126
        %v8175 = vadd.f32 %v8069, %v8127
        %v8176 = vadd.f32 %v8070, %v8128
        %v8177 = vadd.f32 %v8071, %v8129
        %v8178 = vadd.f32 %v8072, %v8130
        %v8179 = vadd.f32 %v8073, %v8131
        %v8180 = vadd.f32 %v8074, %v8132
        %v8181 = vadd.f32 %v8075, %v8133
        %v8182 = vadd.f32 %v8076, %v8134
        %v8183 = vadd.f32 %v8077, %v8135
        %v8184 = vadd.f32 %v8078, %v8136
        %v8185 = vadd.f32 %v8079, %v8137
        %v8186 = vadd.f32 %v8080, %v8138
        %v8187 = vadd.f32 %v8081, %v8139
        %v8188 = vadd.f32 %v8082, %v8140
        %v8189 = vadd.f32 %v8083, %v8141
        %v8190 = vadd.f32 %v8084, %v8142
        %v8191 = vadd.f32 %v8085, %v8143
        %v8192 = vadd.f32 %v8086, %v8144
        %v8193 = vadd.f32 %v8087, %v8145
        %v8194 = vadd.f32 %v8088, %v8146
        %v8195 = vadd.f32 %v8089, %v8147
        %v8196 = vadd.f32 %v8090, %v8148
        %v8197 = vadd.f32 %v8091, %v8149
        %v8198 = vadd.f32 %v8092, %v8150
        %v8199 = vld [vmem:[#allocation3 + $0xcc] sm:$0x1]
        %v8200 = vunpack.c.l.bf16 %v8199
        %v8201 = vlaneseq
        %v8202 = vshrl.u32 %v8201, 7
        %v8203 = vsub.s32 4, %v8202
        %v8204 = vrot.slane %v7347, %v8203
        %v8205 = vmul.f32 %v7400, %v8204
        %v8206 = vmul.f32 %v7401, %v8204
        %v8207 = vmul.f32 %v7402, %v8204
        %v8208 = vmul.f32 %v7403, %v8204
        %v8209 = vmul.f32 %v7404, %v8204
        %v8210 = vmul.f32 %v7405, %v8204
        %v8211 = vmul.f32 %v7406, %v8204
        %v8212 = vmul.f32 %v7407, %v8204
        %v8213 = vmul.f32 %v7408, %v8204
        %v8214 = vmul.f32 %v7409, %v8204
        %v8215 = vmul.f32 %v7410, %v8204
        %v8216 = vmul.f32 %v7411, %v8204
        %v8217 = vmul.f32 %v7412, %v8204
        %v8218 = vmul.f32 %v7413, %v8204
        %v8219 = vmul.f32 %v7414, %v8204
        %v8220 = vmul.f32 %v7415, %v8204
        %v8221 = vmul.f32 %v7416, %v8204
        %v8222 = vmul.f32 %v7417, %v8204
        %v8223 = vmul.f32 %v7418, %v8204
        %v8224 = vmul.f32 %v7419, %v8204
        %v8225 = vmul.f32 %v7420, %v8204
        %v8226 = vmul.f32 %v7421, %v8204
        %v8227 = vmul.f32 %v7422, %v8204
        %v8228 = vmul.f32 %v7423, %v8204
        %v8229 = vmul.f32 %v7424, %v8204
        %v8230 = vmul.f32 %v7425, %v8204
        %v8231 = vmul.f32 %v7426, %v8204
        %v8232 = vmul.f32 %v7427, %v8204
        %v8233 = vmul.f32 %v7428, %v8204
        %v8234 = vmul.f32 %v7429, %v8204
        %v8235 = vmul.f32 %v7430, %v8204
        %v8236 = vmul.f32 %v7431, %v8204
        %v8237 = vmul.f32 %v7432, %v8204
        %v8238 = vmul.f32 %v7433, %v8204
        %v8239 = vmul.f32 %v7434, %v8204
        %v8240 = vmul.f32 %v7435, %v8204
        %v8241 = vmul.f32 %v7436, %v8204
        %v8242 = vmul.f32 %v7437, %v8204
        %v8243 = vmul.f32 %v7438, %v8204
        %v8244 = vmul.f32 %v7439, %v8204
        %v8245 = vmul.f32 %v7440, %v8204
        %v8246 = vmul.f32 %v7441, %v8204
        %v8247 = vmul.f32 %v7442, %v8204
        %v8248 = vmul.f32 %v7443, %v8204
        %v8249 = vmul.f32 %v7444, %v8204
        %v8250 = vmul.f32 %v8096, %v8204
        %v8251 = vmul.f32 %v8097, %v8204
        %v8252 = vmul.f32 %v8098, %v8204
        %v8253 = vmul.f32 %v8200, %v8204
        %v8303 = vrot.slane %v8205, 1
        %v8304 = vrot.slane %v8206, 1
        %v8305 = vsel %vm7601, %v8303, %v8304
        %v8306 = vrot.slane %v8207, 1
        %v8307 = vsel %vm7601, %v8304, %v8306
        %v8308 = vrot.slane %v8208, 1
        %v8309 = vsel %vm7601, %v8306, %v8308
        %v8310 = vrot.slane %v8209, 1
        %v8311 = vsel %vm7601, %v8308, %v8310
        %v8312 = vrot.slane %v8210, 1
        %v8313 = vsel %vm7601, %v8310, %v8312
        %v8314 = vrot.slane %v8211, 1
        %v8315 = vsel %vm7601, %v8312, %v8314
        %v8316 = vrot.slane %v8212, 1
        %v8317 = vsel %vm7601, %v8314, %v8316
        %v8318 = vrot.slane %v8213, 1
        %v8319 = vsel %vm7601, %v8316, %v8318
        %v8320 = vrot.slane %v8214, 1
        %v8321 = vsel %vm7601, %v8318, %v8320
        %v8322 = vrot.slane %v8215, 1
        %v8323 = vsel %vm7601, %v8320, %v8322
        %v8324 = vrot.slane %v8216, 1
        %v8325 = vsel %vm7601, %v8322, %v8324
        %v8326 = vrot.slane %v8217, 1
        %v8327 = vsel %vm7601, %v8324, %v8326
        %v8328 = vrot.slane %v8218, 1
        %v8329 = vsel %vm7601, %v8326, %v8328
        %v8330 = vrot.slane %v8219, 1
        %v8331 = vsel %vm7601, %v8328, %v8330
        %v8332 = vrot.slane %v8220, 1
        %v8333 = vsel %vm7601, %v8330, %v8332
        %v8334 = vrot.slane %v8221, 1
        %v8335 = vsel %vm7601, %v8332, %v8334
        %v8336 = vrot.slane %v8222, 1
        %v8337 = vsel %vm7601, %v8334, %v8336
        %v8338 = vrot.slane %v8223, 1
        %v8339 = vsel %vm7601, %v8336, %v8338
        %v8340 = vrot.slane %v8224, 1
        %v8341 = vsel %vm7601, %v8338, %v8340
        %v8342 = vrot.slane %v8225, 1
        %v8343 = vsel %vm7601, %v8340, %v8342
        %v8344 = vrot.slane %v8226, 1
        %v8345 = vsel %vm7601, %v8342, %v8344
        %v8346 = vrot.slane %v8227, 1
        %v8347 = vsel %vm7601, %v8344, %v8346
        %v8348 = vrot.slane %v8228, 1
        %v8349 = vsel %vm7601, %v8346, %v8348
        %v8350 = vrot.slane %v8229, 1
        %v8351 = vsel %vm7601, %v8348, %v8350
        %v8352 = vrot.slane %v8230, 1
        %v8353 = vsel %vm7601, %v8350, %v8352
        %v8354 = vrot.slane %v8231, 1
        %v8355 = vsel %vm7601, %v8352, %v8354
        %v8356 = vrot.slane %v8232, 1
        %v8357 = vsel %vm7601, %v8354, %v8356
        %v8358 = vrot.slane %v8233, 1
        %v8359 = vsel %vm7601, %v8356, %v8358
        %v8360 = vrot.slane %v8234, 1
        %v8361 = vsel %vm7601, %v8358, %v8360
        %v8362 = vrot.slane %v8235, 1
        %v8363 = vsel %vm7601, %v8360, %v8362
        %v8364 = vrot.slane %v8236, 1
        %v8365 = vsel %vm7601, %v8362, %v8364
        %v8366 = vrot.slane %v8237, 1
        %v8367 = vsel %vm7601, %v8364, %v8366
        %v8368 = vrot.slane %v8238, 1
        %v8369 = vsel %vm7601, %v8366, %v8368
        %v8370 = vrot.slane %v8239, 1
        %v8371 = vsel %vm7601, %v8368, %v8370
        %v8372 = vrot.slane %v8240, 1
        %v8373 = vsel %vm7601, %v8370, %v8372
        %v8374 = vrot.slane %v8241, 1
        %v8375 = vsel %vm7601, %v8372, %v8374
        %v8376 = vrot.slane %v8242, 1
        %v8377 = vsel %vm7601, %v8374, %v8376
        %v8378 = vrot.slane %v8243, 1
        %v8379 = vsel %vm7601, %v8376, %v8378
        %v8380 = vrot.slane %v8244, 1
        %v8381 = vsel %vm7601, %v8378, %v8380
        %v8382 = vrot.slane %v8245, 1
        %v8383 = vsel %vm7601, %v8380, %v8382
        %v8384 = vrot.slane %v8246, 1
        %v8385 = vsel %vm7601, %v8382, %v8384
        %v8386 = vrot.slane %v8247, 1
        %v8387 = vsel %vm7601, %v8384, %v8386
        %v8388 = vrot.slane %v8248, 1
        %v8389 = vsel %vm7601, %v8386, %v8388
        %v8390 = vrot.slane %v8249, 1
        %v8391 = vsel %vm7601, %v8388, %v8390
        %v8392 = vrot.slane %v8250, 1
        %v8393 = vsel %vm7601, %v8390, %v8392
        %v8394 = vrot.slane %v8251, 1
        %v8395 = vsel %vm7601, %v8392, %v8394
        %v8396 = vrot.slane %v8252, 1
        %v8397 = vsel %vm7601, %v8394, %v8396
        %v8398 = vrot.slane %v8253, 1
        %v8399 = vsel %vm7601, %v8396, %v8398
        %v8448 = vadd.f32 %v8151, %v8305
        %v8449 = vadd.f32 %v8152, %v8307
        %v8450 = vadd.f32 %v8153, %v8309
        %v8451 = vadd.f32 %v8154, %v8311
        %v8452 = vadd.f32 %v8155, %v8313
        %v8453 = vadd.f32 %v8156, %v8315
        %v8454 = vadd.f32 %v8157, %v8317
        %v8455 = vadd.f32 %v8158, %v8319
        %v8456 = vadd.f32 %v8159, %v8321
        %v8457 = vadd.f32 %v8160, %v8323
        %v8458 = vadd.f32 %v8161, %v8325
        %v8459 = vadd.f32 %v8162, %v8327
        %v8460 = vadd.f32 %v8163, %v8329
        %v8461 = vadd.f32 %v8164, %v8331
        %v8462 = vadd.f32 %v8165, %v8333
        %v8463 = vadd.f32 %v8166, %v8335
        %v8464 = vadd.f32 %v8167, %v8337
        %v8465 = vadd.f32 %v8168, %v8339
        %v8466 = vadd.f32 %v8169, %v8341
        %v8467 = vadd.f32 %v8170, %v8343
        %v8468 = vadd.f32 %v8171, %v8345
        %v8469 = vadd.f32 %v8172, %v8347
        %v8470 = vadd.f32 %v8173, %v8349
        %v8471 = vadd.f32 %v8174, %v8351
        %v8472 = vadd.f32 %v8175, %v8353
        %v8473 = vadd.f32 %v8176, %v8355
        %v8474 = vadd.f32 %v8177, %v8357
        %v8475 = vadd.f32 %v8178, %v8359
        %v8476 = vadd.f32 %v8179, %v8361
        %v8477 = vadd.f32 %v8180, %v8363
        %v8478 = vadd.f32 %v8181, %v8365
        %v8479 = vadd.f32 %v8182, %v8367
        %v8480 = vadd.f32 %v8183, %v8369
        %v8481 = vadd.f32 %v8184, %v8371
        %v8482 = vadd.f32 %v8185, %v8373
        %v8483 = vadd.f32 %v8186, %v8375
        %v8484 = vadd.f32 %v8187, %v8377
        %v8485 = vadd.f32 %v8188, %v8379
        %v8486 = vadd.f32 %v8189, %v8381
        %v8487 = vadd.f32 %v8190, %v8383
        %v8488 = vadd.f32 %v8191, %v8385
        %v8489 = vadd.f32 %v8192, %v8387
        %v8490 = vadd.f32 %v8193, %v8389
        %v8491 = vadd.f32 %v8194, %v8391
        %v8492 = vadd.f32 %v8195, %v8393
        %v8493 = vadd.f32 %v8196, %v8395
        %v8494 = vadd.f32 %v8197, %v8397
        %v8495 = vadd.f32 %v8198, %v8399
        %v8496 = vld [vmem:[#allocation3 + $0xc] sm:$0xe]
        %v8497 = vunpack.c.l.bf16 %v8496
        %v8498 = vlaneseq
        %v8499 = vshrl.u32 %v8498, 7
        %v8500 = vsub.s32 5, %v8499
        %v8501 = vrot.slane %v7347, %v8500
        %v8502 = vmul.f32 %v8497, %v8501
        %v8503 = vmul.f32 %v7401, %v8501
        %v8504 = vmul.f32 %v7402, %v8501
        %v8505 = vmul.f32 %v7403, %v8501
        %v8506 = vmul.f32 %v7404, %v8501
        %v8507 = vmul.f32 %v7405, %v8501
        %v8508 = vmul.f32 %v7406, %v8501
        %v8509 = vmul.f32 %v7407, %v8501
        %v8510 = vmul.f32 %v7408, %v8501
        %v8511 = vmul.f32 %v7409, %v8501
        %v8512 = vmul.f32 %v7410, %v8501
        %v8513 = vmul.f32 %v7411, %v8501
        %v8514 = vmul.f32 %v7412, %v8501
        %v8515 = vmul.f32 %v7413, %v8501
        %v8516 = vmul.f32 %v7414, %v8501
        %v8517 = vmul.f32 %v7415, %v8501
        %v8518 = vmul.f32 %v7416, %v8501
        %v8519 = vmul.f32 %v7417, %v8501
        %v8520 = vmul.f32 %v7418, %v8501
        %v8521 = vmul.f32 %v7419, %v8501
        %v8522 = vmul.f32 %v7420, %v8501
        %v8523 = vmul.f32 %v7421, %v8501
        %v8524 = vmul.f32 %v7422, %v8501
        %v8525 = vmul.f32 %v7423, %v8501
        %v8526 = vmul.f32 %v7424, %v8501
        %v8527 = vmul.f32 %v7425, %v8501
        %v8528 = vmul.f32 %v7426, %v8501
        %v8529 = vmul.f32 %v7427, %v8501
        %v8530 = vmul.f32 %v7428, %v8501
        %v8531 = vmul.f32 %v7429, %v8501
        %v8532 = vmul.f32 %v7430, %v8501
        %v8533 = vmul.f32 %v7431, %v8501
        %v8534 = vmul.f32 %v7432, %v8501
        %v8535 = vmul.f32 %v7433, %v8501
        %v8536 = vmul.f32 %v7434, %v8501
        %v8537 = vmul.f32 %v7435, %v8501
        %v8538 = vmul.f32 %v7436, %v8501
        %v8539 = vmul.f32 %v7437, %v8501
        %v8540 = vmul.f32 %v7438, %v8501
        %v8541 = vmul.f32 %v7439, %v8501
        %v8542 = vmul.f32 %v7440, %v8501
        %v8543 = vmul.f32 %v7441, %v8501
        %v8544 = vmul.f32 %v7442, %v8501
        %v8545 = vmul.f32 %v7443, %v8501
        %v8546 = vmul.f32 %v7444, %v8501
        %v8547 = vmul.f32 %v8096, %v8501
        %v8548 = vmul.f32 %v8097, %v8501
        %v8549 = vmul.f32 %v8098, %v8501
        %v8550 = vmul.f32 %v8200, %v8501
        %v8600 = vrot.slane %v8502, 2
        %v8601 = vrot.slane %v8503, 2
        %v8602 = vsel %vm7899, %v8600, %v8601
        %v8603 = vrot.slane %v8504, 2
        %v8604 = vsel %vm7899, %v8601, %v8603
        %v8605 = vrot.slane %v8505, 2
        %v8606 = vsel %vm7899, %v8603, %v8605
        %v8607 = vrot.slane %v8506, 2
        %v8608 = vsel %vm7899, %v8605, %v8607
        %v8609 = vrot.slane %v8507, 2
        %v8610 = vsel %vm7899, %v8607, %v8609
        %v8611 = vrot.slane %v8508, 2
        %v8612 = vsel %vm7899, %v8609, %v8611
        %v8613 = vrot.slane %v8509, 2
        %v8614 = vsel %vm7899, %v8611, %v8613
        %v8615 = vrot.slane %v8510, 2
        %v8616 = vsel %vm7899, %v8613, %v8615
        %v8617 = vrot.slane %v8511, 2
        %v8618 = vsel %vm7899, %v8615, %v8617
        %v8619 = vrot.slane %v8512, 2
        %v8620 = vsel %vm7899, %v8617, %v8619
        %v8621 = vrot.slane %v8513, 2
        %v8622 = vsel %vm7899, %v8619, %v8621
        %v8623 = vrot.slane %v8514, 2
        %v8624 = vsel %vm7899, %v8621, %v8623
        %v8625 = vrot.slane %v8515, 2
        %v8626 = vsel %vm7899, %v8623, %v8625
        %v8627 = vrot.slane %v8516, 2
        %v8628 = vsel %vm7899, %v8625, %v8627
        %v8629 = vrot.slane %v8517, 2
        %v8630 = vsel %vm7899, %v8627, %v8629
        %v8631 = vrot.slane %v8518, 2
        %v8632 = vsel %vm7899, %v8629, %v8631
        %v8633 = vrot.slane %v8519, 2
        %v8634 = vsel %vm7899, %v8631, %v8633
        %v8635 = vrot.slane %v8520, 2
        %v8636 = vsel %vm7899, %v8633, %v8635
        %v8637 = vrot.slane %v8521, 2
        %v8638 = vsel %vm7899, %v8635, %v8637
        %v8639 = vrot.slane %v8522, 2
        %v8640 = vsel %vm7899, %v8637, %v8639
        %v8641 = vrot.slane %v8523, 2
        %v8642 = vsel %vm7899, %v8639, %v8641
        %v8643 = vrot.slane %v8524, 2
        %v8644 = vsel %vm7899, %v8641, %v8643
        %v8645 = vrot.slane %v8525, 2
        %v8646 = vsel %vm7899, %v8643, %v8645
        %v8647 = vrot.slane %v8526, 2
        %v8648 = vsel %vm7899, %v8645, %v8647
        %v8649 = vrot.slane %v8527, 2
        %v8650 = vsel %vm7899, %v8647, %v8649
        %v8651 = vrot.slane %v8528, 2
        %v8652 = vsel %vm7899, %v8649, %v8651
        %v8653 = vrot.slane %v8529, 2
        %v8654 = vsel %vm7899, %v8651, %v8653
        %v8655 = vrot.slane %v8530, 2
        %v8656 = vsel %vm7899, %v8653, %v8655
        %v8657 = vrot.slane %v8531, 2
        %v8658 = vsel %vm7899, %v8655, %v8657
        %v8659 = vrot.slane %v8532, 2
        %v8660 = vsel %vm7899, %v8657, %v8659
        %v8661 = vrot.slane %v8533, 2
        %v8662 = vsel %vm7899, %v8659, %v8661
        %v8663 = vrot.slane %v8534, 2
        %v8664 = vsel %vm7899, %v8661, %v8663
        %v8665 = vrot.slane %v8535, 2
        %v8666 = vsel %vm7899, %v8663, %v8665
        %v8667 = vrot.slane %v8536, 2
        %v8668 = vsel %vm7899, %v8665, %v8667
        %v8669 = vrot.slane %v8537, 2
        %v8670 = vsel %vm7899, %v8667, %v8669
        %v8671 = vrot.slane %v8538, 2
        %v8672 = vsel %vm7899, %v8669, %v8671
        %v8673 = vrot.slane %v8539, 2
        %v8674 = vsel %vm7899, %v8671, %v8673
        %v8675 = vrot.slane %v8540, 2
        %v8676 = vsel %vm7899, %v8673, %v8675
        %v8677 = vrot.slane %v8541, 2
        %v8678 = vsel %vm7899, %v8675, %v8677
        %v8679 = vrot.slane %v8542, 2
        %v8680 = vsel %vm7899, %v8677, %v8679
        %v8681 = vrot.slane %v8543, 2
        %v8682 = vsel %vm7899, %v8679, %v8681
        %v8683 = vrot.slane %v8544, 2
        %v8684 = vsel %vm7899, %v8681, %v8683
        %v8685 = vrot.slane %v8545, 2
        %v8686 = vsel %vm7899, %v8683, %v8685
        %v8687 = vrot.slane %v8546, 2
        %v8688 = vsel %vm7899, %v8685, %v8687
        %v8689 = vrot.slane %v8547, 2
        %v8690 = vsel %vm7899, %v8687, %v8689
        %v8691 = vrot.slane %v8548, 2
        %v8692 = vsel %vm7899, %v8689, %v8691
        %v8693 = vrot.slane %v8549, 2
        %v8694 = vsel %vm7899, %v8691, %v8693
        %v8695 = vrot.slane %v8550, 2
        %v8696 = vsel %vm7899, %v8693, %v8695
        %v8745 = vadd.f32 %v8448, %v8602
        %v8746 = vadd.f32 %v8449, %v8604
        %v8747 = vadd.f32 %v8450, %v8606
        %v8748 = vadd.f32 %v8451, %v8608
        %v8749 = vadd.f32 %v8452, %v8610
        %v8750 = vadd.f32 %v8453, %v8612
        %v8751 = vadd.f32 %v8454, %v8614
        %v8752 = vadd.f32 %v8455, %v8616
        %v8753 = vadd.f32 %v8456, %v8618
        %v8754 = vadd.f32 %v8457, %v8620
        %v8755 = vadd.f32 %v8458, %v8622
        %v8756 = vadd.f32 %v8459, %v8624
        %v8757 = vadd.f32 %v8460, %v8626
        %v8758 = vadd.f32 %v8461, %v8628
        %v8759 = vadd.f32 %v8462, %v8630
        %v8760 = vadd.f32 %v8463, %v8632
        %v8761 = vadd.f32 %v8464, %v8634
        %v8762 = vadd.f32 %v8465, %v8636
        %v8763 = vadd.f32 %v8466, %v8638
        %v8764 = vadd.f32 %v8467, %v8640
        %v8765 = vadd.f32 %v8468, %v8642
        %v8766 = vadd.f32 %v8469, %v8644
        %v8767 = vadd.f32 %v8470, %v8646
        %v8768 = vadd.f32 %v8471, %v8648
        %v8769 = vadd.f32 %v8472, %v8650
        %v8770 = vadd.f32 %v8473, %v8652
        %v8771 = vadd.f32 %v8474, %v8654
        %v8772 = vadd.f32 %v8475, %v8656
        %v8773 = vadd.f32 %v8476, %v8658
        %v8774 = vadd.f32 %v8477, %v8660
        %v8775 = vadd.f32 %v8478, %v8662
        %v8776 = vadd.f32 %v8479, %v8664
        %v8777 = vadd.f32 %v8480, %v8666
        %v8778 = vadd.f32 %v8481, %v8668
        %v8779 = vadd.f32 %v8482, %v8670
        %v8780 = vadd.f32 %v8483, %v8672
        %v8781 = vadd.f32 %v8484, %v8674
        %v8782 = vadd.f32 %v8485, %v8676
        %v8783 = vadd.f32 %v8486, %v8678
        %v8784 = vadd.f32 %v8487, %v8680
        %v8785 = vadd.f32 %v8488, %v8682
        %v8786 = vadd.f32 %v8489, %v8684
        %v8787 = vadd.f32 %v8490, %v8686
        %v8788 = vadd.f32 %v8491, %v8688
        %v8789 = vadd.f32 %v8492, %v8690
        %v8790 = vadd.f32 %v8493, %v8692
        %v8791 = vadd.f32 %v8494, %v8694
        %v8792 = vadd.f32 %v8495, %v8696
        %v8793 = vld [vmem:[#allocation3 + $0xcc] sm:$0xf]
        %v8794 = vld [vmem:[#allocation3 + $0xd0] sm:$0xf]
        %v8795 = vld [vmem:[#allocation3 + $0xd4] sm:$0xf]
        %v8796 = vunpack.c.l.bf16 %v8793
        %v8797 = vunpack.c.l.bf16 %v8794
        %v8798 = vunpack.c.l.bf16 %v8795
        %v8799 = vlaneseq
        %v8800 = vshrl.u32 %v8799, 7
        %v8801 = vsub.s32 6, %v8800
        %v8802 = vrot.slane %v7347, %v8801
        %v8803 = vmul.f32 %v7403, %v8802
        %v8804 = vmul.f32 %v7404, %v8802
        %v8805 = vmul.f32 %v7405, %v8802
        %v8806 = vmul.f32 %v7406, %v8802
        %v8807 = vmul.f32 %v7407, %v8802
        %v8808 = vmul.f32 %v7408, %v8802
        %v8809 = vmul.f32 %v7409, %v8802
        %v8810 = vmul.f32 %v7410, %v8802
        %v8811 = vmul.f32 %v7411, %v8802
        %v8812 = vmul.f32 %v7412, %v8802
        %v8813 = vmul.f32 %v7413, %v8802
        %v8814 = vmul.f32 %v7414, %v8802
        %v8815 = vmul.f32 %v7415, %v8802
        %v8816 = vmul.f32 %v7416, %v8802
        %v8817 = vmul.f32 %v7417, %v8802
        %v8818 = vmul.f32 %v7418, %v8802
        %v8819 = vmul.f32 %v7419, %v8802
        %v8820 = vmul.f32 %v7420, %v8802
        %v8821 = vmul.f32 %v7421, %v8802
        %v8822 = vmul.f32 %v7422, %v8802
        %v8823 = vmul.f32 %v7423, %v8802
        %v8824 = vmul.f32 %v7424, %v8802
        %v8825 = vmul.f32 %v7425, %v8802
        %v8826 = vmul.f32 %v7426, %v8802
        %v8827 = vmul.f32 %v7427, %v8802
        %v8828 = vmul.f32 %v7428, %v8802
        %v8829 = vmul.f32 %v7429, %v8802
        %v8830 = vmul.f32 %v7430, %v8802
        %v8831 = vmul.f32 %v7431, %v8802
        %v8832 = vmul.f32 %v7432, %v8802
        %v8833 = vmul.f32 %v7433, %v8802
        %v8834 = vmul.f32 %v7434, %v8802
        %v8835 = vmul.f32 %v7435, %v8802
        %v8836 = vmul.f32 %v7436, %v8802
        %v8837 = vmul.f32 %v7437, %v8802
        %v8838 = vmul.f32 %v7438, %v8802
        %v8839 = vmul.f32 %v7439, %v8802
        %v8840 = vmul.f32 %v7440, %v8802
        %v8841 = vmul.f32 %v7441, %v8802
        %v8842 = vmul.f32 %v7442, %v8802
        %v8843 = vmul.f32 %v7443, %v8802
        %v8844 = vmul.f32 %v7444, %v8802
        %v8845 = vmul.f32 %v8096, %v8802
        %v8846 = vmul.f32 %v8097, %v8802
        %v8847 = vmul.f32 %v8098, %v8802
        %v8848 = vmul.f32 %v8796, %v8802
        %v8849 = vmul.f32 %v8797, %v8802
        %v8850 = vmul.f32 %v8798, %v8802
        %v8851 = vadd.f32 %v8745, %v8803
        %v8852 = vadd.f32 %v8746, %v8804
        %v8853 = vadd.f32 %v8747, %v8805
        %v8854 = vadd.f32 %v8748, %v8806
        %v8855 = vadd.f32 %v8749, %v8807
        %v8856 = vadd.f32 %v8750, %v8808
        %v8857 = vadd.f32 %v8751, %v8809
        %v8858 = vadd.f32 %v8752, %v8810
        %v8859 = vadd.f32 %v8753, %v8811
        %v8860 = vadd.f32 %v8754, %v8812
        %v8861 = vadd.f32 %v8755, %v8813
        %v8862 = vadd.f32 %v8756, %v8814
        %v8863 = vadd.f32 %v8757, %v8815
        %v8864 = vadd.f32 %v8758, %v8816
        %v8865 = vadd.f32 %v8759, %v8817
        %v8866 = vadd.f32 %v8760, %v8818
        %v8867 = vadd.f32 %v8761, %v8819
        %v8868 = vadd.f32 %v8762, %v8820
        %v8869 = vadd.f32 %v8763, %v8821
        %v8870 = vadd.f32 %v8764, %v8822
        %v8871 = vadd.f32 %v8765, %v8823
        %v8872 = vadd.f32 %v8766, %v8824
        %v8873 = vadd.f32 %v8767, %v8825
        %v8874 = vadd.f32 %v8768, %v8826
        %v8875 = vadd.f32 %v8769, %v8827
        %v8876 = vadd.f32 %v8770, %v8828
        %v8877 = vadd.f32 %v8771, %v8829
        %v8878 = vadd.f32 %v8772, %v8830
        %v8879 = vadd.f32 %v8773, %v8831
        %v8880 = vadd.f32 %v8774, %v8832
        %v8881 = vadd.f32 %v8775, %v8833
        %v8882 = vadd.f32 %v8776, %v8834
        %v8883 = vadd.f32 %v8777, %v8835
        %v8884 = vadd.f32 %v8778, %v8836
        %v8885 = vadd.f32 %v8779, %v8837
        %v8886 = vadd.f32 %v8780, %v8838
        %v8887 = vadd.f32 %v8781, %v8839
        %v8888 = vadd.f32 %v8782, %v8840
        %v8889 = vadd.f32 %v8783, %v8841
        %v8890 = vadd.f32 %v8784, %v8842
        %v8891 = vadd.f32 %v8785, %v8843
        %v8892 = vadd.f32 %v8786, %v8844
        %v8893 = vadd.f32 %v8787, %v8845
        %v8894 = vadd.f32 %v8788, %v8846
        %v8895 = vadd.f32 %v8789, %v8847
        %v8896 = vadd.f32 %v8790, %v8848
        %v8897 = vadd.f32 %v8791, %v8849
        %v8898 = vadd.f32 %v8792, %v8850
        %v8899 = vld [vmem:[#allocation3 + $0xd8] sm:$0x1]
        %v8900 = vunpack.c.l.bf16 %v8899
        %v8901 = vlaneseq
        %v8902 = vshrl.u32 %v8901, 7
        %v8903 = vsub.s32 7, %v8902
        %v8904 = vrot.slane %v7347, %v8903
        %v8905 = vmul.f32 %v7403, %v8904
        %v8906 = vmul.f32 %v7404, %v8904
        %v8907 = vmul.f32 %v7405, %v8904
        %v8908 = vmul.f32 %v7406, %v8904
        %v8909 = vmul.f32 %v7407, %v8904
        %v8910 = vmul.f32 %v7408, %v8904
        %v8911 = vmul.f32 %v7409, %v8904
        %v8912 = vmul.f32 %v7410, %v8904
        %v8913 = vmul.f32 %v7411, %v8904
        %v8914 = vmul.f32 %v7412, %v8904
        %v8915 = vmul.f32 %v7413, %v8904
        %v8916 = vmul.f32 %v7414, %v8904
        %v8917 = vmul.f32 %v7415, %v8904
        %v8918 = vmul.f32 %v7416, %v8904
        %v8919 = vmul.f32 %v7417, %v8904
        %v8920 = vmul.f32 %v7418, %v8904
        %v8921 = vmul.f32 %v7419, %v8904
        %v8922 = vmul.f32 %v7420, %v8904
        %v8923 = vmul.f32 %v7421, %v8904
        %v8924 = vmul.f32 %v7422, %v8904
        %v8925 = vmul.f32 %v7423, %v8904
        %v8926 = vmul.f32 %v7424, %v8904
        %v8927 = vmul.f32 %v7425, %v8904
        %v8928 = vmul.f32 %v7426, %v8904
        %v8929 = vmul.f32 %v7427, %v8904
        %v8930 = vmul.f32 %v7428, %v8904
        %v8931 = vmul.f32 %v7429, %v8904
        %v8932 = vmul.f32 %v7430, %v8904
        %v8933 = vmul.f32 %v7431, %v8904
        %v8934 = vmul.f32 %v7432, %v8904
        %v8935 = vmul.f32 %v7433, %v8904
        %v8936 = vmul.f32 %v7434, %v8904
        %v8937 = vmul.f32 %v7435, %v8904
        %v8938 = vmul.f32 %v7436, %v8904
        %v8939 = vmul.f32 %v7437, %v8904
        %v8940 = vmul.f32 %v7438, %v8904
        %v8941 = vmul.f32 %v7439, %v8904
        %v8942 = vmul.f32 %v7440, %v8904
        %v8943 = vmul.f32 %v7441, %v8904
        %v8944 = vmul.f32 %v7442, %v8904
        %v8945 = vmul.f32 %v7443, %v8904
        %v8946 = vmul.f32 %v7444, %v8904
        %v8947 = vmul.f32 %v8096, %v8904
        %v8948 = vmul.f32 %v8097, %v8904
        %v8949 = vmul.f32 %v8098, %v8904
        %v8950 = vmul.f32 %v8796, %v8904
        %v8951 = vmul.f32 %v8797, %v8904
        %v8952 = vmul.f32 %v8798, %v8904
        %v8953 = vmul.f32 %v8900, %v8904
        %v9003 = vrot.slane %v8905, 1
        %v9004 = vrot.slane %v8906, 1
        %v9005 = vsel %vm7601, %v9003, %v9004
        %v9006 = vrot.slane %v8907, 1
        %v9007 = vsel %vm7601, %v9004, %v9006
        %v9008 = vrot.slane %v8908, 1
        %v9009 = vsel %vm7601, %v9006, %v9008
        %v9010 = vrot.slane %v8909, 1
        %v9011 = vsel %vm7601, %v9008, %v9010
        %v9012 = vrot.slane %v8910, 1
        %v9013 = vsel %vm7601, %v9010, %v9012
        %v9014 = vrot.slane %v8911, 1
        %v9015 = vsel %vm7601, %v9012, %v9014
        %v9016 = vrot.slane %v8912, 1
        %v9017 = vsel %vm7601, %v9014, %v9016
        %v9018 = vrot.slane %v8913, 1
        %v9019 = vsel %vm7601, %v9016, %v9018
        %v9020 = vrot.slane %v8914, 1
        %v9021 = vsel %vm7601, %v9018, %v9020
        %v9022 = vrot.slane %v8915, 1
        %v9023 = vsel %vm7601, %v9020, %v9022
        %v9024 = vrot.slane %v8916, 1
        %v9025 = vsel %vm7601, %v9022, %v9024
        %v9026 = vrot.slane %v8917, 1
        %v9027 = vsel %vm7601, %v9024, %v9026
        %v9028 = vrot.slane %v8918, 1
        %v9029 = vsel %vm7601, %v9026, %v9028
        %v9030 = vrot.slane %v8919, 1
        %v9031 = vsel %vm7601, %v9028, %v9030
        %v9032 = vrot.slane %v8920, 1
        %v9033 = vsel %vm7601, %v9030, %v9032
        %v9034 = vrot.slane %v8921, 1
        %v9035 = vsel %vm7601, %v9032, %v9034
        %v9036 = vrot.slane %v8922, 1
        %v9037 = vsel %vm7601, %v9034, %v9036
        %v9038 = vrot.slane %v8923, 1
        %v9039 = vsel %vm7601, %v9036, %v9038
        %v9040 = vrot.slane %v8924, 1
        %v9041 = vsel %vm7601, %v9038, %v9040
        %v9042 = vrot.slane %v8925, 1
        %v9043 = vsel %vm7601, %v9040, %v9042
        %v9044 = vrot.slane %v8926, 1
        %v9045 = vsel %vm7601, %v9042, %v9044
        %v9046 = vrot.slane %v8927, 1
        %v9047 = vsel %vm7601, %v9044, %v9046
        %v9048 = vrot.slane %v8928, 1
        %v9049 = vsel %vm7601, %v9046, %v9048
        %v9050 = vrot.slane %v8929, 1
        %v9051 = vsel %vm7601, %v9048, %v9050
        %v9052 = vrot.slane %v8930, 1
        %v9053 = vsel %vm7601, %v9050, %v9052
        %v9054 = vrot.slane %v8931, 1
        %v9055 = vsel %vm7601, %v9052, %v9054
        %v9056 = vrot.slane %v8932, 1
        %v9057 = vsel %vm7601, %v9054, %v9056
        %v9058 = vrot.slane %v8933, 1
        %v9059 = vsel %vm7601, %v9056, %v9058
        %v9060 = vrot.slane %v8934, 1
        %v9061 = vsel %vm7601, %v9058, %v9060
        %v9062 = vrot.slane %v8935, 1
        %v9063 = vsel %vm7601, %v9060, %v9062
        %v9064 = vrot.slane %v8936, 1
        %v9065 = vsel %vm7601, %v9062, %v9064
        %v9066 = vrot.slane %v8937, 1
        %v9067 = vsel %vm7601, %v9064, %v9066
        %v9068 = vrot.slane %v8938, 1
        %v9069 = vsel %vm7601, %v9066, %v9068
        %v9070 = vrot.slane %v8939, 1
        %v9071 = vsel %vm7601, %v9068, %v9070
        %v9072 = vrot.slane %v8940, 1
        %v9073 = vsel %vm7601, %v9070, %v9072
        %v9074 = vrot.slane %v8941, 1
        %v9075 = vsel %vm7601, %v9072, %v9074
        %v9076 = vrot.slane %v8942, 1
        %v9077 = vsel %vm7601, %v9074, %v9076
        %v9078 = vrot.slane %v8943, 1
        %v9079 = vsel %vm7601, %v9076, %v9078
        %v9080 = vrot.slane %v8944, 1
        %v9081 = vsel %vm7601, %v9078, %v9080
        %v9082 = vrot.slane %v8945, 1
        %v9083 = vsel %vm7601, %v9080, %v9082
        %v9084 = vrot.slane %v8946, 1
        %v9085 = vsel %vm7601, %v9082, %v9084
        %v9086 = vrot.slane %v8947, 1
        %v9087 = vsel %vm7601, %v9084, %v9086
        %v9088 = vrot.slane %v8948, 1
        %v9089 = vsel %vm7601, %v9086, %v9088
        %v9090 = vrot.slane %v8949, 1
        %v9091 = vsel %vm7601, %v9088, %v9090
        %v9092 = vrot.slane %v8950, 1
        %v9093 = vsel %vm7601, %v9090, %v9092
        %v9094 = vrot.slane %v8951, 1
        %v9095 = vsel %vm7601, %v9092, %v9094
        %v9096 = vrot.slane %v8952, 1
        %v9097 = vsel %vm7601, %v9094, %v9096
        %v9098 = vrot.slane %v8953, 1
        %v9099 = vsel %vm7601, %v9096, %v9098
        %v9148 = vadd.f32 %v8851, %v9005
        %v9149 = vadd.f32 %v8852, %v9007
        %v9150 = vadd.f32 %v8853, %v9009
        %v9151 = vadd.f32 %v8854, %v9011
        %v9152 = vadd.f32 %v8855, %v9013
        %v9153 = vadd.f32 %v8856, %v9015
        %v9154 = vadd.f32 %v8857, %v9017
        %v9155 = vadd.f32 %v8858, %v9019
        %v9156 = vadd.f32 %v8859, %v9021
        %v9157 = vadd.f32 %v8860, %v9023
        %v9158 = vadd.f32 %v8861, %v9025
        %v9159 = vadd.f32 %v8862, %v9027
        %v9160 = vadd.f32 %v8863, %v9029
        %v9161 = vadd.f32 %v8864, %v9031
        %v9162 = vadd.f32 %v8865, %v9033
        %v9163 = vadd.f32 %v8866, %v9035
        %v9164 = vadd.f32 %v8867, %v9037
        %v9165 = vadd.f32 %v8868, %v9039
        %v9166 = vadd.f32 %v8869, %v9041
        %v9167 = vadd.f32 %v8870, %v9043
        %v9168 = vadd.f32 %v8871, %v9045
        %v9169 = vadd.f32 %v8872, %v9047
        %v9170 = vadd.f32 %v8873, %v9049
        %v9171 = vadd.f32 %v8874, %v9051
        %v9172 = vadd.f32 %v8875, %v9053
        %v9173 = vadd.f32 %v8876, %v9055
        %v9174 = vadd.f32 %v8877, %v9057
        %v9175 = vadd.f32 %v8878, %v9059
        %v9176 = vadd.f32 %v8879, %v9061
        %v9177 = vadd.f32 %v8880, %v9063
        %v9178 = vadd.f32 %v8881, %v9065
        %v9179 = vadd.f32 %v8882, %v9067
        %v9180 = vadd.f32 %v8883, %v9069
        %v9181 = vadd.f32 %v8884, %v9071
        %v9182 = vadd.f32 %v8885, %v9073
        %v9183 = vadd.f32 %v8886, %v9075
        %v9184 = vadd.f32 %v8887, %v9077
        %v9185 = vadd.f32 %v8888, %v9079
        %v9186 = vadd.f32 %v8889, %v9081
        %v9187 = vadd.f32 %v8890, %v9083
        %v9188 = vadd.f32 %v8891, %v9085
        %v9189 = vadd.f32 %v8892, %v9087
        %v9190 = vadd.f32 %v8893, %v9089
        %v9191 = vadd.f32 %v8894, %v9091
        %v9192 = vadd.f32 %v8895, %v9093
        %v9193 = vadd.f32 %v8896, %v9095
        %v9194 = vadd.f32 %v8897, %v9097
        %v9195 = vadd.f32 %v8898, %v9099
        %v9196 = vld [vmem:[#allocation3 + $0x18] sm:$0xe]
        %v9197 = vunpack.c.l.bf16 %v9196
        %v9198 = vlaneseq
        %v9199 = vshrl.u32 %v9198, 7
        %v9200 = vsub.s32 0, %v9199
        %v9201 = vrot.slane %v7348, %v9200
        %v9202 = vmul.f32 %v9197, %v9201
        %v9203 = vmul.f32 %v7404, %v9201
        %v9204 = vmul.f32 %v7405, %v9201
        %v9205 = vmul.f32 %v7406, %v9201
        %v9206 = vmul.f32 %v7407, %v9201
        %v9207 = vmul.f32 %v7408, %v9201
        %v9208 = vmul.f32 %v7409, %v9201
        %v9209 = vmul.f32 %v7410, %v9201
        %v9210 = vmul.f32 %v7411, %v9201
        %v9211 = vmul.f32 %v7412, %v9201
        %v9212 = vmul.f32 %v7413, %v9201
        %v9213 = vmul.f32 %v7414, %v9201
        %v9214 = vmul.f32 %v7415, %v9201
        %v9215 = vmul.f32 %v7416, %v9201
        %v9216 = vmul.f32 %v7417, %v9201
        %v9217 = vmul.f32 %v7418, %v9201
        %v9218 = vmul.f32 %v7419, %v9201
        %v9219 = vmul.f32 %v7420, %v9201
        %v9220 = vmul.f32 %v7421, %v9201
        %v9221 = vmul.f32 %v7422, %v9201
        %v9222 = vmul.f32 %v7423, %v9201
        %v9223 = vmul.f32 %v7424, %v9201
        %v9224 = vmul.f32 %v7425, %v9201
        %v9225 = vmul.f32 %v7426, %v9201
        %v9226 = vmul.f32 %v7427, %v9201
        %v9227 = vmul.f32 %v7428, %v9201
        %v9228 = vmul.f32 %v7429, %v9201
        %v9229 = vmul.f32 %v7430, %v9201
        %v9230 = vmul.f32 %v7431, %v9201
        %v9231 = vmul.f32 %v7432, %v9201
        %v9232 = vmul.f32 %v7433, %v9201
        %v9233 = vmul.f32 %v7434, %v9201
        %v9234 = vmul.f32 %v7435, %v9201
        %v9235 = vmul.f32 %v7436, %v9201
        %v9236 = vmul.f32 %v7437, %v9201
        %v9237 = vmul.f32 %v7438, %v9201
        %v9238 = vmul.f32 %v7439, %v9201
        %v9239 = vmul.f32 %v7440, %v9201
        %v9240 = vmul.f32 %v7441, %v9201
        %v9241 = vmul.f32 %v7442, %v9201
        %v9242 = vmul.f32 %v7443, %v9201
        %v9243 = vmul.f32 %v7444, %v9201
        %v9244 = vmul.f32 %v8096, %v9201
        %v9245 = vmul.f32 %v8097, %v9201
        %v9246 = vmul.f32 %v8098, %v9201
        %v9247 = vmul.f32 %v8796, %v9201
        %v9248 = vmul.f32 %v8797, %v9201
        %v9249 = vmul.f32 %v8798, %v9201
        %v9250 = vmul.f32 %v8900, %v9201
        %v9300 = vrot.slane %v9202, 2
        %v9301 = vrot.slane %v9203, 2
        %v9302 = vsel %vm7899, %v9300, %v9301
        %v9303 = vrot.slane %v9204, 2
        %v9304 = vsel %vm7899, %v9301, %v9303
        %v9305 = vrot.slane %v9205, 2
        %v9306 = vsel %vm7899, %v9303, %v9305
        %v9307 = vrot.slane %v9206, 2
        %v9308 = vsel %vm7899, %v9305, %v9307
        %v9309 = vrot.slane %v9207, 2
        %v9310 = vsel %vm7899, %v9307, %v9309
        %v9311 = vrot.slane %v9208, 2
        %v9312 = vsel %vm7899, %v9309, %v9311
        %v9313 = vrot.slane %v9209, 2
        %v9314 = vsel %vm7899, %v9311, %v9313
        %v9315 = vrot.slane %v9210, 2
        %v9316 = vsel %vm7899, %v9313, %v9315
        %v9317 = vrot.slane %v9211, 2
        %v9318 = vsel %vm7899, %v9315, %v9317
        %v9319 = vrot.slane %v9212, 2
        %v9320 = vsel %vm7899, %v9317, %v9319
        %v9321 = vrot.slane %v9213, 2
        %v9322 = vsel %vm7899, %v9319, %v9321
        %v9323 = vrot.slane %v9214, 2
        %v9324 = vsel %vm7899, %v9321, %v9323
        %v9325 = vrot.slane %v9215, 2
        %v9326 = vsel %vm7899, %v9323, %v9325
        %v9327 = vrot.slane %v9216, 2
        %v9328 = vsel %vm7899, %v9325, %v9327
        %v9329 = vrot.slane %v9217, 2
        %v9330 = vsel %vm7899, %v9327, %v9329
        %v9331 = vrot.slane %v9218, 2
        %v9332 = vsel %vm7899, %v9329, %v9331
        %v9333 = vrot.slane %v9219, 2
        %v9334 = vsel %vm7899, %v9331, %v9333
        %v9335 = vrot.slane %v9220, 2
        %v9336 = vsel %vm7899, %v9333, %v9335
        %v9337 = vrot.slane %v9221, 2
        %v9338 = vsel %vm7899, %v9335, %v9337
        %v9339 = vrot.slane %v9222, 2
        %v9340 = vsel %vm7899, %v9337, %v9339
        %v9341 = vrot.slane %v9223, 2
        %v9342 = vsel %vm7899, %v9339, %v9341
        %v9343 = vrot.slane %v9224, 2
        %v9344 = vsel %vm7899, %v9341, %v9343
        %v9345 = vrot.slane %v9225, 2
        %v9346 = vsel %vm7899, %v9343, %v9345
        %v9347 = vrot.slane %v9226, 2
        %v9348 = vsel %vm7899, %v9345, %v9347
        %v9349 = vrot.slane %v9227, 2
        %v9350 = vsel %vm7899, %v9347, %v9349
        %v9351 = vrot.slane %v9228, 2
        %v9352 = vsel %vm7899, %v9349, %v9351
        %v9353 = vrot.slane %v9229, 2
        %v9354 = vsel %vm7899, %v9351, %v9353
        %v9355 = vrot.slane %v9230, 2
        %v9356 = vsel %vm7899, %v9353, %v9355
        %v9357 = vrot.slane %v9231, 2
        %v9358 = vsel %vm7899, %v9355, %v9357
        %v9359 = vrot.slane %v9232, 2
        %v9360 = vsel %vm7899, %v9357, %v9359
        %v9361 = vrot.slane %v9233, 2
        %v9362 = vsel %vm7899, %v9359, %v9361
        %v9363 = vrot.slane %v9234, 2
        %v9364 = vsel %vm7899, %v9361, %v9363
        %v9365 = vrot.slane %v9235, 2
        %v9366 = vsel %vm7899, %v9363, %v9365
        %v9367 = vrot.slane %v9236, 2
        %v9368 = vsel %vm7899, %v9365, %v9367
        %v9369 = vrot.slane %v9237, 2
        %v9370 = vsel %vm7899, %v9367, %v9369
        %v9371 = vrot.slane %v9238, 2
        %v9372 = vsel %vm7899, %v9369, %v9371
        %v9373 = vrot.slane %v9239, 2
        %v9374 = vsel %vm7899, %v9371, %v9373
        %v9375 = vrot.slane %v9240, 2
        %v9376 = vsel %vm7899, %v9373, %v9375
        %v9377 = vrot.slane %v9241, 2
        %v9378 = vsel %vm7899, %v9375, %v9377
        %v9379 = vrot.slane %v9242, 2
        %v9380 = vsel %vm7899, %v9377, %v9379
        %v9381 = vrot.slane %v9243, 2
        %v9382 = vsel %vm7899, %v9379, %v9381
        %v9383 = vrot.slane %v9244, 2
        %v9384 = vsel %vm7899, %v9381, %v9383
        %v9385 = vrot.slane %v9245, 2
        %v9386 = vsel %vm7899, %v9383, %v9385
        %v9387 = vrot.slane %v9246, 2
        %v9388 = vsel %vm7899, %v9385, %v9387
        %v9389 = vrot.slane %v9247, 2
        %v9390 = vsel %vm7899, %v9387, %v9389
        %v9391 = vrot.slane %v9248, 2
        %v9392 = vsel %vm7899, %v9389, %v9391
        %v9393 = vrot.slane %v9249, 2
        %v9394 = vsel %vm7899, %v9391, %v9393
        %v9395 = vrot.slane %v9250, 2
        %v9396 = vsel %vm7899, %v9393, %v9395
        %v9445 = vadd.f32 %v9148, %v9302
        %v9446 = vadd.f32 %v9149, %v9304
        %v9447 = vadd.f32 %v9150, %v9306
        %v9448 = vadd.f32 %v9151, %v9308
        %v9449 = vadd.f32 %v9152, %v9310
        %v9450 = vadd.f32 %v9153, %v9312
        %v9451 = vadd.f32 %v9154, %v9314
        %v9452 = vadd.f32 %v9155, %v9316
        %v9453 = vadd.f32 %v9156, %v9318
        %v9454 = vadd.f32 %v9157, %v9320
        %v9455 = vadd.f32 %v9158, %v9322
        %v9456 = vadd.f32 %v9159, %v9324
        %v9457 = vadd.f32 %v9160, %v9326
        %v9458 = vadd.f32 %v9161, %v9328
        %v9459 = vadd.f32 %v9162, %v9330
        %v9460 = vadd.f32 %v9163, %v9332
        %v9461 = vadd.f32 %v9164, %v9334
        %v9462 = vadd.f32 %v9165, %v9336
        %v9463 = vadd.f32 %v9166, %v9338
        %v9464 = vadd.f32 %v9167, %v9340
        %v9465 = vadd.f32 %v9168, %v9342
        %v9466 = vadd.f32 %v9169, %v9344
        %v9467 = vadd.f32 %v9170, %v9346
        %v9468 = vadd.f32 %v9171, %v9348
        %v9469 = vadd.f32 %v9172, %v9350
        %v9470 = vadd.f32 %v9173, %v9352
        %v9471 = vadd.f32 %v9174, %v9354
        %v9472 = vadd.f32 %v9175, %v9356
        %v9473 = vadd.f32 %v9176, %v9358
        %v9474 = vadd.f32 %v9177, %v9360
        %v9475 = vadd.f32 %v9178, %v9362
        %v9476 = vadd.f32 %v9179, %v9364
        %v9477 = vadd.f32 %v9180, %v9366
        %v9478 = vadd.f32 %v9181, %v9368
        %v9479 = vadd.f32 %v9182, %v9370
        %v9480 = vadd.f32 %v9183, %v9372
        %v9481 = vadd.f32 %v9184, %v9374
        %v9482 = vadd.f32 %v9185, %v9376
        %v9483 = vadd.f32 %v9186, %v9378
        %v9484 = vadd.f32 %v9187, %v9380
        %v9485 = vadd.f32 %v9188, %v9382
        %v9486 = vadd.f32 %v9189, %v9384
        %v9487 = vadd.f32 %v9190, %v9386
        %v9488 = vadd.f32 %v9191, %v9388
        %v9489 = vadd.f32 %v9192, %v9390
        %v9490 = vadd.f32 %v9193, %v9392
        %v9491 = vadd.f32 %v9194, %v9394
        %v9492 = vadd.f32 %v9195, %v9396
        %v9493 = vld [vmem:[%s4] sm:$0x1]
        %v9495 = vlaneseq
        %v9496 = vshrl.u32 %v9495, 7
        %v9497 = vsub.s32 0, %v9496
        %v9498 = vrot.slane %v9493, %v9497
        %v9500 = vadd.f32 %v9445, %v9498
        %v9501 = vadd.f32 %v9446, %v9498
        %v9502 = vadd.f32 %v9447, %v9498
        %v9503 = vadd.f32 %v9448, %v9498
        %v9504 = vadd.f32 %v9449, %v9498
        %v9505 = vadd.f32 %v9450, %v9498
        %v9506 = vadd.f32 %v9451, %v9498
        %v9507 = vadd.f32 %v9452, %v9498
        %v9508 = vadd.f32 %v9453, %v9498
        %v9509 = vadd.f32 %v9454, %v9498
        %v9510 = vadd.f32 %v9455, %v9498
        %v9511 = vadd.f32 %v9456, %v9498
        %v9512 = vadd.f32 %v9457, %v9498
        %v9513 = vadd.f32 %v9458, %v9498
        %v9514 = vadd.f32 %v9459, %v9498
        %v9515 = vadd.f32 %v9460, %v9498
        %v9516 = vadd.f32 %v9461, %v9498
        %v9517 = vadd.f32 %v9462, %v9498
        %v9518 = vadd.f32 %v9463, %v9498
        %v9519 = vadd.f32 %v9464, %v9498
        %v9520 = vadd.f32 %v9465, %v9498
        %v9521 = vadd.f32 %v9466, %v9498
        %v9522 = vadd.f32 %v9467, %v9498
        %v9523 = vadd.f32 %v9468, %v9498
        %v9524 = vadd.f32 %v9469, %v9498
        %v9525 = vadd.f32 %v9470, %v9498
        %v9526 = vadd.f32 %v9471, %v9498
        %v9527 = vadd.f32 %v9472, %v9498
        %v9528 = vadd.f32 %v9473, %v9498
        %v9529 = vadd.f32 %v9474, %v9498
        %v9530 = vadd.f32 %v9475, %v9498
        %v9531 = vadd.f32 %v9476, %v9498
        %v9532 = vadd.f32 %v9477, %v9498
        %v9533 = vadd.f32 %v9478, %v9498
        %v9534 = vadd.f32 %v9479, %v9498
        %v9535 = vadd.f32 %v9480, %v9498
        %v9536 = vadd.f32 %v9481, %v9498
        %v9537 = vadd.f32 %v9482, %v9498
        %v9538 = vadd.f32 %v9483, %v9498
        %v9539 = vadd.f32 %v9484, %v9498
        %v9540 = vadd.f32 %v9485, %v9498
        %v9541 = vadd.f32 %v9486, %v9498
        %v9542 = vadd.f32 %v9487, %v9498
        %v9543 = vadd.f32 %v9488, %v9498
        %v9544 = vadd.f32 %v9489, %v9498
        %v9545 = vadd.f32 %v9490, %v9498
        %v9546 = vadd.f32 %v9491, %v9498
        %v9547 = vadd.f32 %v9492, %v9498
        %v9548 = vpack.c.bf16 %v9501, %v9500
        %v9549 = vpack.c.bf16 %v9503, %v9502
        %v9550 = vpack.c.bf16 %v9505, %v9504
        %v9551 = vpack.c.bf16 %v9507, %v9506
        %v9552 = vpack.c.bf16 %v9509, %v9508
        %v9553 = vpack.c.bf16 %v9511, %v9510
        %v9554 = vpack.c.bf16 %v9513, %v9512
        %v9555 = vpack.c.bf16 %v9515, %v9514
        %v9556 = vpack.c.bf16 %v9517, %v9516
        %v9557 = vpack.c.bf16 %v9519, %v9518
        %v9558 = vpack.c.bf16 %v9521, %v9520
        %v9559 = vpack.c.bf16 %v9523, %v9522
        %v9560 = vpack.c.bf16 %v9525, %v9524
        %v9561 = vpack.c.bf16 %v9527, %v9526
        %v9562 = vpack.c.bf16 %v9529, %v9528
        %v9563 = vpack.c.bf16 %v9531, %v9530
        %v9564 = vpack.c.bf16 %v9533, %v9532
        %v9565 = vpack.c.bf16 %v9535, %v9534
        %v9566 = vpack.c.bf16 %v9537, %v9536
        %v9567 = vpack.c.bf16 %v9539, %v9538
        %v9568 = vpack.c.bf16 %v9541, %v9540
        %v9569 = vpack.c.bf16 %v9543, %v9542
        %v9570 = vpack.c.bf16 %v9545, %v9544
        %v9571 = vpack.c.bf16 %v9547, %v9546
        %v9572 = vld [vmem:[%s5] sm:$0xf]
        %v9573 = vld [vmem:[%s5 + $0x4] sm:$0xf]
        %v9574 = vld [vmem:[%s5 + $0x8] sm:$0xf]
        %v9575 = vld [vmem:[%s5 + $0xc] sm:$0xf]
        %v9576 = vld [vmem:[%s5 + $0x10] sm:$0xf]
        %v9577 = vld [vmem:[%s5 + $0x14] sm:$0xf]
        %v9578 = vld [vmem:[%s6] sm:$0x1]
        %v9580 = vlaneseq
        %v9581 = vshrl.u32 %v9580, 7
        %v9582 = vsub.s32 0, %v9581
        %v9583 = vrot.slane %v9578, %v9582
        %v9591 = vunpack.c.l.b16 %v9572
        %v9592 = vunpack.c.l.b16 %v9573
        %v9593 = vunpack.c.l.b16 %v9574
        %v9594 = vunpack.c.l.b16 %v9575
        %v9595 = vunpack.c.l.b16 %v9576
        %v9596 = vunpack.c.l.b16 %v9577
        %v9597 = vpack.c.b16 %v9592, %v9591
        %v9598 = vpack.c.b16 %v9594, %v9593
        %v9599 = vpack.c.b16 %v9596, %v9595
        %vm9603 = vcmask 392192
        %v9605 = vsel %vm9603, %v9548, 0
        %v9608 = vsel %vm9603, %v9549, 0
        %v9611 = vsel %vm9603, %v9550, 0
        %v9614 = vsel %vm9603, %v9551, 0
        %v9617 = vsel %vm9603, %v9552, 0
        %v9620 = vsel %vm9603, %v9553, 0
        %v9623 = vsel %vm9603, %v9554, 0
        %v9626 = vsel %vm9603, %v9555, 0
        %v9629 = vsel %vm9603, %v9556, 0
        %v9632 = vsel %vm9603, %v9557, 0
        %v9635 = vsel %vm9603, %v9558, 0
        %v9638 = vsel %vm9603, %v9559, 0
        %v9641 = vsel %vm9603, %v9560, 0
        %v9644 = vsel %vm9603, %v9561, 0
        %v9647 = vsel %vm9603, %v9562, 0
        %v9650 = vsel %vm9603, %v9563, 0
        %v9653 = vsel %vm9603, %v9564, 0
        %v9656 = vsel %vm9603, %v9565, 0
        %v9659 = vsel %vm9603, %v9566, 0
        %v9662 = vsel %vm9603, %v9567, 0
        %v9665 = vsel %vm9603, %v9568, 0
        %v9668 = vsel %vm9603, %v9569, 0
        %v9671 = vsel %vm9603, %v9570, 0
        %v9674 = vsel %vm9603, %v9571, 0
        %9676 = vmatprep.subr.bf16.mxu0 0
        %9677 = vmatpush1.bf16.msra.mxu0 0
        %9678 = vmatprep.subr.bf16.mxu0 0
        %9679 = vmatpush1.bf16.msra.mxu0 0
        %9680 = vmatprep.subr.bf16.mxu0 0
        %9681 = vmatpush1.bf16.msra.mxu0 0
        %9682 = vmatprep.subr.bf16.mxu0 0
        %9683 = vmatpush1.bf16.msra.mxu0 0
        %9684 = vmatprep.subr.bf16.mxu0 0
        %9685 = vmatpush1.bf16.msra.mxu0 0
        %9686 = vmatprep.subr.bf16.mxu0 0
        %9687 = vmatpush1.bf16.msra.mxu0 %v9599
        %9688 = vmatprep.subr.bf16.mxu0 0
        %9689 = vmatpush1.bf16.msra.mxu0 %v9598
        %9690 = vmatprep.subr.bf16.mxu0 0
        %9691 = vmatpush1.bf16.msra.mxu0 %v9597
        %9692 = vmatprep.subr.bf16.mxu0 0
        %9693 = vmatpush2.bf16.msra.mxu0 0
        %9694 = vmatprep.subr.bf16.mxu0 0
        %9695 = vmatpush2.bf16.msra.mxu0 0
        %9696 = vmatprep.subr.bf16.mxu0 0
        %9697 = vmatpush2.bf16.msra.mxu0 0
        %9698 = vmatprep.subr.bf16.mxu0 0
        %9699 = vmatpush2.bf16.msra.mxu0 0
        %9700 = vmatprep.subr.bf16.mxu0 0
        %9701 = vmatpush2.bf16.msra.mxu0 0
        %9702 = vmatprep.subr.bf16.mxu0 0
        %9703 = vmatpush2.bf16.msra.mxu0 0
        %9704 = vmatprep.subr.bf16.mxu0 0
        %9705 = vmatpush2.bf16.msra.mxu0 0
        %9706 = vmatprep.subr.bf16.mxu0 0
        %9707 = vmatpush2.bf16.msra.mxu0 0
        %9708 = vmatprep.mubr.bf16.mxu0 0
        %9709 = vmatmul.mubr.bf16.gmra.mxu0 %v9605
        %v9710 = vpop.f32.mrf.mxu0
        %v9711 = vadd.f32 %v9583, %v9710
        %v9712 = vpop.f32.mrf.mxu0
        %v9713 = vpop.f32.mrf.mxu0
        %v9714 = vadd.f32 %v9583, %v9713
        %v9715 = vpop.f32.mrf.mxu0
        %9716 = vmatprep.mubr.bf16.mxu0 0
        %9717 = vmatmul.mubr.bf16.gmra.mxu0 %v9608
        %v9718 = vpop.f32.mrf.mxu0
        %v9719 = vpop.f32.mrf.mxu0
        %v9720 = vpop.f32.mrf.mxu0
        %v9721 = vadd.f32 %v9583, %v9720
        %v9722 = vpop.f32.mrf.mxu0
        %9723 = vmatprep.mubr.bf16.mxu0 0
        %9724 = vmatmul.mubr.bf16.gmra.mxu0 %v9611
        %v9725 = vpop.f32.mrf.mxu0
        %v9726 = vadd.f32 %v9583, %v9725
        %v9727 = vpop.f32.mrf.mxu0
        %v9728 = vpop.f32.mrf.mxu0
        %v9729 = vpop.f32.mrf.mxu0
        %9730 = vmatprep.mubr.bf16.mxu0 0
        %9731 = vmatmul.mubr.bf16.gmra.mxu0 %v9614
        %v9732 = vpop.f32.mrf.mxu0
        %v9733 = vadd.f32 %v9583, %v9732
        %v9734 = vpop.f32.mrf.mxu0
        %v9735 = vpop.f32.mrf.mxu0
        %v9736 = vadd.f32 %v9583, %v9735
        %v9737 = vpop.f32.mrf.mxu0
        %9738 = vmatprep.mubr.bf16.mxu0 0
        %9739 = vmatmul.mubr.bf16.gmra.mxu0 %v9617
        %v9740 = vpop.f32.mrf.mxu0
        %v9741 = vpop.f32.mrf.mxu0
        %v9742 = vpop.f32.mrf.mxu0
        %v9743 = vadd.f32 %v9583, %v9742
        %v9744 = vpop.f32.mrf.mxu0
        %9745 = vmatprep.mubr.bf16.mxu0 0
        %9746 = vmatmul.mubr.bf16.gmra.mxu0 %v9620
        %v9747 = vpop.f32.mrf.mxu0
        %v9748 = vadd.f32 %v9583, %v9747
        %v9749 = vpop.f32.mrf.mxu0
        %v9750 = vpop.f32.mrf.mxu0
        %v9751 = vpop.f32.mrf.mxu0
        %9752 = vmatprep.mubr.bf16.mxu0 0
        %9753 = vmatmul.mubr.bf16.gmra.mxu0 %v9623
        %v9754 = vpop.f32.mrf.mxu0
        %v9755 = vadd.f32 %v9583, %v9754
        %v9756 = vpop.f32.mrf.mxu0
        %v9757 = vpop.f32.mrf.mxu0
        %v9758 = vadd.f32 %v9583, %v9757
        %v9759 = vpop.f32.mrf.mxu0
        %9760 = vmatprep.mubr.bf16.mxu0 0
        %9761 = vmatmul.mubr.bf16.gmra.mxu0 %v9626
        %v9762 = vpop.f32.mrf.mxu0
        %v9763 = vpop.f32.mrf.mxu0
        %v9764 = vpop.f32.mrf.mxu0
        %v9765 = vadd.f32 %v9583, %v9764
        %v9766 = vpop.f32.mrf.mxu0
        %9767 = vmatprep.mubr.bf16.mxu0 0
        %9768 = vmatmul.mubr.bf16.gmra.mxu0 %v9629
        %v9769 = vpop.f32.mrf.mxu0
        %v9770 = vadd.f32 %v9583, %v9769
        %v9771 = vpop.f32.mrf.mxu0
        %v9772 = vpop.f32.mrf.mxu0
        %v9773 = vpop.f32.mrf.mxu0
        %9774 = vmatprep.mubr.bf16.mxu0 0
        %9775 = vmatmul.mubr.bf16.gmra.mxu0 %v9632
        %v9776 = vpop.f32.mrf.mxu0
        %v9777 = vadd.f32 %v9583, %v9776
        %v9778 = vpop.f32.mrf.mxu0
        %v9779 = vpop.f32.mrf.mxu0
        %v9780 = vadd.f32 %v9583, %v9779
        %v9781 = vpop.f32.mrf.mxu0
        %9782 = vmatprep.mubr.bf16.mxu0 0
        %9783 = vmatmul.mubr.bf16.gmra.mxu0 %v9635
        %v9784 = vpop.f32.mrf.mxu0
        %v9785 = vpop.f32.mrf.mxu0
        %v9786 = vpop.f32.mrf.mxu0
        %v9787 = vadd.f32 %v9583, %v9786
        %v9788 = vpop.f32.mrf.mxu0
        %9789 = vmatprep.mubr.bf16.mxu0 0
        %9790 = vmatmul.mubr.bf16.gmra.mxu0 %v9638
        %v9791 = vpop.f32.mrf.mxu0
        %v9792 = vadd.f32 %v9583, %v9791
        %v9793 = vpop.f32.mrf.mxu0
        %v9794 = vpop.f32.mrf.mxu0
        %v9795 = vpop.f32.mrf.mxu0
        %9796 = vmatprep.mubr.bf16.mxu0 0
        %9797 = vmatmul.mubr.bf16.gmra.mxu0 %v9641
        %v9798 = vpop.f32.mrf.mxu0
        %v9799 = vadd.f32 %v9583, %v9798
        %v9800 = vpop.f32.mrf.mxu0
        %v9801 = vpop.f32.mrf.mxu0
        %v9802 = vadd.f32 %v9583, %v9801
        %v9803 = vpop.f32.mrf.mxu0
        %9804 = vmatprep.mubr.bf16.mxu0 0
        %9805 = vmatmul.mubr.bf16.gmra.mxu0 %v9644
        %v9806 = vpop.f32.mrf.mxu0
        %v9807 = vpop.f32.mrf.mxu0
        %v9808 = vpop.f32.mrf.mxu0
        %v9809 = vadd.f32 %v9583, %v9808
        %v9810 = vpop.f32.mrf.mxu0
        %9811 = vmatprep.mubr.bf16.mxu0 0
        %9812 = vmatmul.mubr.bf16.gmra.mxu0 %v9647
        %v9813 = vpop.f32.mrf.mxu0
        %v9814 = vadd.f32 %v9583, %v9813
        %v9815 = vpop.f32.mrf.mxu0
        %v9816 = vpop.f32.mrf.mxu0
        %v9817 = vpop.f32.mrf.mxu0
        %9818 = vmatprep.mubr.bf16.mxu0 0
        %9819 = vmatmul.mubr.bf16.gmra.mxu0 %v9650
        %v9820 = vpop.f32.mrf.mxu0
        %v9821 = vadd.f32 %v9583, %v9820
        %v9822 = vpop.f32.mrf.mxu0
        %v9823 = vpop.f32.mrf.mxu0
        %v9824 = vadd.f32 %v9583, %v9823
        %v9825 = vpop.f32.mrf.mxu0
        %9826 = vmatprep.mubr.bf16.mxu0 0
        %9827 = vmatmul.mubr.bf16.gmra.mxu0 %v9653
        %v9828 = vpop.f32.mrf.mxu0
        %v9829 = vpop.f32.mrf.mxu0
        %v9830 = vpop.f32.mrf.mxu0
        %v9831 = vadd.f32 %v9583, %v9830
        %v9832 = vpop.f32.mrf.mxu0
        %9833 = vmatprep.mubr.bf16.mxu0 0
        %9834 = vmatmul.mubr.bf16.gmra.mxu0 %v9656
        %v9835 = vpop.f32.mrf.mxu0
        %v9836 = vadd.f32 %v9583, %v9835
        %v9837 = vpop.f32.mrf.mxu0
        %v9838 = vpop.f32.mrf.mxu0
        %v9839 = vpop.f32.mrf.mxu0
        %9840 = vmatprep.mubr.bf16.mxu0 0
        %9841 = vmatmul.mubr.bf16.gmra.mxu0 %v9659
        %v9842 = vpop.f32.mrf.mxu0
        %v9843 = vadd.f32 %v9583, %v9842
        %v9844 = vpop.f32.mrf.mxu0
        %v9845 = vpop.f32.mrf.mxu0
        %v9846 = vadd.f32 %v9583, %v9845
        %v9847 = vpop.f32.mrf.mxu0
        %9848 = vmatprep.mubr.bf16.mxu0 0
        %9849 = vmatmul.mubr.bf16.gmra.mxu0 %v9662
        %v9850 = vpop.f32.mrf.mxu0
        %v9851 = vpop.f32.mrf.mxu0
        %v9852 = vpop.f32.mrf.mxu0
        %v9853 = vadd.f32 %v9583, %v9852
        %v9854 = vpop.f32.mrf.mxu0
        %9855 = vmatprep.mubr.bf16.mxu0 0
        %9856 = vmatmul.mubr.bf16.gmra.mxu0 %v9665
        %v9857 = vpop.f32.mrf.mxu0
        %v9858 = vadd.f32 %v9583, %v9857
        %v9859 = vpop.f32.mrf.mxu0
        %v9860 = vpop.f32.mrf.mxu0
        %v9861 = vpop.f32.mrf.mxu0
        %9862 = vmatprep.mubr.bf16.mxu0 0
        %9863 = vmatmul.mubr.bf16.gmra.mxu0 %v9668
        %v9864 = vpop.f32.mrf.mxu0
        %v9865 = vadd.f32 %v9583, %v9864
        %v9866 = vpop.f32.mrf.mxu0
        %v9867 = vpop.f32.mrf.mxu0
        %v9868 = vadd.f32 %v9583, %v9867
        %v9869 = vpop.f32.mrf.mxu0
        %9870 = vmatprep.mubr.bf16.mxu0 0
        %9871 = vmatmul.mubr.bf16.gmra.mxu0 %v9671
        %v9872 = vpop.f32.mrf.mxu0
        %v9873 = vpop.f32.mrf.mxu0
        %v9874 = vpop.f32.mrf.mxu0
        %v9875 = vadd.f32 %v9583, %v9874
        %v9876 = vpop.f32.mrf.mxu0
        %9877 = vmatprep.mubr.bf16.mxu0 0
        %9878 = vmatmul.mubr.bf16.gmra.mxu0 %v9674
        %v9879 = vpop.f32.mrf.mxu0
        %v9880 = vadd.f32 %v9583, %v9879
        %v9881 = vpop.f32.mrf.mxu0
        %v9882 = vpop.f32.mrf.mxu0
        %v9883 = vpop.f32.mrf.mxu0
        %9884 = vdwg.mxu0
        %v9885 = vmax.f32 %v9711, 0.0
        %v9886 = vmax.f32 %v9714, 0.0
        %v9887 = vmax.f32 %v9721, 0.0
        %v9888 = vmax.f32 %v9726, 0.0
        %v9889 = vmax.f32 %v9733, 0.0
        %v9890 = vmax.f32 %v9736, 0.0
        %v9891 = vmax.f32 %v9743, 0.0
        %v9892 = vmax.f32 %v9748, 0.0
        %v9893 = vmax.f32 %v9755, 0.0
        %v9894 = vmax.f32 %v9758, 0.0
        %v9895 = vmax.f32 %v9765, 0.0
        %v9896 = vmax.f32 %v9770, 0.0
        %v9897 = vmax.f32 %v9777, 0.0
        %v9898 = vmax.f32 %v9780, 0.0
        %v9899 = vmax.f32 %v9787, 0.0
        %v9900 = vmax.f32 %v9792, 0.0
        %v9901 = vmax.f32 %v9799, 0.0
        %v9902 = vmax.f32 %v9802, 0.0
        %v9903 = vmax.f32 %v9809, 0.0
        %v9904 = vmax.f32 %v9814, 0.0
        %v9905 = vmax.f32 %v9821, 0.0
        %v9906 = vmax.f32 %v9824, 0.0
        %v9907 = vmax.f32 %v9831, 0.0
        %v9908 = vmax.f32 %v9836, 0.0
        %v9909 = vmax.f32 %v9843, 0.0
        %v9910 = vmax.f32 %v9846, 0.0
        %v9911 = vmax.f32 %v9853, 0.0
        %v9912 = vmax.f32 %v9858, 0.0
        %v9913 = vmax.f32 %v9865, 0.0
        %v9914 = vmax.f32 %v9868, 0.0
        %v9915 = vmax.f32 %v9875, 0.0
        %v9916 = vmax.f32 %v9880, 0.0
        %v9917 = vld [vmem:[%s276] sm:$0xff]
        %v9918 = vld [vmem:[%s276 + $0x8] sm:$0xff]
        %v9919 = vld [vmem:[%s276 + $0x10] sm:$0xff]
        %v9920 = vld [vmem:[%s276 + $0x18] sm:$0xff]
        %v9921 = vld [vmem:[%s276 + $0x20] sm:$0xff]
        %v9922 = vld [vmem:[%s276 + $0x28] sm:$0xff]
        %v9923 = vld [vmem:[%s276 + $0x30] sm:$0xff]
        %v9924 = vld [vmem:[%s276 + $0x38] sm:$0xff]
        %v9925 = vld [vmem:[%s276 + $0x40] sm:$0xff]
        %v9926 = vld [vmem:[%s276 + $0x48] sm:$0xff]
        %v9927 = vld [vmem:[%s276 + $0x50] sm:$0xff]
        %v9928 = vld [vmem:[%s276 + $0x58] sm:$0xff]
        %v9929 = vld [vmem:[%s276 + $0x60] sm:$0xff]
        %v9930 = vld [vmem:[%s276 + $0x68] sm:$0xff]
        %v9931 = vld [vmem:[%s276 + $0x70] sm:$0xff]
        %v9932 = vld [vmem:[%s276 + $0x78] sm:$0xff]
        %v9933 = vld [vmem:[%s276 + $0x80] sm:$0xff]
        %v9934 = vld [vmem:[%s276 + $0x88] sm:$0xff]
        %v9935 = vld [vmem:[%s276 + $0x90] sm:$0xff]
        %v9936 = vld [vmem:[%s276 + $0x98] sm:$0xff]
        %v9937 = vld [vmem:[%s276 + $0xa0] sm:$0xff]
        %v9938 = vld [vmem:[%s276 + $0xa8] sm:$0xff]
        %v9939 = vld [vmem:[%s276 + $0xb0] sm:$0xff]
        %v9940 = vld [vmem:[%s276 + $0xb8] sm:$0xff]
        %v9941 = vld [vmem:[%s276 + $0xc0] sm:$0xff]
        %v9942 = vld [vmem:[%s276 + $0xc8] sm:$0xff]
        %v9943 = vld [vmem:[%s276 + $0xd0] sm:$0xff]
        %v9944 = vld [vmem:[%s276 + $0xd8] sm:$0xff]
        %v9945 = vld [vmem:[%s276 + $0xe0] sm:$0xff]
        %v9946 = vld [vmem:[%s276 + $0xe8] sm:$0xff]
        %v9947 = vld [vmem:[%s276 + $0xf0] sm:$0xff]
        %v9948 = vld [vmem:[%s276 + $0xf8] sm:$0xff]
        %v9949 = vadd.f32 %v9885, %v9917
        %v9950 = vadd.f32 %v9886, %v9918
        %v9951 = vadd.f32 %v9887, %v9919
        %v9952 = vadd.f32 %v9888, %v9920
        %v9953 = vadd.f32 %v9889, %v9921
        %v9954 = vadd.f32 %v9890, %v9922
        %v9955 = vadd.f32 %v9891, %v9923
        %v9956 = vadd.f32 %v9892, %v9924
        %v9957 = vadd.f32 %v9893, %v9925
        %v9958 = vadd.f32 %v9894, %v9926
        %v9959 = vadd.f32 %v9895, %v9927
        %v9960 = vadd.f32 %v9896, %v9928
        %v9961 = vadd.f32 %v9897, %v9929
        %v9962 = vadd.f32 %v9898, %v9930
        %v9963 = vadd.f32 %v9899, %v9931
        %v9964 = vadd.f32 %v9900, %v9932
        %v9965 = vadd.f32 %v9901, %v9933
        %v9966 = vadd.f32 %v9902, %v9934
        %v9967 = vadd.f32 %v9903, %v9935
        %v9968 = vadd.f32 %v9904, %v9936
        %v9969 = vadd.f32 %v9905, %v9937
        %v9970 = vadd.f32 %v9906, %v9938
        %v9971 = vadd.f32 %v9907, %v9939
        %v9972 = vadd.f32 %v9908, %v9940
        %v9973 = vadd.f32 %v9909, %v9941
        %v9974 = vadd.f32 %v9910, %v9942
        %v9975 = vadd.f32 %v9911, %v9943
        %v9976 = vadd.f32 %v9912, %v9944
        %v9977 = vadd.f32 %v9913, %v9945
        %v9978 = vadd.f32 %v9914, %v9946
        %v9979 = vadd.f32 %v9915, %v9947
        %v9980 = vadd.f32 %v9916, %v9948
        %v9981 = vmax.f32 %v9949, 0.0
        %v9982 = vmax.f32 %v9950, 0.0
        %v9983 = vmax.f32 %v9951, 0.0
        %v9984 = vmax.f32 %v9952, 0.0
        %v9985 = vmax.f32 %v9953, 0.0
        %v9986 = vmax.f32 %v9954, 0.0
        %v9987 = vmax.f32 %v9955, 0.0
        %v9988 = vmax.f32 %v9956, 0.0
        %v9989 = vmax.f32 %v9957, 0.0
        %v9990 = vmax.f32 %v9958, 0.0
        %v9991 = vmax.f32 %v9959, 0.0
        %v9992 = vmax.f32 %v9960, 0.0
        %v9993 = vmax.f32 %v9961, 0.0
        %v9994 = vmax.f32 %v9962, 0.0
        %v9995 = vmax.f32 %v9963, 0.0
        %v9996 = vmax.f32 %v9964, 0.0
        %v9997 = vmax.f32 %v9965, 0.0
        %v9998 = vmax.f32 %v9966, 0.0
        %v9999 = vmax.f32 %v9967, 0.0
        %v10000 = vmax.f32 %v9968, 0.0
        %v10001 = vmax.f32 %v9969, 0.0
        %v10002 = vmax.f32 %v9970, 0.0
        %v10003 = vmax.f32 %v9971, 0.0
        %v10004 = vmax.f32 %v9972, 0.0
        %v10005 = vmax.f32 %v9973, 0.0
        %v10006 = vmax.f32 %v9974, 0.0
        %v10007 = vmax.f32 %v9975, 0.0
        %v10008 = vmax.f32 %v9976, 0.0
        %v10009 = vmax.f32 %v9977, 0.0
        %v10010 = vmax.f32 %v9978, 0.0
        %v10011 = vmax.f32 %v9979, 0.0
        %v10012 = vmax.f32 %v9980, 0.0
        %10013 = vxpose.xlu0.b32.start [1/16] %v9981, 128
        %10014 = vxpose.xlu0.b32.cont [2/16] %v9982, 128
        %10015 = vxpose.xlu0.b32.cont [3/16] %v9983, 128
        %10016 = vxpose.xlu0.b32.cont [4/16] %v9984, 128
        %10017 = vxpose.xlu0.b32.cont [5/16] %v9985, 128
        %10018 = vxpose.xlu0.b32.cont [6/16] %v9986, 128
        %10019 = vxpose.xlu0.b32.cont [7/16] %v9987, 128
        %10020 = vxpose.xlu0.b32.cont [8/16] %v9988, 128
        %10021 = vxpose.xlu0.b32.cont [9/16] %v9989, 128
        %10022 = vxpose.xlu0.b32.cont [10/16] %v9990, 128
        %10023 = vxpose.xlu0.b32.cont [11/16] %v9991, 128
        %10024 = vxpose.xlu0.b32.cont [12/16] %v9992, 128
        %10025 = vxpose.xlu0.b32.cont [13/16] %v9993, 128
        %10026 = vxpose.xlu0.b32.cont [14/16] %v9994, 128
        %10027 = vxpose.xlu0.b32.cont [15/16] %v9995, 128
        %10028 = vxpose.xlu0.b32.end [16/16] %v9996, 128
        %v10029 = vpop.trf.xlu0
        %v10030 = vpop.trf.xlu0
        %v10031 = vpop.trf.xlu0
        %v10032 = vpop.trf.xlu0
        %v10033 = vpop.trf.xlu0
        %v10034 = vpop.trf.xlu0
        %v10035 = vpop.trf.xlu0
        %v10036 = vpop.trf.xlu0
        %v10037 = vpop.trf.xlu0
        %v10038 = vpop.trf.xlu0
        %v10039 = vpop.trf.xlu0
        %v10040 = vpop.trf.xlu0
        %v10041 = vpop.trf.xlu0
        %v10042 = vpop.trf.xlu0
        %v10043 = vpop.trf.xlu0
        %v10044 = vpop.trf.xlu0
        %10045 = vxpose.xlu0.b32.start [1/16] %v9997, 128
        %10046 = vxpose.xlu0.b32.cont [2/16] %v9998, 128
        %10047 = vxpose.xlu0.b32.cont [3/16] %v9999, 128
        %10048 = vxpose.xlu0.b32.cont [4/16] %v10000, 128
        %10049 = vxpose.xlu0.b32.cont [5/16] %v10001, 128
        %10050 = vxpose.xlu0.b32.cont [6/16] %v10002, 128
        %10051 = vxpose.xlu0.b32.cont [7/16] %v10003, 128
        %10052 = vxpose.xlu0.b32.cont [8/16] %v10004, 128
        %10053 = vxpose.xlu0.b32.cont [9/16] %v10005, 128
        %10054 = vxpose.xlu0.b32.cont [10/16] %v10006, 128
        %10055 = vxpose.xlu0.b32.cont [11/16] %v10007, 128
        %10056 = vxpose.xlu0.b32.cont [12/16] %v10008, 128
        %10057 = vxpose.xlu0.b32.cont [13/16] %v10009, 128
        %10058 = vxpose.xlu0.b32.cont [14/16] %v10010, 128
        %10059 = vxpose.xlu0.b32.cont [15/16] %v10011, 128
        %10060 = vxpose.xlu0.b32.end [16/16] %v10012, 128
        %v10061 = vpop.trf.xlu0
        %v10062 = vpop.trf.xlu0
        %v10063 = vpop.trf.xlu0
        %v10064 = vpop.trf.xlu0
        %v10065 = vpop.trf.xlu0
        %v10066 = vpop.trf.xlu0
        %v10067 = vpop.trf.xlu0
        %v10068 = vpop.trf.xlu0
        %v10069 = vpop.trf.xlu0
        %v10070 = vpop.trf.xlu0
        %v10071 = vpop.trf.xlu0
        %v10072 = vpop.trf.xlu0
        %v10073 = vpop.trf.xlu0
        %v10074 = vpop.trf.xlu0
        %v10075 = vpop.trf.xlu0
        %v10076 = vpop.trf.xlu0
        %10077 = vst [vmem:[%s271] sm:$0xff] %v10029
        %10078 = vst [vmem:[%s271 + $0x8] sm:$0xff] %v10061
        %s10079 = sand.u32 %s181, 1
        %s10080 = scalar_lea.sflag [#allocation5], %s10079
        %s10081 = sand.u32 %s181, 1
        %s10082 = smul.addr %s10081, 16
        %s10083 = scalar_lea.vmem [#allocation4], %s10082
        // Predicated region
        $region49: #{tpu_custom_call.1} parent=47 // pred_check
          %p10084 = pneg %p191
        $region50: #{tpu_custom_call.1} parent=47 // pred_check_branch
          %10086 = sbr.rel (%p10084) target = $region52
        $region51: #{tpu_custom_call.1} parent=47 // pred_region
          %s10088 = ssub.s32 256, 256
          %10089 = vsyncadd %s10080, %s10088
          %s10090 = smul.addr %s21, 2
          %s10091 = smul.addr %s10090, 128
          %s10092 = scalar_lea.hbm %s7, %s10091
          %s10094 = sshll.u32 %s10083, 4
          %s10095 = int_to_ptr.vmem [resolvable:$true] %s10094
          %10097 = dma.vmem_to_hbm [thread:$0]  %s10095, 256, %s10092, %s10080
        $region52: #{tpu_custom_call.1} parent=47 // pred_fallthru
          _
      $region48: #{tpu_custom_call.1} parent=5 // pred_fallthru
        _
      %p10098 = scmp.le.s32.totalorder 2, %s16
      // Predicated region
      $region53: #{tpu_custom_call.1} parent=5 // pred_check
        %p10099 = pneg %p10098
      $region54: #{tpu_custom_call.1} parent=5 // pred_check_branch
        %10101 = sbr.rel (%p10099) target = $region56
      $region55: #{tpu_custom_call.1} parent=5 // pred_region
        %s10102 = ssub.s32 %s16, 2
        // Predicated region
        $region57: #{tpu_custom_call.1} parent=55 // pred_check
          %p10103 = pneg %p197
        $region58: #{tpu_custom_call.1} parent=55 // pred_check_branch
          %10105 = sbr.rel (%p10103) target = $region60
        $region59: #{tpu_custom_call.1} parent=55 // pred_region
          %s10106 = sand.u32 %s182, 1
          %s10107 = scalar_lea.sflag [#allocation5], %s10106
          %s10108 = sand.u32 %s182, 1
          %s10109 = smul.addr %s10108, 16
          %s10110 = scalar_lea.vmem [#allocation4], %s10109
          %10111 = dma.done %s10107, 256
        $region60: #{tpu_custom_call.1} parent=55 // pred_fallthru
          _
      $region56: #{tpu_custom_call.1} parent=5 // pred_fallthru
        _
    $region6: #{tpu_custom_call.1} parent=1 // loop_footer
      %s20 = sadd.s32 1, %s16
    $region7: #{tpu_custom_call.1} parent=1 // loop_footer_branch
      %15 = sbr.rel target = $region3
    $region8: #{tpu_custom_call.1} parent=1 // loop_exit
      _
    %10112 = vsyncpa [#allocation5], 1
    %s10113 = scalar_lea.sflag [#allocation5], 1
    %10114 = vsyncpa %s10113, 1

</llo_original>
